<compile_context>
chip_gen: v5e
topology: v5e:2x2
jax: 0.10.0
libtpu: 0.0.40
codegen_flags: <defaults>
</compile_context>

<pallas_src>
import jax
import jax.numpy as jnp
from jax.experimental import pallas as pl
from jax.experimental.pallas import tpu as pltpu

LANE = 128
SUB = 16                        # sublane multiple that is safe for bf16 blocks
TILE_M = 512                    # <=512 keeps v7x (64 MiB VMEM) comfortable
VMEM_LIMIT = 48 * 1024 * 1024


# ----------------------------- Pallas kernels ------------------------------

def _matmul_bias_relu_kernel(p_ref, w_ref, b_ref, o_ref):
    # p_ref: [tm, Kp] bf16 patches (streamed), w_ref: [Kp, Coutp] bf16
    # (BN scale folded in, VMEM resident), b_ref: [1, Coutp] f32 BN bias,
    # o_ref: [tm, Coutp] (f32 or bf16).
    acc = jnp.dot(p_ref[...], w_ref[...], preferred_element_type=jnp.float32)
    o_ref[...] = jnp.maximum(acc + b_ref[...], 0.0).astype(o_ref.dtype)


def _conv3x3s1_kernel(x_ref, w_ref, b_ref, o_ref, acc_ref):
    # One batch element per grid step; no HBM im2col slab.
    # x_ref: [1, H+2, Wc+2, C] bf16 (zero padded spatially),
    # w_ref: [9, C, Coutp] bf16 (tap-major, scale folded in),
    # b_ref: [1, Coutp] f32, o_ref: [1, H*Wc, Coutp], acc_ref: [H*Wc, Coutp] f32.
    H = x_ref.shape[1] - 2
    Wc = x_ref.shape[2] - 2
    C = x_ref.shape[3]
    acc_ref[...] = jnp.zeros_like(acc_ref)
    for t in range(9):
        di, dj = t // 3, t % 3
        patch = x_ref[0, di:di + H, dj:dj + Wc, :].reshape(H * Wc, C)
        acc_ref[...] += jnp.dot(patch, w_ref[t],
                                preferred_element_type=jnp.float32)
    y = jnp.maximum(acc_ref[...] + b_ref[...], 0.0)
    o_ref[...] = y.reshape(o_ref.shape).astype(o_ref.dtype)


def _maxpool3x3s2_kernel(t0_ref, t1_ref, t2_ref, o_ref):
    # t{0,1,2}_ref: [tm, W, C] vertical taps (input rows i, i+2, ...);
    # horizontal 3-tap / stride-2 max via strided ref reads.  o_ref: [tm, ow, C].
    ow = o_ref.shape[1]

    def hmax(t_ref):
        m = jnp.maximum(t_ref[:, pl.ds(0, ow, stride=2), :],
                        t_ref[:, pl.ds(1, ow, stride=2), :])
        return jnp.maximum(m, t_ref[:, pl.ds(2, ow, stride=2), :])

    o_ref[...] = jnp.maximum(jnp.maximum(hmax(t0_ref), hmax(t1_ref)),
                             hmax(t2_ref))


# ------------------------------- glue helpers ------------------------------

def _round_up(x, m):
    return (x + m - 1) // m * m


def _choose_tile(m, align):
    """Row-tile size: multiple of `align`, <= TILE_M, and >=2 grid steps
    whenever possible (lets v7x split the parallel axis across both cores and
    gives the DMA pipeline something to overlap)."""
    tm = min(TILE_M, _round_up(m, align))
    if m > align and _round_up(m, tm) // tm < 2:
        tm = _round_up((m + 1) // 2, align)
    return tm


def _fold_bn(w_hwio, scale, bias, cin_actual):
    """Fold BN scale into conv weights (f32), zero-pad cin up to the actual
    activation channel count and cout up to a lane multiple (exact: zero
    weights / zero bias contribute nothing after ReLU)."""
    kh, kw, cin, cout = w_hwio.shape
    coutp = _round_up(cout, LANE)
    wf = w_hwio * scale                                   # broadcast over cout
    wf = jnp.pad(wf, ((0, 0), (0, 0), (0, cin_actual - cin), (0, coutp - cout)))
    bf = jnp.pad(bias, (0, coutp - cout)).reshape(1, coutp)
    return wf, bf, coutp


def _im2col(x_nhwc, kh, kw, stride):
    """[N*oh*ow, kh*kw*C] patches (K left at its natural size) + (N, oh, ow)."""
    N, H, W, C = x_nhwc.shape
    oh = (H - kh) // stride + 1
    ow = (W - kw) // stride + 1
    if kh == 1 and kw == 1 and stride == 1:
        return x_nhwc.reshape(N * oh * ow, C), (N, oh, ow)
    cols = []
    for i in range(kh):
        for j in range(kw):
            cols.append(x_nhwc[:, i:i + (oh - 1) * stride + 1:stride,
                               j:j + (ow - 1) * stride + 1:stride, :])
    patches = jnp.stack(cols, axis=3)                     # [N, oh, ow, kh*kw, C]
    return patches.reshape(N * oh * ow, kh * kw * C), (N, oh, ow)


def conv_bn_relu(x_nhwc, w_hwio, scale, bias, *, stride, out_dtype=jnp.float32):
    """BasicConv2d (valid padding) via im2col + one fused matmul kernel."""
    kh, kw = w_hwio.shape[:2]
    wf, bf, coutp = _fold_bn(w_hwio, scale, bias, x_nhwc.shape[-1])

    patches, (N, oh, ow) = _im2col(x_nhwc, kh, kw, stride)
    patches = patches.astype(jnp.bfloat16)
    M, K = patches.shape
    Kp = _round_up(K, LANE)                               # pad K post-im2col
    tm = _choose_tile(M, SUB)
    Mp = _round_up(M, tm)
    patches = jnp.pad(patches, ((0, Mp - M), (0, Kp - K)))
    w2d = jnp.pad(wf.reshape(K, coutp),
                  ((0, Kp - K), (0, 0))).astype(jnp.bfloat16)

    out = pl.pallas_call(
        _matmul_bias_relu_kernel,
        out_shape=jax.ShapeDtypeStruct((Mp, coutp), out_dtype),
        grid=(Mp // tm,),
        in_specs=[
            pl.BlockSpec((tm, Kp), lambda i: (i, 0)),     # streamed patches
            pl.BlockSpec((Kp, coutp), lambda i: (0, 0)),  # resident weights
            pl.BlockSpec((1, coutp), lambda i: (0, 0)),   # resident bias
        ],
        out_specs=pl.BlockSpec((tm, coutp), lambda i: (i, 0)),
        compiler_params=pltpu.CompilerParams(
            dimension_semantics=("parallel",),
            vmem_limit_bytes=VMEM_LIMIT),
    )(patches, w2d, bf)

    return out[:M].reshape(N, oh, ow, coutp)


def conv3x3s1_bn_relu(x_nhwc, w_hwio, scale, bias, *, out_dtype=jnp.float32):
    """BasicConv2d 3x3 / stride 1 / pad 1, windowed: the padded activation is
    read once per batch element and the 9 taps accumulate in a VMEM scratch."""
    N, H, W, C = x_nhwc.shape
    wf, bf, coutp = _fold_bn(w_hwio, scale, bias, C)
    Wc = _round_up(W, 8)                  # extra cols so (H,Wc)->(H*Wc) merges cleanly
    x_pad = jnp.pad(x_nhwc.astype(jnp.bfloat16),
                    ((0, 0), (1, 1), (1, 1 + Wc - W), (0, 0)))
    w3 = wf.reshape(9, C, coutp).astype(jnp.bfloat16)

    out = pl.pallas_call(
        _conv3x3s1_kernel,
        out_shape=jax.ShapeDtypeStruct((N, H * Wc, coutp), out_dtype),
        grid=(N,),
        in_specs=[
            pl.BlockSpec((1, H + 2, Wc + 2, C), lambda n: (n, 0, 0, 0)),
            pl.BlockSpec((9, C, coutp), lambda n: (0, 0, 0)),   # resident
            pl.BlockSpec((1, coutp), lambda n: (0, 0)),         # resident
        ],
        out_specs=pl.BlockSpec((1, H * Wc, coutp), lambda n: (n, 0, 0)),
        scratch_shapes=[pltpu.VMEM((H * Wc, coutp), jnp.float32)],
        compiler_params=pltpu.CompilerParams(
            dimension_semantics=("parallel",),
            vmem_limit_bytes=VMEM_LIMIT),
    )(x_pad, w3, bf)

    return out.reshape(N, H, Wc, coutp)[:, :, :W, :]


def maxpool3x3s2(x_nhwc):
    """F.max_pool2d(x, kernel_size=3, stride=2) on NHWC, raw channel count."""
    N, H, W, C = x_nhwc.shape
    oh = (H - 3) // 2 + 1
    ow = (W - 3) // 2 + 1
    R = N * oh
    tm = _choose_tile(R, 8)
    Rp = _round_up(R, tm)

    taps = []
    for i in range(3):
        t = x_nhwc[:, i:i + 2 * (oh - 1) + 1:2, :, :].reshape(R, W, C)
        taps.append(jnp.pad(t, ((0, Rp - R), (0, 0), (0, 0))))

    out = pl.pallas_call(
        _maxpool3x3s2_kernel,
        out_shape=jax.ShapeDtypeStruct((Rp, ow, C), x_nhwc.dtype),
        grid=(Rp // tm,),
        in_specs=[pl.BlockSpec((tm, W, C), lambda i: (i, 0, 0))] * 3,
        out_specs=pl.BlockSpec((tm, ow, C), lambda i: (i, 0, 0)),
        compiler_params=pltpu.CompilerParams(
            dimension_semantics=("parallel",),
            vmem_limit_bytes=VMEM_LIMIT),
    )(*taps)

    return out[:R].reshape(N, oh, ow, C)


# ------------------------------ InceptionB ---------------------------------

def make_conv_params(key, kh, kw, cin, cout, eps=1e-3):
    """Deterministic synthetic conv weight + folded eval-mode BN scale/bias."""
    k1, k2, k3, k4, k5 = jax.random.split(key, 5)
    w = 0.05 * jax.random.normal(k1, (kh, kw, cin, cout), jnp.float32)
    gamma = 1.0 + 0.1 * jax.random.normal(k2, (cout,), jnp.float32)
    beta = 0.1 * jax.random.normal(k3, (cout,), jnp.float32)
    running_mean = 0.1 * jax.random.normal(k4, (cout,), jnp.float32)
    running_var = jnp.abs(jax.random.normal(k5, (cout,), jnp.float32)) + 0.5
    scale = gamma / jnp.sqrt(running_var + eps)
    bias = beta - running_mean * scale
    return (w, scale, bias)


def init_inception_b_params(key, in_channels):
    k1, k2, k3, k4 = jax.random.split(key, 4)
    return {
        "branch3x3": make_conv_params(k1, 3, 3, in_channels, 384),
        "dbl1":      make_conv_params(k2, 1, 1, in_channels, 64),
        "dbl2":      make_conv_params(k3, 3, 3, 64, 96),
        "dbl3":      make_conv_params(k4, 3, 3, 96, 96),
    }


@jax.jit
def inception_b_forward(x_nchw, params):
    x = jnp.transpose(x_nchw, (0, 2, 3, 1))               # NCHW -> NHWC (f32)
    cin = x.shape[-1]

    # branch3x3: 3x3 stride 2 (valid)                      -> 384 channels
    b1 = conv_bn_relu(x, *params["branch3x3"], stride=2)

    # branch3x3dbl: 1x1 -> 3x3 pad 1 -> 3x3 stride 2       -> 96 channels
    d = conv_bn_relu(x, *params["dbl1"], stride=1, out_dtype=jnp.bfloat16)
    d = conv3x3s1_bn_relu(d, *params["dbl2"], out_dtype=jnp.bfloat16)
    d = conv_bn_relu(d, *params["dbl3"], stride=2)

    # branch_pool: max_pool2d 3x3 stride 2                 -> cin channels
    bp = maxpool3x3s2(x)

    out = jnp.concatenate([b1[..., :384], d[..., :96], bp], axis=-1)
    return jnp.transpose(out, (0, 3, 1, 2))                # NHWC -> NCHW


# ---------------------------- pure-JAX reference ----------------------------

def _ref_basic_conv(x_nchw, w_hwio, scale, bias, stride, pad):
    w_oihw = jnp.transpose(w_hwio, (3, 2, 0, 1))
    y = jax.lax.conv_general_dilated(
        x_nchw, w_oihw, window_strides=(stride, stride),
        padding=[(pad, pad), (pad, pad)],
        dimension_numbers=("NCHW", "OIHW", "NCHW"),
        precision=jax.lax.Precision.HIGHEST)
    y = y * scale[None, :, None, None] + bias[None, :, None, None]
    return jnp.maximum(y, 0.0)


def inception_b_reference(x_nchw, params):
    b1 = _ref_basic_conv(x_nchw, *params["branch3x3"], 2, 0)
    b2 = _ref_basic_conv(x_nchw, *params["dbl1"], 1, 0)
    b2 = _ref_basic_conv(b2, *params["dbl2"], 1, 1)
    b2 = _ref_basic_conv(b2, *params["dbl3"], 2, 0)
    bp = jax.lax.reduce_window(x_nchw, -jnp.inf, jax.lax.max,
                               (1, 1, 3, 3), (1, 1, 2, 2), "VALID")
    return jnp.concatenate([b1, b2, bp], axis=1)


# --------------------------------- main -------------------------------------

if __name__ == "__main__":
    key = jax.random.PRNGKey(0)
    kx, kp = jax.random.split(key)

    N, Cin, H, W = 2, 4, 16, 16
    x = jax.random.normal(kx, (N, Cin, H, W), jnp.float32)
    params = init_inception_b_params(kp, Cin)

    out = inception_b_forward(x, params)
    out = jax.block_until_ready(out)

    # output spatial = (16 - 3)//2 + 1 = 7 ; channels = 384 + 96 + Cin
    expected_shape = (N, 384 + 96 + Cin, 7, 7)
    assert out.shape == expected_shape, (out.shape, expected_shape)
    assert bool(jnp.all(jnp.isfinite(out)))

    ref = jax.block_until_ready(inception_b_reference(x, params))
    assert ref.shape == expected_shape
    # bf16 MXU inputs / bf16 intermediates vs f32 reference -> loose tolerance.
    max_err = float(jnp.max(jnp.abs(out - ref)))
    assert bool(jnp.allclose(out, ref, atol=5e-2, rtol=5e-2)), max_err

    print("KERNEL_OK")
</pallas_src>

<mosaic_0001>
module attributes {stable_mosaic.version = 11 : i64} {
  func.func @_matmul_bias_relu_kernel(%arg0: i32, %arg1: memref<256x128xbf16, #tpu.memory_space<vmem>>, %arg2: memref<128x128xbf16, #tpu.memory_space<vmem>>, %arg3: memref<1x128xf32, #tpu.memory_space<vmem>>, %arg4: memref<256x128xbf16, #tpu.memory_space<vmem>>) attributes {dimension_semantics = [#tpu.dimension_semantics<parallel>], iteration_bounds = array<i64: 2>, scalar_prefetch = 0 : i64, scratch_operands = 0 : i64, tpu.core_type = #tpu.core_type<tc>, window_params = [{transform_indices = @transform_0, window_bounds = array<i64: 256, 128>}, {pipeline_mode = #tpu.pipeline_mode<synchronous>, transform_indices = @transform_1, window_bounds = array<i64: 128, 128>}, {pipeline_mode = #tpu.pipeline_mode<synchronous>, transform_indices = @transform_2, window_bounds = array<i64: 1, 128>}, {transform_indices = @transform_3, window_bounds = array<i64: 256, 128>}]} {
    %c0 = arith.constant 0 : index
    %c0_0 = arith.constant 0 : index
    %0 = vector.load %arg1[%c0, %c0_0] : memref<256x128xbf16, #tpu.memory_space<vmem>>, vector<256x128xbf16>
    %c0_1 = arith.constant 0 : index
    %c0_2 = arith.constant 0 : index
    %1 = vector.load %arg2[%c0_1, %c0_2] : memref<128x128xbf16, #tpu.memory_space<vmem>>, vector<128x128xbf16>
    %cst = arith.constant dense<0.000000e+00> : vector<256x128xf32>
    %2 = tpu.matmul %0, %1, %cst {dimension_numbers = #tpu.dot_dimension_numbers<[1], [0], [0], [1], [0, 0, 1, 1], [], []>} : vector<256x128xbf16>, vector<128x128xbf16>, vector<256x128xf32> -> vector<256x128xf32>
    %c0_3 = arith.constant 0 : index
    %c0_4 = arith.constant 0 : index
    %3 = vector.load %arg3[%c0_3, %c0_4] : memref<1x128xf32, #tpu.memory_space<vmem>>, vector<1x128xf32>
    %4 = vector.broadcast %3 : vector<1x128xf32> to vector<256x128xf32>
    %5 = arith.addf %2, %4 : vector<256x128xf32>
    %cst_5 = arith.constant 0.000000e+00 : f32
    %6 = vector.broadcast %cst_5 : f32 to vector<256x128xf32>
    %7 = arith.maximumf %5, %6 : vector<256x128xf32>
    %8 = arith.truncf %7 : vector<256x128xf32> to vector<256x128xbf16>
    %c0_6 = arith.constant 0 : index
    %c0_7 = arith.constant 0 : index
    %9 = vector.load %arg4[%c0_6, %c0_7] : memref<256x128xbf16, #tpu.memory_space<vmem>>, vector<256x128xbf16>
    tpu.vector_store %arg4[%c0_6, %c0_7], %8 {strides = array<i32>} : memref<256x128xbf16, #tpu.memory_space<vmem>>, vector<256x128xbf16>,
    return
  }
  func.func @transform_0(%arg0: i32) -> (i32, i32) {
    %c0_i32 = arith.constant 0 : i32
    %c0_i32_0 = arith.constant 0 : i32
    return %arg0, %c0_i32 : i32, i32
  }
  func.func @transform_1(%arg0: i32) -> (i32, i32) {
    %c0_i32 = arith.constant 0 : i32
    %c0_i32_0 = arith.constant 0 : i32
    %c0_i32_1 = arith.constant 0 : i32
    return %c0_i32, %c0_i32_0 : i32, i32
  }
  func.func @transform_2(%arg0: i32) -> (i32, i32) {
    %c0_i32 = arith.constant 0 : i32
    %c0_i32_0 = arith.constant 0 : i32
    %c0_i32_1 = arith.constant 0 : i32
    return %c0_i32, %c0_i32_0 : i32, i32
  }
  func.func @transform_3(%arg0: i32) -> (i32, i32) {
    %c0_i32 = arith.constant 0 : i32
    %c0_i32_0 = arith.constant 0 : i32
    return %arg0, %c0_i32 : i32, i32
  }
}

module attributes {stable_mosaic.version = 11 : i64} {
  func.func @_conv3x3s1_kernel(%arg0: i32, %arg1: memref<1x18x18x128xbf16, #tpu.memory_space<vmem>>, %arg2: memref<9x128x128xbf16, #tpu.memory_space<vmem>>, %arg3: memref<1x128xf32, #tpu.memory_space<vmem>>, %arg4: memref<1x256x128xbf16, #tpu.memory_space<vmem>>, %arg5: memref<256x128xf32, #tpu.memory_space<vmem>>) attributes {dimension_semantics = [#tpu.dimension_semantics<parallel>], iteration_bounds = array<i64: 2>, scalar_prefetch = 0 : i64, scratch_operands = 1 : i64, tpu.core_type = #tpu.core_type<tc>, window_params = [{transform_indices = @transform_0, window_bounds = array<i64: 1, 18, 18, 128>}, {pipeline_mode = #tpu.pipeline_mode<synchronous>, transform_indices = @transform_1, window_bounds = array<i64: 9, 128, 128>}, {pipeline_mode = #tpu.pipeline_mode<synchronous>, transform_indices = @transform_2, window_bounds = array<i64: 1, 128>}, {transform_indices = @transform_3, window_bounds = array<i64: 1, 256, 128>}]} {
    %cst = arith.constant 0.000000e+00 : f32
    %0 = vector.broadcast %cst : f32 to vector<256x128xf32>
    %c0 = arith.constant 0 : index
    %c0_0 = arith.constant 0 : index
    %1 = vector.load %arg5[%c0, %c0_0] : memref<256x128xf32, #tpu.memory_space<vmem>>, vector<256x128xf32>
    tpu.vector_store %arg5[%c0, %c0_0], %0 {strides = array<i32>} : memref<256x128xf32, #tpu.memory_space<vmem>>, vector<256x128xf32>,
    %c0_1 = arith.constant 0 : index
    %c0_2 = arith.constant 0 : index
    %c0_3 = arith.constant 0 : index
    %c0_4 = arith.constant 0 : index
    %2 = vector.load %arg1[%c0_1, %c0_2, %c0_3, %c0_4] : memref<1x18x18x128xbf16, #tpu.memory_space<vmem>>, vector<1x16x16x128xbf16>
    %3 = vector.shape_cast %2 : vector<1x16x16x128xbf16> to vector<16x16x128xbf16>
    %4 = vector.shape_cast %3 : vector<16x16x128xbf16> to vector<256x128xbf16>
    %c0_5 = arith.constant 0 : index
    %c0_6 = arith.constant 0 : index
    %5 = vector.load %arg5[%c0_5, %c0_6] : memref<256x128xf32, #tpu.memory_space<vmem>>, vector<256x128xf32>
    %c0_7 = arith.constant 0 : index
    %c0_8 = arith.constant 0 : index
    %c0_9 = arith.constant 0 : index
    %6 = vector.load %arg2[%c0_7, %c0_8, %c0_9] : memref<9x128x128xbf16, #tpu.memory_space<vmem>>, vector<1x128x128xbf16>
    %7 = vector.shape_cast %6 : vector<1x128x128xbf16> to vector<128x128xbf16>
    %cst_10 = arith.constant dense<0.000000e+00> : vector<256x128xf32>
    %8 = tpu.matmul %4, %7, %cst_10 {dimension_numbers = #tpu.dot_dimension_numbers<[1], [0], [0], [1], [0, 0, 1, 1], [], []>} : vector<256x128xbf16>, vector<128x128xbf16>, vector<256x128xf32> -> vector<256x128xf32>
    %9 = arith.addf %5, %8 : vector<256x128xf32>
    %c0_11 = arith.constant 0 : index
    %c0_12 = arith.constant 0 : index
    %10 = vector.load %arg5[%c0_11, %c0_12] : memref<256x128xf32, #tpu.memory_space<vmem>>, vector<256x128xf32>
    tpu.vector_store %arg5[%c0_11, %c0_12], %9 {strides = array<i32>} : memref<256x128xf32, #tpu.memory_space<vmem>>, vector<256x128xf32>,
    %c0_13 = arith.constant 0 : index
    %c0_14 = arith.constant 0 : index
    %c1 = arith.constant 1 : index
    %c0_15 = arith.constant 0 : index
    %11 = vector.load %arg1[%c0_13, %c0_14, %c1, %c0_15] : memref<1x18x18x128xbf16, #tpu.memory_space<vmem>>, vector<1x16x16x128xbf16>
    %12 = vector.shape_cast %11 : vector<1x16x16x128xbf16> to vector<16x16x128xbf16>
    %13 = vector.shape_cast %12 : vector<16x16x128xbf16> to vector<256x128xbf16>
    %c0_16 = arith.constant 0 : index
    %c0_17 = arith.constant 0 : index
    %14 = vector.load %arg5[%c0_16, %c0_17] : memref<256x128xf32, #tpu.memory_space<vmem>>, vector<256x128xf32>
    %c1_18 = arith.constant 1 : index
    %c0_19 = arith.constant 0 : index
    %c0_20 = arith.constant 0 : index
    %15 = vector.load %arg2[%c1_18, %c0_19, %c0_20] : memref<9x128x128xbf16, #tpu.memory_space<vmem>>, vector<1x128x128xbf16>
    %16 = vector.shape_cast %15 : vector<1x128x128xbf16> to vector<128x128xbf16>
    %cst_21 = arith.constant dense<0.000000e+00> : vector<256x128xf32>
    %17 = tpu.matmul %13, %16, %cst_21 {dimension_numbers = #tpu.dot_dimension_numbers<[1], [0], [0], [1], [0, 0, 1, 1], [], []>} : vector<256x128xbf16>, vector<128x128xbf16>, vector<256x128xf32> -> vector<256x128xf32>
    %18 = arith.addf %14, %17 : vector<256x128xf32>
    %c0_22 = arith.constant 0 : index
    %c0_23 = arith.constant 0 : index
    %19 = vector.load %arg5[%c0_22, %c0_23] : memref<256x128xf32, #tpu.memory_space<vmem>>, vector<256x128xf32>
    tpu.vector_store %arg5[%c0_22, %c0_23], %18 {strides = array<i32>} : memref<256x128xf32, #tpu.memory_space<vmem>>, vector<256x128xf32>,
    %c0_24 = arith.constant 0 : index
    %c0_25 = arith.constant 0 : index
    %c2 = arith.constant 2 : index
    %c0_26 = arith.constant 0 : index
    %20 = vector.load %arg1[%c0_24, %c0_25, %c2, %c0_26] : memref<1x18x18x128xbf16, #tpu.memory_space<vmem>>, vector<1x16x16x128xbf16>
    %21 = vector.shape_cast %20 : vector<1x16x16x128xbf16> to vector<16x16x128xbf16>
    %22 = vector.shape_cast %21 : vector<16x16x128xbf16> to vector<256x128xbf16>
    %c0_27 = arith.constant 0 : index
    %c0_28 = arith.constant 0 : index
    %23 = vector.load %arg5[%c0_27, %c0_28] : memref<256x128xf32, #tpu.memory_space<vmem>>, vector<256x128xf32>
    %c2_29 = arith.constant 2 : index
    %c0_30 = arith.constant 0 : index
    %c0_31 = arith.constant 0 : index
    %24 = vector.load %arg2[%c2_29, %c0_30, %c0_31] : memref<9x128x128xbf16, #tpu.memory_space<vmem>>, vector<1x128x128xbf16>
    %25 = vector.shape_cast %24 : vector<1x128x128xbf16> to vector<128x128xbf16>
    %cst_32 = arith.constant dense<0.000000e+00> : vector<256x128xf32>
    %26 = tpu.matmul %22, %25, %cst_32 {dimension_numbers = #tpu.dot_dimension_numbers<[1], [0], [0], [1], [0, 0, 1, 1], [], []>} : vector<256x128xbf16>, vector<128x128xbf16>, vector<256x128xf32> -> vector<256x128xf32>
    %27 = arith.addf %23, %26 : vector<256x128xf32>
    %c0_33 = arith.constant 0 : index
    %c0_34 = arith.constant 0 : index
    %28 = vector.load %arg5[%c0_33, %c0_34] : memref<256x128xf32, #tpu.memory_space<vmem>>, vector<256x128xf32>
    tpu.vector_store %arg5[%c0_33, %c0_34], %27 {strides = array<i32>} : memref<256x128xf32, #tpu.memory_space<vmem>>, vector<256x128xf32>,
    %c0_35 = arith.constant 0 : index
    %c1_36 = arith.constant 1 : index
    %c0_37 = arith.constant 0 : index
    %c0_38 = arith.constant 0 : index
    %29 = vector.load %arg1[%c0_35, %c1_36, %c0_37, %c0_38] : memref<1x18x18x128xbf16, #tpu.memory_space<vmem>>, vector<1x16x16x128xbf16>
    %30 = vector.shape_cast %29 : vector<1x16x16x128xbf16> to vector<16x16x128xbf16>
    %31 = vector.shape_cast %30 : vector<16x16x128xbf16> to vector<256x128xbf16>
    %c0_39 = arith.constant 0 : index
    %c0_40 = arith.constant 0 : index
    %32 = vector.load %arg5[%c0_39, %c0_40] : memref<256x128xf32, #tpu.memory_space<vmem>>, vector<256x128xf32>
    %c3 = arith.constant 3 : index
    %c0_41 = arith.constant 0 : index
    %c0_42 = arith.constant 0 : index
    %33 = vector.load %arg2[%c3, %c0_41, %c0_42] : memref<9x128x128xbf16, #tpu.memory_space<vmem>>, vector<1x128x128xbf16>
    %34 = vector.shape_cast %33 : vector<1x128x128xbf16> to vector<128x128xbf16>
    %cst_43 = arith.constant dense<0.000000e+00> : vector<256x128xf32>
    %35 = tpu.matmul %31, %34, %cst_43 {dimension_numbers = #tpu.dot_dimension_numbers<[1], [0], [0], [1], [0, 0, 1, 1], [], []>} : vector<256x128xbf16>, vector<128x128xbf16>, vector<256x128xf32> -> vector<256x128xf32>
    %36 = arith.addf %32, %35 : vector<256x128xf32>
    %c0_44 = arith.constant 0 : index
    %c0_45 = arith.constant 0 : index
    %37 = vector.load %arg5[%c0_44, %c0_45] : memref<256x128xf32, #tpu.memory_space<vmem>>, vector<256x128xf32>
    tpu.vector_store %arg5[%c0_44, %c0_45], %36 {strides = array<i32>} : memref<256x128xf32, #tpu.memory_space<vmem>>, vector<256x128xf32>,
    %c0_46 = arith.constant 0 : index
    %c1_47 = arith.constant 1 : index
    %c1_48 = arith.constant 1 : index
    %c0_49 = arith.constant 0 : index
    %38 = vector.load %arg1[%c0_46, %c1_47, %c1_48, %c0_49] : memref<1x18x18x128xbf16, #tpu.memory_space<vmem>>, vector<1x16x16x128xbf16>
    %39 = vector.shape_cast %38 : vector<1x16x16x128xbf16> to vector<16x16x128xbf16>
    %40 = vector.shape_cast %39 : vector<16x16x128xbf16> to vector<256x128xbf16>
    %c0_50 = arith.constant 0 : index
    %c0_51 = arith.constant 0 : index
    %41 = vector.load %arg5[%c0_50, %c0_51] : memref<256x128xf32, #tpu.memory_space<vmem>>, vector<256x128xf32>
    %c4 = arith.constant 4 : index
    %c0_52 = arith.constant 0 : index
    %c0_53 = arith.constant 0 : index
    %42 = vector.load %arg2[%c4, %c0_52, %c0_53] : memref<9x128x128xbf16, #tpu.memory_space<vmem>>, vector<1x128x128xbf16>
    %43 = vector.shape_cast %42 : vector<1x128x128xbf16> to vector<128x128xbf16>
    %cst_54 = arith.constant dense<0.000000e+00> : vector<256x128xf32>
    %44 = tpu.matmul %40, %43, %cst_54 {dimension_numbers = #tpu.dot_dimension_numbers<[1], [0], [0], [1], [0, 0, 1, 1], [], []>} : vector<256x128xbf16>, vector<128x128xbf16>, vector<256x128xf32> -> vector<256x128xf32>
    %45 = arith.addf %41, %44 : vector<256x128xf32>
    %c0_55 = arith.constant 0 : index
    %c0_56 = arith.constant 0 : index
    %46 = vector.load %arg5[%c0_55, %c0_56] : memref<256x128xf32, #tpu.memory_space<vmem>>, vector<256x128xf32>
    tpu.vector_store %arg5[%c0_55, %c0_56], %45 {strides = array<i32>} : memref<256x128xf32, #tpu.memory_space<vmem>>, vector<256x128xf32>,
    %c0_57 = arith.constant 0 : index
    %c1_58 = arith.constant 1 : index
    %c2_59 = arith.constant 2 : index
    %c0_60 = arith.constant 0 : index
    %47 = vector.load %arg1[%c0_57, %c1_58, %c2_59, %c0_60] : memref<1x18x18x128xbf16, #tpu.memory_space<vmem>>, vector<1x16x16x128xbf16>
    %48 = vector.shape_cast %47 : vector<1x16x16x128xbf16> to vector<16x16x128xbf16>
    %49 = vector.shape_cast %48 : vector<16x16x128xbf16> to vector<256x128xbf16>
    %c0_61 = arith.constant 0 : index
    %c0_62 = arith.constant 0 : index
    %50 = vector.load %arg5[%c0_61, %c0_62] : memref<256x128xf32, #tpu.memory_space<vmem>>, vector<256x128xf32>
    %c5 = arith.constant 5 : index
    %c0_63 = arith.constant 0 : index
    %c0_64 = arith.constant 0 : index
    %51 = vector.load %arg2[%c5, %c0_63, %c0_64] : memref<9x128x128xbf16, #tpu.memory_space<vmem>>, vector<1x128x128xbf16>
    %52 = vector.shape_cast %51 : vector<1x128x128xbf16> to vector<128x128xbf16>
    %cst_65 = arith.constant dense<0.000000e+00> : vector<256x128xf32>
    %53 = tpu.matmul %49, %52, %cst_65 {dimension_numbers = #tpu.dot_dimension_numbers<[1], [0], [0], [1], [0, 0, 1, 1], [], []>} : vector<256x128xbf16>, vector<128x128xbf16>, vector<256x128xf32> -> vector<256x128xf32>
    %54 = arith.addf %50, %53 : vector<256x128xf32>
    %c0_66 = arith.constant 0 : index
    %c0_67 = arith.constant 0 : index
    %55 = vector.load %arg5[%c0_66, %c0_67] : memref<256x128xf32, #tpu.memory_space<vmem>>, vector<256x128xf32>
    tpu.vector_store %arg5[%c0_66, %c0_67], %54 {strides = array<i32>} : memref<256x128xf32, #tpu.memory_space<vmem>>, vector<256x128xf32>,
    %c0_68 = arith.constant 0 : index
    %c2_69 = arith.constant 2 : index
    %c0_70 = arith.constant 0 : index
    %c0_71 = arith.constant 0 : index
    %56 = vector.load %arg1[%c0_68, %c2_69, %c0_70, %c0_71] : memref<1x18x18x128xbf16, #tpu.memory_space<vmem>>, vector<1x16x16x128xbf16>
    %57 = vector.shape_cast %56 : vector<1x16x16x128xbf16> to vector<16x16x128xbf16>
    %58 = vector.shape_cast %57 : vector<16x16x128xbf16> to vector<256x128xbf16>
    %c0_72 = arith.constant 0 : index
    %c0_73 = arith.constant 0 : index
    %59 = vector.load %arg5[%c0_72, %c0_73] : memref<256x128xf32, #tpu.memory_space<vmem>>, vector<256x128xf32>
    %c6 = arith.constant 6 : index
    %c0_74 = arith.constant 0 : index
    %c0_75 = arith.constant 0 : index
    %60 = vector.load %arg2[%c6, %c0_74, %c0_75] : memref<9x128x128xbf16, #tpu.memory_space<vmem>>, vector<1x128x128xbf16>
    %61 = vector.shape_cast %60 : vector<1x128x128xbf16> to vector<128x128xbf16>
    %cst_76 = arith.constant dense<0.000000e+00> : vector<256x128xf32>
    %62 = tpu.matmul %58, %61, %cst_76 {dimension_numbers = #tpu.dot_dimension_numbers<[1], [0], [0], [1], [0, 0, 1, 1], [], []>} : vector<256x128xbf16>, vector<128x128xbf16>, vector<256x128xf32> -> vector<256x128xf32>
    %63 = arith.addf %59, %62 : vector<256x128xf32>
    %c0_77 = arith.constant 0 : index
    %c0_78 = arith.constant 0 : index
    %64 = vector.load %arg5[%c0_77, %c0_78] : memref<256x128xf32, #tpu.memory_space<vmem>>, vector<256x128xf32>
    tpu.vector_store %arg5[%c0_77, %c0_78], %63 {strides = array<i32>} : memref<256x128xf32, #tpu.memory_space<vmem>>, vector<256x128xf32>,
    %c0_79 = arith.constant 0 : index
    %c2_80 = arith.constant 2 : index
    %c1_81 = arith.constant 1 : index
    %c0_82 = arith.constant 0 : index
    %65 = vector.load %arg1[%c0_79, %c2_80, %c1_81, %c0_82] : memref<1x18x18x128xbf16, #tpu.memory_space<vmem>>, vector<1x16x16x128xbf16>
    %66 = vector.shape_cast %65 : vector<1x16x16x128xbf16> to vector<16x16x128xbf16>
    %67 = vector.shape_cast %66 : vector<16x16x128xbf16> to vector<256x128xbf16>
    %c0_83 = arith.constant 0 : index
    %c0_84 = arith.constant 0 : index
    %68 = vector.load %arg5[%c0_83, %c0_84] : memref<256x128xf32, #tpu.memory_space<vmem>>, vector<256x128xf32>
    %c7 = arith.constant 7 : index
    %c0_85 = arith.constant 0 : index
    %c0_86 = arith.constant 0 : index
    %69 = vector.load %arg2[%c7, %c0_85, %c0_86] : memref<9x128x128xbf16, #tpu.memory_space<vmem>>, vector<1x128x128xbf16>
    %70 = vector.shape_cast %69 : vector<1x128x128xbf16> to vector<128x128xbf16>
    %cst_87 = arith.constant dense<0.000000e+00> : vector<256x128xf32>
    %71 = tpu.matmul %67, %70, %cst_87 {dimension_numbers = #tpu.dot_dimension_numbers<[1], [0], [0], [1], [0, 0, 1, 1], [], []>} : vector<256x128xbf16>, vector<128x128xbf16>, vector<256x128xf32> -> vector<256x128xf32>
    %72 = arith.addf %68, %71 : vector<256x128xf32>
    %c0_88 = arith.constant 0 : index
    %c0_89 = arith.constant 0 : index
    %73 = vector.load %arg5[%c0_88, %c0_89] : memref<256x128xf32, #tpu.memory_space<vmem>>, vector<256x128xf32>
    tpu.vector_store %arg5[%c0_88, %c0_89], %72 {strides = array<i32>} : memref<256x128xf32, #tpu.memory_space<vmem>>, vector<256x128xf32>,
    %c0_90 = arith.constant 0 : index
    %c2_91 = arith.constant 2 : index
    %c2_92 = arith.constant 2 : index
    %c0_93 = arith.constant 0 : index
    %74 = vector.load %arg1[%c0_90, %c2_91, %c2_92, %c0_93] : memref<1x18x18x128xbf16, #tpu.memory_space<vmem>>, vector<1x16x16x128xbf16>
    %75 = vector.shape_cast %74 : vector<1x16x16x128xbf16> to vector<16x16x128xbf16>
    %76 = vector.shape_cast %75 : vector<16x16x128xbf16> to vector<256x128xbf16>
    %c0_94 = arith.constant 0 : index
    %c0_95 = arith.constant 0 : index
    %77 = vector.load %arg5[%c0_94, %c0_95] : memref<256x128xf32, #tpu.memory_space<vmem>>, vector<256x128xf32>
    %c8 = arith.constant 8 : index
    %c0_96 = arith.constant 0 : index
    %c0_97 = arith.constant 0 : index
    %78 = vector.load %arg2[%c8, %c0_96, %c0_97] : memref<9x128x128xbf16, #tpu.memory_space<vmem>>, vector<1x128x128xbf16>
    %79 = vector.shape_cast %78 : vector<1x128x128xbf16> to vector<128x128xbf16>
    %cst_98 = arith.constant dense<0.000000e+00> : vector<256x128xf32>
    %80 = tpu.matmul %76, %79, %cst_98 {dimension_numbers = #tpu.dot_dimension_numbers<[1], [0], [0], [1], [0, 0, 1, 1], [], []>} : vector<256x128xbf16>, vector<128x128xbf16>, vector<256x128xf32> -> vector<256x128xf32>
    %81 = arith.addf %77, %80 : vector<256x128xf32>
    %c0_99 = arith.constant 0 : index
    %c0_100 = arith.constant 0 : index
    %82 = vector.load %arg5[%c0_99, %c0_100] : memref<256x128xf32, #tpu.memory_space<vmem>>, vector<256x128xf32>
    tpu.vector_store %arg5[%c0_99, %c0_100], %81 {strides = array<i32>} : memref<256x128xf32, #tpu.memory_space<vmem>>, vector<256x128xf32>,
    %c0_101 = arith.constant 0 : index
    %c0_102 = arith.constant 0 : index
    %83 = vector.load %arg5[%c0_101, %c0_102] : memref<256x128xf32, #tpu.memory_space<vmem>>, vector<256x128xf32>
    %c0_103 = arith.constant 0 : index
    %c0_104 = arith.constant 0 : index
    %84 = vector.load %arg3[%c0_103, %c0_104] : memref<1x128xf32, #tpu.memory_space<vmem>>, vector<1x128xf32>
    %85 = vector.broadcast %84 : vector<1x128xf32> to vector<256x128xf32>
    %86 = arith.addf %83, %85 : vector<256x128xf32>
    %cst_105 = arith.constant 0.000000e+00 : f32
    %87 = vector.broadcast %cst_105 : f32 to vector<256x128xf32>
    %88 = arith.maximumf %86, %87 : vector<256x128xf32>
    %89 = vector.shape_cast %88 : vector<256x128xf32> to vector<1x256x128xf32>
    %90 = arith.truncf %89 : vector<1x256x128xf32> to vector<1x256x128xbf16>
    %c0_106 = arith.constant 0 : index
    %c0_107 = arith.constant 0 : index
    %c0_108 = arith.constant 0 : index
    %91 = vector.load %arg4[%c0_106, %c0_107, %c0_108] : memref<1x256x128xbf16, #tpu.memory_space<vmem>>, vector<1x256x128xbf16>
    tpu.vector_store %arg4[%c0_106, %c0_107, %c0_108], %90 {strides = array<i32>} : memref<1x256x128xbf16, #tpu.memory_space<vmem>>, vector<1x256x128xbf16>,
    return
  }
  func.func @transform_0(%arg0: i32) -> (i32, i32, i32, i32) {
    %c0_i32 = arith.constant 0 : i32
    %c0_i32_0 = arith.constant 0 : i32
    %c0_i32_1 = arith.constant 0 : i32
    %c0_i32_2 = arith.constant 0 : i32
    return %arg0, %c0_i32, %c0_i32_0, %c0_i32_1 : i32, i32, i32, i32
  }
  func.func @transform_1(%arg0: i32) -> (i32, i32, i32) {
    %c0_i32 = arith.constant 0 : i32
    %c0_i32_0 = arith.constant 0 : i32
    %c0_i32_1 = arith.constant 0 : i32
    %c0_i32_2 = arith.constant 0 : i32
    return %c0_i32, %c0_i32_0, %c0_i32_1 : i32, i32, i32
  }
  func.func @transform_2(%arg0: i32) -> (i32, i32) {
    %c0_i32 = arith.constant 0 : i32
    %c0_i32_0 = arith.constant 0 : i32
    %c0_i32_1 = arith.constant 0 : i32
    return %c0_i32, %c0_i32_0 : i32, i32
  }
  func.func @transform_3(%arg0: i32) -> (i32, i32, i32) {
    %c0_i32 = arith.constant 0 : i32
    %c0_i32_0 = arith.constant 0 : i32
    %c0_i32_1 = arith.constant 0 : i32
    return %arg0, %c0_i32, %c0_i32_0 : i32, i32, i32
  }
}

module attributes {stable_mosaic.version = 11 : i64} {
  func.func @_matmul_bias_relu_kernel(%arg0: i32, %arg1: memref<64x1152xbf16, #tpu.memory_space<vmem>>, %arg2: memref<1152x128xbf16, #tpu.memory_space<vmem>>, %arg3: memref<1x128xf32, #tpu.memory_space<vmem>>, %arg4: memref<64x128xf32, #tpu.memory_space<vmem>>) attributes {dimension_semantics = [#tpu.dimension_semantics<parallel>], iteration_bounds = array<i64: 2>, scalar_prefetch = 0 : i64, scratch_operands = 0 : i64, tpu.core_type = #tpu.core_type<tc>, window_params = [{transform_indices = @transform_0, window_bounds = array<i64: 64, 1152>}, {pipeline_mode = #tpu.pipeline_mode<synchronous>, transform_indices = @transform_1, window_bounds = array<i64: 1152, 128>}, {pipeline_mode = #tpu.pipeline_mode<synchronous>, transform_indices = @transform_2, window_bounds = array<i64: 1, 128>}, {transform_indices = @transform_3, window_bounds = array<i64: 64, 128>}]} {
    %c0 = arith.constant 0 : index
    %c0_0 = arith.constant 0 : index
    %0 = vector.load %arg1[%c0, %c0_0] : memref<64x1152xbf16, #tpu.memory_space<vmem>>, vector<64x1152xbf16>
    %c0_1 = arith.constant 0 : index
    %c0_2 = arith.constant 0 : index
    %1 = vector.load %arg2[%c0_1, %c0_2] : memref<1152x128xbf16, #tpu.memory_space<vmem>>, vector<1152x128xbf16>
    %cst = arith.constant dense<0.000000e+00> : vector<64x128xf32>
    %2 = tpu.matmul %0, %1, %cst {dimension_numbers = #tpu.dot_dimension_numbers<[1], [0], [0], [1], [0, 0, 1, 1], [], []>} : vector<64x1152xbf16>, vector<1152x128xbf16>, vector<64x128xf32> -> vector<64x128xf32>
    %c0_3 = arith.constant 0 : index
    %c0_4 = arith.constant 0 : index
    %3 = vector.load %arg3[%c0_3, %c0_4] : memref<1x128xf32, #tpu.memory_space<vmem>>, vector<1x128xf32>
    %4 = vector.broadcast %3 : vector<1x128xf32> to vector<64x128xf32>
    %5 = arith.addf %2, %4 : vector<64x128xf32>
    %cst_5 = arith.constant 0.000000e+00 : f32
    %6 = vector.broadcast %cst_5 : f32 to vector<64x128xf32>
    %7 = arith.maximumf %5, %6 : vector<64x128xf32>
    %c0_6 = arith.constant 0 : index
    %c0_7 = arith.constant 0 : index
    %8 = vector.load %arg4[%c0_6, %c0_7] : memref<64x128xf32, #tpu.memory_space<vmem>>, vector<64x128xf32>
    tpu.vector_store %arg4[%c0_6, %c0_7], %7 {strides = array<i32>} : memref<64x128xf32, #tpu.memory_space<vmem>>, vector<64x128xf32>,
    return
  }
  func.func @transform_0(%arg0: i32) -> (i32, i32) {
    %c0_i32 = arith.constant 0 : i32
    %c0_i32_0 = arith.constant 0 : i32
    return %arg0, %c0_i32 : i32, i32
  }
  func.func @transform_1(%arg0: i32) -> (i32, i32) {
    %c0_i32 = arith.constant 0 : i32
    %c0_i32_0 = arith.constant 0 : i32
    %c0_i32_1 = arith.constant 0 : i32
    return %c0_i32, %c0_i32_0 : i32, i32
  }
  func.func @transform_2(%arg0: i32) -> (i32, i32) {
    %c0_i32 = arith.constant 0 : i32
    %c0_i32_0 = arith.constant 0 : i32
    %c0_i32_1 = arith.constant 0 : i32
    return %c0_i32, %c0_i32_0 : i32, i32
  }
  func.func @transform_3(%arg0: i32) -> (i32, i32) {
    %c0_i32 = arith.constant 0 : i32
    %c0_i32_0 = arith.constant 0 : i32
    return %arg0, %c0_i32 : i32, i32
  }
}

module attributes {stable_mosaic.version = 11 : i64} {
  func.func @_matmul_bias_relu_kernel(%arg0: i32, %arg1: memref<64x128xbf16, #tpu.memory_space<vmem>>, %arg2: memref<128x384xbf16, #tpu.memory_space<vmem>>, %arg3: memref<1x384xf32, #tpu.memory_space<vmem>>, %arg4: memref<64x384xf32, #tpu.memory_space<vmem>>) attributes {dimension_semantics = [#tpu.dimension_semantics<parallel>], iteration_bounds = array<i64: 2>, scalar_prefetch = 0 : i64, scratch_operands = 0 : i64, tpu.core_type = #tpu.core_type<tc>, window_params = [{transform_indices = @transform_0, window_bounds = array<i64: 64, 128>}, {pipeline_mode = #tpu.pipeline_mode<synchronous>, transform_indices = @transform_1, window_bounds = array<i64: 128, 384>}, {pipeline_mode = #tpu.pipeline_mode<synchronous>, transform_indices = @transform_2, window_bounds = array<i64: 1, 384>}, {transform_indices = @transform_3, window_bounds = array<i64: 64, 384>}]} {
    %c0 = arith.constant 0 : index
    %c0_0 = arith.constant 0 : index
    %0 = vector.load %arg1[%c0, %c0_0] : memref<64x128xbf16, #tpu.memory_space<vmem>>, vector<64x128xbf16>
    %c0_1 = arith.constant 0 : index
    %c0_2 = arith.constant 0 : index
    %1 = vector.load %arg2[%c0_1, %c0_2] : memref<128x384xbf16, #tpu.memory_space<vmem>>, vector<128x384xbf16>
    %cst = arith.constant dense<0.000000e+00> : vector<64x384xf32>
    %2 = tpu.matmul %0, %1, %cst {dimension_numbers = #tpu.dot_dimension_numbers<[1], [0], [0], [1], [0, 0, 1, 1], [], []>} : vector<64x128xbf16>, vector<128x384xbf16>, vector<64x384xf32> -> vector<64x384xf32>
    %c0_3 = arith.constant 0 : index
    %c0_4 = arith.constant 0 : index
    %3 = vector.load %arg3[%c0_3, %c0_4] : memref<1x384xf32, #tpu.memory_space<vmem>>, vector<1x384xf32>
    %4 = vector.broadcast %3 : vector<1x384xf32> to vector<64x384xf32>
    %5 = arith.addf %2, %4 : vector<64x384xf32>
    %cst_5 = arith.constant 0.000000e+00 : f32
    %6 = vector.broadcast %cst_5 : f32 to vector<64x384xf32>
    %7 = arith.maximumf %5, %6 : vector<64x384xf32>
    %c0_6 = arith.constant 0 : index
    %c0_7 = arith.constant 0 : index
    %8 = vector.load %arg4[%c0_6, %c0_7] : memref<64x384xf32, #tpu.memory_space<vmem>>, vector<64x384xf32>
    tpu.vector_store %arg4[%c0_6, %c0_7], %7 {strides = array<i32>} : memref<64x384xf32, #tpu.memory_space<vmem>>, vector<64x384xf32>,
    return
  }
  func.func @transform_0(%arg0: i32) -> (i32, i32) {
    %c0_i32 = arith.constant 0 : i32
    %c0_i32_0 = arith.constant 0 : i32
    return %arg0, %c0_i32 : i32, i32
  }
  func.func @transform_1(%arg0: i32) -> (i32, i32) {
    %c0_i32 = arith.constant 0 : i32
    %c0_i32_0 = arith.constant 0 : i32
    %c0_i32_1 = arith.constant 0 : i32
    return %c0_i32, %c0_i32_0 : i32, i32
  }
  func.func @transform_2(%arg0: i32) -> (i32, i32) {
    %c0_i32 = arith.constant 0 : i32
    %c0_i32_0 = arith.constant 0 : i32
    %c0_i32_1 = arith.constant 0 : i32
    return %c0_i32, %c0_i32_0 : i32, i32
  }
  func.func @transform_3(%arg0: i32) -> (i32, i32) {
    %c0_i32 = arith.constant 0 : i32
    %c0_i32_0 = arith.constant 0 : i32
    return %arg0, %c0_i32 : i32, i32
  }
}

module attributes {stable_mosaic.version = 11 : i64} {
  func.func @_maxpool3x3s2_kernel(%arg0: i32, %arg1: memref<8x16x4xf32, #tpu.memory_space<vmem>>, %arg2: memref<8x16x4xf32, #tpu.memory_space<vmem>>, %arg3: memref<8x16x4xf32, #tpu.memory_space<vmem>>, %arg4: memref<8x7x4xf32, #tpu.memory_space<vmem>>) attributes {dimension_semantics = [#tpu.dimension_semantics<parallel>], iteration_bounds = array<i64: 2>, scalar_prefetch = 0 : i64, scratch_operands = 0 : i64, tpu.core_type = #tpu.core_type<tc>, window_params = [{transform_indices = @transform_0, window_bounds = array<i64: 8, 16, 4>}, {transform_indices = @transform_1, window_bounds = array<i64: 8, 16, 4>}, {transform_indices = @transform_2, window_bounds = array<i64: 8, 16, 4>}, {transform_indices = @transform_3, window_bounds = array<i64: 8, 7, 4>}]} {
    %c0 = arith.constant 0 : index
    %c0_0 = arith.constant 0 : index
    %c0_1 = arith.constant 0 : index
    %0 = tpu.strided_load %arg1[%c0, %c0_0, %c0_1] {strides = array<i32: 1, 2, 1>} : memref<8x16x4xf32, #tpu.memory_space<vmem>>, vector<8x7x4xf32>
    %c0_2 = arith.constant 0 : index
    %c1 = arith.constant 1 : index
    %c0_3 = arith.constant 0 : index
    %1 = tpu.strided_load %arg1[%c0_2, %c1, %c0_3] {strides = array<i32: 1, 2, 1>} : memref<8x16x4xf32, #tpu.memory_space<vmem>>, vector<8x7x4xf32>
    %2 = arith.maximumf %0, %1 : vector<8x7x4xf32>
    %c0_4 = arith.constant 0 : index
    %c2 = arith.constant 2 : index
    %c0_5 = arith.constant 0 : index
    %3 = tpu.strided_load %arg1[%c0_4, %c2, %c0_5] {strides = array<i32: 1, 2, 1>} : memref<8x16x4xf32, #tpu.memory_space<vmem>>, vector<8x7x4xf32>
    %4 = arith.maximumf %2, %3 : vector<8x7x4xf32>
    %c0_6 = arith.constant 0 : index
    %c0_7 = arith.constant 0 : index
    %c0_8 = arith.constant 0 : index
    %5 = tpu.strided_load %arg2[%c0_6, %c0_7, %c0_8] {strides = array<i32: 1, 2, 1>} : memref<8x16x4xf32, #tpu.memory_space<vmem>>, vector<8x7x4xf32>
    %c0_9 = arith.constant 0 : index
    %c1_10 = arith.constant 1 : index
    %c0_11 = arith.constant 0 : index
    %6 = tpu.strided_load %arg2[%c0_9, %c1_10, %c0_11] {strides = array<i32: 1, 2, 1>} : memref<8x16x4xf32, #tpu.memory_space<vmem>>, vector<8x7x4xf32>
    %7 = arith.maximumf %5, %6 : vector<8x7x4xf32>
    %c0_12 = arith.constant 0 : index
    %c2_13 = arith.constant 2 : index
    %c0_14 = arith.constant 0 : index
    %8 = tpu.strided_load %arg2[%c0_12, %c2_13, %c0_14] {strides = array<i32: 1, 2, 1>} : memref<8x16x4xf32, #tpu.memory_space<vmem>>, vector<8x7x4xf32>
    %9 = arith.maximumf %7, %8 : vector<8x7x4xf32>
    %10 = arith.maximumf %4, %9 : vector<8x7x4xf32>
    %c0_15 = arith.constant 0 : index
    %c0_16 = arith.constant 0 : index
    %c0_17 = arith.constant 0 : index
    %11 = tpu.strided_load %arg3[%c0_15, %c0_16, %c0_17] {strides = array<i32: 1, 2, 1>} : memref<8x16x4xf32, #tpu.memory_space<vmem>>, vector<8x7x4xf32>
    %c0_18 = arith.constant 0 : index
    %c1_19 = arith.constant 1 : index
    %c0_20 = arith.constant 0 : index
    %12 = tpu.strided_load %arg3[%c0_18, %c1_19, %c0_20] {strides = array<i32: 1, 2, 1>} : memref<8x16x4xf32, #tpu.memory_space<vmem>>, vector<8x7x4xf32>
    %13 = arith.maximumf %11, %12 : vector<8x7x4xf32>
    %c0_21 = arith.constant 0 : index
    %c2_22 = arith.constant 2 : index
    %c0_23 = arith.constant 0 : index
    %14 = tpu.strided_load %arg3[%c0_21, %c2_22, %c0_23] {strides = array<i32: 1, 2, 1>} : memref<8x16x4xf32, #tpu.memory_space<vmem>>, vector<8x7x4xf32>
    %15 = arith.maximumf %13, %14 : vector<8x7x4xf32>
    %16 = arith.maximumf %10, %15 : vector<8x7x4xf32>
    %c0_24 = arith.constant 0 : index
    %c0_25 = arith.constant 0 : index
    %c0_26 = arith.constant 0 : index
    %17 = vector.load %arg4[%c0_24, %c0_25, %c0_26] : memref<8x7x4xf32, #tpu.memory_space<vmem>>, vector<8x7x4xf32>
    tpu.vector_store %arg4[%c0_24, %c0_25, %c0_26], %16 {strides = array<i32>} : memref<8x7x4xf32, #tpu.memory_space<vmem>>, vector<8x7x4xf32>,
    return
  }
  func.func @transform_0(%arg0: i32) -> (i32, i32, i32) {
    %c0_i32 = arith.constant 0 : i32
    %c0_i32_0 = arith.constant 0 : i32
    %c0_i32_1 = arith.constant 0 : i32
    return %arg0, %c0_i32, %c0_i32_0 : i32, i32, i32
  }
  func.func @transform_1(%arg0: i32) -> (i32, i32, i32) {
    %c0_i32 = arith.constant 0 : i32
    %c0_i32_0 = arith.constant 0 : i32
    %c0_i32_1 = arith.constant 0 : i32
    return %arg0, %c0_i32, %c0_i32_0 : i32, i32, i32
  }
  func.func @transform_2(%arg0: i32) -> (i32, i32, i32) {
    %c0_i32 = arith.constant 0 : i32
    %c0_i32_0 = arith.constant 0 : i32
    %c0_i32_1 = arith.constant 0 : i32
    return %arg0, %c0_i32, %c0_i32_0 : i32, i32, i32
  }
  func.func @transform_3(%arg0: i32) -> (i32, i32, i32) {
    %c0_i32 = arith.constant 0 : i32
    %c0_i32_0 = arith.constant 0 : i32
    %c0_i32_1 = arith.constant 0 : i32
    return %arg0, %c0_i32, %c0_i32_0 : i32, i32, i32
  }
}

</mosaic_0001>

<llo_original>
// kernel: inception_b_forward.6
$region0: #{inception_b_forward.6}
  #allocation0 [shape = 'u32[]', space=smem, size = 0x4, offset = 0x4, fixed_abs, tag = 'smem constant byte address 0x4 - core index']
  #allocation1 [shape = 'u32[72,128]{1,0:T(1,128)}', space=vmem, size = 0x9000, scoped, tag = 'internal scratch']
  %s0 = inlined_call_operand.vmem [shape: bf16[512,128], index: 0, kind: input, shape index: {}]
  %s1 = inlined_call_operand.vmem [shape: bf16[128,128], index: 1, kind: input, shape index: {}]
  %s2 = inlined_call_operand.vmem [shape: f32[1,128], index: 2, kind: input, shape index: {}]
  %s3 = inlined_call_operand.vmem [shape: bf16[512,128], index: 3, kind: output, shape index: {}]
  %s4 = sld [smem:[#allocation0]]
  $region45: #{inception_b_forward.6} parent=0
    _
  %s6 = ssub.s32 1, %s4
  %s7 = scalar_select 0, %s6, %s4
  loop: start=0, step=1, limit=4
  $region2: #{inception_b_forward.6} parent=0 // loop_pre_header
    _
  $region3: #{inception_b_forward.6} parent=0 // loop_header
    %s9 = sphi 0, %s13
    %p10 = scmp.ge.s32.totalorder %s9, 4
    %s19 = sphi 0, %s21
    %s22 = sphi 0, %s19
    %s23 = sphi 0, %s22
    %s39 = sphi 0, %s23
    %s43 = sphi 0, %s43
    %s45 = sphi 0, %s43
    %s46 = sphi 0, %s45
    %s60 = sphi 0, %s46
    %s64 = sphi 0, %s64
    %s66 = sphi 0, %s64
    %s67 = sphi 0, %s66
    %s81 = sphi 0, %s67
    %s87 = sphi 0, %s89
    %s90 = sphi 0, %s87
    %s91 = sphi 0, %s90
    %s107 = sphi 0, %s91
  $region4: #{inception_b_forward.6} parent=0 // loop_header_branch
    %12 = sbr.rel (%p10) target = $region8
  $region5: #{inception_b_forward.6} parent=0 // loop_body
    %s14 = ssub.s32 %s9, 1
    %s15 = ssub.s32 %s9, 2
    %s16 = sadd.s32 %s9, 1
    %s17 = ssub.s32 %s9, %s16
    %p18 = scmp.eq.s32.totalorder %s17, 0
    %s20 = sadd.s32 %s19, 1
    %s21 = scalar_select %p18, %s19, %s20
    %p24 = pneg %p18
    %p25 = scmp.eq.s32.totalorder %s9, 1
    %p26 = por %p24, %p25
    %p27 = scmp.ne.s32.totalorder %s19, %s22
    %p28 = scmp.eq.s32.totalorder %s9, 0
    %p29 = por %p27, %p28
    %p30 = scmp.ne.s32.totalorder %s19, %s22
    %p31 = scmp.eq.s32.totalorder %s14, 1
    %p32 = por %p30, %p31
    %p33 = scmp.ne.s32.totalorder %s22, %s23
    %p34 = scmp.eq.s32.totalorder %s14, 0
    %p35 = por %p33, %p34
    %p36 = scmp.ne.s32.totalorder %s22, %s23
    %p37 = scmp.eq.s32.totalorder %s15, 1
    %p38 = por %p36, %p37
    %p40 = scmp.ne.s32.totalorder %s23, %s39
    %p41 = scmp.eq.s32.totalorder %s15, 0
    %p42 = por %p40, %p41
    %s44 = sadd.s32 %s43, 1
    %p47 = scmp.eq.s32.totalorder %s9, 1
    %p48 = scmp.ne.s32.totalorder %s43, %s45
    %p49 = scmp.eq.s32.totalorder %s9, 0
    %p50 = por %p48, %p49
    %p51 = scmp.ne.s32.totalorder %s43, %s45
    %p52 = scmp.eq.s32.totalorder %s14, 1
    %p53 = por %p51, %p52
    %p54 = scmp.ne.s32.totalorder %s45, %s46
    %p55 = scmp.eq.s32.totalorder %s14, 0
    %p56 = por %p54, %p55
    %p57 = scmp.ne.s32.totalorder %s45, %s46
    %p58 = scmp.eq.s32.totalorder %s15, 1
    %p59 = por %p57, %p58
    %p61 = scmp.ne.s32.totalorder %s46, %s60
    %p62 = scmp.eq.s32.totalorder %s15, 0
    %p63 = por %p61, %p62
    %s65 = sadd.s32 %s64, 1
    %p68 = scmp.eq.s32.totalorder %s9, 1
    %p69 = scmp.ne.s32.totalorder %s64, %s66
    %p70 = scmp.eq.s32.totalorder %s9, 0
    %p71 = por %p69, %p70
    %p72 = scmp.ne.s32.totalorder %s64, %s66
    %p73 = scmp.eq.s32.totalorder %s14, 1
    %p74 = por %p72, %p73
    %p75 = scmp.ne.s32.totalorder %s66, %s67
    %p76 = scmp.eq.s32.totalorder %s14, 0
    %p77 = por %p75, %p76
    %p78 = scmp.ne.s32.totalorder %s66, %s67
    %p79 = scmp.eq.s32.totalorder %s15, 1
    %p80 = por %p78, %p79
    %p82 = scmp.ne.s32.totalorder %s67, %s81
    %p83 = scmp.eq.s32.totalorder %s15, 0
    %p84 = por %p82, %p83
    %s85 = ssub.s32 %s9, %s16
    %p86 = scmp.eq.s32.totalorder %s85, 0
    %s88 = sadd.s32 %s87, 1
    %s89 = scalar_select %p86, %s87, %s88
    %p92 = pneg %p86
    %p93 = scmp.eq.s32.totalorder %s9, 1
    %p94 = por %p92, %p93
    %p95 = scmp.ne.s32.totalorder %s87, %s90
    %p96 = scmp.eq.s32.totalorder %s9, 0
    %p97 = por %p95, %p96
    %p98 = scmp.ne.s32.totalorder %s87, %s90
    %p99 = scmp.eq.s32.totalorder %s14, 1
    %p100 = por %p98, %p99
    %p101 = scmp.ne.s32.totalorder %s90, %s91
    %p102 = scmp.eq.s32.totalorder %s14, 0
    %p103 = por %p101, %p102
    %p104 = scmp.ne.s32.totalorder %s90, %s91
    %p105 = scmp.eq.s32.totalorder %s15, 1
    %p106 = por %p104, %p105
    %p108 = scmp.ne.s32.totalorder %s91, %s107
    %p109 = scmp.eq.s32.totalorder %s15, 0
    %p110 = por %p108, %p109
    %p111 = scmp.le.s32.totalorder 1, %s9
    %p112 = scmp.lt.s32.totalorder %s9, 3
    %p113 = pnand %p111, %p112
    %p114 = pneg %p113
    // Predicated region
    $region9: #{inception_b_forward.6} parent=5 // pred_check
      _
    $region10: #{inception_b_forward.6} parent=5 // pred_check_branch
      %116 = sbr.rel (%p113) target = $region12
    $region11: #{inception_b_forward.6} parent=5 // pred_region
      %s117 = ssub.s32 %s9, 1
      // Predicated region
      $region13: #{inception_b_forward.6} parent=11 // pred_check
        %p118 = pneg %p56
      $region14: #{inception_b_forward.6} parent=11 // pred_check_branch
        %120 = sbr.rel (%p118) target = $region16
      $region15: #{inception_b_forward.6} parent=11 // pred_region
        _
      $region16: #{inception_b_forward.6} parent=11 // pred_fallthru
        _
      // Predicated region
      $region17: #{inception_b_forward.6} parent=11 // pred_check
        %p121 = pneg %p77
      $region18: #{inception_b_forward.6} parent=11 // pred_check_branch
        %123 = sbr.rel (%p121) target = $region20
      $region19: #{inception_b_forward.6} parent=11 // pred_region
        _
      $region20: #{inception_b_forward.6} parent=11 // pred_fallthru
        _
    $region12: #{inception_b_forward.6} parent=5 // pred_fallthru
      _
    %p124 = scmp.lt.s32.totalorder %s9, 2
    // Predicated region
    $region21: #{inception_b_forward.6} parent=5 // pred_check
      %p125 = pneg %p124
    $region22: #{inception_b_forward.6} parent=5 // pred_check_branch
      %127 = sbr.rel (%p125) target = $region24
    $region23: #{inception_b_forward.6} parent=5 // pred_region
      // Predicated region
      $region25: #{inception_b_forward.6} parent=23 // pred_check
        %p128 = pneg %p29
      $region26: #{inception_b_forward.6} parent=23 // pred_check_branch
        %130 = sbr.rel (%p128) target = $region28
      $region27: #{inception_b_forward.6} parent=23 // pred_region
        %s131 = smul.u32 32, %s9
        %p132 = scmp.lt.s32.totalorder %s131, 63
        %s133 = scalar_select %p132, %s131, 63
        %s134 = smul.addr %s133, 4
        %s135 = scalar_lea.vmem %s0, %s134
        %s136 = smul.u32 32, %s9
      $region28: #{inception_b_forward.6} parent=23 // pred_fallthru
        _
    $region24: #{inception_b_forward.6} parent=5 // pred_fallthru
      _
    %p137 = scmp.le.s32.totalorder 1, %s9
    %p138 = scmp.lt.s32.totalorder %s9, 3
    %p139 = pnand %p137, %p138
    %p140 = pneg %p139
    // Predicated region
    $region29: #{inception_b_forward.6} parent=5 // pred_check
      _
    $region30: #{inception_b_forward.6} parent=5 // pred_check_branch
      %142 = sbr.rel (%p139) target = $region32
    $region31: #{inception_b_forward.6} parent=5 // pred_region
      %s143 = ssub.s32 %s9, 1
      %s144 = smul.u32 32, %s14
      %p145 = scmp.lt.s32.totalorder %s144, 63
      %s146 = scalar_select %p145, %s144, 63
      %s147 = smul.addr %s146, 4
      %s148 = scalar_lea.vmem %s0, %s147
      %p149 = pneg %p35
      %p150 = pneg %p32
      %p151 = pneg %p56
      %p152 = pneg %p53
      %p153 = pneg %p77
      %p154 = pneg %p74
      %p155 = pneg %p103
      %p156 = pneg %p100
      %s157 = smul.u32 32, %s14
      %p158 = scmp.lt.s32.totalorder %s157, 63
      %s159 = scalar_select %p158, %s157, 63
      %s160 = smul.addr %s159, 4
      %s161 = scalar_lea.vmem %s3, %s160
      %s162 = smul.u32 32, %s14
      %p163 = scmp.lt.s32.totalorder %s162, 63
      %s164 = scalar_select %p163, %s162, 63
      %s165 = smul.addr %s164, 4
      %s166 = scalar_lea.vmem %s0, %s165
      %s167 = smul.u32 32, %s14
      %s168 = smul.u32 32, %s14
      %p169 = scmp.lt.s32.totalorder %s168, 63
      %s170 = scalar_select %p169, %s168, 63
      %s171 = smul.addr %s170, 4
      %s172 = scalar_lea.vmem %s3, %s171
      %s173 = smul.u32 32, %s14
      %v174 = vld [vmem:[%s166] sm:$0xf]
      %v175 = vld [vmem:[%s166 + $0x4] sm:$0xf]
      %v176 = vld [vmem:[%s166 + $0x8] sm:$0xf]
      %v177 = vld [vmem:[%s166 + $0xc] sm:$0xf]
      %v178 = vld [vmem:[%s166 + $0x10] sm:$0xf]
      %v179 = vld [vmem:[%s166 + $0x14] sm:$0xf]
      %v180 = vld [vmem:[%s166 + $0x18] sm:$0xf]
      %v181 = vld [vmem:[%s166 + $0x1c] sm:$0xf]
      %v182 = vld [vmem:[%s166 + $0x20] sm:$0xf]
      %v183 = vld [vmem:[%s166 + $0x24] sm:$0xf]
      %v184 = vld [vmem:[%s166 + $0x28] sm:$0xf]
      %v185 = vld [vmem:[%s166 + $0x2c] sm:$0xf]
      %v186 = vld [vmem:[%s166 + $0x30] sm:$0xf]
      %v187 = vld [vmem:[%s166 + $0x34] sm:$0xf]
      %v188 = vld [vmem:[%s166 + $0x38] sm:$0xf]
      %v189 = vld [vmem:[%s166 + $0x3c] sm:$0xf]
      %v190 = vld [vmem:[%s166 + $0x40] sm:$0xf]
      %v191 = vld [vmem:[%s166 + $0x44] sm:$0xf]
      %v192 = vld [vmem:[%s166 + $0x48] sm:$0xf]
      %v193 = vld [vmem:[%s166 + $0x4c] sm:$0xf]
      %v194 = vld [vmem:[%s166 + $0x50] sm:$0xf]
      %v195 = vld [vmem:[%s166 + $0x54] sm:$0xf]
      %v196 = vld [vmem:[%s166 + $0x58] sm:$0xf]
      %v197 = vld [vmem:[%s166 + $0x5c] sm:$0xf]
      %v198 = vld [vmem:[%s166 + $0x60] sm:$0xf]
      %v199 = vld [vmem:[%s166 + $0x64] sm:$0xf]
      %v200 = vld [vmem:[%s166 + $0x68] sm:$0xf]
      %v201 = vld [vmem:[%s166 + $0x6c] sm:$0xf]
      %v202 = vld [vmem:[%s166 + $0x70] sm:$0xf]
      %v203 = vld [vmem:[%s166 + $0x74] sm:$0xf]
      %v204 = vld [vmem:[%s166 + $0x78] sm:$0xf]
      %v205 = vld [vmem:[%s166 + $0x7c] sm:$0xf]
      %v206 = vld [vmem:[%s1] sm:$0xf]
      %v207 = vld [vmem:[%s1 + $0x4] sm:$0xf]
      %v208 = vld [vmem:[%s1 + $0x8] sm:$0xf]
      %v209 = vld [vmem:[%s1 + $0xc] sm:$0xf]
      %v210 = vld [vmem:[%s1 + $0x10] sm:$0xf]
      %v211 = vld [vmem:[%s1 + $0x14] sm:$0xf]
      %v212 = vld [vmem:[%s1 + $0x18] sm:$0xf]
      %v213 = vld [vmem:[%s1 + $0x1c] sm:$0xf]
      %v214 = vld [vmem:[%s1 + $0x20] sm:$0xf]
      %v215 = vld [vmem:[%s1 + $0x24] sm:$0xf]
      %v216 = vld [vmem:[%s1 + $0x28] sm:$0xf]
      %v217 = vld [vmem:[%s1 + $0x2c] sm:$0xf]
      %v218 = vld [vmem:[%s1 + $0x30] sm:$0xf]
      %v219 = vld [vmem:[%s1 + $0x34] sm:$0xf]
      %v220 = vld [vmem:[%s1 + $0x38] sm:$0xf]
      %v221 = vld [vmem:[%s1 + $0x3c] sm:$0xf]
      %v222 = vld [vmem:[%s2] sm:$0x1]
      %v224 = vperm.slane %v222, 0
      %v258 = vunpack.c.l.b16 %v174
      %v259 = vunpack.c.l.b16 %v175
      %v260 = vunpack.c.l.b16 %v176
      %v261 = vunpack.c.l.b16 %v177
      %v262 = vunpack.c.l.b16 %v178
      %v263 = vunpack.c.l.b16 %v179
      %v264 = vunpack.c.l.b16 %v180
      %v265 = vunpack.c.l.b16 %v181
      %v266 = vunpack.c.l.b16 %v182
      %v267 = vunpack.c.l.b16 %v183
      %v268 = vunpack.c.l.b16 %v184
      %v269 = vunpack.c.l.b16 %v185
      %v270 = vunpack.c.l.b16 %v186
      %v271 = vunpack.c.l.b16 %v187
      %v272 = vunpack.c.l.b16 %v188
      %v273 = vunpack.c.l.b16 %v189
      %v274 = vunpack.c.l.b16 %v190
      %v275 = vunpack.c.l.b16 %v191
      %v276 = vunpack.c.l.b16 %v192
      %v277 = vunpack.c.l.b16 %v193
      %v278 = vunpack.c.l.b16 %v194
      %v279 = vunpack.c.l.b16 %v195
      %v280 = vunpack.c.l.b16 %v196
      %v281 = vunpack.c.l.b16 %v197
      %v282 = vunpack.c.l.b16 %v198
      %v283 = vunpack.c.l.b16 %v199
      %v284 = vunpack.c.l.b16 %v200
      %v285 = vunpack.c.l.b16 %v201
      %v286 = vunpack.c.l.b16 %v202
      %v287 = vunpack.c.l.b16 %v203
      %v288 = vunpack.c.l.b16 %v204
      %v289 = vunpack.c.l.b16 %v205
      %v290 = vpack.c.b16 %v259, %v258
      %v291 = vpack.c.b16 %v261, %v260
      %v292 = vpack.c.b16 %v263, %v262
      %v293 = vpack.c.b16 %v265, %v264
      %v294 = vpack.c.b16 %v267, %v266
      %v295 = vpack.c.b16 %v269, %v268
      %v296 = vpack.c.b16 %v271, %v270
      %v297 = vpack.c.b16 %v273, %v272
      %v298 = vpack.c.b16 %v275, %v274
      %v299 = vpack.c.b16 %v277, %v276
      %v300 = vpack.c.b16 %v279, %v278
      %v301 = vpack.c.b16 %v281, %v280
      %v302 = vpack.c.b16 %v283, %v282
      %v303 = vpack.c.b16 %v285, %v284
      %v304 = vpack.c.b16 %v287, %v286
      %v305 = vpack.c.b16 %v289, %v288
      %v338 = vunpack.c.l.b16 %v206
      %v339 = vunpack.c.l.b16 %v207
      %v340 = vunpack.c.l.b16 %v208
      %v341 = vunpack.c.l.b16 %v209
      %v342 = vunpack.c.l.b16 %v210
      %v343 = vunpack.c.l.b16 %v211
      %v344 = vunpack.c.l.b16 %v212
      %v345 = vunpack.c.l.b16 %v213
      %v346 = vunpack.c.l.b16 %v214
      %v347 = vunpack.c.l.b16 %v215
      %v348 = vunpack.c.l.b16 %v216
      %v349 = vunpack.c.l.b16 %v217
      %v350 = vunpack.c.l.b16 %v218
      %v351 = vunpack.c.l.b16 %v219
      %v352 = vunpack.c.l.b16 %v220
      %v353 = vunpack.c.l.b16 %v221
      %v354 = vpack.c.b16 %v339, %v338
      %v355 = vpack.c.b16 %v341, %v340
      %v356 = vpack.c.b16 %v343, %v342
      %v357 = vpack.c.b16 %v345, %v344
      %v358 = vpack.c.b16 %v347, %v346
      %v359 = vpack.c.b16 %v349, %v348
      %v360 = vpack.c.b16 %v351, %v350
      %v361 = vpack.c.b16 %v353, %v352
      %370 = vmatpush.bf16.msra.mxu0 %v361
      %371 = vmatpush.bf16.msra.mxu0 %v360
      %372 = vmatpush.bf16.msra.mxu0 %v359
      %373 = vmatpush.bf16.msra.mxu0 %v358
      %374 = vmatpush.bf16.msra.mxu0 %v357
      %375 = vmatpush.bf16.msra.mxu0 %v356
      %376 = vmatpush.bf16.msra.mxu0 %v355
      %377 = vmatpush.bf16.msra.mxu0 %v354
      %378 = vmatmul.bf16.gmra.mxu0 %v290
      %v379 = vpop.f32.mrf.mxu0
      %v380 = vadd.f32 %v224, %v379
      %v381 = vpop.f32.mrf.mxu0
      %v382 = vadd.f32 %v224, %v381
      %383 = vmatmul.bf16.gmra.mxu0 %v291
      %v384 = vpop.f32.mrf.mxu0
      %v385 = vadd.f32 %v224, %v384
      %v386 = vpop.f32.mrf.mxu0
      %v387 = vadd.f32 %v224, %v386
      %388 = vmatmul.bf16.gmra.mxu0 %v292
      %v389 = vpop.f32.mrf.mxu0
      %v390 = vadd.f32 %v224, %v389
      %v391 = vpop.f32.mrf.mxu0
      %v392 = vadd.f32 %v224, %v391
      %393 = vmatmul.bf16.gmra.mxu0 %v293
      %v394 = vpop.f32.mrf.mxu0
      %v395 = vadd.f32 %v224, %v394
      %v396 = vpop.f32.mrf.mxu0
      %v397 = vadd.f32 %v224, %v396
      %398 = vmatmul.bf16.gmra.mxu0 %v294
      %v399 = vpop.f32.mrf.mxu0
      %v400 = vadd.f32 %v224, %v399
      %v401 = vpop.f32.mrf.mxu0
      %v402 = vadd.f32 %v224, %v401
      %403 = vmatmul.bf16.gmra.mxu0 %v295
      %v404 = vpop.f32.mrf.mxu0
      %v405 = vadd.f32 %v224, %v404
      %v406 = vpop.f32.mrf.mxu0
      %v407 = vadd.f32 %v224, %v406
      %408 = vmatmul.bf16.gmra.mxu0 %v296
      %v409 = vpop.f32.mrf.mxu0
      %v410 = vadd.f32 %v224, %v409
      %v411 = vpop.f32.mrf.mxu0
      %v412 = vadd.f32 %v224, %v411
      %413 = vmatmul.bf16.gmra.mxu0 %v297
      %v414 = vpop.f32.mrf.mxu0
      %v415 = vadd.f32 %v224, %v414
      %v416 = vpop.f32.mrf.mxu0
      %v417 = vadd.f32 %v224, %v416
      %418 = vmatmul.bf16.gmra.mxu0 %v298
      %v419 = vpop.f32.mrf.mxu0
      %v420 = vadd.f32 %v224, %v419
      %v421 = vpop.f32.mrf.mxu0
      %v422 = vadd.f32 %v224, %v421
      %423 = vmatmul.bf16.gmra.mxu0 %v299
      %v424 = vpop.f32.mrf.mxu0
      %v425 = vadd.f32 %v224, %v424
      %v426 = vpop.f32.mrf.mxu0
      %v427 = vadd.f32 %v224, %v426
      %428 = vmatmul.bf16.gmra.mxu0 %v300
      %v429 = vpop.f32.mrf.mxu0
      %v430 = vadd.f32 %v224, %v429
      %v431 = vpop.f32.mrf.mxu0
      %v432 = vadd.f32 %v224, %v431
      %433 = vmatmul.bf16.gmra.mxu0 %v301
      %v434 = vpop.f32.mrf.mxu0
      %v435 = vadd.f32 %v224, %v434
      %v436 = vpop.f32.mrf.mxu0
      %v437 = vadd.f32 %v224, %v436
      %438 = vmatmul.bf16.gmra.mxu0 %v302
      %v439 = vpop.f32.mrf.mxu0
      %v440 = vadd.f32 %v224, %v439
      %v441 = vpop.f32.mrf.mxu0
      %v442 = vadd.f32 %v224, %v441
      %443 = vmatmul.bf16.gmra.mxu0 %v303
      %v444 = vpop.f32.mrf.mxu0
      %v445 = vadd.f32 %v224, %v444
      %v446 = vpop.f32.mrf.mxu0
      %v447 = vadd.f32 %v224, %v446
      %448 = vmatmul.bf16.gmra.mxu0 %v304
      %v449 = vpop.f32.mrf.mxu0
      %v450 = vadd.f32 %v224, %v449
      %v451 = vpop.f32.mrf.mxu0
      %v452 = vadd.f32 %v224, %v451
      %453 = vmatmul.bf16.gmra.mxu0 %v305
      %v454 = vpop.f32.mrf.mxu0
      %v455 = vadd.f32 %v224, %v454
      %v456 = vpop.f32.mrf.mxu0
      %v457 = vadd.f32 %v224, %v456
      %458 = vdwg.mxu0
      %v459 = vmax.f32 %v380, 0.0
      %v460 = vmax.f32 %v382, 0.0
      %v461 = vmax.f32 %v385, 0.0
      %v462 = vmax.f32 %v387, 0.0
      %v463 = vmax.f32 %v390, 0.0
      %v464 = vmax.f32 %v392, 0.0
      %v465 = vmax.f32 %v395, 0.0
      %v466 = vmax.f32 %v397, 0.0
      %v467 = vmax.f32 %v400, 0.0
      %v468 = vmax.f32 %v402, 0.0
      %v469 = vmax.f32 %v405, 0.0
      %v470 = vmax.f32 %v407, 0.0
      %v471 = vmax.f32 %v410, 0.0
      %v472 = vmax.f32 %v412, 0.0
      %v473 = vmax.f32 %v415, 0.0
      %v474 = vmax.f32 %v417, 0.0
      %v475 = vmax.f32 %v420, 0.0
      %v476 = vmax.f32 %v422, 0.0
      %v477 = vmax.f32 %v425, 0.0
      %v478 = vmax.f32 %v427, 0.0
      %v479 = vmax.f32 %v430, 0.0
      %v480 = vmax.f32 %v432, 0.0
      %v481 = vmax.f32 %v435, 0.0
      %v482 = vmax.f32 %v437, 0.0
      %v483 = vmax.f32 %v440, 0.0
      %v484 = vmax.f32 %v442, 0.0
      %v485 = vmax.f32 %v445, 0.0
      %v486 = vmax.f32 %v447, 0.0
      %v487 = vmax.f32 %v450, 0.0
      %v488 = vmax.f32 %v452, 0.0
      %v489 = vmax.f32 %v455, 0.0
      %v490 = vmax.f32 %v457, 0.0
      %v491 = vpack.c.bf16 %v459, %v459
      %v492 = vpack.c.bf16 %v460, %v460
      %v493 = vpack.c.bf16 %v461, %v461
      %v494 = vpack.c.bf16 %v462, %v462
      %v495 = vpack.c.bf16 %v463, %v463
      %v496 = vpack.c.bf16 %v464, %v464
      %v497 = vpack.c.bf16 %v465, %v465
      %v498 = vpack.c.bf16 %v466, %v466
      %v499 = vpack.c.bf16 %v467, %v467
      %v500 = vpack.c.bf16 %v468, %v468
      %v501 = vpack.c.bf16 %v469, %v469
      %v502 = vpack.c.bf16 %v470, %v470
      %v503 = vpack.c.bf16 %v471, %v471
      %v504 = vpack.c.bf16 %v472, %v472
      %v505 = vpack.c.bf16 %v473, %v473
      %v506 = vpack.c.bf16 %v474, %v474
      %v507 = vpack.c.bf16 %v475, %v475
      %v508 = vpack.c.bf16 %v476, %v476
      %v509 = vpack.c.bf16 %v477, %v477
      %v510 = vpack.c.bf16 %v478, %v478
      %v511 = vpack.c.bf16 %v479, %v479
      %v512 = vpack.c.bf16 %v480, %v480
      %v513 = vpack.c.bf16 %v481, %v481
      %v514 = vpack.c.bf16 %v482, %v482
      %v515 = vpack.c.bf16 %v483, %v483
      %v516 = vpack.c.bf16 %v484, %v484
      %v517 = vpack.c.bf16 %v485, %v485
      %v518 = vpack.c.bf16 %v486, %v486
      %v519 = vpack.c.bf16 %v487, %v487
      %v520 = vpack.c.bf16 %v488, %v488
      %v521 = vpack.c.bf16 %v489, %v489
      %v522 = vpack.c.bf16 %v490, %v490
      %523 = vst [vmem:[%s172] sm:$0xf] %v491
      %524 = vst [vmem:[%s172 + $0x4] sm:$0xf] %v492
      %525 = vst [vmem:[%s172 + $0x8] sm:$0xf] %v493
      %526 = vst [vmem:[%s172 + $0xc] sm:$0xf] %v494
      %527 = vst [vmem:[%s172 + $0x10] sm:$0xf] %v495
      %528 = vst [vmem:[%s172 + $0x14] sm:$0xf] %v496
      %529 = vst [vmem:[%s172 + $0x18] sm:$0xf] %v497
      %530 = vst [vmem:[%s172 + $0x1c] sm:$0xf] %v498
      %531 = vst [vmem:[%s172 + $0x20] sm:$0xf] %v499
      %532 = vst [vmem:[%s172 + $0x24] sm:$0xf] %v500
      %533 = vst [vmem:[%s172 + $0x28] sm:$0xf] %v501
      %534 = vst [vmem:[%s172 + $0x2c] sm:$0xf] %v502
      %535 = vst [vmem:[%s172 + $0x30] sm:$0xf] %v503
      %536 = vst [vmem:[%s172 + $0x34] sm:$0xf] %v504
      %537 = vst [vmem:[%s172 + $0x38] sm:$0xf] %v505
      %538 = vst [vmem:[%s172 + $0x3c] sm:$0xf] %v506
      %539 = vst [vmem:[%s172 + $0x40] sm:$0xf] %v507
      %540 = vst [vmem:[%s172 + $0x44] sm:$0xf] %v508
      %541 = vst [vmem:[%s172 + $0x48] sm:$0xf] %v509
      %542 = vst [vmem:[%s172 + $0x4c] sm:$0xf] %v510
      %543 = vst [vmem:[%s172 + $0x50] sm:$0xf] %v511
      %544 = vst [vmem:[%s172 + $0x54] sm:$0xf] %v512
      %545 = vst [vmem:[%s172 + $0x58] sm:$0xf] %v513
      %546 = vst [vmem:[%s172 + $0x5c] sm:$0xf] %v514
      %547 = vst [vmem:[%s172 + $0x60] sm:$0xf] %v515
      %548 = vst [vmem:[%s172 + $0x64] sm:$0xf] %v516
      %549 = vst [vmem:[%s172 + $0x68] sm:$0xf] %v517
      %550 = vst [vmem:[%s172 + $0x6c] sm:$0xf] %v518
      %551 = vst [vmem:[%s172 + $0x70] sm:$0xf] %v519
      %552 = vst [vmem:[%s172 + $0x74] sm:$0xf] %v520
      %553 = vst [vmem:[%s172 + $0x78] sm:$0xf] %v521
      %554 = vst [vmem:[%s172 + $0x7c] sm:$0xf] %v522
      %s555 = smul.u32 32, %s14
      %p556 = scmp.lt.s32.totalorder %s555, 63
      %s557 = scalar_select %p556, %s555, 63
      %s558 = smul.addr %s557, 4
      %s559 = scalar_lea.vmem %s3, %s558
      // Predicated region
      $region33: #{inception_b_forward.6} parent=31 // pred_check
        %p560 = pneg %p100
      $region34: #{inception_b_forward.6} parent=31 // pred_check_branch
        %562 = sbr.rel (%p560) target = $region36
      $region35: #{inception_b_forward.6} parent=31 // pred_region
        %s563 = smul.u32 32, %s14
      $region36: #{inception_b_forward.6} parent=31 // pred_fallthru
        _
    $region32: #{inception_b_forward.6} parent=5 // pred_fallthru
      _
    %p564 = scmp.le.s32.totalorder 2, %s9
    // Predicated region
    $region37: #{inception_b_forward.6} parent=5 // pred_check
      %p565 = pneg %p564
    $region38: #{inception_b_forward.6} parent=5 // pred_check_branch
      %567 = sbr.rel (%p565) target = $region40
    $region39: #{inception_b_forward.6} parent=5 // pred_region
      %s568 = ssub.s32 %s9, 2
      // Predicated region
      $region41: #{inception_b_forward.6} parent=39 // pred_check
        %p569 = pneg %p106
      $region42: #{inception_b_forward.6} parent=39 // pred_check_branch
        %571 = sbr.rel (%p569) target = $region44
      $region43: #{inception_b_forward.6} parent=39 // pred_region
        %s572 = smul.u32 32, %s15
        %p573 = scmp.lt.s32.totalorder %s572, 63
        %s574 = scalar_select %p573, %s572, 63
        %s575 = smul.addr %s574, 4
        %s576 = scalar_lea.vmem %s3, %s575
      $region44: #{inception_b_forward.6} parent=39 // pred_fallthru
        _
    $region40: #{inception_b_forward.6} parent=5 // pred_fallthru
      _
  $region6: #{inception_b_forward.6} parent=0 // loop_footer
    %s13 = sadd.s32 1, %s9
  $region7: #{inception_b_forward.6} parent=0 // loop_footer_branch
    %8 = sbr.rel target = $region3
  $region8: #{inception_b_forward.6} parent=0 // loop_exit
    _

// kernel: inception_b_forward.8
$region0: #{inception_b_forward.8}
  #allocation0 [shape = 'u32[]', space=smem, size = 0x4, offset = 0x4, fixed_abs, tag = 'smem constant byte address 0x4 - core index']
  #allocation1 [shape = 'u32[72,128]{1,0:T(1,128)}', space=vmem, size = 0x9000, scoped, tag = 'internal scratch']
  %s0 = inlined_call_operand.vmem [shape: bf16[128,1152], index: 0, kind: input, shape index: {}]
  %s1 = inlined_call_operand.vmem [shape: bf16[1152,128], index: 1, kind: input, shape index: {}]
  %s2 = inlined_call_operand.vmem [shape: f32[1,128], index: 2, kind: input, shape index: {}]
  %s3 = inlined_call_operand.vmem [shape: f32[128,128], index: 3, kind: output, shape index: {}]
  %s4 = sld [smem:[#allocation0]]
  $region45: #{inception_b_forward.8} parent=0
    _
  %s6 = ssub.s32 1, %s4
  %s7 = scalar_select 0, %s6, %s4
  loop: start=0, step=1, limit=4
  $region2: #{inception_b_forward.8} parent=0 // loop_pre_header
    _
  $region3: #{inception_b_forward.8} parent=0 // loop_header
    %s9 = sphi 0, %s13
    %p10 = scmp.ge.s32.totalorder %s9, 4
    %s19 = sphi 0, %s21
    %s22 = sphi 0, %s19
    %s23 = sphi 0, %s22
    %s39 = sphi 0, %s23
    %s43 = sphi 0, %s43
    %s45 = sphi 0, %s43
    %s46 = sphi 0, %s45
    %s60 = sphi 0, %s46
    %s64 = sphi 0, %s64
    %s66 = sphi 0, %s64
    %s67 = sphi 0, %s66
    %s81 = sphi 0, %s67
    %s87 = sphi 0, %s89
    %s90 = sphi 0, %s87
    %s91 = sphi 0, %s90
    %s107 = sphi 0, %s91
  $region4: #{inception_b_forward.8} parent=0 // loop_header_branch
    %12 = sbr.rel (%p10) target = $region8
  $region5: #{inception_b_forward.8} parent=0 // loop_body
    %s14 = ssub.s32 %s9, 1
    %s15 = ssub.s32 %s9, 2
    %s16 = sadd.s32 %s9, 1
    %s17 = ssub.s32 %s9, %s16
    %p18 = scmp.eq.s32.totalorder %s17, 0
    %s20 = sadd.s32 %s19, 1
    %s21 = scalar_select %p18, %s19, %s20
    %p24 = pneg %p18
    %p25 = scmp.eq.s32.totalorder %s9, 1
    %p26 = por %p24, %p25
    %p27 = scmp.ne.s32.totalorder %s19, %s22
    %p28 = scmp.eq.s32.totalorder %s9, 0
    %p29 = por %p27, %p28
    %p30 = scmp.ne.s32.totalorder %s19, %s22
    %p31 = scmp.eq.s32.totalorder %s14, 1
    %p32 = por %p30, %p31
    %p33 = scmp.ne.s32.totalorder %s22, %s23
    %p34 = scmp.eq.s32.totalorder %s14, 0
    %p35 = por %p33, %p34
    %p36 = scmp.ne.s32.totalorder %s22, %s23
    %p37 = scmp.eq.s32.totalorder %s15, 1
    %p38 = por %p36, %p37
    %p40 = scmp.ne.s32.totalorder %s23, %s39
    %p41 = scmp.eq.s32.totalorder %s15, 0
    %p42 = por %p40, %p41
    %s44 = sadd.s32 %s43, 1
    %p47 = scmp.eq.s32.totalorder %s9, 1
    %p48 = scmp.ne.s32.totalorder %s43, %s45
    %p49 = scmp.eq.s32.totalorder %s9, 0
    %p50 = por %p48, %p49
    %p51 = scmp.ne.s32.totalorder %s43, %s45
    %p52 = scmp.eq.s32.totalorder %s14, 1
    %p53 = por %p51, %p52
    %p54 = scmp.ne.s32.totalorder %s45, %s46
    %p55 = scmp.eq.s32.totalorder %s14, 0
    %p56 = por %p54, %p55
    %p57 = scmp.ne.s32.totalorder %s45, %s46
    %p58 = scmp.eq.s32.totalorder %s15, 1
    %p59 = por %p57, %p58
    %p61 = scmp.ne.s32.totalorder %s46, %s60
    %p62 = scmp.eq.s32.totalorder %s15, 0
    %p63 = por %p61, %p62
    %s65 = sadd.s32 %s64, 1
    %p68 = scmp.eq.s32.totalorder %s9, 1
    %p69 = scmp.ne.s32.totalorder %s64, %s66
    %p70 = scmp.eq.s32.totalorder %s9, 0
    %p71 = por %p69, %p70
    %p72 = scmp.ne.s32.totalorder %s64, %s66
    %p73 = scmp.eq.s32.totalorder %s14, 1
    %p74 = por %p72, %p73
    %p75 = scmp.ne.s32.totalorder %s66, %s67
    %p76 = scmp.eq.s32.totalorder %s14, 0
    %p77 = por %p75, %p76
    %p78 = scmp.ne.s32.totalorder %s66, %s67
    %p79 = scmp.eq.s32.totalorder %s15, 1
    %p80 = por %p78, %p79
    %p82 = scmp.ne.s32.totalorder %s67, %s81
    %p83 = scmp.eq.s32.totalorder %s15, 0
    %p84 = por %p82, %p83
    %s85 = ssub.s32 %s9, %s16
    %p86 = scmp.eq.s32.totalorder %s85, 0
    %s88 = sadd.s32 %s87, 1
    %s89 = scalar_select %p86, %s87, %s88
    %p92 = pneg %p86
    %p93 = scmp.eq.s32.totalorder %s9, 1
    %p94 = por %p92, %p93
    %p95 = scmp.ne.s32.totalorder %s87, %s90
    %p96 = scmp.eq.s32.totalorder %s9, 0
    %p97 = por %p95, %p96
    %p98 = scmp.ne.s32.totalorder %s87, %s90
    %p99 = scmp.eq.s32.totalorder %s14, 1
    %p100 = por %p98, %p99
    %p101 = scmp.ne.s32.totalorder %s90, %s91
    %p102 = scmp.eq.s32.totalorder %s14, 0
    %p103 = por %p101, %p102
    %p104 = scmp.ne.s32.totalorder %s90, %s91
    %p105 = scmp.eq.s32.totalorder %s15, 1
    %p106 = por %p104, %p105
    %p108 = scmp.ne.s32.totalorder %s91, %s107
    %p109 = scmp.eq.s32.totalorder %s15, 0
    %p110 = por %p108, %p109
    %p111 = scmp.le.s32.totalorder 1, %s9
    %p112 = scmp.lt.s32.totalorder %s9, 3
    %p113 = pnand %p111, %p112
    %p114 = pneg %p113
    // Predicated region
    $region9: #{inception_b_forward.8} parent=5 // pred_check
      _
    $region10: #{inception_b_forward.8} parent=5 // pred_check_branch
      %116 = sbr.rel (%p113) target = $region12
    $region11: #{inception_b_forward.8} parent=5 // pred_region
      %s117 = ssub.s32 %s9, 1
      // Predicated region
      $region13: #{inception_b_forward.8} parent=11 // pred_check
        %p118 = pneg %p56
      $region14: #{inception_b_forward.8} parent=11 // pred_check_branch
        %120 = sbr.rel (%p118) target = $region16
      $region15: #{inception_b_forward.8} parent=11 // pred_region
        _
      $region16: #{inception_b_forward.8} parent=11 // pred_fallthru
        _
      // Predicated region
      $region17: #{inception_b_forward.8} parent=11 // pred_check
        %p121 = pneg %p77
      $region18: #{inception_b_forward.8} parent=11 // pred_check_branch
        %123 = sbr.rel (%p121) target = $region20
      $region19: #{inception_b_forward.8} parent=11 // pred_region
        _
      $region20: #{inception_b_forward.8} parent=11 // pred_fallthru
        _
    $region12: #{inception_b_forward.8} parent=5 // pred_fallthru
      _
    %p124 = scmp.lt.s32.totalorder %s9, 2
    // Predicated region
    $region21: #{inception_b_forward.8} parent=5 // pred_check
      %p125 = pneg %p124
    $region22: #{inception_b_forward.8} parent=5 // pred_check_branch
      %127 = sbr.rel (%p125) target = $region24
    $region23: #{inception_b_forward.8} parent=5 // pred_region
      // Predicated region
      $region25: #{inception_b_forward.8} parent=23 // pred_check
        %p128 = pneg %p29
      $region26: #{inception_b_forward.8} parent=23 // pred_check_branch
        %130 = sbr.rel (%p128) target = $region28
      $region27: #{inception_b_forward.8} parent=23 // pred_region
        %s131 = smul.u32 8, %s9
        %p132 = scmp.lt.s32.totalorder %s131, 15
        %s133 = scalar_select %p132, %s131, 15
        %s134 = smul.addr %s133, 9
        %s135 = smul.addr %s134, 4
        %s136 = scalar_lea.vmem %s0, %s135
        %s137 = smul.u32 8, %s9
      $region28: #{inception_b_forward.8} parent=23 // pred_fallthru
        _
    $region24: #{inception_b_forward.8} parent=5 // pred_fallthru
      _
    %p138 = scmp.le.s32.totalorder 1, %s9
    %p139 = scmp.lt.s32.totalorder %s9, 3
    %p140 = pnand %p138, %p139
    %p141 = pneg %p140
    // Predicated region
    $region29: #{inception_b_forward.8} parent=5 // pred_check
      _
    $region30: #{inception_b_forward.8} parent=5 // pred_check_branch
      %143 = sbr.rel (%p140) target = $region32
    $region31: #{inception_b_forward.8} parent=5 // pred_region
      %s144 = ssub.s32 %s9, 1
      %s145 = smul.u32 8, %s14
      %p146 = scmp.lt.s32.totalorder %s145, 15
      %s147 = scalar_select %p146, %s145, 15
      %s148 = smul.addr %s147, 9
      %s149 = smul.addr %s148, 4
      %s150 = scalar_lea.vmem %s0, %s149
      %p151 = pneg %p35
      %p152 = pneg %p32
      %p153 = pneg %p56
      %p154 = pneg %p53
      %p155 = pneg %p77
      %p156 = pneg %p74
      %p157 = pneg %p103
      %p158 = pneg %p100
      %s159 = smul.u32 8, %s14
      %p160 = scmp.lt.s32.totalorder %s159, 15
      %s161 = scalar_select %p160, %s159, 15
      %s162 = smul.addr %s161, 8
      %s163 = scalar_lea.vmem %s3, %s162
      %s164 = smul.u32 8, %s14
      %p165 = scmp.lt.s32.totalorder %s164, 15
      %s166 = scalar_select %p165, %s164, 15
      %s167 = smul.addr %s166, 9
      %s168 = smul.addr %s167, 4
      %s169 = scalar_lea.vmem %s0, %s168
      %s170 = smul.u32 8, %s14
      %s171 = smul.u32 8, %s14
      %p172 = scmp.lt.s32.totalorder %s171, 15
      %s173 = scalar_select %p172, %s171, 15
      %s174 = smul.addr %s173, 8
      %s175 = scalar_lea.vmem %s3, %s174
      %s176 = smul.u32 8, %s14
      %v177 = vld [vmem:[%s169] sm:$0xff]
      %v178 = vld [vmem:[%s169 + $0x8] sm:$0xff]
      %v179 = vld [vmem:[%s169 + $0x10] sm:$0xff]
      %v180 = vld [vmem:[%s169 + $0x18] sm:$0xff]
      %v181 = vld [vmem:[%s169 + $0x20] sm:$0xf]
      %v182 = vld [vmem:[%s169 + $0x24] sm:$0xff]
      %v183 = vld [vmem:[%s169 + $0x2c] sm:$0xff]
      %v184 = vld [vmem:[%s169 + $0x34] sm:$0xff]
      %v185 = vld [vmem:[%s169 + $0x3c] sm:$0xff]
      %v186 = vld [vmem:[%s169 + $0x44] sm:$0xf]
      %v187 = vld [vmem:[%s169 + $0x48] sm:$0xff]
      %v188 = vld [vmem:[%s169 + $0x50] sm:$0xff]
      %v189 = vld [vmem:[%s169 + $0x58] sm:$0xff]
      %v190 = vld [vmem:[%s169 + $0x60] sm:$0xff]
      %v191 = vld [vmem:[%s169 + $0x68] sm:$0xf]
      %v192 = vld [vmem:[%s169 + $0x6c] sm:$0xff]
      %v193 = vld [vmem:[%s169 + $0x74] sm:$0xff]
      %v194 = vld [vmem:[%s169 + $0x7c] sm:$0xff]
      %v195 = vld [vmem:[%s169 + $0x84] sm:$0xff]
      %v196 = vld [vmem:[%s169 + $0x8c] sm:$0xf]
      %v197 = vld [vmem:[%s169 + $0x90] sm:$0xff]
      %v198 = vld [vmem:[%s169 + $0x98] sm:$0xff]
      %v199 = vld [vmem:[%s169 + $0xa0] sm:$0xff]
      %v200 = vld [vmem:[%s169 + $0xa8] sm:$0xff]
      %v201 = vld [vmem:[%s169 + $0xb0] sm:$0xf]
      %v202 = vld [vmem:[%s169 + $0xb4] sm:$0xff]
      %v203 = vld [vmem:[%s169 + $0xbc] sm:$0xff]
      %v204 = vld [vmem:[%s169 + $0xc4] sm:$0xff]
      %v205 = vld [vmem:[%s169 + $0xcc] sm:$0xff]
      %v206 = vld [vmem:[%s169 + $0xd4] sm:$0xf]
      %v207 = vld [vmem:[%s169 + $0xd8] sm:$0xff]
      %v208 = vld [vmem:[%s169 + $0xe0] sm:$0xff]
      %v209 = vld [vmem:[%s169 + $0xe8] sm:$0xff]
      %v210 = vld [vmem:[%s169 + $0xf0] sm:$0xff]
      %v211 = vld [vmem:[%s169 + $0xf8] sm:$0xf]
      %v212 = vld [vmem:[%s169 + $0xfc] sm:$0xff]
      %v213 = vld [vmem:[%s169 + $0x104] sm:$0xff]
      %v214 = vld [vmem:[%s169 + $0x10c] sm:$0xff]
      %v215 = vld [vmem:[%s169 + $0x114] sm:$0xff]
      %v216 = vld [vmem:[%s169 + $0x11c] sm:$0xf]
      %v217 = vld [vmem:[%s1] sm:$0xf]
      %v218 = vld [vmem:[%s1 + $0x4] sm:$0xf]
      %v219 = vld [vmem:[%s1 + $0x8] sm:$0xf]
      %v220 = vld [vmem:[%s1 + $0xc] sm:$0xf]
      %v221 = vld [vmem:[%s1 + $0x10] sm:$0xf]
      %v222 = vld [vmem:[%s1 + $0x14] sm:$0xf]
      %v223 = vld [vmem:[%s1 + $0x18] sm:$0xf]
      %v224 = vld [vmem:[%s1 + $0x1c] sm:$0xf]
      %v225 = vld [vmem:[%s1 + $0x20] sm:$0xf]
      %v226 = vld [vmem:[%s1 + $0x24] sm:$0xf]
      %v227 = vld [vmem:[%s1 + $0x28] sm:$0xf]
      %v228 = vld [vmem:[%s1 + $0x2c] sm:$0xf]
      %v229 = vld [vmem:[%s1 + $0x30] sm:$0xf]
      %v230 = vld [vmem:[%s1 + $0x34] sm:$0xf]
      %v231 = vld [vmem:[%s1 + $0x38] sm:$0xf]
      %v232 = vld [vmem:[%s1 + $0x3c] sm:$0xf]
      %v233 = vld [vmem:[%s1 + $0x40] sm:$0xf]
      %v234 = vld [vmem:[%s1 + $0x44] sm:$0xf]
      %v235 = vld [vmem:[%s1 + $0x48] sm:$0xf]
      %v236 = vld [vmem:[%s1 + $0x4c] sm:$0xf]
      %v237 = vld [vmem:[%s1 + $0x50] sm:$0xf]
      %v238 = vld [vmem:[%s1 + $0x54] sm:$0xf]
      %v239 = vld [vmem:[%s1 + $0x58] sm:$0xf]
      %v240 = vld [vmem:[%s1 + $0x5c] sm:$0xf]
      %v241 = vld [vmem:[%s1 + $0x60] sm:$0xf]
      %v242 = vld [vmem:[%s1 + $0x64] sm:$0xf]
      %v243 = vld [vmem:[%s1 + $0x68] sm:$0xf]
      %v244 = vld [vmem:[%s1 + $0x6c] sm:$0xf]
      %v245 = vld [vmem:[%s1 + $0x70] sm:$0xf]
      %v246 = vld [vmem:[%s1 + $0x74] sm:$0xf]
      %v247 = vld [vmem:[%s1 + $0x78] sm:$0xf]
      %v248 = vld [vmem:[%s1 + $0x7c] sm:$0xf]
      %v249 = vld [vmem:[%s1 + $0x80] sm:$0xf]
      %v250 = vld [vmem:[%s1 + $0x84] sm:$0xf]
      %v251 = vld [vmem:[%s1 + $0x88] sm:$0xf]
      %v252 = vld [vmem:[%s1 + $0x8c] sm:$0xf]
      %v253 = vld [vmem:[%s1 + $0x90] sm:$0xf]
      %v254 = vld [vmem:[%s1 + $0x94] sm:$0xf]
      %v255 = vld [vmem:[%s1 + $0x98] sm:$0xf]
      %v256 = vld [vmem:[%s1 + $0x9c] sm:$0xf]
      %v257 = vld [vmem:[%s1 + $0xa0] sm:$0xf]
      %v258 = vld [vmem:[%s1 + $0xa4] sm:$0xf]
      %v259 = vld [vmem:[%s1 + $0xa8] sm:$0xf]
      %v260 = vld [vmem:[%s1 + $0xac] sm:$0xf]
      %v261 = vld [vmem:[%s1 + $0xb0] sm:$0xf]
      %v262 = vld [vmem:[%s1 + $0xb4] sm:$0xf]
      %v263 = vld [vmem:[%s1 + $0xb8] sm:$0xf]
      %v264 = vld [vmem:[%s1 + $0xbc] sm:$0xf]
      %v265 = vld [vmem:[%s1 + $0xc0] sm:$0xf]
      %v266 = vld [vmem:[%s1 + $0xc4] sm:$0xf]
      %v267 = vld [vmem:[%s1 + $0xc8] sm:$0xf]
      %v268 = vld [vmem:[%s1 + $0xcc] sm:$0xf]
      %v269 = vld [vmem:[%s1 + $0xd0] sm:$0xf]
      %v270 = vld [vmem:[%s1 + $0xd4] sm:$0xf]
      %v271 = vld [vmem:[%s1 + $0xd8] sm:$0xf]
      %v272 = vld [vmem:[%s1 + $0xdc] sm:$0xf]
      %v273 = vld [vmem:[%s1 + $0xe0] sm:$0xf]
      %v274 = vld [vmem:[%s1 + $0xe4] sm:$0xf]
      %v275 = vld [vmem:[%s1 + $0xe8] sm:$0xf]
      %v276 = vld [vmem:[%s1 + $0xec] sm:$0xf]
      %v277 = vld [vmem:[%s1 + $0xf0] sm:$0xf]
      %v278 = vld [vmem:[%s1 + $0xf4] sm:$0xf]
      %v279 = vld [vmem:[%s1 + $0xf8] sm:$0xf]
      %v280 = vld [vmem:[%s1 + $0xfc] sm:$0xf]
      %v281 = vld [vmem:[%s1 + $0x100] sm:$0xf]
      %v282 = vld [vmem:[%s1 + $0x104] sm:$0xf]
      %v283 = vld [vmem:[%s1 + $0x108] sm:$0xf]
      %v284 = vld [vmem:[%s1 + $0x10c] sm:$0xf]
      %v285 = vld [vmem:[%s1 + $0x110] sm:$0xf]
      %v286 = vld [vmem:[%s1 + $0x114] sm:$0xf]
      %v287 = vld [vmem:[%s1 + $0x118] sm:$0xf]
      %v288 = vld [vmem:[%s1 + $0x11c] sm:$0xf]
      %v289 = vld [vmem:[%s1 + $0x120] sm:$0xf]
      %v290 = vld [vmem:[%s1 + $0x124] sm:$0xf]
      %v291 = vld [vmem:[%s1 + $0x128] sm:$0xf]
      %v292 = vld [vmem:[%s1 + $0x12c] sm:$0xf]
      %v293 = vld [vmem:[%s1 + $0x130] sm:$0xf]
      %v294 = vld [vmem:[%s1 + $0x134] sm:$0xf]
      %v295 = vld [vmem:[%s1 + $0x138] sm:$0xf]
      %v296 = vld [vmem:[%s1 + $0x13c] sm:$0xf]
      %v297 = vld [vmem:[%s1 + $0x140] sm:$0xf]
      %v298 = vld [vmem:[%s1 + $0x144] sm:$0xf]
      %v299 = vld [vmem:[%s1 + $0x148] sm:$0xf]
      %v300 = vld [vmem:[%s1 + $0x14c] sm:$0xf]
      %v301 = vld [vmem:[%s1 + $0x150] sm:$0xf]
      %v302 = vld [vmem:[%s1 + $0x154] sm:$0xf]
      %v303 = vld [vmem:[%s1 + $0x158] sm:$0xf]
      %v304 = vld [vmem:[%s1 + $0x15c] sm:$0xf]
      %v305 = vld [vmem:[%s1 + $0x160] sm:$0xf]
      %v306 = vld [vmem:[%s1 + $0x164] sm:$0xf]
      %v307 = vld [vmem:[%s1 + $0x168] sm:$0xf]
      %v308 = vld [vmem:[%s1 + $0x16c] sm:$0xf]
      %v309 = vld [vmem:[%s1 + $0x170] sm:$0xf]
      %v310 = vld [vmem:[%s1 + $0x174] sm:$0xf]
      %v311 = vld [vmem:[%s1 + $0x178] sm:$0xf]
      %v312 = vld [vmem:[%s1 + $0x17c] sm:$0xf]
      %v313 = vld [vmem:[%s1 + $0x180] sm:$0xf]
      %v314 = vld [vmem:[%s1 + $0x184] sm:$0xf]
      %v315 = vld [vmem:[%s1 + $0x188] sm:$0xf]
      %v316 = vld [vmem:[%s1 + $0x18c] sm:$0xf]
      %v317 = vld [vmem:[%s1 + $0x190] sm:$0xf]
      %v318 = vld [vmem:[%s1 + $0x194] sm:$0xf]
      %v319 = vld [vmem:[%s1 + $0x198] sm:$0xf]
      %v320 = vld [vmem:[%s1 + $0x19c] sm:$0xf]
      %v321 = vld [vmem:[%s1 + $0x1a0] sm:$0xf]
      %v322 = vld [vmem:[%s1 + $0x1a4] sm:$0xf]
      %v323 = vld [vmem:[%s1 + $0x1a8] sm:$0xf]
      %v324 = vld [vmem:[%s1 + $0x1ac] sm:$0xf]
      %v325 = vld [vmem:[%s1 + $0x1b0] sm:$0xf]
      %v326 = vld [vmem:[%s1 + $0x1b4] sm:$0xf]
      %v327 = vld [vmem:[%s1 + $0x1b8] sm:$0xf]
      %v328 = vld [vmem:[%s1 + $0x1bc] sm:$0xf]
      %v329 = vld [vmem:[%s1 + $0x1c0] sm:$0xf]
      %v330 = vld [vmem:[%s1 + $0x1c4] sm:$0xf]
      %v331 = vld [vmem:[%s1 + $0x1c8] sm:$0xf]
      %v332 = vld [vmem:[%s1 + $0x1cc] sm:$0xf]
      %v333 = vld [vmem:[%s1 + $0x1d0] sm:$0xf]
      %v334 = vld [vmem:[%s1 + $0x1d4] sm:$0xf]
      %v335 = vld [vmem:[%s1 + $0x1d8] sm:$0xf]
      %v336 = vld [vmem:[%s1 + $0x1dc] sm:$0xf]
      %v337 = vld [vmem:[%s1 + $0x1e0] sm:$0xf]
      %v338 = vld [vmem:[%s1 + $0x1e4] sm:$0xf]
      %v339 = vld [vmem:[%s1 + $0x1e8] sm:$0xf]
      %v340 = vld [vmem:[%s1 + $0x1ec] sm:$0xf]
      %v341 = vld [vmem:[%s1 + $0x1f0] sm:$0xf]
      %v342 = vld [vmem:[%s1 + $0x1f4] sm:$0xf]
      %v343 = vld [vmem:[%s1 + $0x1f8] sm:$0xf]
      %v344 = vld [vmem:[%s1 + $0x1fc] sm:$0xf]
      %v345 = vld [vmem:[%s1 + $0x200] sm:$0xf]
      %v346 = vld [vmem:[%s1 + $0x204] sm:$0xf]
      %v347 = vld [vmem:[%s1 + $0x208] sm:$0xf]
      %v348 = vld [vmem:[%s1 + $0x20c] sm:$0xf]
      %v349 = vld [vmem:[%s1 + $0x210] sm:$0xf]
      %v350 = vld [vmem:[%s1 + $0x214] sm:$0xf]
      %v351 = vld [vmem:[%s1 + $0x218] sm:$0xf]
      %v352 = vld [vmem:[%s1 + $0x21c] sm:$0xf]
      %v353 = vld [vmem:[%s1 + $0x220] sm:$0xf]
      %v354 = vld [vmem:[%s1 + $0x224] sm:$0xf]
      %v355 = vld [vmem:[%s1 + $0x228] sm:$0xf]
      %v356 = vld [vmem:[%s1 + $0x22c] sm:$0xf]
      %v357 = vld [vmem:[%s1 + $0x230] sm:$0xf]
      %v358 = vld [vmem:[%s1 + $0x234] sm:$0xf]
      %v359 = vld [vmem:[%s1 + $0x238] sm:$0xf]
      %v360 = vld [vmem:[%s1 + $0x23c] sm:$0xf]
      %v361 = vld [vmem:[%s2] sm:$0x1]
      %v363 = vperm.slane %v361, 0
      %v405 = vunpack.c.l.b16 %v177
      %v406 = vunpack.c.h.b16 %v177
      %v407 = vunpack.c.l.b16 %v178
      %v408 = vunpack.c.h.b16 %v178
      %v409 = vunpack.c.l.b16 %v179
      %v410 = vunpack.c.h.b16 %v179
      %v411 = vunpack.c.l.b16 %v180
      %v412 = vunpack.c.h.b16 %v180
      %v413 = vunpack.c.l.b16 %v181
      %v414 = vunpack.c.l.b16 %v182
      %v415 = vunpack.c.h.b16 %v182
      %v416 = vunpack.c.l.b16 %v183
      %v417 = vunpack.c.h.b16 %v183
      %v418 = vunpack.c.l.b16 %v184
      %v419 = vunpack.c.h.b16 %v184
      %v420 = vunpack.c.l.b16 %v185
      %v421 = vunpack.c.h.b16 %v185
      %v422 = vunpack.c.l.b16 %v186
      %v423 = vunpack.c.l.b16 %v187
      %v424 = vunpack.c.h.b16 %v187
      %v425 = vunpack.c.l.b16 %v188
      %v426 = vunpack.c.h.b16 %v188
      %v427 = vunpack.c.l.b16 %v189
      %v428 = vunpack.c.h.b16 %v189
      %v429 = vunpack.c.l.b16 %v190
      %v430 = vunpack.c.h.b16 %v190
      %v431 = vunpack.c.l.b16 %v191
      %v432 = vunpack.c.l.b16 %v192
      %v433 = vunpack.c.h.b16 %v192
      %v434 = vunpack.c.l.b16 %v193
      %v435 = vunpack.c.h.b16 %v193
      %v436 = vunpack.c.l.b16 %v194
      %v437 = vunpack.c.h.b16 %v194
      %v438 = vunpack.c.l.b16 %v195
      %v439 = vunpack.c.h.b16 %v195
      %v440 = vunpack.c.l.b16 %v196
      %v441 = vunpack.c.l.b16 %v197
      %v442 = vunpack.c.h.b16 %v197
      %v443 = vunpack.c.l.b16 %v198
      %v444 = vunpack.c.h.b16 %v198
      %v445 = vunpack.c.l.b16 %v199
      %v446 = vunpack.c.h.b16 %v199
      %v447 = vunpack.c.l.b16 %v200
      %v448 = vunpack.c.h.b16 %v200
      %v449 = vunpack.c.l.b16 %v201
      %v450 = vunpack.c.l.b16 %v202
      %v451 = vunpack.c.h.b16 %v202
      %v452 = vunpack.c.l.b16 %v203
      %v453 = vunpack.c.h.b16 %v203
      %v454 = vunpack.c.l.b16 %v204
      %v455 = vunpack.c.h.b16 %v204
      %v456 = vunpack.c.l.b16 %v205
      %v457 = vunpack.c.h.b16 %v205
      %v458 = vunpack.c.l.b16 %v206
      %v459 = vunpack.c.l.b16 %v207
      %v460 = vunpack.c.h.b16 %v207
      %v461 = vunpack.c.l.b16 %v208
      %v462 = vunpack.c.h.b16 %v208
      %v463 = vunpack.c.l.b16 %v209
      %v464 = vunpack.c.h.b16 %v209
      %v465 = vunpack.c.l.b16 %v210
      %v466 = vunpack.c.h.b16 %v210
      %v467 = vunpack.c.l.b16 %v211
      %v468 = vunpack.c.l.b16 %v212
      %v469 = vunpack.c.h.b16 %v212
      %v470 = vunpack.c.l.b16 %v213
      %v471 = vunpack.c.h.b16 %v213
      %v472 = vunpack.c.l.b16 %v214
      %v473 = vunpack.c.h.b16 %v214
      %v474 = vunpack.c.l.b16 %v215
      %v475 = vunpack.c.h.b16 %v215
      %v476 = vunpack.c.l.b16 %v216
      %v477 = vpack.c.b16 %v414, %v405
      %v478 = vpack.c.b16 %v415, %v406
      %v479 = vpack.c.b16 %v416, %v407
      %v480 = vpack.c.b16 %v417, %v408
      %v481 = vpack.c.b16 %v418, %v409
      %v482 = vpack.c.b16 %v419, %v410
      %v483 = vpack.c.b16 %v420, %v411
      %v484 = vpack.c.b16 %v421, %v412
      %v485 = vpack.c.b16 %v422, %v413
      %v486 = vpack.c.b16 %v432, %v423
      %v487 = vpack.c.b16 %v433, %v424
      %v488 = vpack.c.b16 %v434, %v425
      %v489 = vpack.c.b16 %v435, %v426
      %v490 = vpack.c.b16 %v436, %v427
      %v491 = vpack.c.b16 %v437, %v428
      %v492 = vpack.c.b16 %v438, %v429
      %v493 = vpack.c.b16 %v439, %v430
      %v494 = vpack.c.b16 %v440, %v431
      %v495 = vpack.c.b16 %v450, %v441
      %v496 = vpack.c.b16 %v451, %v442
      %v497 = vpack.c.b16 %v452, %v443
      %v498 = vpack.c.b16 %v453, %v444
      %v499 = vpack.c.b16 %v454, %v445
      %v500 = vpack.c.b16 %v455, %v446
      %v501 = vpack.c.b16 %v456, %v447
      %v502 = vpack.c.b16 %v457, %v448
      %v503 = vpack.c.b16 %v458, %v449
      %v504 = vpack.c.b16 %v468, %v459
      %v505 = vpack.c.b16 %v469, %v460
      %v506 = vpack.c.b16 %v470, %v461
      %v507 = vpack.c.b16 %v471, %v462
      %v508 = vpack.c.b16 %v472, %v463
      %v509 = vpack.c.b16 %v473, %v464
      %v510 = vpack.c.b16 %v474, %v465
      %v511 = vpack.c.b16 %v475, %v466
      %v512 = vpack.c.b16 %v476, %v467
      %v693 = vunpack.c.l.b16 %v217
      %v694 = vunpack.c.l.b16 %v218
      %v695 = vunpack.c.l.b16 %v219
      %v696 = vunpack.c.l.b16 %v220
      %v697 = vunpack.c.l.b16 %v221
      %v698 = vunpack.c.l.b16 %v222
      %v699 = vunpack.c.l.b16 %v223
      %v700 = vunpack.c.l.b16 %v224
      %v701 = vunpack.c.l.b16 %v225
      %v702 = vunpack.c.l.b16 %v226
      %v703 = vunpack.c.l.b16 %v227
      %v704 = vunpack.c.l.b16 %v228
      %v705 = vunpack.c.l.b16 %v229
      %v706 = vunpack.c.l.b16 %v230
      %v707 = vunpack.c.l.b16 %v231
      %v708 = vunpack.c.l.b16 %v232
      %v709 = vunpack.c.l.b16 %v233
      %v710 = vunpack.c.l.b16 %v234
      %v711 = vunpack.c.l.b16 %v235
      %v712 = vunpack.c.l.b16 %v236
      %v713 = vunpack.c.l.b16 %v237
      %v714 = vunpack.c.l.b16 %v238
      %v715 = vunpack.c.l.b16 %v239
      %v716 = vunpack.c.l.b16 %v240
      %v717 = vunpack.c.l.b16 %v241
      %v718 = vunpack.c.l.b16 %v242
      %v719 = vunpack.c.l.b16 %v243
      %v720 = vunpack.c.l.b16 %v244
      %v721 = vunpack.c.l.b16 %v245
      %v722 = vunpack.c.l.b16 %v246
      %v723 = vunpack.c.l.b16 %v247
      %v724 = vunpack.c.l.b16 %v248
      %v725 = vunpack.c.l.b16 %v249
      %v726 = vunpack.c.l.b16 %v250
      %v727 = vunpack.c.l.b16 %v251
      %v728 = vunpack.c.l.b16 %v252
      %v729 = vunpack.c.l.b16 %v253
      %v730 = vunpack.c.l.b16 %v254
      %v731 = vunpack.c.l.b16 %v255
      %v732 = vunpack.c.l.b16 %v256
      %v733 = vunpack.c.l.b16 %v257
      %v734 = vunpack.c.l.b16 %v258
      %v735 = vunpack.c.l.b16 %v259
      %v736 = vunpack.c.l.b16 %v260
      %v737 = vunpack.c.l.b16 %v261
      %v738 = vunpack.c.l.b16 %v262
      %v739 = vunpack.c.l.b16 %v263
      %v740 = vunpack.c.l.b16 %v264
      %v741 = vunpack.c.l.b16 %v265
      %v742 = vunpack.c.l.b16 %v266
      %v743 = vunpack.c.l.b16 %v267
      %v744 = vunpack.c.l.b16 %v268
      %v745 = vunpack.c.l.b16 %v269
      %v746 = vunpack.c.l.b16 %v270
      %v747 = vunpack.c.l.b16 %v271
      %v748 = vunpack.c.l.b16 %v272
      %v749 = vunpack.c.l.b16 %v273
      %v750 = vunpack.c.l.b16 %v274
      %v751 = vunpack.c.l.b16 %v275
      %v752 = vunpack.c.l.b16 %v276
      %v753 = vunpack.c.l.b16 %v277
      %v754 = vunpack.c.l.b16 %v278
      %v755 = vunpack.c.l.b16 %v279
      %v756 = vunpack.c.l.b16 %v280
      %v757 = vunpack.c.l.b16 %v281
      %v758 = vunpack.c.l.b16 %v282
      %v759 = vunpack.c.l.b16 %v283
      %v760 = vunpack.c.l.b16 %v284
      %v761 = vunpack.c.l.b16 %v285
      %v762 = vunpack.c.l.b16 %v286
      %v763 = vunpack.c.l.b16 %v287
      %v764 = vunpack.c.l.b16 %v288
      %v765 = vunpack.c.l.b16 %v289
      %v766 = vunpack.c.l.b16 %v290
      %v767 = vunpack.c.l.b16 %v291
      %v768 = vunpack.c.l.b16 %v292
      %v769 = vunpack.c.l.b16 %v293
      %v770 = vunpack.c.l.b16 %v294
      %v771 = vunpack.c.l.b16 %v295
      %v772 = vunpack.c.l.b16 %v296
      %v773 = vunpack.c.l.b16 %v297
      %v774 = vunpack.c.l.b16 %v298
      %v775 = vunpack.c.l.b16 %v299
      %v776 = vunpack.c.l.b16 %v300
      %v777 = vunpack.c.l.b16 %v301
      %v778 = vunpack.c.l.b16 %v302
      %v779 = vunpack.c.l.b16 %v303
      %v780 = vunpack.c.l.b16 %v304
      %v781 = vunpack.c.l.b16 %v305
      %v782 = vunpack.c.l.b16 %v306
      %v783 = vunpack.c.l.b16 %v307
      %v784 = vunpack.c.l.b16 %v308
      %v785 = vunpack.c.l.b16 %v309
      %v786 = vunpack.c.l.b16 %v310
      %v787 = vunpack.c.l.b16 %v311
      %v788 = vunpack.c.l.b16 %v312
      %v789 = vunpack.c.l.b16 %v313
      %v790 = vunpack.c.l.b16 %v314
      %v791 = vunpack.c.l.b16 %v315
      %v792 = vunpack.c.l.b16 %v316
      %v793 = vunpack.c.l.b16 %v317
      %v794 = vunpack.c.l.b16 %v318
      %v795 = vunpack.c.l.b16 %v319
      %v796 = vunpack.c.l.b16 %v320
      %v797 = vunpack.c.l.b16 %v321
      %v798 = vunpack.c.l.b16 %v322
      %v799 = vunpack.c.l.b16 %v323
      %v800 = vunpack.c.l.b16 %v324
      %v801 = vunpack.c.l.b16 %v325
      %v802 = vunpack.c.l.b16 %v326
      %v803 = vunpack.c.l.b16 %v327
      %v804 = vunpack.c.l.b16 %v328
      %v805 = vunpack.c.l.b16 %v329
      %v806 = vunpack.c.l.b16 %v330
      %v807 = vunpack.c.l.b16 %v331
      %v808 = vunpack.c.l.b16 %v332
      %v809 = vunpack.c.l.b16 %v333
      %v810 = vunpack.c.l.b16 %v334
      %v811 = vunpack.c.l.b16 %v335
      %v812 = vunpack.c.l.b16 %v336
      %v813 = vunpack.c.l.b16 %v337
      %v814 = vunpack.c.l.b16 %v338
      %v815 = vunpack.c.l.b16 %v339
      %v816 = vunpack.c.l.b16 %v340
      %v817 = vunpack.c.l.b16 %v341
      %v818 = vunpack.c.l.b16 %v342
      %v819 = vunpack.c.l.b16 %v343
      %v820 = vunpack.c.l.b16 %v344
      %v821 = vunpack.c.l.b16 %v345
      %v822 = vunpack.c.l.b16 %v346
      %v823 = vunpack.c.l.b16 %v347
      %v824 = vunpack.c.l.b16 %v348
      %v825 = vunpack.c.l.b16 %v349
      %v826 = vunpack.c.l.b16 %v350
      %v827 = vunpack.c.l.b16 %v351
      %v828 = vunpack.c.l.b16 %v352
      %v829 = vunpack.c.l.b16 %v353
      %v830 = vunpack.c.l.b16 %v354
      %v831 = vunpack.c.l.b16 %v355
      %v832 = vunpack.c.l.b16 %v356
      %v833 = vunpack.c.l.b16 %v357
      %v834 = vunpack.c.l.b16 %v358
      %v835 = vunpack.c.l.b16 %v359
      %v836 = vunpack.c.l.b16 %v360
      %v837 = vpack.c.b16 %v694, %v693
      %v838 = vpack.c.b16 %v696, %v695
      %v839 = vpack.c.b16 %v698, %v697
      %v840 = vpack.c.b16 %v700, %v699
      %v841 = vpack.c.b16 %v702, %v701
      %v842 = vpack.c.b16 %v704, %v703
      %v843 = vpack.c.b16 %v706, %v705
      %v844 = vpack.c.b16 %v708, %v707
      %v845 = vpack.c.b16 %v710, %v709
      %v846 = vpack.c.b16 %v712, %v711
      %v847 = vpack.c.b16 %v714, %v713
      %v848 = vpack.c.b16 %v716, %v715
      %v849 = vpack.c.b16 %v718, %v717
      %v850 = vpack.c.b16 %v720, %v719
      %v851 = vpack.c.b16 %v722, %v721
      %v852 = vpack.c.b16 %v724, %v723
      %v853 = vpack.c.b16 %v726, %v725
      %v854 = vpack.c.b16 %v728, %v727
      %v855 = vpack.c.b16 %v730, %v729
      %v856 = vpack.c.b16 %v732, %v731
      %v857 = vpack.c.b16 %v734, %v733
      %v858 = vpack.c.b16 %v736, %v735
      %v859 = vpack.c.b16 %v738, %v737
      %v860 = vpack.c.b16 %v740, %v739
      %v861 = vpack.c.b16 %v742, %v741
      %v862 = vpack.c.b16 %v744, %v743
      %v863 = vpack.c.b16 %v746, %v745
      %v864 = vpack.c.b16 %v748, %v747
      %v865 = vpack.c.b16 %v750, %v749
      %v866 = vpack.c.b16 %v752, %v751
      %v867 = vpack.c.b16 %v754, %v753
      %v868 = vpack.c.b16 %v756, %v755
      %v869 = vpack.c.b16 %v758, %v757
      %v870 = vpack.c.b16 %v760, %v759
      %v871 = vpack.c.b16 %v762, %v761
      %v872 = vpack.c.b16 %v764, %v763
      %v873 = vpack.c.b16 %v766, %v765
      %v874 = vpack.c.b16 %v768, %v767
      %v875 = vpack.c.b16 %v770, %v769
      %v876 = vpack.c.b16 %v772, %v771
      %v877 = vpack.c.b16 %v774, %v773
      %v878 = vpack.c.b16 %v776, %v775
      %v879 = vpack.c.b16 %v778, %v777
      %v880 = vpack.c.b16 %v780, %v779
      %v881 = vpack.c.b16 %v782, %v781
      %v882 = vpack.c.b16 %v784, %v783
      %v883 = vpack.c.b16 %v786, %v785
      %v884 = vpack.c.b16 %v788, %v787
      %v885 = vpack.c.b16 %v790, %v789
      %v886 = vpack.c.b16 %v792, %v791
      %v887 = vpack.c.b16 %v794, %v793
      %v888 = vpack.c.b16 %v796, %v795
      %v889 = vpack.c.b16 %v798, %v797
      %v890 = vpack.c.b16 %v800, %v799
      %v891 = vpack.c.b16 %v802, %v801
      %v892 = vpack.c.b16 %v804, %v803
      %v893 = vpack.c.b16 %v806, %v805
      %v894 = vpack.c.b16 %v808, %v807
      %v895 = vpack.c.b16 %v810, %v809
      %v896 = vpack.c.b16 %v812, %v811
      %v897 = vpack.c.b16 %v814, %v813
      %v898 = vpack.c.b16 %v816, %v815
      %v899 = vpack.c.b16 %v818, %v817
      %v900 = vpack.c.b16 %v820, %v819
      %v901 = vpack.c.b16 %v822, %v821
      %v902 = vpack.c.b16 %v824, %v823
      %v903 = vpack.c.b16 %v826, %v825
      %v904 = vpack.c.b16 %v828, %v827
      %v905 = vpack.c.b16 %v830, %v829
      %v906 = vpack.c.b16 %v832, %v831
      %v907 = vpack.c.b16 %v834, %v833
      %v908 = vpack.c.b16 %v836, %v835
      %981 = vmatpush.bf16.msra.mxu0 %v844
      %982 = vmatpush.bf16.msra.mxu0 %v843
      %983 = vmatpush.bf16.msra.mxu0 %v842
      %984 = vmatpush.bf16.msra.mxu0 %v841
      %985 = vmatpush.bf16.msra.mxu0 %v840
      %986 = vmatpush.bf16.msra.mxu0 %v839
      %987 = vmatpush.bf16.msra.mxu0 %v838
      %988 = vmatpush.bf16.msra.mxu0 %v837
      %989 = vmatmul.bf16.gmra.mxu0 %v477
      %v990 = vpop.f32.mrf.mxu0
      %v991 = vadd.f32 %v363, %v990
      %v992 = vpop.f32.mrf.mxu0
      %v993 = vadd.f32 %v363, %v992
      %994 = vmatmul.bf16.gmra.mxu0 %v486
      %v995 = vpop.f32.mrf.mxu0
      %v996 = vadd.f32 %v363, %v995
      %v997 = vpop.f32.mrf.mxu0
      %v998 = vadd.f32 %v363, %v997
      %999 = vmatmul.bf16.gmra.mxu0 %v495
      %v1000 = vpop.f32.mrf.mxu0
      %v1001 = vadd.f32 %v363, %v1000
      %v1002 = vpop.f32.mrf.mxu0
      %v1003 = vadd.f32 %v363, %v1002
      %1004 = vmatmul.bf16.gmra.mxu0 %v504
      %v1005 = vpop.f32.mrf.mxu0
      %v1006 = vadd.f32 %v363, %v1005
      %v1007 = vpop.f32.mrf.mxu0
      %v1008 = vadd.f32 %v363, %v1007
      %1009 = vdwg.mxu0
      %1010 = vmatpush.bf16.msra.mxu0 %v852
      %1011 = vmatpush.bf16.msra.mxu0 %v851
      %1012 = vmatpush.bf16.msra.mxu0 %v850
      %1013 = vmatpush.bf16.msra.mxu0 %v849
      %1014 = vmatpush.bf16.msra.mxu0 %v848
      %1015 = vmatpush.bf16.msra.mxu0 %v847
      %1016 = vmatpush.bf16.msra.mxu0 %v846
      %1017 = vmatpush.bf16.msra.mxu0 %v845
      %1018 = vmatmul.bf16.gmra.mxu0 %v478
      %v1019 = vpop.f32.mrf.mxu0
      %v1020 = vadd.f32 %v991, %v1019
      %v1021 = vpop.f32.mrf.mxu0
      %v1022 = vadd.f32 %v993, %v1021
      %1023 = vmatmul.bf16.gmra.mxu0 %v487
      %v1024 = vpop.f32.mrf.mxu0
      %v1025 = vadd.f32 %v996, %v1024
      %v1026 = vpop.f32.mrf.mxu0
      %v1027 = vadd.f32 %v998, %v1026
      %1028 = vmatmul.bf16.gmra.mxu0 %v496
      %v1029 = vpop.f32.mrf.mxu0
      %v1030 = vadd.f32 %v1001, %v1029
      %v1031 = vpop.f32.mrf.mxu0
      %v1032 = vadd.f32 %v1003, %v1031
      %1033 = vmatmul.bf16.gmra.mxu0 %v505
      %v1034 = vpop.f32.mrf.mxu0
      %v1035 = vadd.f32 %v1006, %v1034
      %v1036 = vpop.f32.mrf.mxu0
      %v1037 = vadd.f32 %v1008, %v1036
      %1038 = vdwg.mxu0
      %1039 = vmatpush.bf16.msra.mxu0 %v860
      %1040 = vmatpush.bf16.msra.mxu0 %v859
      %1041 = vmatpush.bf16.msra.mxu0 %v858
      %1042 = vmatpush.bf16.msra.mxu0 %v857
      %1043 = vmatpush.bf16.msra.mxu0 %v856
      %1044 = vmatpush.bf16.msra.mxu0 %v855
      %1045 = vmatpush.bf16.msra.mxu0 %v854
      %1046 = vmatpush.bf16.msra.mxu0 %v853
      %1047 = vmatmul.bf16.gmra.mxu0 %v479
      %v1048 = vpop.f32.mrf.mxu0
      %v1049 = vadd.f32 %v1020, %v1048
      %v1050 = vpop.f32.mrf.mxu0
      %v1051 = vadd.f32 %v1022, %v1050
      %1052 = vmatmul.bf16.gmra.mxu0 %v488
      %v1053 = vpop.f32.mrf.mxu0
      %v1054 = vadd.f32 %v1025, %v1053
      %v1055 = vpop.f32.mrf.mxu0
      %v1056 = vadd.f32 %v1027, %v1055
      %1057 = vmatmul.bf16.gmra.mxu0 %v497
      %v1058 = vpop.f32.mrf.mxu0
      %v1059 = vadd.f32 %v1030, %v1058
      %v1060 = vpop.f32.mrf.mxu0
      %v1061 = vadd.f32 %v1032, %v1060
      %1062 = vmatmul.bf16.gmra.mxu0 %v506
      %v1063 = vpop.f32.mrf.mxu0
      %v1064 = vadd.f32 %v1035, %v1063
      %v1065 = vpop.f32.mrf.mxu0
      %v1066 = vadd.f32 %v1037, %v1065
      %1067 = vdwg.mxu0
      %1068 = vmatpush.bf16.msra.mxu0 %v868
      %1069 = vmatpush.bf16.msra.mxu0 %v867
      %1070 = vmatpush.bf16.msra.mxu0 %v866
      %1071 = vmatpush.bf16.msra.mxu0 %v865
      %1072 = vmatpush.bf16.msra.mxu0 %v864
      %1073 = vmatpush.bf16.msra.mxu0 %v863
      %1074 = vmatpush.bf16.msra.mxu0 %v862
      %1075 = vmatpush.bf16.msra.mxu0 %v861
      %1076 = vmatmul.bf16.gmra.mxu0 %v480
      %v1077 = vpop.f32.mrf.mxu0
      %v1078 = vadd.f32 %v1049, %v1077
      %v1079 = vpop.f32.mrf.mxu0
      %v1080 = vadd.f32 %v1051, %v1079
      %1081 = vmatmul.bf16.gmra.mxu0 %v489
      %v1082 = vpop.f32.mrf.mxu0
      %v1083 = vadd.f32 %v1054, %v1082
      %v1084 = vpop.f32.mrf.mxu0
      %v1085 = vadd.f32 %v1056, %v1084
      %1086 = vmatmul.bf16.gmra.mxu0 %v498
      %v1087 = vpop.f32.mrf.mxu0
      %v1088 = vadd.f32 %v1059, %v1087
      %v1089 = vpop.f32.mrf.mxu0
      %v1090 = vadd.f32 %v1061, %v1089
      %1091 = vmatmul.bf16.gmra.mxu0 %v507
      %v1092 = vpop.f32.mrf.mxu0
      %v1093 = vadd.f32 %v1064, %v1092
      %v1094 = vpop.f32.mrf.mxu0
      %v1095 = vadd.f32 %v1066, %v1094
      %1096 = vdwg.mxu0
      %1097 = vmatpush.bf16.msra.mxu0 %v876
      %1098 = vmatpush.bf16.msra.mxu0 %v875
      %1099 = vmatpush.bf16.msra.mxu0 %v874
      %1100 = vmatpush.bf16.msra.mxu0 %v873
      %1101 = vmatpush.bf16.msra.mxu0 %v872
      %1102 = vmatpush.bf16.msra.mxu0 %v871
      %1103 = vmatpush.bf16.msra.mxu0 %v870
      %1104 = vmatpush.bf16.msra.mxu0 %v869
      %1105 = vmatmul.bf16.gmra.mxu0 %v481
      %v1106 = vpop.f32.mrf.mxu0
      %v1107 = vadd.f32 %v1078, %v1106
      %v1108 = vpop.f32.mrf.mxu0
      %v1109 = vadd.f32 %v1080, %v1108
      %1110 = vmatmul.bf16.gmra.mxu0 %v490
      %v1111 = vpop.f32.mrf.mxu0
      %v1112 = vadd.f32 %v1083, %v1111
      %v1113 = vpop.f32.mrf.mxu0
      %v1114 = vadd.f32 %v1085, %v1113
      %1115 = vmatmul.bf16.gmra.mxu0 %v499
      %v1116 = vpop.f32.mrf.mxu0
      %v1117 = vadd.f32 %v1088, %v1116
      %v1118 = vpop.f32.mrf.mxu0
      %v1119 = vadd.f32 %v1090, %v1118
      %1120 = vmatmul.bf16.gmra.mxu0 %v508
      %v1121 = vpop.f32.mrf.mxu0
      %v1122 = vadd.f32 %v1093, %v1121
      %v1123 = vpop.f32.mrf.mxu0
      %v1124 = vadd.f32 %v1095, %v1123
      %1125 = vdwg.mxu0
      %1126 = vmatpush.bf16.msra.mxu0 %v884
      %1127 = vmatpush.bf16.msra.mxu0 %v883
      %1128 = vmatpush.bf16.msra.mxu0 %v882
      %1129 = vmatpush.bf16.msra.mxu0 %v881
      %1130 = vmatpush.bf16.msra.mxu0 %v880
      %1131 = vmatpush.bf16.msra.mxu0 %v879
      %1132 = vmatpush.bf16.msra.mxu0 %v878
      %1133 = vmatpush.bf16.msra.mxu0 %v877
      %1134 = vmatmul.bf16.gmra.mxu0 %v482
      %v1135 = vpop.f32.mrf.mxu0
      %v1136 = vadd.f32 %v1107, %v1135
      %v1137 = vpop.f32.mrf.mxu0
      %v1138 = vadd.f32 %v1109, %v1137
      %1139 = vmatmul.bf16.gmra.mxu0 %v491
      %v1140 = vpop.f32.mrf.mxu0
      %v1141 = vadd.f32 %v1112, %v1140
      %v1142 = vpop.f32.mrf.mxu0
      %v1143 = vadd.f32 %v1114, %v1142
      %1144 = vmatmul.bf16.gmra.mxu0 %v500
      %v1145 = vpop.f32.mrf.mxu0
      %v1146 = vadd.f32 %v1117, %v1145
      %v1147 = vpop.f32.mrf.mxu0
      %v1148 = vadd.f32 %v1119, %v1147
      %1149 = vmatmul.bf16.gmra.mxu0 %v509
      %v1150 = vpop.f32.mrf.mxu0
      %v1151 = vadd.f32 %v1122, %v1150
      %v1152 = vpop.f32.mrf.mxu0
      %v1153 = vadd.f32 %v1124, %v1152
      %1154 = vdwg.mxu0
      %1155 = vmatpush.bf16.msra.mxu0 %v892
      %1156 = vmatpush.bf16.msra.mxu0 %v891
      %1157 = vmatpush.bf16.msra.mxu0 %v890
      %1158 = vmatpush.bf16.msra.mxu0 %v889
      %1159 = vmatpush.bf16.msra.mxu0 %v888
      %1160 = vmatpush.bf16.msra.mxu0 %v887
      %1161 = vmatpush.bf16.msra.mxu0 %v886
      %1162 = vmatpush.bf16.msra.mxu0 %v885
      %1163 = vmatmul.bf16.gmra.mxu0 %v483
      %v1164 = vpop.f32.mrf.mxu0
      %v1165 = vadd.f32 %v1136, %v1164
      %v1166 = vpop.f32.mrf.mxu0
      %v1167 = vadd.f32 %v1138, %v1166
      %1168 = vmatmul.bf16.gmra.mxu0 %v492
      %v1169 = vpop.f32.mrf.mxu0
      %v1170 = vadd.f32 %v1141, %v1169
      %v1171 = vpop.f32.mrf.mxu0
      %v1172 = vadd.f32 %v1143, %v1171
      %1173 = vmatmul.bf16.gmra.mxu0 %v501
      %v1174 = vpop.f32.mrf.mxu0
      %v1175 = vadd.f32 %v1146, %v1174
      %v1176 = vpop.f32.mrf.mxu0
      %v1177 = vadd.f32 %v1148, %v1176
      %1178 = vmatmul.bf16.gmra.mxu0 %v510
      %v1179 = vpop.f32.mrf.mxu0
      %v1180 = vadd.f32 %v1151, %v1179
      %v1181 = vpop.f32.mrf.mxu0
      %v1182 = vadd.f32 %v1153, %v1181
      %1183 = vdwg.mxu0
      %1184 = vmatpush.bf16.msra.mxu0 %v900
      %1185 = vmatpush.bf16.msra.mxu0 %v899
      %1186 = vmatpush.bf16.msra.mxu0 %v898
      %1187 = vmatpush.bf16.msra.mxu0 %v897
      %1188 = vmatpush.bf16.msra.mxu0 %v896
      %1189 = vmatpush.bf16.msra.mxu0 %v895
      %1190 = vmatpush.bf16.msra.mxu0 %v894
      %1191 = vmatpush.bf16.msra.mxu0 %v893
      %1192 = vmatmul.bf16.gmra.mxu0 %v484
      %v1193 = vpop.f32.mrf.mxu0
      %v1194 = vadd.f32 %v1165, %v1193
      %v1195 = vpop.f32.mrf.mxu0
      %v1196 = vadd.f32 %v1167, %v1195
      %1197 = vmatmul.bf16.gmra.mxu0 %v493
      %v1198 = vpop.f32.mrf.mxu0
      %v1199 = vadd.f32 %v1170, %v1198
      %v1200 = vpop.f32.mrf.mxu0
      %v1201 = vadd.f32 %v1172, %v1200
      %1202 = vmatmul.bf16.gmra.mxu0 %v502
      %v1203 = vpop.f32.mrf.mxu0
      %v1204 = vadd.f32 %v1175, %v1203
      %v1205 = vpop.f32.mrf.mxu0
      %v1206 = vadd.f32 %v1177, %v1205
      %1207 = vmatmul.bf16.gmra.mxu0 %v511
      %v1208 = vpop.f32.mrf.mxu0
      %v1209 = vadd.f32 %v1180, %v1208
      %v1210 = vpop.f32.mrf.mxu0
      %v1211 = vadd.f32 %v1182, %v1210
      %1212 = vdwg.mxu0
      %1213 = vmatpush.bf16.msra.mxu0 %v908
      %1214 = vmatpush.bf16.msra.mxu0 %v907
      %1215 = vmatpush.bf16.msra.mxu0 %v906
      %1216 = vmatpush.bf16.msra.mxu0 %v905
      %1217 = vmatpush.bf16.msra.mxu0 %v904
      %1218 = vmatpush.bf16.msra.mxu0 %v903
      %1219 = vmatpush.bf16.msra.mxu0 %v902
      %1220 = vmatpush.bf16.msra.mxu0 %v901
      %1221 = vmatmul.bf16.gmra.mxu0 %v485
      %v1222 = vpop.f32.mrf.mxu0
      %v1223 = vadd.f32 %v1194, %v1222
      %v1224 = vpop.f32.mrf.mxu0
      %v1225 = vadd.f32 %v1196, %v1224
      %1226 = vmatmul.bf16.gmra.mxu0 %v494
      %v1227 = vpop.f32.mrf.mxu0
      %v1228 = vadd.f32 %v1199, %v1227
      %v1229 = vpop.f32.mrf.mxu0
      %v1230 = vadd.f32 %v1201, %v1229
      %1231 = vmatmul.bf16.gmra.mxu0 %v503
      %v1232 = vpop.f32.mrf.mxu0
      %v1233 = vadd.f32 %v1204, %v1232
      %v1234 = vpop.f32.mrf.mxu0
      %v1235 = vadd.f32 %v1206, %v1234
      %1236 = vmatmul.bf16.gmra.mxu0 %v512
      %v1237 = vpop.f32.mrf.mxu0
      %v1238 = vadd.f32 %v1209, %v1237
      %v1239 = vpop.f32.mrf.mxu0
      %v1240 = vadd.f32 %v1211, %v1239
      %1241 = vdwg.mxu0
      %v1242 = vmax.f32 %v1223, 0.0
      %v1243 = vmax.f32 %v1225, 0.0
      %v1244 = vmax.f32 %v1228, 0.0
      %v1245 = vmax.f32 %v1230, 0.0
      %v1246 = vmax.f32 %v1233, 0.0
      %v1247 = vmax.f32 %v1235, 0.0
      %v1248 = vmax.f32 %v1238, 0.0
      %v1249 = vmax.f32 %v1240, 0.0
      %1250 = vst [vmem:[%s175] sm:$0xff] %v1242
      %1251 = vst [vmem:[%s175 + $0x8] sm:$0xff] %v1243
      %1252 = vst [vmem:[%s175 + $0x10] sm:$0xff] %v1244
      %1253 = vst [vmem:[%s175 + $0x18] sm:$0xff] %v1245
      %1254 = vst [vmem:[%s175 + $0x20] sm:$0xff] %v1246
      %1255 = vst [vmem:[%s175 + $0x28] sm:$0xff] %v1247
      %1256 = vst [vmem:[%s175 + $0x30] sm:$0xff] %v1248
      %1257 = vst [vmem:[%s175 + $0x38] sm:$0xff] %v1249
      %s1258 = smul.u32 8, %s14
      %p1259 = scmp.lt.s32.totalorder %s1258, 15
      %s1260 = scalar_select %p1259, %s1258, 15
      %s1261 = smul.addr %s1260, 8
      %s1262 = scalar_lea.vmem %s3, %s1261
      // Predicated region
      $region33: #{inception_b_forward.8} parent=31 // pred_check
        %p1263 = pneg %p100
      $region34: #{inception_b_forward.8} parent=31 // pred_check_branch
        %1265 = sbr.rel (%p1263) target = $region36
      $region35: #{inception_b_forward.8} parent=31 // pred_region
        %s1266 = smul.u32 8, %s14
      $region36: #{inception_b_forward.8} parent=31 // pred_fallthru
        _
    $region32: #{inception_b_forward.8} parent=5 // pred_fallthru
      _
    %p1267 = scmp.le.s32.totalorder 2, %s9
    // Predicated region
    $region37: #{inception_b_forward.8} parent=5 // pred_check
      %p1268 = pneg %p1267
    $region38: #{inception_b_forward.8} parent=5 // pred_check_branch
      %1270 = sbr.rel (%p1268) target = $region40
    $region39: #{inception_b_forward.8} parent=5 // pred_region
      %s1271 = ssub.s32 %s9, 2
      // Predicated region
      $region41: #{inception_b_forward.8} parent=39 // pred_check
        %p1272 = pneg %p106
      $region42: #{inception_b_forward.8} parent=39 // pred_check_branch
        %1274 = sbr.rel (%p1272) target = $region44
      $region43: #{inception_b_forward.8} parent=39 // pred_region
        %s1275 = smul.u32 8, %s15
        %p1276 = scmp.lt.s32.totalorder %s1275, 15
        %s1277 = scalar_select %p1276, %s1275, 15
        %s1278 = smul.addr %s1277, 8
        %s1279 = scalar_lea.vmem %s3, %s1278
      $region44: #{inception_b_forward.8} parent=39 // pred_fallthru
        _
    $region40: #{inception_b_forward.8} parent=5 // pred_fallthru
      _
  $region6: #{inception_b_forward.8} parent=0 // loop_footer
    %s13 = sadd.s32 1, %s9
  $region7: #{inception_b_forward.8} parent=0 // loop_footer_branch
    %8 = sbr.rel target = $region3
  $region8: #{inception_b_forward.8} parent=0 // loop_exit
    _

// kernel: inception_b_forward.7
$region0: #{inception_b_forward.7}
  #allocation0 [shape = 'u32[]', space=smem, size = 0x4, offset = 0x4, fixed_abs, tag = 'smem constant byte address 0x4 - core index']
  #allocation1 [shape = 'u32[72,128]{1,0:T(1,128)}', space=vmem, size = 0x9000, scoped, tag = 'internal scratch']
  #allocation2 [shape = 'f32[256,128]{1,0:T(8,128)}', space=vmem, size = 0x20000, scoped, tag = 'scratch operand']
  %s0 = inlined_call_operand.vmem [shape: bf16[2,18,18,128], index: 0, kind: input, shape index: {}]
  %s1 = inlined_call_operand.vmem [shape: bf16[9,128,128], index: 1, kind: input, shape index: {}]
  %s2 = inlined_call_operand.vmem [shape: f32[1,128], index: 2, kind: input, shape index: {}]
  %s3 = inlined_call_operand.vmem [shape: bf16[2,256,128], index: 3, kind: output, shape index: {}]
  %s4 = sld [smem:[#allocation0]]
  $region45: #{inception_b_forward.7} parent=0
    _
  %s6 = ssub.s32 1, %s4
  %s7 = scalar_select 0, %s6, %s4
  loop: start=0, step=1, limit=4
  $region2: #{inception_b_forward.7} parent=0 // loop_pre_header
    _
  $region3: #{inception_b_forward.7} parent=0 // loop_header
    %s9 = sphi 0, %s13
    %p10 = scmp.ge.s32.totalorder %s9, 4
    %s19 = sphi 0, %s21
    %s22 = sphi 0, %s19
    %s23 = sphi 0, %s22
    %s39 = sphi 0, %s23
    %s43 = sphi 0, %s43
    %s45 = sphi 0, %s43
    %s46 = sphi 0, %s45
    %s60 = sphi 0, %s46
    %s64 = sphi 0, %s64
    %s66 = sphi 0, %s64
    %s67 = sphi 0, %s66
    %s81 = sphi 0, %s67
    %s87 = sphi 0, %s89
    %s90 = sphi 0, %s87
    %s91 = sphi 0, %s90
    %s107 = sphi 0, %s91
  $region4: #{inception_b_forward.7} parent=0 // loop_header_branch
    %12 = sbr.rel (%p10) target = $region8
  $region5: #{inception_b_forward.7} parent=0 // loop_body
    %s14 = ssub.s32 %s9, 1
    %s15 = ssub.s32 %s9, 2
    %s16 = sadd.s32 %s9, 1
    %s17 = ssub.s32 %s9, %s16
    %p18 = scmp.eq.s32.totalorder %s17, 0
    %s20 = sadd.s32 %s19, 1
    %s21 = scalar_select %p18, %s19, %s20
    %p24 = pneg %p18
    %p25 = scmp.eq.s32.totalorder %s9, 1
    %p26 = por %p24, %p25
    %p27 = scmp.ne.s32.totalorder %s19, %s22
    %p28 = scmp.eq.s32.totalorder %s9, 0
    %p29 = por %p27, %p28
    %p30 = scmp.ne.s32.totalorder %s19, %s22
    %p31 = scmp.eq.s32.totalorder %s14, 1
    %p32 = por %p30, %p31
    %p33 = scmp.ne.s32.totalorder %s22, %s23
    %p34 = scmp.eq.s32.totalorder %s14, 0
    %p35 = por %p33, %p34
    %p36 = scmp.ne.s32.totalorder %s22, %s23
    %p37 = scmp.eq.s32.totalorder %s15, 1
    %p38 = por %p36, %p37
    %p40 = scmp.ne.s32.totalorder %s23, %s39
    %p41 = scmp.eq.s32.totalorder %s15, 0
    %p42 = por %p40, %p41
    %s44 = sadd.s32 %s43, 1
    %p47 = scmp.eq.s32.totalorder %s9, 1
    %p48 = scmp.ne.s32.totalorder %s43, %s45
    %p49 = scmp.eq.s32.totalorder %s9, 0
    %p50 = por %p48, %p49
    %p51 = scmp.ne.s32.totalorder %s43, %s45
    %p52 = scmp.eq.s32.totalorder %s14, 1
    %p53 = por %p51, %p52
    %p54 = scmp.ne.s32.totalorder %s45, %s46
    %p55 = scmp.eq.s32.totalorder %s14, 0
    %p56 = por %p54, %p55
    %p57 = scmp.ne.s32.totalorder %s45, %s46
    %p58 = scmp.eq.s32.totalorder %s15, 1
    %p59 = por %p57, %p58
    %p61 = scmp.ne.s32.totalorder %s46, %s60
    %p62 = scmp.eq.s32.totalorder %s15, 0
    %p63 = por %p61, %p62
    %s65 = sadd.s32 %s64, 1
    %p68 = scmp.eq.s32.totalorder %s9, 1
    %p69 = scmp.ne.s32.totalorder %s64, %s66
    %p70 = scmp.eq.s32.totalorder %s9, 0
    %p71 = por %p69, %p70
    %p72 = scmp.ne.s32.totalorder %s64, %s66
    %p73 = scmp.eq.s32.totalorder %s14, 1
    %p74 = por %p72, %p73
    %p75 = scmp.ne.s32.totalorder %s66, %s67
    %p76 = scmp.eq.s32.totalorder %s14, 0
    %p77 = por %p75, %p76
    %p78 = scmp.ne.s32.totalorder %s66, %s67
    %p79 = scmp.eq.s32.totalorder %s15, 1
    %p80 = por %p78, %p79
    %p82 = scmp.ne.s32.totalorder %s67, %s81
    %p83 = scmp.eq.s32.totalorder %s15, 0
    %p84 = por %p82, %p83
    %s85 = ssub.s32 %s9, %s16
    %p86 = scmp.eq.s32.totalorder %s85, 0
    %s88 = sadd.s32 %s87, 1
    %s89 = scalar_select %p86, %s87, %s88
    %p92 = pneg %p86
    %p93 = scmp.eq.s32.totalorder %s9, 1
    %p94 = por %p92, %p93
    %p95 = scmp.ne.s32.totalorder %s87, %s90
    %p96 = scmp.eq.s32.totalorder %s9, 0
    %p97 = por %p95, %p96
    %p98 = scmp.ne.s32.totalorder %s87, %s90
    %p99 = scmp.eq.s32.totalorder %s14, 1
    %p100 = por %p98, %p99
    %p101 = scmp.ne.s32.totalorder %s90, %s91
    %p102 = scmp.eq.s32.totalorder %s14, 0
    %p103 = por %p101, %p102
    %p104 = scmp.ne.s32.totalorder %s90, %s91
    %p105 = scmp.eq.s32.totalorder %s15, 1
    %p106 = por %p104, %p105
    %p108 = scmp.ne.s32.totalorder %s91, %s107
    %p109 = scmp.eq.s32.totalorder %s15, 0
    %p110 = por %p108, %p109
    %p111 = scmp.le.s32.totalorder 1, %s9
    %p112 = scmp.lt.s32.totalorder %s9, 3
    %p113 = pnand %p111, %p112
    %p114 = pneg %p113
    // Predicated region
    $region9: #{inception_b_forward.7} parent=5 // pred_check
      _
    $region10: #{inception_b_forward.7} parent=5 // pred_check_branch
      %116 = sbr.rel (%p113) target = $region12
    $region11: #{inception_b_forward.7} parent=5 // pred_region
      %s117 = ssub.s32 %s9, 1
      // Predicated region
      $region13: #{inception_b_forward.7} parent=11 // pred_check
        %p118 = pneg %p56
      $region14: #{inception_b_forward.7} parent=11 // pred_check_branch
        %120 = sbr.rel (%p118) target = $region16
      $region15: #{inception_b_forward.7} parent=11 // pred_region
        _
      $region16: #{inception_b_forward.7} parent=11 // pred_fallthru
        _
      // Predicated region
      $region17: #{inception_b_forward.7} parent=11 // pred_check
        %p121 = pneg %p77
      $region18: #{inception_b_forward.7} parent=11 // pred_check_branch
        %123 = sbr.rel (%p121) target = $region20
      $region19: #{inception_b_forward.7} parent=11 // pred_region
        _
      $region20: #{inception_b_forward.7} parent=11 // pred_fallthru
        _
    $region12: #{inception_b_forward.7} parent=5 // pred_fallthru
      _
    %p124 = scmp.lt.s32.totalorder %s9, 2
    // Predicated region
    $region21: #{inception_b_forward.7} parent=5 // pred_check
      %p125 = pneg %p124
    $region22: #{inception_b_forward.7} parent=5 // pred_check_branch
      %127 = sbr.rel (%p125) target = $region24
    $region23: #{inception_b_forward.7} parent=5 // pred_region
      // Predicated region
      $region25: #{inception_b_forward.7} parent=23 // pred_check
        %p128 = pneg %p29
      $region26: #{inception_b_forward.7} parent=23 // pred_check_branch
        %130 = sbr.rel (%p128) target = $region28
      $region27: #{inception_b_forward.7} parent=23 // pred_region
        %p131 = scmp.lt.s32.totalorder %s9, 1
        %s132 = scalar_select %p131, %s9, 1
        %s133 = smul.addr %s132, 54
        %s134 = smul.addr %s133, 4
        %s135 = scalar_lea.vmem %s0, %s134
      $region28: #{inception_b_forward.7} parent=23 // pred_fallthru
        _
    $region24: #{inception_b_forward.7} parent=5 // pred_fallthru
      _
    %p136 = scmp.le.s32.totalorder 1, %s9
    %p137 = scmp.lt.s32.totalorder %s9, 3
    %p138 = pnand %p136, %p137
    %p139 = pneg %p138
    // Predicated region
    $region29: #{inception_b_forward.7} parent=5 // pred_check
      _
    $region30: #{inception_b_forward.7} parent=5 // pred_check_branch
      %141 = sbr.rel (%p138) target = $region32
    $region31: #{inception_b_forward.7} parent=5 // pred_region
      %s142 = ssub.s32 %s9, 1
      %p143 = scmp.lt.s32.totalorder %s14, 1
      %s144 = scalar_select %p143, %s14, 1
      %s145 = smul.addr %s144, 54
      %s146 = smul.addr %s145, 4
      %s147 = scalar_lea.vmem %s0, %s146
      %p148 = pneg %p35
      %p149 = pneg %p32
      %p150 = pneg %p56
      %p151 = pneg %p53
      %p152 = pneg %p77
      %p153 = pneg %p74
      %p154 = pneg %p103
      %p155 = pneg %p100
      %p156 = scmp.lt.s32.totalorder %s14, 1
      %s157 = scalar_select %p156, %s14, 1
      %s158 = smul.addr %s157, 32
      %s159 = smul.addr %s158, 4
      %s160 = scalar_lea.vmem %s3, %s159
      %p161 = scmp.lt.s32.totalorder %s14, 1
      %s162 = scalar_select %p161, %s14, 1
      %s163 = smul.addr %s162, 54
      %s164 = smul.addr %s163, 4
      %s165 = scalar_lea.vmem %s0, %s164
      %p166 = scmp.lt.s32.totalorder %s14, 1
      %s167 = scalar_select %p166, %s14, 1
      %s168 = smul.addr %s167, 32
      %s169 = smul.addr %s168, 4
      %s170 = scalar_lea.vmem %s3, %s169
      %171 = vst [vmem:[#allocation2] sm:$0xff] 0.0
      %172 = vst [vmem:[#allocation2 + $0x8] sm:$0xff] 0.0
      %173 = vst [vmem:[#allocation2 + $0x10] sm:$0xff] 0.0
      %174 = vst [vmem:[#allocation2 + $0x18] sm:$0xff] 0.0
      %175 = vst [vmem:[#allocation2 + $0x20] sm:$0xff] 0.0
      %176 = vst [vmem:[#allocation2 + $0x28] sm:$0xff] 0.0
      %177 = vst [vmem:[#allocation2 + $0x30] sm:$0xff] 0.0
      %178 = vst [vmem:[#allocation2 + $0x38] sm:$0xff] 0.0
      %179 = vst [vmem:[#allocation2 + $0x40] sm:$0xff] 0.0
      %180 = vst [vmem:[#allocation2 + $0x48] sm:$0xff] 0.0
      %181 = vst [vmem:[#allocation2 + $0x50] sm:$0xff] 0.0
      %182 = vst [vmem:[#allocation2 + $0x58] sm:$0xff] 0.0
      %183 = vst [vmem:[#allocation2 + $0x60] sm:$0xff] 0.0
      %184 = vst [vmem:[#allocation2 + $0x68] sm:$0xff] 0.0
      %185 = vst [vmem:[#allocation2 + $0x70] sm:$0xff] 0.0
      %186 = vst [vmem:[#allocation2 + $0x78] sm:$0xff] 0.0
      %187 = vst [vmem:[#allocation2 + $0x80] sm:$0xff] 0.0
      %188 = vst [vmem:[#allocation2 + $0x88] sm:$0xff] 0.0
      %189 = vst [vmem:[#allocation2 + $0x90] sm:$0xff] 0.0
      %190 = vst [vmem:[#allocation2 + $0x98] sm:$0xff] 0.0
      %191 = vst [vmem:[#allocation2 + $0xa0] sm:$0xff] 0.0
      %192 = vst [vmem:[#allocation2 + $0xa8] sm:$0xff] 0.0
      %193 = vst [vmem:[#allocation2 + $0xb0] sm:$0xff] 0.0
      %194 = vst [vmem:[#allocation2 + $0xb8] sm:$0xff] 0.0
      %195 = vst [vmem:[#allocation2 + $0xc0] sm:$0xff] 0.0
      %196 = vst [vmem:[#allocation2 + $0xc8] sm:$0xff] 0.0
      %197 = vst [vmem:[#allocation2 + $0xd0] sm:$0xff] 0.0
      %198 = vst [vmem:[#allocation2 + $0xd8] sm:$0xff] 0.0
      %199 = vst [vmem:[#allocation2 + $0xe0] sm:$0xff] 0.0
      %200 = vst [vmem:[#allocation2 + $0xe8] sm:$0xff] 0.0
      %201 = vst [vmem:[#allocation2 + $0xf0] sm:$0xff] 0.0
      %202 = vst [vmem:[#allocation2 + $0xf8] sm:$0xff] 0.0
      %v203 = vld [vmem:[%s165] sm:$0xf]
      %v204 = vld [vmem:[%s165 + $0x4] sm:$0xf]
      %v205 = vld [vmem:[%s165 + $0xc] sm:$0xf]
      %v206 = vld [vmem:[%s165 + $0x10] sm:$0xf]
      %v207 = vld [vmem:[%s165 + $0x18] sm:$0xf]
      %v208 = vld [vmem:[%s165 + $0x1c] sm:$0xf]
      %v209 = vld [vmem:[%s165 + $0x24] sm:$0xf]
      %v210 = vld [vmem:[%s165 + $0x28] sm:$0xf]
      %v211 = vld [vmem:[%s165 + $0x30] sm:$0xf]
      %v212 = vld [vmem:[%s165 + $0x34] sm:$0xf]
      %v213 = vld [vmem:[%s165 + $0x3c] sm:$0xf]
      %v214 = vld [vmem:[%s165 + $0x40] sm:$0xf]
      %v215 = vld [vmem:[%s165 + $0x48] sm:$0xf]
      %v216 = vld [vmem:[%s165 + $0x4c] sm:$0xf]
      %v217 = vld [vmem:[%s165 + $0x54] sm:$0xf]
      %v218 = vld [vmem:[%s165 + $0x58] sm:$0xf]
      %v219 = vld [vmem:[%s165 + $0x60] sm:$0xf]
      %v220 = vld [vmem:[%s165 + $0x64] sm:$0xf]
      %v221 = vld [vmem:[%s165 + $0x6c] sm:$0xf]
      %v222 = vld [vmem:[%s165 + $0x70] sm:$0xf]
      %v223 = vld [vmem:[%s165 + $0x78] sm:$0xf]
      %v224 = vld [vmem:[%s165 + $0x7c] sm:$0xf]
      %v225 = vld [vmem:[%s165 + $0x84] sm:$0xf]
      %v226 = vld [vmem:[%s165 + $0x88] sm:$0xf]
      %v227 = vld [vmem:[%s165 + $0x90] sm:$0xf]
      %v228 = vld [vmem:[%s165 + $0x94] sm:$0xf]
      %v229 = vld [vmem:[%s165 + $0x9c] sm:$0xf]
      %v230 = vld [vmem:[%s165 + $0xa0] sm:$0xf]
      %v231 = vld [vmem:[%s165 + $0xa8] sm:$0xf]
      %v232 = vld [vmem:[%s165 + $0xac] sm:$0xf]
      %v233 = vld [vmem:[%s165 + $0xb4] sm:$0xf]
      %v234 = vld [vmem:[%s165 + $0xb8] sm:$0xf]
      %v235 = vld [vmem:[#allocation2] sm:$0xff]
      %v236 = vld [vmem:[#allocation2 + $0x8] sm:$0xff]
      %v237 = vld [vmem:[#allocation2 + $0x10] sm:$0xff]
      %v238 = vld [vmem:[#allocation2 + $0x18] sm:$0xff]
      %v239 = vld [vmem:[#allocation2 + $0x20] sm:$0xff]
      %v240 = vld [vmem:[#allocation2 + $0x28] sm:$0xff]
      %v241 = vld [vmem:[#allocation2 + $0x30] sm:$0xff]
      %v242 = vld [vmem:[#allocation2 + $0x38] sm:$0xff]
      %v243 = vld [vmem:[#allocation2 + $0x40] sm:$0xff]
      %v244 = vld [vmem:[#allocation2 + $0x48] sm:$0xff]
      %v245 = vld [vmem:[#allocation2 + $0x50] sm:$0xff]
      %v246 = vld [vmem:[#allocation2 + $0x58] sm:$0xff]
      %v247 = vld [vmem:[#allocation2 + $0x60] sm:$0xff]
      %v248 = vld [vmem:[#allocation2 + $0x68] sm:$0xff]
      %v249 = vld [vmem:[#allocation2 + $0x70] sm:$0xff]
      %v250 = vld [vmem:[#allocation2 + $0x78] sm:$0xff]
      %v251 = vld [vmem:[#allocation2 + $0x80] sm:$0xff]
      %v252 = vld [vmem:[#allocation2 + $0x88] sm:$0xff]
      %v253 = vld [vmem:[#allocation2 + $0x90] sm:$0xff]
      %v254 = vld [vmem:[#allocation2 + $0x98] sm:$0xff]
      %v255 = vld [vmem:[#allocation2 + $0xa0] sm:$0xff]
      %v256 = vld [vmem:[#allocation2 + $0xa8] sm:$0xff]
      %v257 = vld [vmem:[#allocation2 + $0xb0] sm:$0xff]
      %v258 = vld [vmem:[#allocation2 + $0xb8] sm:$0xff]
      %v259 = vld [vmem:[#allocation2 + $0xc0] sm:$0xff]
      %v260 = vld [vmem:[#allocation2 + $0xc8] sm:$0xff]
      %v261 = vld [vmem:[#allocation2 + $0xd0] sm:$0xff]
      %v262 = vld [vmem:[#allocation2 + $0xd8] sm:$0xff]
      %v263 = vld [vmem:[#allocation2 + $0xe0] sm:$0xff]
      %v264 = vld [vmem:[#allocation2 + $0xe8] sm:$0xff]
      %v265 = vld [vmem:[#allocation2 + $0xf0] sm:$0xff]
      %v266 = vld [vmem:[#allocation2 + $0xf8] sm:$0xff]
      %v267 = vld [vmem:[%s1] sm:$0xf]
      %v268 = vld [vmem:[%s1 + $0x4] sm:$0xf]
      %v269 = vld [vmem:[%s1 + $0x8] sm:$0xf]
      %v270 = vld [vmem:[%s1 + $0xc] sm:$0xf]
      %v271 = vld [vmem:[%s1 + $0x10] sm:$0xf]
      %v272 = vld [vmem:[%s1 + $0x14] sm:$0xf]
      %v273 = vld [vmem:[%s1 + $0x18] sm:$0xf]
      %v274 = vld [vmem:[%s1 + $0x1c] sm:$0xf]
      %v275 = vld [vmem:[%s1 + $0x20] sm:$0xf]
      %v276 = vld [vmem:[%s1 + $0x24] sm:$0xf]
      %v277 = vld [vmem:[%s1 + $0x28] sm:$0xf]
      %v278 = vld [vmem:[%s1 + $0x2c] sm:$0xf]
      %v279 = vld [vmem:[%s1 + $0x30] sm:$0xf]
      %v280 = vld [vmem:[%s1 + $0x34] sm:$0xf]
      %v281 = vld [vmem:[%s1 + $0x38] sm:$0xf]
      %v282 = vld [vmem:[%s1 + $0x3c] sm:$0xf]
      %v315 = vunpack.c.l.b16 %v203
      %v316 = vunpack.c.l.b16 %v204
      %v317 = vunpack.c.l.b16 %v205
      %v318 = vunpack.c.l.b16 %v206
      %v319 = vunpack.c.l.b16 %v207
      %v320 = vunpack.c.l.b16 %v208
      %v321 = vunpack.c.l.b16 %v209
      %v322 = vunpack.c.l.b16 %v210
      %v323 = vunpack.c.l.b16 %v211
      %v324 = vunpack.c.l.b16 %v212
      %v325 = vunpack.c.l.b16 %v213
      %v326 = vunpack.c.l.b16 %v214
      %v327 = vunpack.c.l.b16 %v215
      %v328 = vunpack.c.l.b16 %v216
      %v329 = vunpack.c.l.b16 %v217
      %v330 = vunpack.c.l.b16 %v218
      %v331 = vunpack.c.l.b16 %v219
      %v332 = vunpack.c.l.b16 %v220
      %v333 = vunpack.c.l.b16 %v221
      %v334 = vunpack.c.l.b16 %v222
      %v335 = vunpack.c.l.b16 %v223
      %v336 = vunpack.c.l.b16 %v224
      %v337 = vunpack.c.l.b16 %v225
      %v338 = vunpack.c.l.b16 %v226
      %v339 = vunpack.c.l.b16 %v227
      %v340 = vunpack.c.l.b16 %v228
      %v341 = vunpack.c.l.b16 %v229
      %v342 = vunpack.c.l.b16 %v230
      %v343 = vunpack.c.l.b16 %v231
      %v344 = vunpack.c.l.b16 %v232
      %v345 = vunpack.c.l.b16 %v233
      %v346 = vunpack.c.l.b16 %v234
      %v347 = vpack.c.b16 %v316, %v315
      %v348 = vpack.c.b16 %v318, %v317
      %v349 = vpack.c.b16 %v320, %v319
      %v350 = vpack.c.b16 %v322, %v321
      %v351 = vpack.c.b16 %v324, %v323
      %v352 = vpack.c.b16 %v326, %v325
      %v353 = vpack.c.b16 %v328, %v327
      %v354 = vpack.c.b16 %v330, %v329
      %v355 = vpack.c.b16 %v332, %v331
      %v356 = vpack.c.b16 %v334, %v333
      %v357 = vpack.c.b16 %v336, %v335
      %v358 = vpack.c.b16 %v338, %v337
      %v359 = vpack.c.b16 %v340, %v339
      %v360 = vpack.c.b16 %v342, %v341
      %v361 = vpack.c.b16 %v344, %v343
      %v362 = vpack.c.b16 %v346, %v345
      %v395 = vunpack.c.l.b16 %v267
      %v396 = vunpack.c.l.b16 %v268
      %v397 = vunpack.c.l.b16 %v269
      %v398 = vunpack.c.l.b16 %v270
      %v399 = vunpack.c.l.b16 %v271
      %v400 = vunpack.c.l.b16 %v272
      %v401 = vunpack.c.l.b16 %v273
      %v402 = vunpack.c.l.b16 %v274
      %v403 = vunpack.c.l.b16 %v275
      %v404 = vunpack.c.l.b16 %v276
      %v405 = vunpack.c.l.b16 %v277
      %v406 = vunpack.c.l.b16 %v278
      %v407 = vunpack.c.l.b16 %v279
      %v408 = vunpack.c.l.b16 %v280
      %v409 = vunpack.c.l.b16 %v281
      %v410 = vunpack.c.l.b16 %v282
      %v411 = vpack.c.b16 %v396, %v395
      %v412 = vpack.c.b16 %v398, %v397
      %v413 = vpack.c.b16 %v400, %v399
      %v414 = vpack.c.b16 %v402, %v401
      %v415 = vpack.c.b16 %v404, %v403
      %v416 = vpack.c.b16 %v406, %v405
      %v417 = vpack.c.b16 %v408, %v407
      %v418 = vpack.c.b16 %v410, %v409
      %427 = vmatpush.bf16.msra.mxu0 %v418
      %428 = vmatpush.bf16.msra.mxu0 %v417
      %429 = vmatpush.bf16.msra.mxu0 %v416
      %430 = vmatpush.bf16.msra.mxu0 %v415
      %431 = vmatpush.bf16.msra.mxu0 %v414
      %432 = vmatpush.bf16.msra.mxu0 %v413
      %433 = vmatpush.bf16.msra.mxu0 %v412
      %434 = vmatpush.bf16.msra.mxu0 %v411
      %435 = vmatmul.bf16.gmra.mxu0 %v347
      %v436 = vpop.f32.mrf.mxu0
      %v437 = vadd.f32 0.0, %v436
      %v438 = vpop.f32.mrf.mxu0
      %v439 = vadd.f32 0.0, %v438
      %440 = vmatmul.bf16.gmra.mxu0 %v348
      %v441 = vpop.f32.mrf.mxu0
      %v442 = vadd.f32 0.0, %v441
      %v443 = vpop.f32.mrf.mxu0
      %v444 = vadd.f32 0.0, %v443
      %445 = vmatmul.bf16.gmra.mxu0 %v349
      %v446 = vpop.f32.mrf.mxu0
      %v447 = vadd.f32 0.0, %v446
      %v448 = vpop.f32.mrf.mxu0
      %v449 = vadd.f32 0.0, %v448
      %450 = vmatmul.bf16.gmra.mxu0 %v350
      %v451 = vpop.f32.mrf.mxu0
      %v452 = vadd.f32 0.0, %v451
      %v453 = vpop.f32.mrf.mxu0
      %v454 = vadd.f32 0.0, %v453
      %455 = vmatmul.bf16.gmra.mxu0 %v351
      %v456 = vpop.f32.mrf.mxu0
      %v457 = vadd.f32 0.0, %v456
      %v458 = vpop.f32.mrf.mxu0
      %v459 = vadd.f32 0.0, %v458
      %460 = vmatmul.bf16.gmra.mxu0 %v352
      %v461 = vpop.f32.mrf.mxu0
      %v462 = vadd.f32 0.0, %v461
      %v463 = vpop.f32.mrf.mxu0
      %v464 = vadd.f32 0.0, %v463
      %465 = vmatmul.bf16.gmra.mxu0 %v353
      %v466 = vpop.f32.mrf.mxu0
      %v467 = vadd.f32 0.0, %v466
      %v468 = vpop.f32.mrf.mxu0
      %v469 = vadd.f32 0.0, %v468
      %470 = vmatmul.bf16.gmra.mxu0 %v354
      %v471 = vpop.f32.mrf.mxu0
      %v472 = vadd.f32 0.0, %v471
      %v473 = vpop.f32.mrf.mxu0
      %v474 = vadd.f32 0.0, %v473
      %475 = vmatmul.bf16.gmra.mxu0 %v355
      %v476 = vpop.f32.mrf.mxu0
      %v477 = vadd.f32 0.0, %v476
      %v478 = vpop.f32.mrf.mxu0
      %v479 = vadd.f32 0.0, %v478
      %480 = vmatmul.bf16.gmra.mxu0 %v356
      %v481 = vpop.f32.mrf.mxu0
      %v482 = vadd.f32 0.0, %v481
      %v483 = vpop.f32.mrf.mxu0
      %v484 = vadd.f32 0.0, %v483
      %485 = vmatmul.bf16.gmra.mxu0 %v357
      %v486 = vpop.f32.mrf.mxu0
      %v487 = vadd.f32 0.0, %v486
      %v488 = vpop.f32.mrf.mxu0
      %v489 = vadd.f32 0.0, %v488
      %490 = vmatmul.bf16.gmra.mxu0 %v358
      %v491 = vpop.f32.mrf.mxu0
      %v492 = vadd.f32 0.0, %v491
      %v493 = vpop.f32.mrf.mxu0
      %v494 = vadd.f32 0.0, %v493
      %495 = vmatmul.bf16.gmra.mxu0 %v359
      %v496 = vpop.f32.mrf.mxu0
      %v497 = vadd.f32 0.0, %v496
      %v498 = vpop.f32.mrf.mxu0
      %v499 = vadd.f32 0.0, %v498
      %500 = vmatmul.bf16.gmra.mxu0 %v360
      %v501 = vpop.f32.mrf.mxu0
      %v502 = vadd.f32 0.0, %v501
      %v503 = vpop.f32.mrf.mxu0
      %v504 = vadd.f32 0.0, %v503
      %505 = vmatmul.bf16.gmra.mxu0 %v361
      %v506 = vpop.f32.mrf.mxu0
      %v507 = vadd.f32 0.0, %v506
      %v508 = vpop.f32.mrf.mxu0
      %v509 = vadd.f32 0.0, %v508
      %510 = vmatmul.bf16.gmra.mxu0 %v362
      %v511 = vpop.f32.mrf.mxu0
      %v512 = vadd.f32 0.0, %v511
      %v513 = vpop.f32.mrf.mxu0
      %v514 = vadd.f32 0.0, %v513
      %515 = vdwg.mxu0
      %v516 = vadd.f32 %v235, %v437
      %v517 = vadd.f32 %v236, %v439
      %v518 = vadd.f32 %v237, %v442
      %v519 = vadd.f32 %v238, %v444
      %v520 = vadd.f32 %v239, %v447
      %v521 = vadd.f32 %v240, %v449
      %v522 = vadd.f32 %v241, %v452
      %v523 = vadd.f32 %v242, %v454
      %v524 = vadd.f32 %v243, %v457
      %v525 = vadd.f32 %v244, %v459
      %v526 = vadd.f32 %v245, %v462
      %v527 = vadd.f32 %v246, %v464
      %v528 = vadd.f32 %v247, %v467
      %v529 = vadd.f32 %v248, %v469
      %v530 = vadd.f32 %v249, %v472
      %v531 = vadd.f32 %v250, %v474
      %v532 = vadd.f32 %v251, %v477
      %v533 = vadd.f32 %v252, %v479
      %v534 = vadd.f32 %v253, %v482
      %v535 = vadd.f32 %v254, %v484
      %v536 = vadd.f32 %v255, %v487
      %v537 = vadd.f32 %v256, %v489
      %v538 = vadd.f32 %v257, %v492
      %v539 = vadd.f32 %v258, %v494
      %v540 = vadd.f32 %v259, %v497
      %v541 = vadd.f32 %v260, %v499
      %v542 = vadd.f32 %v261, %v502
      %v543 = vadd.f32 %v262, %v504
      %v544 = vadd.f32 %v263, %v507
      %v545 = vadd.f32 %v264, %v509
      %v546 = vadd.f32 %v265, %v512
      %v547 = vadd.f32 %v266, %v514
      %548 = vst [vmem:[#allocation2] sm:$0xff] %v516
      %549 = vst [vmem:[#allocation2 + $0x8] sm:$0xff] %v517
      %550 = vst [vmem:[#allocation2 + $0x10] sm:$0xff] %v518
      %551 = vst [vmem:[#allocation2 + $0x18] sm:$0xff] %v519
      %552 = vst [vmem:[#allocation2 + $0x20] sm:$0xff] %v520
      %553 = vst [vmem:[#allocation2 + $0x28] sm:$0xff] %v521
      %554 = vst [vmem:[#allocation2 + $0x30] sm:$0xff] %v522
      %555 = vst [vmem:[#allocation2 + $0x38] sm:$0xff] %v523
      %556 = vst [vmem:[#allocation2 + $0x40] sm:$0xff] %v524
      %557 = vst [vmem:[#allocation2 + $0x48] sm:$0xff] %v525
      %558 = vst [vmem:[#allocation2 + $0x50] sm:$0xff] %v526
      %559 = vst [vmem:[#allocation2 + $0x58] sm:$0xff] %v527
      %560 = vst [vmem:[#allocation2 + $0x60] sm:$0xff] %v528
      %561 = vst [vmem:[#allocation2 + $0x68] sm:$0xff] %v529
      %562 = vst [vmem:[#allocation2 + $0x70] sm:$0xff] %v530
      %563 = vst [vmem:[#allocation2 + $0x78] sm:$0xff] %v531
      %564 = vst [vmem:[#allocation2 + $0x80] sm:$0xff] %v532
      %565 = vst [vmem:[#allocation2 + $0x88] sm:$0xff] %v533
      %566 = vst [vmem:[#allocation2 + $0x90] sm:$0xff] %v534
      %567 = vst [vmem:[#allocation2 + $0x98] sm:$0xff] %v535
      %568 = vst [vmem:[#allocation2 + $0xa0] sm:$0xff] %v536
      %569 = vst [vmem:[#allocation2 + $0xa8] sm:$0xff] %v537
      %570 = vst [vmem:[#allocation2 + $0xb0] sm:$0xff] %v538
      %571 = vst [vmem:[#allocation2 + $0xb8] sm:$0xff] %v539
      %572 = vst [vmem:[#allocation2 + $0xc0] sm:$0xff] %v540
      %573 = vst [vmem:[#allocation2 + $0xc8] sm:$0xff] %v541
      %574 = vst [vmem:[#allocation2 + $0xd0] sm:$0xff] %v542
      %575 = vst [vmem:[#allocation2 + $0xd8] sm:$0xff] %v543
      %576 = vst [vmem:[#allocation2 + $0xe0] sm:$0xff] %v544
      %577 = vst [vmem:[#allocation2 + $0xe8] sm:$0xff] %v545
      %578 = vst [vmem:[#allocation2 + $0xf0] sm:$0xff] %v546
      %579 = vst [vmem:[#allocation2 + $0xf8] sm:$0xff] %v547
      %v580 = vld [vmem:[%s165] sm:$0xf]
      %v581 = vld [vmem:[%s165 + $0x4] sm:$0xf]
      %v582 = vld [vmem:[%s165 + $0x8] sm:$0x1]
      %v583 = vld [vmem:[%s165 + $0xc] sm:$0xf]
      %v584 = vld [vmem:[%s165 + $0x10] sm:$0xf]
      %v585 = vld [vmem:[%s165 + $0x14] sm:$0x1]
      %v586 = vld [vmem:[%s165 + $0x18] sm:$0xf]
      %v587 = vld [vmem:[%s165 + $0x1c] sm:$0xf]
      %v588 = vld [vmem:[%s165 + $0x20] sm:$0x1]
      %v589 = vld [vmem:[%s165 + $0x24] sm:$0xf]
      %v590 = vld [vmem:[%s165 + $0x28] sm:$0xf]
      %v591 = vld [vmem:[%s165 + $0x2c] sm:$0x1]
      %v592 = vld [vmem:[%s165 + $0x30] sm:$0xf]
      %v593 = vld [vmem:[%s165 + $0x34] sm:$0xf]
      %v594 = vld [vmem:[%s165 + $0x38] sm:$0x1]
      %v595 = vld [vmem:[%s165 + $0x3c] sm:$0xf]
      %v596 = vld [vmem:[%s165 + $0x40] sm:$0xf]
      %v597 = vld [vmem:[%s165 + $0x44] sm:$0x1]
      %v598 = vld [vmem:[%s165 + $0x48] sm:$0xf]
      %v599 = vld [vmem:[%s165 + $0x4c] sm:$0xf]
      %v600 = vld [vmem:[%s165 + $0x50] sm:$0x1]
      %v601 = vld [vmem:[%s165 + $0x54] sm:$0xf]
      %v602 = vld [vmem:[%s165 + $0x58] sm:$0xf]
      %v603 = vld [vmem:[%s165 + $0x5c] sm:$0x1]
      %v604 = vld [vmem:[%s165 + $0x60] sm:$0xf]
      %v605 = vld [vmem:[%s165 + $0x64] sm:$0xf]
      %v606 = vld [vmem:[%s165 + $0x68] sm:$0x1]
      %v607 = vld [vmem:[%s165 + $0x6c] sm:$0xf]
      %v608 = vld [vmem:[%s165 + $0x70] sm:$0xf]
      %v609 = vld [vmem:[%s165 + $0x74] sm:$0x1]
      %v610 = vld [vmem:[%s165 + $0x78] sm:$0xf]
      %v611 = vld [vmem:[%s165 + $0x7c] sm:$0xf]
      %v612 = vld [vmem:[%s165 + $0x80] sm:$0x1]
      %v613 = vld [vmem:[%s165 + $0x84] sm:$0xf]
      %v614 = vld [vmem:[%s165 + $0x88] sm:$0xf]
      %v615 = vld [vmem:[%s165 + $0x8c] sm:$0x1]
      %v616 = vld [vmem:[%s165 + $0x90] sm:$0xf]
      %v617 = vld [vmem:[%s165 + $0x94] sm:$0xf]
      %v618 = vld [vmem:[%s165 + $0x98] sm:$0x1]
      %v619 = vld [vmem:[%s165 + $0x9c] sm:$0xf]
      %v620 = vld [vmem:[%s165 + $0xa0] sm:$0xf]
      %v621 = vld [vmem:[%s165 + $0xa4] sm:$0x1]
      %v622 = vld [vmem:[%s165 + $0xa8] sm:$0xf]
      %v623 = vld [vmem:[%s165 + $0xac] sm:$0xf]
      %v624 = vld [vmem:[%s165 + $0xb0] sm:$0x1]
      %v625 = vld [vmem:[%s165 + $0xb4] sm:$0xf]
      %v626 = vld [vmem:[%s165 + $0xb8] sm:$0xf]
      %v627 = vld [vmem:[%s165 + $0xbc] sm:$0x1]
      %vm628 = vsmask.f32 3328
      %vm629 = vsmask.f32 7440
      %vm630 = vmor %vm628, %vm629
      %v632 = vshrl.u32 %v580, 16
      %v634 = vrot.slane %v632, 4
      %v635 = vshll.u32 %v580, 16
      %v637 = vrot.slane %v635, 5
      %v638 = vor.u32 %v634, %v637
      %v639 = vrot.slane %v638, 4
      %v641 = vshll.u32 %v581, 16
      %v643 = vrot.slane %v641, 5
      %v644 = vsel %vm630, %v639, %v643
      %v645 = vshrl.u32 %v581, 16
      %v647 = vrot.slane %v645, 4
      %v648 = vor.u32 %v647, %v643
      %v649 = vrot.slane %v648, 4
      %v651 = vshll.u32 %v582, 16
      %v653 = vrot.slane %v651, 5
      %v654 = vsel %vm630, %v649, %v653
      %v656 = vshrl.u32 %v583, 16
      %v658 = vrot.slane %v656, 4
      %v659 = vshll.u32 %v583, 16
      %v661 = vrot.slane %v659, 5
      %v662 = vor.u32 %v658, %v661
      %v663 = vrot.slane %v662, 4
      %v665 = vshll.u32 %v584, 16
      %v667 = vrot.slane %v665, 5
      %v668 = vsel %vm630, %v663, %v667
      %v669 = vshrl.u32 %v584, 16
      %v671 = vrot.slane %v669, 4
      %v672 = vor.u32 %v671, %v667
      %v673 = vrot.slane %v672, 4
      %v675 = vshll.u32 %v585, 16
      %v677 = vrot.slane %v675, 5
      %v678 = vsel %vm630, %v673, %v677
      %v680 = vshrl.u32 %v586, 16
      %v682 = vrot.slane %v680, 4
      %v683 = vshll.u32 %v586, 16
      %v685 = vrot.slane %v683, 5
      %v686 = vor.u32 %v682, %v685
      %v687 = vrot.slane %v686, 4
      %v689 = vshll.u32 %v587, 16
      %v691 = vrot.slane %v689, 5
      %v692 = vsel %vm630, %v687, %v691
      %v693 = vshrl.u32 %v587, 16
      %v695 = vrot.slane %v693, 4
      %v696 = vor.u32 %v695, %v691
      %v697 = vrot.slane %v696, 4
      %v699 = vshll.u32 %v588, 16
      %v701 = vrot.slane %v699, 5
      %v702 = vsel %vm630, %v697, %v701
      %v704 = vshrl.u32 %v589, 16
      %v706 = vrot.slane %v704, 4
      %v707 = vshll.u32 %v589, 16
      %v709 = vrot.slane %v707, 5
      %v710 = vor.u32 %v706, %v709
      %v711 = vrot.slane %v710, 4
      %v713 = vshll.u32 %v590, 16
      %v715 = vrot.slane %v713, 5
      %v716 = vsel %vm630, %v711, %v715
      %v717 = vshrl.u32 %v590, 16
      %v719 = vrot.slane %v717, 4
      %v720 = vor.u32 %v719, %v715
      %v721 = vrot.slane %v720, 4
      %v723 = vshll.u32 %v591, 16
      %v725 = vrot.slane %v723, 5
      %v726 = vsel %vm630, %v721, %v725
      %v728 = vshrl.u32 %v592, 16
      %v730 = vrot.slane %v728, 4
      %v731 = vshll.u32 %v592, 16
      %v733 = vrot.slane %v731, 5
      %v734 = vor.u32 %v730, %v733
      %v735 = vrot.slane %v734, 4
      %v737 = vshll.u32 %v593, 16
      %v739 = vrot.slane %v737, 5
      %v740 = vsel %vm630, %v735, %v739
      %v741 = vshrl.u32 %v593, 16
      %v743 = vrot.slane %v741, 4
      %v744 = vor.u32 %v743, %v739
      %v745 = vrot.slane %v744, 4
      %v747 = vshll.u32 %v594, 16
      %v749 = vrot.slane %v747, 5
      %v750 = vsel %vm630, %v745, %v749
      %v752 = vshrl.u32 %v595, 16
      %v754 = vrot.slane %v752, 4
      %v755 = vshll.u32 %v595, 16
      %v757 = vrot.slane %v755, 5
      %v758 = vor.u32 %v754, %v757
      %v759 = vrot.slane %v758, 4
      %v761 = vshll.u32 %v596, 16
      %v763 = vrot.slane %v761, 5
      %v764 = vsel %vm630, %v759, %v763
      %v765 = vshrl.u32 %v596, 16
      %v767 = vrot.slane %v765, 4
      %v768 = vor.u32 %v767, %v763
      %v769 = vrot.slane %v768, 4
      %v771 = vshll.u32 %v597, 16
      %v773 = vrot.slane %v771, 5
      %v774 = vsel %vm630, %v769, %v773
      %v776 = vshrl.u32 %v598, 16
      %v778 = vrot.slane %v776, 4
      %v779 = vshll.u32 %v598, 16
      %v781 = vrot.slane %v779, 5
      %v782 = vor.u32 %v778, %v781
      %v783 = vrot.slane %v782, 4
      %v785 = vshll.u32 %v599, 16
      %v787 = vrot.slane %v785, 5
      %v788 = vsel %vm630, %v783, %v787
      %v789 = vshrl.u32 %v599, 16
      %v791 = vrot.slane %v789, 4
      %v792 = vor.u32 %v791, %v787
      %v793 = vrot.slane %v792, 4
      %v795 = vshll.u32 %v600, 16
      %v797 = vrot.slane %v795, 5
      %v798 = vsel %vm630, %v793, %v797
      %v800 = vshrl.u32 %v601, 16
      %v802 = vrot.slane %v800, 4
      %v803 = vshll.u32 %v601, 16
      %v805 = vrot.slane %v803, 5
      %v806 = vor.u32 %v802, %v805
      %v807 = vrot.slane %v806, 4
      %v809 = vshll.u32 %v602, 16
      %v811 = vrot.slane %v809, 5
      %v812 = vsel %vm630, %v807, %v811
      %v813 = vshrl.u32 %v602, 16
      %v815 = vrot.slane %v813, 4
      %v816 = vor.u32 %v815, %v811
      %v817 = vrot.slane %v816, 4
      %v819 = vshll.u32 %v603, 16
      %v821 = vrot.slane %v819, 5
      %v822 = vsel %vm630, %v817, %v821
      %v824 = vshrl.u32 %v604, 16
      %v826 = vrot.slane %v824, 4
      %v827 = vshll.u32 %v604, 16
      %v829 = vrot.slane %v827, 5
      %v830 = vor.u32 %v826, %v829
      %v831 = vrot.slane %v830, 4
      %v833 = vshll.u32 %v605, 16
      %v835 = vrot.slane %v833, 5
      %v836 = vsel %vm630, %v831, %v835
      %v837 = vshrl.u32 %v605, 16
      %v839 = vrot.slane %v837, 4
      %v840 = vor.u32 %v839, %v835
      %v841 = vrot.slane %v840, 4
      %v843 = vshll.u32 %v606, 16
      %v845 = vrot.slane %v843, 5
      %v846 = vsel %vm630, %v841, %v845
      %v848 = vshrl.u32 %v607, 16
      %v850 = vrot.slane %v848, 4
      %v851 = vshll.u32 %v607, 16
      %v853 = vrot.slane %v851, 5
      %v854 = vor.u32 %v850, %v853
      %v855 = vrot.slane %v854, 4
      %v857 = vshll.u32 %v608, 16
      %v859 = vrot.slane %v857, 5
      %v860 = vsel %vm630, %v855, %v859
      %v861 = vshrl.u32 %v608, 16
      %v863 = vrot.slane %v861, 4
      %v864 = vor.u32 %v863, %v859
      %v865 = vrot.slane %v864, 4
      %v867 = vshll.u32 %v609, 16
      %v869 = vrot.slane %v867, 5
      %v870 = vsel %vm630, %v865, %v869
      %v872 = vshrl.u32 %v610, 16
      %v874 = vrot.slane %v872, 4
      %v875 = vshll.u32 %v610, 16
      %v877 = vrot.slane %v875, 5
      %v878 = vor.u32 %v874, %v877
      %v879 = vrot.slane %v878, 4
      %v881 = vshll.u32 %v611, 16
      %v883 = vrot.slane %v881, 5
      %v884 = vsel %vm630, %v879, %v883
      %v885 = vshrl.u32 %v611, 16
      %v887 = vrot.slane %v885, 4
      %v888 = vor.u32 %v887, %v883
      %v889 = vrot.slane %v888, 4
      %v891 = vshll.u32 %v612, 16
      %v893 = vrot.slane %v891, 5
      %v894 = vsel %vm630, %v889, %v893
      %v896 = vshrl.u32 %v613, 16
      %v898 = vrot.slane %v896, 4
      %v899 = vshll.u32 %v613, 16
      %v901 = vrot.slane %v899, 5
      %v902 = vor.u32 %v898, %v901
      %v903 = vrot.slane %v902, 4
      %v905 = vshll.u32 %v614, 16
      %v907 = vrot.slane %v905, 5
      %v908 = vsel %vm630, %v903, %v907
      %v909 = vshrl.u32 %v614, 16
      %v911 = vrot.slane %v909, 4
      %v912 = vor.u32 %v911, %v907
      %v913 = vrot.slane %v912, 4
      %v915 = vshll.u32 %v615, 16
      %v917 = vrot.slane %v915, 5
      %v918 = vsel %vm630, %v913, %v917
      %v920 = vshrl.u32 %v616, 16
      %v922 = vrot.slane %v920, 4
      %v923 = vshll.u32 %v616, 16
      %v925 = vrot.slane %v923, 5
      %v926 = vor.u32 %v922, %v925
      %v927 = vrot.slane %v926, 4
      %v929 = vshll.u32 %v617, 16
      %v931 = vrot.slane %v929, 5
      %v932 = vsel %vm630, %v927, %v931
      %v933 = vshrl.u32 %v617, 16
      %v935 = vrot.slane %v933, 4
      %v936 = vor.u32 %v935, %v931
      %v937 = vrot.slane %v936, 4
      %v939 = vshll.u32 %v618, 16
      %v941 = vrot.slane %v939, 5
      %v942 = vsel %vm630, %v937, %v941
      %v944 = vshrl.u32 %v619, 16
      %v946 = vrot.slane %v944, 4
      %v947 = vshll.u32 %v619, 16
      %v949 = vrot.slane %v947, 5
      %v950 = vor.u32 %v946, %v949
      %v951 = vrot.slane %v950, 4
      %v953 = vshll.u32 %v620, 16
      %v955 = vrot.slane %v953, 5
      %v956 = vsel %vm630, %v951, %v955
      %v957 = vshrl.u32 %v620, 16
      %v959 = vrot.slane %v957, 4
      %v960 = vor.u32 %v959, %v955
      %v961 = vrot.slane %v960, 4
      %v963 = vshll.u32 %v621, 16
      %v965 = vrot.slane %v963, 5
      %v966 = vsel %vm630, %v961, %v965
      %v968 = vshrl.u32 %v622, 16
      %v970 = vrot.slane %v968, 4
      %v971 = vshll.u32 %v622, 16
      %v973 = vrot.slane %v971, 5
      %v974 = vor.u32 %v970, %v973
      %v975 = vrot.slane %v974, 4
      %v977 = vshll.u32 %v623, 16
      %v979 = vrot.slane %v977, 5
      %v980 = vsel %vm630, %v975, %v979
      %v981 = vshrl.u32 %v623, 16
      %v983 = vrot.slane %v981, 4
      %v984 = vor.u32 %v983, %v979
      %v985 = vrot.slane %v984, 4
      %v987 = vshll.u32 %v624, 16
      %v989 = vrot.slane %v987, 5
      %v990 = vsel %vm630, %v985, %v989
      %v992 = vshrl.u32 %v625, 16
      %v994 = vrot.slane %v992, 4
      %v995 = vshll.u32 %v625, 16
      %v997 = vrot.slane %v995, 5
      %v998 = vor.u32 %v994, %v997
      %v999 = vrot.slane %v998, 4
      %v1001 = vshll.u32 %v626, 16
      %v1003 = vrot.slane %v1001, 5
      %v1004 = vsel %vm630, %v999, %v1003
      %v1005 = vshrl.u32 %v626, 16
      %v1007 = vrot.slane %v1005, 4
      %v1008 = vor.u32 %v1007, %v1003
      %v1009 = vrot.slane %v1008, 4
      %v1011 = vshll.u32 %v627, 16
      %v1013 = vrot.slane %v1011, 5
      %v1014 = vsel %vm630, %v1009, %v1013
      %v1015 = vld [vmem:[#allocation2] sm:$0xff]
      %v1016 = vld [vmem:[#allocation2 + $0x8] sm:$0xff]
      %v1017 = vld [vmem:[#allocation2 + $0x10] sm:$0xff]
      %v1018 = vld [vmem:[#allocation2 + $0x18] sm:$0xff]
      %v1019 = vld [vmem:[#allocation2 + $0x20] sm:$0xff]
      %v1020 = vld [vmem:[#allocation2 + $0x28] sm:$0xff]
      %v1021 = vld [vmem:[#allocation2 + $0x30] sm:$0xff]
      %v1022 = vld [vmem:[#allocation2 + $0x38] sm:$0xff]
      %v1023 = vld [vmem:[#allocation2 + $0x40] sm:$0xff]
      %v1024 = vld [vmem:[#allocation2 + $0x48] sm:$0xff]
      %v1025 = vld [vmem:[#allocation2 + $0x50] sm:$0xff]
      %v1026 = vld [vmem:[#allocation2 + $0x58] sm:$0xff]
      %v1027 = vld [vmem:[#allocation2 + $0x60] sm:$0xff]
      %v1028 = vld [vmem:[#allocation2 + $0x68] sm:$0xff]
      %v1029 = vld [vmem:[#allocation2 + $0x70] sm:$0xff]
      %v1030 = vld [vmem:[#allocation2 + $0x78] sm:$0xff]
      %v1031 = vld [vmem:[#allocation2 + $0x80] sm:$0xff]
      %v1032 = vld [vmem:[#allocation2 + $0x88] sm:$0xff]
      %v1033 = vld [vmem:[#allocation2 + $0x90] sm:$0xff]
      %v1034 = vld [vmem:[#allocation2 + $0x98] sm:$0xff]
      %v1035 = vld [vmem:[#allocation2 + $0xa0] sm:$0xff]
      %v1036 = vld [vmem:[#allocation2 + $0xa8] sm:$0xff]
      %v1037 = vld [vmem:[#allocation2 + $0xb0] sm:$0xff]
      %v1038 = vld [vmem:[#allocation2 + $0xb8] sm:$0xff]
      %v1039 = vld [vmem:[#allocation2 + $0xc0] sm:$0xff]
      %v1040 = vld [vmem:[#allocation2 + $0xc8] sm:$0xff]
      %v1041 = vld [vmem:[#allocation2 + $0xd0] sm:$0xff]
      %v1042 = vld [vmem:[#allocation2 + $0xd8] sm:$0xff]
      %v1043 = vld [vmem:[#allocation2 + $0xe0] sm:$0xff]
      %v1044 = vld [vmem:[#allocation2 + $0xe8] sm:$0xff]
      %v1045 = vld [vmem:[#allocation2 + $0xf0] sm:$0xff]
      %v1046 = vld [vmem:[#allocation2 + $0xf8] sm:$0xff]
      %s1047 = scalar_lea.vmem %s1, 64
      %v1048 = vld [vmem:[%s1047] sm:$0xf]
      %v1049 = vld [vmem:[%s1047 + $0x4] sm:$0xf]
      %v1050 = vld [vmem:[%s1047 + $0x8] sm:$0xf]
      %v1051 = vld [vmem:[%s1047 + $0xc] sm:$0xf]
      %v1052 = vld [vmem:[%s1047 + $0x10] sm:$0xf]
      %v1053 = vld [vmem:[%s1047 + $0x14] sm:$0xf]
      %v1054 = vld [vmem:[%s1047 + $0x18] sm:$0xf]
      %v1055 = vld [vmem:[%s1047 + $0x1c] sm:$0xf]
      %v1056 = vld [vmem:[%s1047 + $0x20] sm:$0xf]
      %v1057 = vld [vmem:[%s1047 + $0x24] sm:$0xf]
      %v1058 = vld [vmem:[%s1047 + $0x28] sm:$0xf]
      %v1059 = vld [vmem:[%s1047 + $0x2c] sm:$0xf]
      %v1060 = vld [vmem:[%s1047 + $0x30] sm:$0xf]
      %v1061 = vld [vmem:[%s1047 + $0x34] sm:$0xf]
      %v1062 = vld [vmem:[%s1047 + $0x38] sm:$0xf]
      %v1063 = vld [vmem:[%s1047 + $0x3c] sm:$0xf]
      %v1064 = vunpack.c.l.b16 %v644
      %v1065 = vunpack.c.l.b16 %v654
      %v1066 = vunpack.c.l.b16 %v668
      %v1067 = vunpack.c.l.b16 %v678
      %v1068 = vunpack.c.l.b16 %v692
      %v1069 = vunpack.c.l.b16 %v702
      %v1070 = vunpack.c.l.b16 %v716
      %v1071 = vunpack.c.l.b16 %v726
      %v1072 = vunpack.c.l.b16 %v740
      %v1073 = vunpack.c.l.b16 %v750
      %v1074 = vunpack.c.l.b16 %v764
      %v1075 = vunpack.c.l.b16 %v774
      %v1076 = vunpack.c.l.b16 %v788
      %v1077 = vunpack.c.l.b16 %v798
      %v1078 = vunpack.c.l.b16 %v812
      %v1079 = vunpack.c.l.b16 %v822
      %v1080 = vunpack.c.l.b16 %v836
      %v1081 = vunpack.c.l.b16 %v846
      %v1082 = vunpack.c.l.b16 %v860
      %v1083 = vunpack.c.l.b16 %v870
      %v1084 = vunpack.c.l.b16 %v884
      %v1085 = vunpack.c.l.b16 %v894
      %v1086 = vunpack.c.l.b16 %v908
      %v1087 = vunpack.c.l.b16 %v918
      %v1088 = vunpack.c.l.b16 %v932
      %v1089 = vunpack.c.l.b16 %v942
      %v1090 = vunpack.c.l.b16 %v956
      %v1091 = vunpack.c.l.b16 %v966
      %v1092 = vunpack.c.l.b16 %v980
      %v1093 = vunpack.c.l.b16 %v990
      %v1094 = vunpack.c.l.b16 %v1004
      %v1095 = vunpack.c.l.b16 %v1014
      %v1096 = vpack.c.b16 %v1065, %v1064
      %v1097 = vpack.c.b16 %v1067, %v1066
      %v1098 = vpack.c.b16 %v1069, %v1068
      %v1099 = vpack.c.b16 %v1071, %v1070
      %v1100 = vpack.c.b16 %v1073, %v1072
      %v1101 = vpack.c.b16 %v1075, %v1074
      %v1102 = vpack.c.b16 %v1077, %v1076
      %v1103 = vpack.c.b16 %v1079, %v1078
      %v1104 = vpack.c.b16 %v1081, %v1080
      %v1105 = vpack.c.b16 %v1083, %v1082
      %v1106 = vpack.c.b16 %v1085, %v1084
      %v1107 = vpack.c.b16 %v1087, %v1086
      %v1108 = vpack.c.b16 %v1089, %v1088
      %v1109 = vpack.c.b16 %v1091, %v1090
      %v1110 = vpack.c.b16 %v1093, %v1092
      %v1111 = vpack.c.b16 %v1095, %v1094
      %v1144 = vunpack.c.l.b16 %v1048
      %v1145 = vunpack.c.l.b16 %v1049
      %v1146 = vunpack.c.l.b16 %v1050
      %v1147 = vunpack.c.l.b16 %v1051
      %v1148 = vunpack.c.l.b16 %v1052
      %v1149 = vunpack.c.l.b16 %v1053
      %v1150 = vunpack.c.l.b16 %v1054
      %v1151 = vunpack.c.l.b16 %v1055
      %v1152 = vunpack.c.l.b16 %v1056
      %v1153 = vunpack.c.l.b16 %v1057
      %v1154 = vunpack.c.l.b16 %v1058
      %v1155 = vunpack.c.l.b16 %v1059
      %v1156 = vunpack.c.l.b16 %v1060
      %v1157 = vunpack.c.l.b16 %v1061
      %v1158 = vunpack.c.l.b16 %v1062
      %v1159 = vunpack.c.l.b16 %v1063
      %v1160 = vpack.c.b16 %v1145, %v1144
      %v1161 = vpack.c.b16 %v1147, %v1146
      %v1162 = vpack.c.b16 %v1149, %v1148
      %v1163 = vpack.c.b16 %v1151, %v1150
      %v1164 = vpack.c.b16 %v1153, %v1152
      %v1165 = vpack.c.b16 %v1155, %v1154
      %v1166 = vpack.c.b16 %v1157, %v1156
      %v1167 = vpack.c.b16 %v1159, %v1158
      %1176 = vmatpush.bf16.msra.mxu0 %v1167
      %1177 = vmatpush.bf16.msra.mxu0 %v1166
      %1178 = vmatpush.bf16.msra.mxu0 %v1165
      %1179 = vmatpush.bf16.msra.mxu0 %v1164
      %1180 = vmatpush.bf16.msra.mxu0 %v1163
      %1181 = vmatpush.bf16.msra.mxu0 %v1162
      %1182 = vmatpush.bf16.msra.mxu0 %v1161
      %1183 = vmatpush.bf16.msra.mxu0 %v1160
      %1184 = vmatmul.bf16.gmra.mxu0 %v1096
      %v1185 = vpop.f32.mrf.mxu0
      %v1186 = vadd.f32 0.0, %v1185
      %v1187 = vpop.f32.mrf.mxu0
      %v1188 = vadd.f32 0.0, %v1187
      %1189 = vmatmul.bf16.gmra.mxu0 %v1097
      %v1190 = vpop.f32.mrf.mxu0
      %v1191 = vadd.f32 0.0, %v1190
      %v1192 = vpop.f32.mrf.mxu0
      %v1193 = vadd.f32 0.0, %v1192
      %1194 = vmatmul.bf16.gmra.mxu0 %v1098
      %v1195 = vpop.f32.mrf.mxu0
      %v1196 = vadd.f32 0.0, %v1195
      %v1197 = vpop.f32.mrf.mxu0
      %v1198 = vadd.f32 0.0, %v1197
      %1199 = vmatmul.bf16.gmra.mxu0 %v1099
      %v1200 = vpop.f32.mrf.mxu0
      %v1201 = vadd.f32 0.0, %v1200
      %v1202 = vpop.f32.mrf.mxu0
      %v1203 = vadd.f32 0.0, %v1202
      %1204 = vmatmul.bf16.gmra.mxu0 %v1100
      %v1205 = vpop.f32.mrf.mxu0
      %v1206 = vadd.f32 0.0, %v1205
      %v1207 = vpop.f32.mrf.mxu0
      %v1208 = vadd.f32 0.0, %v1207
      %1209 = vmatmul.bf16.gmra.mxu0 %v1101
      %v1210 = vpop.f32.mrf.mxu0
      %v1211 = vadd.f32 0.0, %v1210
      %v1212 = vpop.f32.mrf.mxu0
      %v1213 = vadd.f32 0.0, %v1212
      %1214 = vmatmul.bf16.gmra.mxu0 %v1102
      %v1215 = vpop.f32.mrf.mxu0
      %v1216 = vadd.f32 0.0, %v1215
      %v1217 = vpop.f32.mrf.mxu0
      %v1218 = vadd.f32 0.0, %v1217
      %1219 = vmatmul.bf16.gmra.mxu0 %v1103
      %v1220 = vpop.f32.mrf.mxu0
      %v1221 = vadd.f32 0.0, %v1220
      %v1222 = vpop.f32.mrf.mxu0
      %v1223 = vadd.f32 0.0, %v1222
      %1224 = vmatmul.bf16.gmra.mxu0 %v1104
      %v1225 = vpop.f32.mrf.mxu0
      %v1226 = vadd.f32 0.0, %v1225
      %v1227 = vpop.f32.mrf.mxu0
      %v1228 = vadd.f32 0.0, %v1227
      %1229 = vmatmul.bf16.gmra.mxu0 %v1105
      %v1230 = vpop.f32.mrf.mxu0
      %v1231 = vadd.f32 0.0, %v1230
      %v1232 = vpop.f32.mrf.mxu0
      %v1233 = vadd.f32 0.0, %v1232
      %1234 = vmatmul.bf16.gmra.mxu0 %v1106
      %v1235 = vpop.f32.mrf.mxu0
      %v1236 = vadd.f32 0.0, %v1235
      %v1237 = vpop.f32.mrf.mxu0
      %v1238 = vadd.f32 0.0, %v1237
      %1239 = vmatmul.bf16.gmra.mxu0 %v1107
      %v1240 = vpop.f32.mrf.mxu0
      %v1241 = vadd.f32 0.0, %v1240
      %v1242 = vpop.f32.mrf.mxu0
      %v1243 = vadd.f32 0.0, %v1242
      %1244 = vmatmul.bf16.gmra.mxu0 %v1108
      %v1245 = vpop.f32.mrf.mxu0
      %v1246 = vadd.f32 0.0, %v1245
      %v1247 = vpop.f32.mrf.mxu0
      %v1248 = vadd.f32 0.0, %v1247
      %1249 = vmatmul.bf16.gmra.mxu0 %v1109
      %v1250 = vpop.f32.mrf.mxu0
      %v1251 = vadd.f32 0.0, %v1250
      %v1252 = vpop.f32.mrf.mxu0
      %v1253 = vadd.f32 0.0, %v1252
      %1254 = vmatmul.bf16.gmra.mxu0 %v1110
      %v1255 = vpop.f32.mrf.mxu0
      %v1256 = vadd.f32 0.0, %v1255
      %v1257 = vpop.f32.mrf.mxu0
      %v1258 = vadd.f32 0.0, %v1257
      %1259 = vmatmul.bf16.gmra.mxu0 %v1111
      %v1260 = vpop.f32.mrf.mxu0
      %v1261 = vadd.f32 0.0, %v1260
      %v1262 = vpop.f32.mrf.mxu0
      %v1263 = vadd.f32 0.0, %v1262
      %1264 = vdwg.mxu0
      %v1265 = vadd.f32 %v1015, %v1186
      %v1266 = vadd.f32 %v1016, %v1188
      %v1267 = vadd.f32 %v1017, %v1191
      %v1268 = vadd.f32 %v1018, %v1193
      %v1269 = vadd.f32 %v1019, %v1196
      %v1270 = vadd.f32 %v1020, %v1198
      %v1271 = vadd.f32 %v1021, %v1201
      %v1272 = vadd.f32 %v1022, %v1203
      %v1273 = vadd.f32 %v1023, %v1206
      %v1274 = vadd.f32 %v1024, %v1208
      %v1275 = vadd.f32 %v1025, %v1211
      %v1276 = vadd.f32 %v1026, %v1213
      %v1277 = vadd.f32 %v1027, %v1216
      %v1278 = vadd.f32 %v1028, %v1218
      %v1279 = vadd.f32 %v1029, %v1221
      %v1280 = vadd.f32 %v1030, %v1223
      %v1281 = vadd.f32 %v1031, %v1226
      %v1282 = vadd.f32 %v1032, %v1228
      %v1283 = vadd.f32 %v1033, %v1231
      %v1284 = vadd.f32 %v1034, %v1233
      %v1285 = vadd.f32 %v1035, %v1236
      %v1286 = vadd.f32 %v1036, %v1238
      %v1287 = vadd.f32 %v1037, %v1241
      %v1288 = vadd.f32 %v1038, %v1243
      %v1289 = vadd.f32 %v1039, %v1246
      %v1290 = vadd.f32 %v1040, %v1248
      %v1291 = vadd.f32 %v1041, %v1251
      %v1292 = vadd.f32 %v1042, %v1253
      %v1293 = vadd.f32 %v1043, %v1256
      %v1294 = vadd.f32 %v1044, %v1258
      %v1295 = vadd.f32 %v1045, %v1261
      %v1296 = vadd.f32 %v1046, %v1263
      %1297 = vst [vmem:[#allocation2] sm:$0xff] %v1265
      %1298 = vst [vmem:[#allocation2 + $0x8] sm:$0xff] %v1266
      %1299 = vst [vmem:[#allocation2 + $0x10] sm:$0xff] %v1267
      %1300 = vst [vmem:[#allocation2 + $0x18] sm:$0xff] %v1268
      %1301 = vst [vmem:[#allocation2 + $0x20] sm:$0xff] %v1269
      %1302 = vst [vmem:[#allocation2 + $0x28] sm:$0xff] %v1270
      %1303 = vst [vmem:[#allocation2 + $0x30] sm:$0xff] %v1271
      %1304 = vst [vmem:[#allocation2 + $0x38] sm:$0xff] %v1272
      %1305 = vst [vmem:[#allocation2 + $0x40] sm:$0xff] %v1273
      %1306 = vst [vmem:[#allocation2 + $0x48] sm:$0xff] %v1274
      %1307 = vst [vmem:[#allocation2 + $0x50] sm:$0xff] %v1275
      %1308 = vst [vmem:[#allocation2 + $0x58] sm:$0xff] %v1276
      %1309 = vst [vmem:[#allocation2 + $0x60] sm:$0xff] %v1277
      %1310 = vst [vmem:[#allocation2 + $0x68] sm:$0xff] %v1278
      %1311 = vst [vmem:[#allocation2 + $0x70] sm:$0xff] %v1279
      %1312 = vst [vmem:[#allocation2 + $0x78] sm:$0xff] %v1280
      %1313 = vst [vmem:[#allocation2 + $0x80] sm:$0xff] %v1281
      %1314 = vst [vmem:[#allocation2 + $0x88] sm:$0xff] %v1282
      %1315 = vst [vmem:[#allocation2 + $0x90] sm:$0xff] %v1283
      %1316 = vst [vmem:[#allocation2 + $0x98] sm:$0xff] %v1284
      %1317 = vst [vmem:[#allocation2 + $0xa0] sm:$0xff] %v1285
      %1318 = vst [vmem:[#allocation2 + $0xa8] sm:$0xff] %v1286
      %1319 = vst [vmem:[#allocation2 + $0xb0] sm:$0xff] %v1287
      %1320 = vst [vmem:[#allocation2 + $0xb8] sm:$0xff] %v1288
      %1321 = vst [vmem:[#allocation2 + $0xc0] sm:$0xff] %v1289
      %1322 = vst [vmem:[#allocation2 + $0xc8] sm:$0xff] %v1290
      %1323 = vst [vmem:[#allocation2 + $0xd0] sm:$0xff] %v1291
      %1324 = vst [vmem:[#allocation2 + $0xd8] sm:$0xff] %v1292
      %1325 = vst [vmem:[#allocation2 + $0xe0] sm:$0xff] %v1293
      %1326 = vst [vmem:[#allocation2 + $0xe8] sm:$0xff] %v1294
      %1327 = vst [vmem:[#allocation2 + $0xf0] sm:$0xff] %v1295
      %1328 = vst [vmem:[#allocation2 + $0xf8] sm:$0xff] %v1296
      %v1329 = vld [vmem:[%s165] sm:$0xe]
      %v1330 = vld [vmem:[%s165 + $0x4] sm:$0xf]
      %v1331 = vld [vmem:[%s165 + $0x8] sm:$0x1]
      %v1332 = vld [vmem:[%s165 + $0xc] sm:$0xe]
      %v1333 = vld [vmem:[%s165 + $0x10] sm:$0xf]
      %v1334 = vld [vmem:[%s165 + $0x14] sm:$0x1]
      %v1335 = vld [vmem:[%s165 + $0x18] sm:$0xe]
      %v1336 = vld [vmem:[%s165 + $0x1c] sm:$0xf]
      %v1337 = vld [vmem:[%s165 + $0x20] sm:$0x1]
      %v1338 = vld [vmem:[%s165 + $0x24] sm:$0xe]
      %v1339 = vld [vmem:[%s165 + $0x28] sm:$0xf]
      %v1340 = vld [vmem:[%s165 + $0x2c] sm:$0x1]
      %v1341 = vld [vmem:[%s165 + $0x30] sm:$0xe]
      %v1342 = vld [vmem:[%s165 + $0x34] sm:$0xf]
      %v1343 = vld [vmem:[%s165 + $0x38] sm:$0x1]
      %v1344 = vld [vmem:[%s165 + $0x3c] sm:$0xe]
      %v1345 = vld [vmem:[%s165 + $0x40] sm:$0xf]
      %v1346 = vld [vmem:[%s165 + $0x44] sm:$0x1]
      %v1347 = vld [vmem:[%s165 + $0x48] sm:$0xe]
      %v1348 = vld [vmem:[%s165 + $0x4c] sm:$0xf]
      %v1349 = vld [vmem:[%s165 + $0x50] sm:$0x1]
      %v1350 = vld [vmem:[%s165 + $0x54] sm:$0xe]
      %v1351 = vld [vmem:[%s165 + $0x58] sm:$0xf]
      %v1352 = vld [vmem:[%s165 + $0x5c] sm:$0x1]
      %v1353 = vld [vmem:[%s165 + $0x60] sm:$0xe]
      %v1354 = vld [vmem:[%s165 + $0x64] sm:$0xf]
      %v1355 = vld [vmem:[%s165 + $0x68] sm:$0x1]
      %v1356 = vld [vmem:[%s165 + $0x6c] sm:$0xe]
      %v1357 = vld [vmem:[%s165 + $0x70] sm:$0xf]
      %v1358 = vld [vmem:[%s165 + $0x74] sm:$0x1]
      %v1359 = vld [vmem:[%s165 + $0x78] sm:$0xe]
      %v1360 = vld [vmem:[%s165 + $0x7c] sm:$0xf]
      %v1361 = vld [vmem:[%s165 + $0x80] sm:$0x1]
      %v1362 = vld [vmem:[%s165 + $0x84] sm:$0xe]
      %v1363 = vld [vmem:[%s165 + $0x88] sm:$0xf]
      %v1364 = vld [vmem:[%s165 + $0x8c] sm:$0x1]
      %v1365 = vld [vmem:[%s165 + $0x90] sm:$0xe]
      %v1366 = vld [vmem:[%s165 + $0x94] sm:$0xf]
      %v1367 = vld [vmem:[%s165 + $0x98] sm:$0x1]
      %v1368 = vld [vmem:[%s165 + $0x9c] sm:$0xe]
      %v1369 = vld [vmem:[%s165 + $0xa0] sm:$0xf]
      %v1370 = vld [vmem:[%s165 + $0xa4] sm:$0x1]
      %v1371 = vld [vmem:[%s165 + $0xa8] sm:$0xe]
      %v1372 = vld [vmem:[%s165 + $0xac] sm:$0xf]
      %v1373 = vld [vmem:[%s165 + $0xb0] sm:$0x1]
      %v1374 = vld [vmem:[%s165 + $0xb4] sm:$0xe]
      %v1375 = vld [vmem:[%s165 + $0xb8] sm:$0xf]
      %v1376 = vld [vmem:[%s165 + $0xbc] sm:$0x1]
      %vm1425 = vcmask 1042432
      %vm1426 = vcmask 1046532
      %vm1427 = vmor %vm1425, %vm1426
      %v1428 = vrot.slane %v1329, 5
      %v1429 = vrot.slane %v1428, 4
      %v1430 = vrot.slane %v1330, 5
      %v1431 = vsel %vm1427, %v1429, %v1430
      %v1432 = vrot.slane %v1430, 4
      %v1433 = vrot.slane %v1331, 5
      %v1434 = vsel %vm1427, %v1432, %v1433
      %v1435 = vrot.slane %v1332, 5
      %v1436 = vrot.slane %v1435, 4
      %v1437 = vrot.slane %v1333, 5
      %v1438 = vsel %vm1427, %v1436, %v1437
      %v1439 = vrot.slane %v1437, 4
      %v1440 = vrot.slane %v1334, 5
      %v1441 = vsel %vm1427, %v1439, %v1440
      %v1442 = vrot.slane %v1335, 5
      %v1443 = vrot.slane %v1442, 4
      %v1444 = vrot.slane %v1336, 5
      %v1445 = vsel %vm1427, %v1443, %v1444
      %v1446 = vrot.slane %v1444, 4
      %v1447 = vrot.slane %v1337, 5
      %v1448 = vsel %vm1427, %v1446, %v1447
      %v1449 = vrot.slane %v1338, 5
      %v1450 = vrot.slane %v1449, 4
      %v1451 = vrot.slane %v1339, 5
      %v1452 = vsel %vm1427, %v1450, %v1451
      %v1453 = vrot.slane %v1451, 4
      %v1454 = vrot.slane %v1340, 5
      %v1455 = vsel %vm1427, %v1453, %v1454
      %v1456 = vrot.slane %v1341, 5
      %v1457 = vrot.slane %v1456, 4
      %v1458 = vrot.slane %v1342, 5
      %v1459 = vsel %vm1427, %v1457, %v1458
      %v1460 = vrot.slane %v1458, 4
      %v1461 = vrot.slane %v1343, 5
      %v1462 = vsel %vm1427, %v1460, %v1461
      %v1463 = vrot.slane %v1344, 5
      %v1464 = vrot.slane %v1463, 4
      %v1465 = vrot.slane %v1345, 5
      %v1466 = vsel %vm1427, %v1464, %v1465
      %v1467 = vrot.slane %v1465, 4
      %v1468 = vrot.slane %v1346, 5
      %v1469 = vsel %vm1427, %v1467, %v1468
      %v1470 = vrot.slane %v1347, 5
      %v1471 = vrot.slane %v1470, 4
      %v1472 = vrot.slane %v1348, 5
      %v1473 = vsel %vm1427, %v1471, %v1472
      %v1474 = vrot.slane %v1472, 4
      %v1475 = vrot.slane %v1349, 5
      %v1476 = vsel %vm1427, %v1474, %v1475
      %v1477 = vrot.slane %v1350, 5
      %v1478 = vrot.slane %v1477, 4
      %v1479 = vrot.slane %v1351, 5
      %v1480 = vsel %vm1427, %v1478, %v1479
      %v1481 = vrot.slane %v1479, 4
      %v1482 = vrot.slane %v1352, 5
      %v1483 = vsel %vm1427, %v1481, %v1482
      %v1484 = vrot.slane %v1353, 5
      %v1485 = vrot.slane %v1484, 4
      %v1486 = vrot.slane %v1354, 5
      %v1487 = vsel %vm1427, %v1485, %v1486
      %v1488 = vrot.slane %v1486, 4
      %v1489 = vrot.slane %v1355, 5
      %v1490 = vsel %vm1427, %v1488, %v1489
      %v1491 = vrot.slane %v1356, 5
      %v1492 = vrot.slane %v1491, 4
      %v1493 = vrot.slane %v1357, 5
      %v1494 = vsel %vm1427, %v1492, %v1493
      %v1495 = vrot.slane %v1493, 4
      %v1496 = vrot.slane %v1358, 5
      %v1497 = vsel %vm1427, %v1495, %v1496
      %v1498 = vrot.slane %v1359, 5
      %v1499 = vrot.slane %v1498, 4
      %v1500 = vrot.slane %v1360, 5
      %v1501 = vsel %vm1427, %v1499, %v1500
      %v1502 = vrot.slane %v1500, 4
      %v1503 = vrot.slane %v1361, 5
      %v1504 = vsel %vm1427, %v1502, %v1503
      %v1505 = vrot.slane %v1362, 5
      %v1506 = vrot.slane %v1505, 4
      %v1507 = vrot.slane %v1363, 5
      %v1508 = vsel %vm1427, %v1506, %v1507
      %v1509 = vrot.slane %v1507, 4
      %v1510 = vrot.slane %v1364, 5
      %v1511 = vsel %vm1427, %v1509, %v1510
      %v1512 = vrot.slane %v1365, 5
      %v1513 = vrot.slane %v1512, 4
      %v1514 = vrot.slane %v1366, 5
      %v1515 = vsel %vm1427, %v1513, %v1514
      %v1516 = vrot.slane %v1514, 4
      %v1517 = vrot.slane %v1367, 5
      %v1518 = vsel %vm1427, %v1516, %v1517
      %v1519 = vrot.slane %v1368, 5
      %v1520 = vrot.slane %v1519, 4
      %v1521 = vrot.slane %v1369, 5
      %v1522 = vsel %vm1427, %v1520, %v1521
      %v1523 = vrot.slane %v1521, 4
      %v1524 = vrot.slane %v1370, 5
      %v1525 = vsel %vm1427, %v1523, %v1524
      %v1526 = vrot.slane %v1371, 5
      %v1527 = vrot.slane %v1526, 4
      %v1528 = vrot.slane %v1372, 5
      %v1529 = vsel %vm1427, %v1527, %v1528
      %v1530 = vrot.slane %v1528, 4
      %v1531 = vrot.slane %v1373, 5
      %v1532 = vsel %vm1427, %v1530, %v1531
      %v1533 = vrot.slane %v1374, 5
      %v1534 = vrot.slane %v1533, 4
      %v1535 = vrot.slane %v1375, 5
      %v1536 = vsel %vm1427, %v1534, %v1535
      %v1537 = vrot.slane %v1535, 4
      %v1538 = vrot.slane %v1376, 5
      %v1539 = vsel %vm1427, %v1537, %v1538
      %v1540 = vld [vmem:[#allocation2] sm:$0xff]
      %v1541 = vld [vmem:[#allocation2 + $0x8] sm:$0xff]
      %v1542 = vld [vmem:[#allocation2 + $0x10] sm:$0xff]
      %v1543 = vld [vmem:[#allocation2 + $0x18] sm:$0xff]
      %v1544 = vld [vmem:[#allocation2 + $0x20] sm:$0xff]
      %v1545 = vld [vmem:[#allocation2 + $0x28] sm:$0xff]
      %v1546 = vld [vmem:[#allocation2 + $0x30] sm:$0xff]
      %v1547 = vld [vmem:[#allocation2 + $0x38] sm:$0xff]
      %v1548 = vld [vmem:[#allocation2 + $0x40] sm:$0xff]
      %v1549 = vld [vmem:[#allocation2 + $0x48] sm:$0xff]
      %v1550 = vld [vmem:[#allocation2 + $0x50] sm:$0xff]
      %v1551 = vld [vmem:[#allocation2 + $0x58] sm:$0xff]
      %v1552 = vld [vmem:[#allocation2 + $0x60] sm:$0xff]
      %v1553 = vld [vmem:[#allocation2 + $0x68] sm:$0xff]
      %v1554 = vld [vmem:[#allocation2 + $0x70] sm:$0xff]
      %v1555 = vld [vmem:[#allocation2 + $0x78] sm:$0xff]
      %v1556 = vld [vmem:[#allocation2 + $0x80] sm:$0xff]
      %v1557 = vld [vmem:[#allocation2 + $0x88] sm:$0xff]
      %v1558 = vld [vmem:[#allocation2 + $0x90] sm:$0xff]
      %v1559 = vld [vmem:[#allocation2 + $0x98] sm:$0xff]
      %v1560 = vld [vmem:[#allocation2 + $0xa0] sm:$0xff]
      %v1561 = vld [vmem:[#allocation2 + $0xa8] sm:$0xff]
      %v1562 = vld [vmem:[#allocation2 + $0xb0] sm:$0xff]
      %v1563 = vld [vmem:[#allocation2 + $0xb8] sm:$0xff]
      %v1564 = vld [vmem:[#allocation2 + $0xc0] sm:$0xff]
      %v1565 = vld [vmem:[#allocation2 + $0xc8] sm:$0xff]
      %v1566 = vld [vmem:[#allocation2 + $0xd0] sm:$0xff]
      %v1567 = vld [vmem:[#allocation2 + $0xd8] sm:$0xff]
      %v1568 = vld [vmem:[#allocation2 + $0xe0] sm:$0xff]
      %v1569 = vld [vmem:[#allocation2 + $0xe8] sm:$0xff]
      %v1570 = vld [vmem:[#allocation2 + $0xf0] sm:$0xff]
      %v1571 = vld [vmem:[#allocation2 + $0xf8] sm:$0xff]
      %s1572 = scalar_lea.vmem %s1, 128
      %v1573 = vld [vmem:[%s1572] sm:$0xf]
      %v1574 = vld [vmem:[%s1572 + $0x4] sm:$0xf]
      %v1575 = vld [vmem:[%s1572 + $0x8] sm:$0xf]
      %v1576 = vld [vmem:[%s1572 + $0xc] sm:$0xf]
      %v1577 = vld [vmem:[%s1572 + $0x10] sm:$0xf]
      %v1578 = vld [vmem:[%s1572 + $0x14] sm:$0xf]
      %v1579 = vld [vmem:[%s1572 + $0x18] sm:$0xf]
      %v1580 = vld [vmem:[%s1572 + $0x1c] sm:$0xf]
      %v1581 = vld [vmem:[%s1572 + $0x20] sm:$0xf]
      %v1582 = vld [vmem:[%s1572 + $0x24] sm:$0xf]
      %v1583 = vld [vmem:[%s1572 + $0x28] sm:$0xf]
      %v1584 = vld [vmem:[%s1572 + $0x2c] sm:$0xf]
      %v1585 = vld [vmem:[%s1572 + $0x30] sm:$0xf]
      %v1586 = vld [vmem:[%s1572 + $0x34] sm:$0xf]
      %v1587 = vld [vmem:[%s1572 + $0x38] sm:$0xf]
      %v1588 = vld [vmem:[%s1572 + $0x3c] sm:$0xf]
      %v1589 = vunpack.c.l.b16 %v1431
      %v1590 = vunpack.c.l.b16 %v1434
      %v1591 = vunpack.c.l.b16 %v1438
      %v1592 = vunpack.c.l.b16 %v1441
      %v1593 = vunpack.c.l.b16 %v1445
      %v1594 = vunpack.c.l.b16 %v1448
      %v1595 = vunpack.c.l.b16 %v1452
      %v1596 = vunpack.c.l.b16 %v1455
      %v1597 = vunpack.c.l.b16 %v1459
      %v1598 = vunpack.c.l.b16 %v1462
      %v1599 = vunpack.c.l.b16 %v1466
      %v1600 = vunpack.c.l.b16 %v1469
      %v1601 = vunpack.c.l.b16 %v1473
      %v1602 = vunpack.c.l.b16 %v1476
      %v1603 = vunpack.c.l.b16 %v1480
      %v1604 = vunpack.c.l.b16 %v1483
      %v1605 = vunpack.c.l.b16 %v1487
      %v1606 = vunpack.c.l.b16 %v1490
      %v1607 = vunpack.c.l.b16 %v1494
      %v1608 = vunpack.c.l.b16 %v1497
      %v1609 = vunpack.c.l.b16 %v1501
      %v1610 = vunpack.c.l.b16 %v1504
      %v1611 = vunpack.c.l.b16 %v1508
      %v1612 = vunpack.c.l.b16 %v1511
      %v1613 = vunpack.c.l.b16 %v1515
      %v1614 = vunpack.c.l.b16 %v1518
      %v1615 = vunpack.c.l.b16 %v1522
      %v1616 = vunpack.c.l.b16 %v1525
      %v1617 = vunpack.c.l.b16 %v1529
      %v1618 = vunpack.c.l.b16 %v1532
      %v1619 = vunpack.c.l.b16 %v1536
      %v1620 = vunpack.c.l.b16 %v1539
      %v1621 = vpack.c.b16 %v1590, %v1589
      %v1622 = vpack.c.b16 %v1592, %v1591
      %v1623 = vpack.c.b16 %v1594, %v1593
      %v1624 = vpack.c.b16 %v1596, %v1595
      %v1625 = vpack.c.b16 %v1598, %v1597
      %v1626 = vpack.c.b16 %v1600, %v1599
      %v1627 = vpack.c.b16 %v1602, %v1601
      %v1628 = vpack.c.b16 %v1604, %v1603
      %v1629 = vpack.c.b16 %v1606, %v1605
      %v1630 = vpack.c.b16 %v1608, %v1607
      %v1631 = vpack.c.b16 %v1610, %v1609
      %v1632 = vpack.c.b16 %v1612, %v1611
      %v1633 = vpack.c.b16 %v1614, %v1613
      %v1634 = vpack.c.b16 %v1616, %v1615
      %v1635 = vpack.c.b16 %v1618, %v1617
      %v1636 = vpack.c.b16 %v1620, %v1619
      %v1669 = vunpack.c.l.b16 %v1573
      %v1670 = vunpack.c.l.b16 %v1574
      %v1671 = vunpack.c.l.b16 %v1575
      %v1672 = vunpack.c.l.b16 %v1576
      %v1673 = vunpack.c.l.b16 %v1577
      %v1674 = vunpack.c.l.b16 %v1578
      %v1675 = vunpack.c.l.b16 %v1579
      %v1676 = vunpack.c.l.b16 %v1580
      %v1677 = vunpack.c.l.b16 %v1581
      %v1678 = vunpack.c.l.b16 %v1582
      %v1679 = vunpack.c.l.b16 %v1583
      %v1680 = vunpack.c.l.b16 %v1584
      %v1681 = vunpack.c.l.b16 %v1585
      %v1682 = vunpack.c.l.b16 %v1586
      %v1683 = vunpack.c.l.b16 %v1587
      %v1684 = vunpack.c.l.b16 %v1588
      %v1685 = vpack.c.b16 %v1670, %v1669
      %v1686 = vpack.c.b16 %v1672, %v1671
      %v1687 = vpack.c.b16 %v1674, %v1673
      %v1688 = vpack.c.b16 %v1676, %v1675
      %v1689 = vpack.c.b16 %v1678, %v1677
      %v1690 = vpack.c.b16 %v1680, %v1679
      %v1691 = vpack.c.b16 %v1682, %v1681
      %v1692 = vpack.c.b16 %v1684, %v1683
      %1701 = vmatpush.bf16.msra.mxu0 %v1692
      %1702 = vmatpush.bf16.msra.mxu0 %v1691
      %1703 = vmatpush.bf16.msra.mxu0 %v1690
      %1704 = vmatpush.bf16.msra.mxu0 %v1689
      %1705 = vmatpush.bf16.msra.mxu0 %v1688
      %1706 = vmatpush.bf16.msra.mxu0 %v1687
      %1707 = vmatpush.bf16.msra.mxu0 %v1686
      %1708 = vmatpush.bf16.msra.mxu0 %v1685
      %1709 = vmatmul.bf16.gmra.mxu0 %v1621
      %v1710 = vpop.f32.mrf.mxu0
      %v1711 = vadd.f32 0.0, %v1710
      %v1712 = vpop.f32.mrf.mxu0
      %v1713 = vadd.f32 0.0, %v1712
      %1714 = vmatmul.bf16.gmra.mxu0 %v1622
      %v1715 = vpop.f32.mrf.mxu0
      %v1716 = vadd.f32 0.0, %v1715
      %v1717 = vpop.f32.mrf.mxu0
      %v1718 = vadd.f32 0.0, %v1717
      %1719 = vmatmul.bf16.gmra.mxu0 %v1623
      %v1720 = vpop.f32.mrf.mxu0
      %v1721 = vadd.f32 0.0, %v1720
      %v1722 = vpop.f32.mrf.mxu0
      %v1723 = vadd.f32 0.0, %v1722
      %1724 = vmatmul.bf16.gmra.mxu0 %v1624
      %v1725 = vpop.f32.mrf.mxu0
      %v1726 = vadd.f32 0.0, %v1725
      %v1727 = vpop.f32.mrf.mxu0
      %v1728 = vadd.f32 0.0, %v1727
      %1729 = vmatmul.bf16.gmra.mxu0 %v1625
      %v1730 = vpop.f32.mrf.mxu0
      %v1731 = vadd.f32 0.0, %v1730
      %v1732 = vpop.f32.mrf.mxu0
      %v1733 = vadd.f32 0.0, %v1732
      %1734 = vmatmul.bf16.gmra.mxu0 %v1626
      %v1735 = vpop.f32.mrf.mxu0
      %v1736 = vadd.f32 0.0, %v1735
      %v1737 = vpop.f32.mrf.mxu0
      %v1738 = vadd.f32 0.0, %v1737
      %1739 = vmatmul.bf16.gmra.mxu0 %v1627
      %v1740 = vpop.f32.mrf.mxu0
      %v1741 = vadd.f32 0.0, %v1740
      %v1742 = vpop.f32.mrf.mxu0
      %v1743 = vadd.f32 0.0, %v1742
      %1744 = vmatmul.bf16.gmra.mxu0 %v1628
      %v1745 = vpop.f32.mrf.mxu0
      %v1746 = vadd.f32 0.0, %v1745
      %v1747 = vpop.f32.mrf.mxu0
      %v1748 = vadd.f32 0.0, %v1747
      %1749 = vmatmul.bf16.gmra.mxu0 %v1629
      %v1750 = vpop.f32.mrf.mxu0
      %v1751 = vadd.f32 0.0, %v1750
      %v1752 = vpop.f32.mrf.mxu0
      %v1753 = vadd.f32 0.0, %v1752
      %1754 = vmatmul.bf16.gmra.mxu0 %v1630
      %v1755 = vpop.f32.mrf.mxu0
      %v1756 = vadd.f32 0.0, %v1755
      %v1757 = vpop.f32.mrf.mxu0
      %v1758 = vadd.f32 0.0, %v1757
      %1759 = vmatmul.bf16.gmra.mxu0 %v1631
      %v1760 = vpop.f32.mrf.mxu0
      %v1761 = vadd.f32 0.0, %v1760
      %v1762 = vpop.f32.mrf.mxu0
      %v1763 = vadd.f32 0.0, %v1762
      %1764 = vmatmul.bf16.gmra.mxu0 %v1632
      %v1765 = vpop.f32.mrf.mxu0
      %v1766 = vadd.f32 0.0, %v1765
      %v1767 = vpop.f32.mrf.mxu0
      %v1768 = vadd.f32 0.0, %v1767
      %1769 = vmatmul.bf16.gmra.mxu0 %v1633
      %v1770 = vpop.f32.mrf.mxu0
      %v1771 = vadd.f32 0.0, %v1770
      %v1772 = vpop.f32.mrf.mxu0
      %v1773 = vadd.f32 0.0, %v1772
      %1774 = vmatmul.bf16.gmra.mxu0 %v1634
      %v1775 = vpop.f32.mrf.mxu0
      %v1776 = vadd.f32 0.0, %v1775
      %v1777 = vpop.f32.mrf.mxu0
      %v1778 = vadd.f32 0.0, %v1777
      %1779 = vmatmul.bf16.gmra.mxu0 %v1635
      %v1780 = vpop.f32.mrf.mxu0
      %v1781 = vadd.f32 0.0, %v1780
      %v1782 = vpop.f32.mrf.mxu0
      %v1783 = vadd.f32 0.0, %v1782
      %1784 = vmatmul.bf16.gmra.mxu0 %v1636
      %v1785 = vpop.f32.mrf.mxu0
      %v1786 = vadd.f32 0.0, %v1785
      %v1787 = vpop.f32.mrf.mxu0
      %v1788 = vadd.f32 0.0, %v1787
      %1789 = vdwg.mxu0
      %v1790 = vadd.f32 %v1540, %v1711
      %v1791 = vadd.f32 %v1541, %v1713
      %v1792 = vadd.f32 %v1542, %v1716
      %v1793 = vadd.f32 %v1543, %v1718
      %v1794 = vadd.f32 %v1544, %v1721
      %v1795 = vadd.f32 %v1545, %v1723
      %v1796 = vadd.f32 %v1546, %v1726
      %v1797 = vadd.f32 %v1547, %v1728
      %v1798 = vadd.f32 %v1548, %v1731
      %v1799 = vadd.f32 %v1549, %v1733
      %v1800 = vadd.f32 %v1550, %v1736
      %v1801 = vadd.f32 %v1551, %v1738
      %v1802 = vadd.f32 %v1552, %v1741
      %v1803 = vadd.f32 %v1553, %v1743
      %v1804 = vadd.f32 %v1554, %v1746
      %v1805 = vadd.f32 %v1555, %v1748
      %v1806 = vadd.f32 %v1556, %v1751
      %v1807 = vadd.f32 %v1557, %v1753
      %v1808 = vadd.f32 %v1558, %v1756
      %v1809 = vadd.f32 %v1559, %v1758
      %v1810 = vadd.f32 %v1560, %v1761
      %v1811 = vadd.f32 %v1561, %v1763
      %v1812 = vadd.f32 %v1562, %v1766
      %v1813 = vadd.f32 %v1563, %v1768
      %v1814 = vadd.f32 %v1564, %v1771
      %v1815 = vadd.f32 %v1565, %v1773
      %v1816 = vadd.f32 %v1566, %v1776
      %v1817 = vadd.f32 %v1567, %v1778
      %v1818 = vadd.f32 %v1568, %v1781
      %v1819 = vadd.f32 %v1569, %v1783
      %v1820 = vadd.f32 %v1570, %v1786
      %v1821 = vadd.f32 %v1571, %v1788
      %1822 = vst [vmem:[#allocation2] sm:$0xff] %v1790
      %1823 = vst [vmem:[#allocation2 + $0x8] sm:$0xff] %v1791
      %1824 = vst [vmem:[#allocation2 + $0x10] sm:$0xff] %v1792
      %1825 = vst [vmem:[#allocation2 + $0x18] sm:$0xff] %v1793
      %1826 = vst [vmem:[#allocation2 + $0x20] sm:$0xff] %v1794
      %1827 = vst [vmem:[#allocation2 + $0x28] sm:$0xff] %v1795
      %1828 = vst [vmem:[#allocation2 + $0x30] sm:$0xff] %v1796
      %1829 = vst [vmem:[#allocation2 + $0x38] sm:$0xff] %v1797
      %1830 = vst [vmem:[#allocation2 + $0x40] sm:$0xff] %v1798
      %1831 = vst [vmem:[#allocation2 + $0x48] sm:$0xff] %v1799
      %1832 = vst [vmem:[#allocation2 + $0x50] sm:$0xff] %v1800
      %1833 = vst [vmem:[#allocation2 + $0x58] sm:$0xff] %v1801
      %1834 = vst [vmem:[#allocation2 + $0x60] sm:$0xff] %v1802
      %1835 = vst [vmem:[#allocation2 + $0x68] sm:$0xff] %v1803
      %1836 = vst [vmem:[#allocation2 + $0x70] sm:$0xff] %v1804
      %1837 = vst [vmem:[#allocation2 + $0x78] sm:$0xff] %v1805
      %1838 = vst [vmem:[#allocation2 + $0x80] sm:$0xff] %v1806
      %1839 = vst [vmem:[#allocation2 + $0x88] sm:$0xff] %v1807
      %1840 = vst [vmem:[#allocation2 + $0x90] sm:$0xff] %v1808
      %1841 = vst [vmem:[#allocation2 + $0x98] sm:$0xff] %v1809
      %1842 = vst [vmem:[#allocation2 + $0xa0] sm:$0xff] %v1810
      %1843 = vst [vmem:[#allocation2 + $0xa8] sm:$0xff] %v1811
      %1844 = vst [vmem:[#allocation2 + $0xb0] sm:$0xff] %v1812
      %1845 = vst [vmem:[#allocation2 + $0xb8] sm:$0xff] %v1813
      %1846 = vst [vmem:[#allocation2 + $0xc0] sm:$0xff] %v1814
      %1847 = vst [vmem:[#allocation2 + $0xc8] sm:$0xff] %v1815
      %1848 = vst [vmem:[#allocation2 + $0xd0] sm:$0xff] %v1816
      %1849 = vst [vmem:[#allocation2 + $0xd8] sm:$0xff] %v1817
      %1850 = vst [vmem:[#allocation2 + $0xe0] sm:$0xff] %v1818
      %1851 = vst [vmem:[#allocation2 + $0xe8] sm:$0xff] %v1819
      %1852 = vst [vmem:[#allocation2 + $0xf0] sm:$0xff] %v1820
      %1853 = vst [vmem:[#allocation2 + $0xf8] sm:$0xff] %v1821
      %s1854 = scalar_lea.vmem %s165, 12
      %v1855 = vld [vmem:[%s1854] sm:$0xf]
      %v1856 = vld [vmem:[%s1854 + $0x4] sm:$0xf]
      %v1857 = vld [vmem:[%s1854 + $0xc] sm:$0xf]
      %v1858 = vld [vmem:[%s1854 + $0x10] sm:$0xf]
      %v1859 = vld [vmem:[%s1854 + $0x18] sm:$0xf]
      %v1860 = vld [vmem:[%s1854 + $0x1c] sm:$0xf]
      %v1861 = vld [vmem:[%s1854 + $0x24] sm:$0xf]
      %v1862 = vld [vmem:[%s1854 + $0x28] sm:$0xf]
      %v1863 = vld [vmem:[%s1854 + $0x30] sm:$0xf]
      %v1864 = vld [vmem:[%s1854 + $0x34] sm:$0xf]
      %v1865 = vld [vmem:[%s1854 + $0x3c] sm:$0xf]
      %v1866 = vld [vmem:[%s1854 + $0x40] sm:$0xf]
      %v1867 = vld [vmem:[%s1854 + $0x48] sm:$0xf]
      %v1868 = vld [vmem:[%s1854 + $0x4c] sm:$0xf]
      %v1869 = vld [vmem:[%s1854 + $0x54] sm:$0xf]
      %v1870 = vld [vmem:[%s1854 + $0x58] sm:$0xf]
      %v1871 = vld [vmem:[%s1854 + $0x60] sm:$0xf]
      %v1872 = vld [vmem:[%s1854 + $0x64] sm:$0xf]
      %v1873 = vld [vmem:[%s1854 + $0x6c] sm:$0xf]
      %v1874 = vld [vmem:[%s1854 + $0x70] sm:$0xf]
      %v1875 = vld [vmem:[%s1854 + $0x78] sm:$0xf]
      %v1876 = vld [vmem:[%s1854 + $0x7c] sm:$0xf]
      %v1877 = vld [vmem:[%s1854 + $0x84] sm:$0xf]
      %v1878 = vld [vmem:[%s1854 + $0x88] sm:$0xf]
      %v1879 = vld [vmem:[%s1854 + $0x90] sm:$0xf]
      %v1880 = vld [vmem:[%s1854 + $0x94] sm:$0xf]
      %v1881 = vld [vmem:[%s1854 + $0x9c] sm:$0xf]
      %v1882 = vld [vmem:[%s1854 + $0xa0] sm:$0xf]
      %v1883 = vld [vmem:[%s1854 + $0xa8] sm:$0xf]
      %v1884 = vld [vmem:[%s1854 + $0xac] sm:$0xf]
      %v1885 = vld [vmem:[%s1854 + $0xb4] sm:$0xf]
      %v1886 = vld [vmem:[%s1854 + $0xb8] sm:$0xf]
      %v1887 = vld [vmem:[#allocation2] sm:$0xff]
      %v1888 = vld [vmem:[#allocation2 + $0x8] sm:$0xff]
      %v1889 = vld [vmem:[#allocation2 + $0x10] sm:$0xff]
      %v1890 = vld [vmem:[#allocation2 + $0x18] sm:$0xff]
      %v1891 = vld [vmem:[#allocation2 + $0x20] sm:$0xff]
      %v1892 = vld [vmem:[#allocation2 + $0x28] sm:$0xff]
      %v1893 = vld [vmem:[#allocation2 + $0x30] sm:$0xff]
      %v1894 = vld [vmem:[#allocation2 + $0x38] sm:$0xff]
      %v1895 = vld [vmem:[#allocation2 + $0x40] sm:$0xff]
      %v1896 = vld [vmem:[#allocation2 + $0x48] sm:$0xff]
      %v1897 = vld [vmem:[#allocation2 + $0x50] sm:$0xff]
      %v1898 = vld [vmem:[#allocation2 + $0x58] sm:$0xff]
      %v1899 = vld [vmem:[#allocation2 + $0x60] sm:$0xff]
      %v1900 = vld [vmem:[#allocation2 + $0x68] sm:$0xff]
      %v1901 = vld [vmem:[#allocation2 + $0x70] sm:$0xff]
      %v1902 = vld [vmem:[#allocation2 + $0x78] sm:$0xff]
      %v1903 = vld [vmem:[#allocation2 + $0x80] sm:$0xff]
      %v1904 = vld [vmem:[#allocation2 + $0x88] sm:$0xff]
      %v1905 = vld [vmem:[#allocation2 + $0x90] sm:$0xff]
      %v1906 = vld [vmem:[#allocation2 + $0x98] sm:$0xff]
      %v1907 = vld [vmem:[#allocation2 + $0xa0] sm:$0xff]
      %v1908 = vld [vmem:[#allocation2 + $0xa8] sm:$0xff]
      %v1909 = vld [vmem:[#allocation2 + $0xb0] sm:$0xff]
      %v1910 = vld [vmem:[#allocation2 + $0xb8] sm:$0xff]
      %v1911 = vld [vmem:[#allocation2 + $0xc0] sm:$0xff]
      %v1912 = vld [vmem:[#allocation2 + $0xc8] sm:$0xff]
      %v1913 = vld [vmem:[#allocation2 + $0xd0] sm:$0xff]
      %v1914 = vld [vmem:[#allocation2 + $0xd8] sm:$0xff]
      %v1915 = vld [vmem:[#allocation2 + $0xe0] sm:$0xff]
      %v1916 = vld [vmem:[#allocation2 + $0xe8] sm:$0xff]
      %v1917 = vld [vmem:[#allocation2 + $0xf0] sm:$0xff]
      %v1918 = vld [vmem:[#allocation2 + $0xf8] sm:$0xff]
      %s1919 = scalar_lea.vmem %s1, 192
      %v1920 = vld [vmem:[%s1919] sm:$0xf]
      %v1921 = vld [vmem:[%s1919 + $0x4] sm:$0xf]
      %v1922 = vld [vmem:[%s1919 + $0x8] sm:$0xf]
      %v1923 = vld [vmem:[%s1919 + $0xc] sm:$0xf]
      %v1924 = vld [vmem:[%s1919 + $0x10] sm:$0xf]
      %v1925 = vld [vmem:[%s1919 + $0x14] sm:$0xf]
      %v1926 = vld [vmem:[%s1919 + $0x18] sm:$0xf]
      %v1927 = vld [vmem:[%s1919 + $0x1c] sm:$0xf]
      %v1928 = vld [vmem:[%s1919 + $0x20] sm:$0xf]
      %v1929 = vld [vmem:[%s1919 + $0x24] sm:$0xf]
      %v1930 = vld [vmem:[%s1919 + $0x28] sm:$0xf]
      %v1931 = vld [vmem:[%s1919 + $0x2c] sm:$0xf]
      %v1932 = vld [vmem:[%s1919 + $0x30] sm:$0xf]
      %v1933 = vld [vmem:[%s1919 + $0x34] sm:$0xf]
      %v1934 = vld [vmem:[%s1919 + $0x38] sm:$0xf]
      %v1935 = vld [vmem:[%s1919 + $0x3c] sm:$0xf]
      %v1968 = vunpack.c.l.b16 %v1855
      %v1969 = vunpack.c.l.b16 %v1856
      %v1970 = vunpack.c.l.b16 %v1857
      %v1971 = vunpack.c.l.b16 %v1858
      %v1972 = vunpack.c.l.b16 %v1859
      %v1973 = vunpack.c.l.b16 %v1860
      %v1974 = vunpack.c.l.b16 %v1861
      %v1975 = vunpack.c.l.b16 %v1862
      %v1976 = vunpack.c.l.b16 %v1863
      %v1977 = vunpack.c.l.b16 %v1864
      %v1978 = vunpack.c.l.b16 %v1865
      %v1979 = vunpack.c.l.b16 %v1866
      %v1980 = vunpack.c.l.b16 %v1867
      %v1981 = vunpack.c.l.b16 %v1868
      %v1982 = vunpack.c.l.b16 %v1869
      %v1983 = vunpack.c.l.b16 %v1870
      %v1984 = vunpack.c.l.b16 %v1871
      %v1985 = vunpack.c.l.b16 %v1872
      %v1986 = vunpack.c.l.b16 %v1873
      %v1987 = vunpack.c.l.b16 %v1874
      %v1988 = vunpack.c.l.b16 %v1875
      %v1989 = vunpack.c.l.b16 %v1876
      %v1990 = vunpack.c.l.b16 %v1877
      %v1991 = vunpack.c.l.b16 %v1878
      %v1992 = vunpack.c.l.b16 %v1879
      %v1993 = vunpack.c.l.b16 %v1880
      %v1994 = vunpack.c.l.b16 %v1881
      %v1995 = vunpack.c.l.b16 %v1882
      %v1996 = vunpack.c.l.b16 %v1883
      %v1997 = vunpack.c.l.b16 %v1884
      %v1998 = vunpack.c.l.b16 %v1885
      %v1999 = vunpack.c.l.b16 %v1886
      %v2000 = vpack.c.b16 %v1969, %v1968
      %v2001 = vpack.c.b16 %v1971, %v1970
      %v2002 = vpack.c.b16 %v1973, %v1972
      %v2003 = vpack.c.b16 %v1975, %v1974
      %v2004 = vpack.c.b16 %v1977, %v1976
      %v2005 = vpack.c.b16 %v1979, %v1978
      %v2006 = vpack.c.b16 %v1981, %v1980
      %v2007 = vpack.c.b16 %v1983, %v1982
      %v2008 = vpack.c.b16 %v1985, %v1984
      %v2009 = vpack.c.b16 %v1987, %v1986
      %v2010 = vpack.c.b16 %v1989, %v1988
      %v2011 = vpack.c.b16 %v1991, %v1990
      %v2012 = vpack.c.b16 %v1993, %v1992
      %v2013 = vpack.c.b16 %v1995, %v1994
      %v2014 = vpack.c.b16 %v1997, %v1996
      %v2015 = vpack.c.b16 %v1999, %v1998
      %v2048 = vunpack.c.l.b16 %v1920
      %v2049 = vunpack.c.l.b16 %v1921
      %v2050 = vunpack.c.l.b16 %v1922
      %v2051 = vunpack.c.l.b16 %v1923
      %v2052 = vunpack.c.l.b16 %v1924
      %v2053 = vunpack.c.l.b16 %v1925
      %v2054 = vunpack.c.l.b16 %v1926
      %v2055 = vunpack.c.l.b16 %v1927
      %v2056 = vunpack.c.l.b16 %v1928
      %v2057 = vunpack.c.l.b16 %v1929
      %v2058 = vunpack.c.l.b16 %v1930
      %v2059 = vunpack.c.l.b16 %v1931
      %v2060 = vunpack.c.l.b16 %v1932
      %v2061 = vunpack.c.l.b16 %v1933
      %v2062 = vunpack.c.l.b16 %v1934
      %v2063 = vunpack.c.l.b16 %v1935
      %v2064 = vpack.c.b16 %v2049, %v2048
      %v2065 = vpack.c.b16 %v2051, %v2050
      %v2066 = vpack.c.b16 %v2053, %v2052
      %v2067 = vpack.c.b16 %v2055, %v2054
      %v2068 = vpack.c.b16 %v2057, %v2056
      %v2069 = vpack.c.b16 %v2059, %v2058
      %v2070 = vpack.c.b16 %v2061, %v2060
      %v2071 = vpack.c.b16 %v2063, %v2062
      %2080 = vmatpush.bf16.msra.mxu0 %v2071
      %2081 = vmatpush.bf16.msra.mxu0 %v2070
      %2082 = vmatpush.bf16.msra.mxu0 %v2069
      %2083 = vmatpush.bf16.msra.mxu0 %v2068
      %2084 = vmatpush.bf16.msra.mxu0 %v2067
      %2085 = vmatpush.bf16.msra.mxu0 %v2066
      %2086 = vmatpush.bf16.msra.mxu0 %v2065
      %2087 = vmatpush.bf16.msra.mxu0 %v2064
      %2088 = vmatmul.bf16.gmra.mxu0 %v2000
      %v2089 = vpop.f32.mrf.mxu0
      %v2090 = vadd.f32 0.0, %v2089
      %v2091 = vpop.f32.mrf.mxu0
      %v2092 = vadd.f32 0.0, %v2091
      %2093 = vmatmul.bf16.gmra.mxu0 %v2001
      %v2094 = vpop.f32.mrf.mxu0
      %v2095 = vadd.f32 0.0, %v2094
      %v2096 = vpop.f32.mrf.mxu0
      %v2097 = vadd.f32 0.0, %v2096
      %2098 = vmatmul.bf16.gmra.mxu0 %v2002
      %v2099 = vpop.f32.mrf.mxu0
      %v2100 = vadd.f32 0.0, %v2099
      %v2101 = vpop.f32.mrf.mxu0
      %v2102 = vadd.f32 0.0, %v2101
      %2103 = vmatmul.bf16.gmra.mxu0 %v2003
      %v2104 = vpop.f32.mrf.mxu0
      %v2105 = vadd.f32 0.0, %v2104
      %v2106 = vpop.f32.mrf.mxu0
      %v2107 = vadd.f32 0.0, %v2106
      %2108 = vmatmul.bf16.gmra.mxu0 %v2004
      %v2109 = vpop.f32.mrf.mxu0
      %v2110 = vadd.f32 0.0, %v2109
      %v2111 = vpop.f32.mrf.mxu0
      %v2112 = vadd.f32 0.0, %v2111
      %2113 = vmatmul.bf16.gmra.mxu0 %v2005
      %v2114 = vpop.f32.mrf.mxu0
      %v2115 = vadd.f32 0.0, %v2114
      %v2116 = vpop.f32.mrf.mxu0
      %v2117 = vadd.f32 0.0, %v2116
      %2118 = vmatmul.bf16.gmra.mxu0 %v2006
      %v2119 = vpop.f32.mrf.mxu0
      %v2120 = vadd.f32 0.0, %v2119
      %v2121 = vpop.f32.mrf.mxu0
      %v2122 = vadd.f32 0.0, %v2121
      %2123 = vmatmul.bf16.gmra.mxu0 %v2007
      %v2124 = vpop.f32.mrf.mxu0
      %v2125 = vadd.f32 0.0, %v2124
      %v2126 = vpop.f32.mrf.mxu0
      %v2127 = vadd.f32 0.0, %v2126
      %2128 = vmatmul.bf16.gmra.mxu0 %v2008
      %v2129 = vpop.f32.mrf.mxu0
      %v2130 = vadd.f32 0.0, %v2129
      %v2131 = vpop.f32.mrf.mxu0
      %v2132 = vadd.f32 0.0, %v2131
      %2133 = vmatmul.bf16.gmra.mxu0 %v2009
      %v2134 = vpop.f32.mrf.mxu0
      %v2135 = vadd.f32 0.0, %v2134
      %v2136 = vpop.f32.mrf.mxu0
      %v2137 = vadd.f32 0.0, %v2136
      %2138 = vmatmul.bf16.gmra.mxu0 %v2010
      %v2139 = vpop.f32.mrf.mxu0
      %v2140 = vadd.f32 0.0, %v2139
      %v2141 = vpop.f32.mrf.mxu0
      %v2142 = vadd.f32 0.0, %v2141
      %2143 = vmatmul.bf16.gmra.mxu0 %v2011
      %v2144 = vpop.f32.mrf.mxu0
      %v2145 = vadd.f32 0.0, %v2144
      %v2146 = vpop.f32.mrf.mxu0
      %v2147 = vadd.f32 0.0, %v2146
      %2148 = vmatmul.bf16.gmra.mxu0 %v2012
      %v2149 = vpop.f32.mrf.mxu0
      %v2150 = vadd.f32 0.0, %v2149
      %v2151 = vpop.f32.mrf.mxu0
      %v2152 = vadd.f32 0.0, %v2151
      %2153 = vmatmul.bf16.gmra.mxu0 %v2013
      %v2154 = vpop.f32.mrf.mxu0
      %v2155 = vadd.f32 0.0, %v2154
      %v2156 = vpop.f32.mrf.mxu0
      %v2157 = vadd.f32 0.0, %v2156
      %2158 = vmatmul.bf16.gmra.mxu0 %v2014
      %v2159 = vpop.f32.mrf.mxu0
      %v2160 = vadd.f32 0.0, %v2159
      %v2161 = vpop.f32.mrf.mxu0
      %v2162 = vadd.f32 0.0, %v2161
      %2163 = vmatmul.bf16.gmra.mxu0 %v2015
      %v2164 = vpop.f32.mrf.mxu0
      %v2165 = vadd.f32 0.0, %v2164
      %v2166 = vpop.f32.mrf.mxu0
      %v2167 = vadd.f32 0.0, %v2166
      %2168 = vdwg.mxu0
      %v2169 = vadd.f32 %v1887, %v2090
      %v2170 = vadd.f32 %v1888, %v2092
      %v2171 = vadd.f32 %v1889, %v2095
      %v2172 = vadd.f32 %v1890, %v2097
      %v2173 = vadd.f32 %v1891, %v2100
      %v2174 = vadd.f32 %v1892, %v2102
      %v2175 = vadd.f32 %v1893, %v2105
      %v2176 = vadd.f32 %v1894, %v2107
      %v2177 = vadd.f32 %v1895, %v2110
      %v2178 = vadd.f32 %v1896, %v2112
      %v2179 = vadd.f32 %v1897, %v2115
      %v2180 = vadd.f32 %v1898, %v2117
      %v2181 = vadd.f32 %v1899, %v2120
      %v2182 = vadd.f32 %v1900, %v2122
      %v2183 = vadd.f32 %v1901, %v2125
      %v2184 = vadd.f32 %v1902, %v2127
      %v2185 = vadd.f32 %v1903, %v2130
      %v2186 = vadd.f32 %v1904, %v2132
      %v2187 = vadd.f32 %v1905, %v2135
      %v2188 = vadd.f32 %v1906, %v2137
      %v2189 = vadd.f32 %v1907, %v2140
      %v2190 = vadd.f32 %v1908, %v2142
      %v2191 = vadd.f32 %v1909, %v2145
      %v2192 = vadd.f32 %v1910, %v2147
      %v2193 = vadd.f32 %v1911, %v2150
      %v2194 = vadd.f32 %v1912, %v2152
      %v2195 = vadd.f32 %v1913, %v2155
      %v2196 = vadd.f32 %v1914, %v2157
      %v2197 = vadd.f32 %v1915, %v2160
      %v2198 = vadd.f32 %v1916, %v2162
      %v2199 = vadd.f32 %v1917, %v2165
      %v2200 = vadd.f32 %v1918, %v2167
      %2201 = vst [vmem:[#allocation2] sm:$0xff] %v2169
      %2202 = vst [vmem:[#allocation2 + $0x8] sm:$0xff] %v2170
      %2203 = vst [vmem:[#allocation2 + $0x10] sm:$0xff] %v2171
      %2204 = vst [vmem:[#allocation2 + $0x18] sm:$0xff] %v2172
      %2205 = vst [vmem:[#allocation2 + $0x20] sm:$0xff] %v2173
      %2206 = vst [vmem:[#allocation2 + $0x28] sm:$0xff] %v2174
      %2207 = vst [vmem:[#allocation2 + $0x30] sm:$0xff] %v2175
      %2208 = vst [vmem:[#allocation2 + $0x38] sm:$0xff] %v2176
      %2209 = vst [vmem:[#allocation2 + $0x40] sm:$0xff] %v2177
      %2210 = vst [vmem:[#allocation2 + $0x48] sm:$0xff] %v2178
      %2211 = vst [vmem:[#allocation2 + $0x50] sm:$0xff] %v2179
      %2212 = vst [vmem:[#allocation2 + $0x58] sm:$0xff] %v2180
      %2213 = vst [vmem:[#allocation2 + $0x60] sm:$0xff] %v2181
      %2214 = vst [vmem:[#allocation2 + $0x68] sm:$0xff] %v2182
      %2215 = vst [vmem:[#allocation2 + $0x70] sm:$0xff] %v2183
      %2216 = vst [vmem:[#allocation2 + $0x78] sm:$0xff] %v2184
      %2217 = vst [vmem:[#allocation2 + $0x80] sm:$0xff] %v2185
      %2218 = vst [vmem:[#allocation2 + $0x88] sm:$0xff] %v2186
      %2219 = vst [vmem:[#allocation2 + $0x90] sm:$0xff] %v2187
      %2220 = vst [vmem:[#allocation2 + $0x98] sm:$0xff] %v2188
      %2221 = vst [vmem:[#allocation2 + $0xa0] sm:$0xff] %v2189
      %2222 = vst [vmem:[#allocation2 + $0xa8] sm:$0xff] %v2190
      %2223 = vst [vmem:[#allocation2 + $0xb0] sm:$0xff] %v2191
      %2224 = vst [vmem:[#allocation2 + $0xb8] sm:$0xff] %v2192
      %2225 = vst [vmem:[#allocation2 + $0xc0] sm:$0xff] %v2193
      %2226 = vst [vmem:[#allocation2 + $0xc8] sm:$0xff] %v2194
      %2227 = vst [vmem:[#allocation2 + $0xd0] sm:$0xff] %v2195
      %2228 = vst [vmem:[#allocation2 + $0xd8] sm:$0xff] %v2196
      %2229 = vst [vmem:[#allocation2 + $0xe0] sm:$0xff] %v2197
      %2230 = vst [vmem:[#allocation2 + $0xe8] sm:$0xff] %v2198
      %2231 = vst [vmem:[#allocation2 + $0xf0] sm:$0xff] %v2199
      %2232 = vst [vmem:[#allocation2 + $0xf8] sm:$0xff] %v2200
      %v2233 = vld [vmem:[%s1854] sm:$0xf]
      %v2234 = vld [vmem:[%s1854 + $0x4] sm:$0xf]
      %v2235 = vld [vmem:[%s1854 + $0x8] sm:$0x1]
      %v2236 = vld [vmem:[%s1854 + $0xc] sm:$0xf]
      %v2237 = vld [vmem:[%s1854 + $0x10] sm:$0xf]
      %v2238 = vld [vmem:[%s1854 + $0x14] sm:$0x1]
      %v2239 = vld [vmem:[%s1854 + $0x18] sm:$0xf]
      %v2240 = vld [vmem:[%s1854 + $0x1c] sm:$0xf]
      %v2241 = vld [vmem:[%s1854 + $0x20] sm:$0x1]
      %v2242 = vld [vmem:[%s1854 + $0x24] sm:$0xf]
      %v2243 = vld [vmem:[%s1854 + $0x28] sm:$0xf]
      %v2244 = vld [vmem:[%s1854 + $0x2c] sm:$0x1]
      %v2245 = vld [vmem:[%s1854 + $0x30] sm:$0xf]
      %v2246 = vld [vmem:[%s1854 + $0x34] sm:$0xf]
      %v2247 = vld [vmem:[%s1854 + $0x38] sm:$0x1]
      %v2248 = vld [vmem:[%s1854 + $0x3c] sm:$0xf]
      %v2249 = vld [vmem:[%s1854 + $0x40] sm:$0xf]
      %v2250 = vld [vmem:[%s1854 + $0x44] sm:$0x1]
      %v2251 = vld [vmem:[%s1854 + $0x48] sm:$0xf]
      %v2252 = vld [vmem:[%s1854 + $0x4c] sm:$0xf]
      %v2253 = vld [vmem:[%s1854 + $0x50] sm:$0x1]
      %v2254 = vld [vmem:[%s1854 + $0x54] sm:$0xf]
      %v2255 = vld [vmem:[%s1854 + $0x58] sm:$0xf]
      %v2256 = vld [vmem:[%s1854 + $0x5c] sm:$0x1]
      %v2257 = vld [vmem:[%s1854 + $0x60] sm:$0xf]
      %v2258 = vld [vmem:[%s1854 + $0x64] sm:$0xf]
      %v2259 = vld [vmem:[%s1854 + $0x68] sm:$0x1]
      %v2260 = vld [vmem:[%s1854 + $0x6c] sm:$0xf]
      %v2261 = vld [vmem:[%s1854 + $0x70] sm:$0xf]
      %v2262 = vld [vmem:[%s1854 + $0x74] sm:$0x1]
      %v2263 = vld [vmem:[%s1854 + $0x78] sm:$0xf]
      %v2264 = vld [vmem:[%s1854 + $0x7c] sm:$0xf]
      %v2265 = vld [vmem:[%s1854 + $0x80] sm:$0x1]
      %v2266 = vld [vmem:[%s1854 + $0x84] sm:$0xf]
      %v2267 = vld [vmem:[%s1854 + $0x88] sm:$0xf]
      %v2268 = vld [vmem:[%s1854 + $0x8c] sm:$0x1]
      %v2269 = vld [vmem:[%s1854 + $0x90] sm:$0xf]
      %v2270 = vld [vmem:[%s1854 + $0x94] sm:$0xf]
      %v2271 = vld [vmem:[%s1854 + $0x98] sm:$0x1]
      %v2272 = vld [vmem:[%s1854 + $0x9c] sm:$0xf]
      %v2273 = vld [vmem:[%s1854 + $0xa0] sm:$0xf]
      %v2274 = vld [vmem:[%s1854 + $0xa4] sm:$0x1]
      %v2275 = vld [vmem:[%s1854 + $0xa8] sm:$0xf]
      %v2276 = vld [vmem:[%s1854 + $0xac] sm:$0xf]
      %v2277 = vld [vmem:[%s1854 + $0xb0] sm:$0x1]
      %v2278 = vld [vmem:[%s1854 + $0xb4] sm:$0xf]
      %v2279 = vld [vmem:[%s1854 + $0xb8] sm:$0xf]
      %v2280 = vld [vmem:[%s1854 + $0xbc] sm:$0x1]
      %v2282 = vshrl.u32 %v2233, 16
      %v2284 = vrot.slane %v2282, 4
      %v2285 = vshll.u32 %v2233, 16
      %v2287 = vrot.slane %v2285, 5
      %v2288 = vor.u32 %v2284, %v2287
      %v2289 = vrot.slane %v2288, 4
      %v2291 = vshll.u32 %v2234, 16
      %v2293 = vrot.slane %v2291, 5
      %v2294 = vsel %vm630, %v2289, %v2293
      %v2295 = vshrl.u32 %v2234, 16
      %v2297 = vrot.slane %v2295, 4
      %v2298 = vor.u32 %v2297, %v2293
      %v2299 = vrot.slane %v2298, 4
      %v2301 = vshll.u32 %v2235, 16
      %v2303 = vrot.slane %v2301, 5
      %v2304 = vsel %vm630, %v2299, %v2303
      %v2306 = vshrl.u32 %v2236, 16
      %v2308 = vrot.slane %v2306, 4
      %v2309 = vshll.u32 %v2236, 16
      %v2311 = vrot.slane %v2309, 5
      %v2312 = vor.u32 %v2308, %v2311
      %v2313 = vrot.slane %v2312, 4
      %v2315 = vshll.u32 %v2237, 16
      %v2317 = vrot.slane %v2315, 5
      %v2318 = vsel %vm630, %v2313, %v2317
      %v2319 = vshrl.u32 %v2237, 16
      %v2321 = vrot.slane %v2319, 4
      %v2322 = vor.u32 %v2321, %v2317
      %v2323 = vrot.slane %v2322, 4
      %v2325 = vshll.u32 %v2238, 16
      %v2327 = vrot.slane %v2325, 5
      %v2328 = vsel %vm630, %v2323, %v2327
      %v2330 = vshrl.u32 %v2239, 16
      %v2332 = vrot.slane %v2330, 4
      %v2333 = vshll.u32 %v2239, 16
      %v2335 = vrot.slane %v2333, 5
      %v2336 = vor.u32 %v2332, %v2335
      %v2337 = vrot.slane %v2336, 4
      %v2339 = vshll.u32 %v2240, 16
      %v2341 = vrot.slane %v2339, 5
      %v2342 = vsel %vm630, %v2337, %v2341
      %v2343 = vshrl.u32 %v2240, 16
      %v2345 = vrot.slane %v2343, 4
      %v2346 = vor.u32 %v2345, %v2341
      %v2347 = vrot.slane %v2346, 4
      %v2349 = vshll.u32 %v2241, 16
      %v2351 = vrot.slane %v2349, 5
      %v2352 = vsel %vm630, %v2347, %v2351
      %v2354 = vshrl.u32 %v2242, 16
      %v2356 = vrot.slane %v2354, 4
      %v2357 = vshll.u32 %v2242, 16
      %v2359 = vrot.slane %v2357, 5
      %v2360 = vor.u32 %v2356, %v2359
      %v2361 = vrot.slane %v2360, 4
      %v2363 = vshll.u32 %v2243, 16
      %v2365 = vrot.slane %v2363, 5
      %v2366 = vsel %vm630, %v2361, %v2365
      %v2367 = vshrl.u32 %v2243, 16
      %v2369 = vrot.slane %v2367, 4
      %v2370 = vor.u32 %v2369, %v2365
      %v2371 = vrot.slane %v2370, 4
      %v2373 = vshll.u32 %v2244, 16
      %v2375 = vrot.slane %v2373, 5
      %v2376 = vsel %vm630, %v2371, %v2375
      %v2378 = vshrl.u32 %v2245, 16
      %v2380 = vrot.slane %v2378, 4
      %v2381 = vshll.u32 %v2245, 16
      %v2383 = vrot.slane %v2381, 5
      %v2384 = vor.u32 %v2380, %v2383
      %v2385 = vrot.slane %v2384, 4
      %v2387 = vshll.u32 %v2246, 16
      %v2389 = vrot.slane %v2387, 5
      %v2390 = vsel %vm630, %v2385, %v2389
      %v2391 = vshrl.u32 %v2246, 16
      %v2393 = vrot.slane %v2391, 4
      %v2394 = vor.u32 %v2393, %v2389
      %v2395 = vrot.slane %v2394, 4
      %v2397 = vshll.u32 %v2247, 16
      %v2399 = vrot.slane %v2397, 5
      %v2400 = vsel %vm630, %v2395, %v2399
      %v2402 = vshrl.u32 %v2248, 16
      %v2404 = vrot.slane %v2402, 4
      %v2405 = vshll.u32 %v2248, 16
      %v2407 = vrot.slane %v2405, 5
      %v2408 = vor.u32 %v2404, %v2407
      %v2409 = vrot.slane %v2408, 4
      %v2411 = vshll.u32 %v2249, 16
      %v2413 = vrot.slane %v2411, 5
      %v2414 = vsel %vm630, %v2409, %v2413
      %v2415 = vshrl.u32 %v2249, 16
      %v2417 = vrot.slane %v2415, 4
      %v2418 = vor.u32 %v2417, %v2413
      %v2419 = vrot.slane %v2418, 4
      %v2421 = vshll.u32 %v2250, 16
      %v2423 = vrot.slane %v2421, 5
      %v2424 = vsel %vm630, %v2419, %v2423
      %v2426 = vshrl.u32 %v2251, 16
      %v2428 = vrot.slane %v2426, 4
      %v2429 = vshll.u32 %v2251, 16
      %v2431 = vrot.slane %v2429, 5
      %v2432 = vor.u32 %v2428, %v2431
      %v2433 = vrot.slane %v2432, 4
      %v2435 = vshll.u32 %v2252, 16
      %v2437 = vrot.slane %v2435, 5
      %v2438 = vsel %vm630, %v2433, %v2437
      %v2439 = vshrl.u32 %v2252, 16
      %v2441 = vrot.slane %v2439, 4
      %v2442 = vor.u32 %v2441, %v2437
      %v2443 = vrot.slane %v2442, 4
      %v2445 = vshll.u32 %v2253, 16
      %v2447 = vrot.slane %v2445, 5
      %v2448 = vsel %vm630, %v2443, %v2447
      %v2450 = vshrl.u32 %v2254, 16
      %v2452 = vrot.slane %v2450, 4
      %v2453 = vshll.u32 %v2254, 16
      %v2455 = vrot.slane %v2453, 5
      %v2456 = vor.u32 %v2452, %v2455
      %v2457 = vrot.slane %v2456, 4
      %v2459 = vshll.u32 %v2255, 16
      %v2461 = vrot.slane %v2459, 5
      %v2462 = vsel %vm630, %v2457, %v2461
      %v2463 = vshrl.u32 %v2255, 16
      %v2465 = vrot.slane %v2463, 4
      %v2466 = vor.u32 %v2465, %v2461
      %v2467 = vrot.slane %v2466, 4
      %v2469 = vshll.u32 %v2256, 16
      %v2471 = vrot.slane %v2469, 5
      %v2472 = vsel %vm630, %v2467, %v2471
      %v2474 = vshrl.u32 %v2257, 16
      %v2476 = vrot.slane %v2474, 4
      %v2477 = vshll.u32 %v2257, 16
      %v2479 = vrot.slane %v2477, 5
      %v2480 = vor.u32 %v2476, %v2479
      %v2481 = vrot.slane %v2480, 4
      %v2483 = vshll.u32 %v2258, 16
      %v2485 = vrot.slane %v2483, 5
      %v2486 = vsel %vm630, %v2481, %v2485
      %v2487 = vshrl.u32 %v2258, 16
      %v2489 = vrot.slane %v2487, 4
      %v2490 = vor.u32 %v2489, %v2485
      %v2491 = vrot.slane %v2490, 4
      %v2493 = vshll.u32 %v2259, 16
      %v2495 = vrot.slane %v2493, 5
      %v2496 = vsel %vm630, %v2491, %v2495
      %v2498 = vshrl.u32 %v2260, 16
      %v2500 = vrot.slane %v2498, 4
      %v2501 = vshll.u32 %v2260, 16
      %v2503 = vrot.slane %v2501, 5
      %v2504 = vor.u32 %v2500, %v2503
      %v2505 = vrot.slane %v2504, 4
      %v2507 = vshll.u32 %v2261, 16
      %v2509 = vrot.slane %v2507, 5
      %v2510 = vsel %vm630, %v2505, %v2509
      %v2511 = vshrl.u32 %v2261, 16
      %v2513 = vrot.slane %v2511, 4
      %v2514 = vor.u32 %v2513, %v2509
      %v2515 = vrot.slane %v2514, 4
      %v2517 = vshll.u32 %v2262, 16
      %v2519 = vrot.slane %v2517, 5
      %v2520 = vsel %vm630, %v2515, %v2519
      %v2522 = vshrl.u32 %v2263, 16
      %v2524 = vrot.slane %v2522, 4
      %v2525 = vshll.u32 %v2263, 16
      %v2527 = vrot.slane %v2525, 5
      %v2528 = vor.u32 %v2524, %v2527
      %v2529 = vrot.slane %v2528, 4
      %v2531 = vshll.u32 %v2264, 16
      %v2533 = vrot.slane %v2531, 5
      %v2534 = vsel %vm630, %v2529, %v2533
      %v2535 = vshrl.u32 %v2264, 16
      %v2537 = vrot.slane %v2535, 4
      %v2538 = vor.u32 %v2537, %v2533
      %v2539 = vrot.slane %v2538, 4
      %v2541 = vshll.u32 %v2265, 16
      %v2543 = vrot.slane %v2541, 5
      %v2544 = vsel %vm630, %v2539, %v2543
      %v2546 = vshrl.u32 %v2266, 16
      %v2548 = vrot.slane %v2546, 4
      %v2549 = vshll.u32 %v2266, 16
      %v2551 = vrot.slane %v2549, 5
      %v2552 = vor.u32 %v2548, %v2551
      %v2553 = vrot.slane %v2552, 4
      %v2555 = vshll.u32 %v2267, 16
      %v2557 = vrot.slane %v2555, 5
      %v2558 = vsel %vm630, %v2553, %v2557
      %v2559 = vshrl.u32 %v2267, 16
      %v2561 = vrot.slane %v2559, 4
      %v2562 = vor.u32 %v2561, %v2557
      %v2563 = vrot.slane %v2562, 4
      %v2565 = vshll.u32 %v2268, 16
      %v2567 = vrot.slane %v2565, 5
      %v2568 = vsel %vm630, %v2563, %v2567
      %v2570 = vshrl.u32 %v2269, 16
      %v2572 = vrot.slane %v2570, 4
      %v2573 = vshll.u32 %v2269, 16
      %v2575 = vrot.slane %v2573, 5
      %v2576 = vor.u32 %v2572, %v2575
      %v2577 = vrot.slane %v2576, 4
      %v2579 = vshll.u32 %v2270, 16
      %v2581 = vrot.slane %v2579, 5
      %v2582 = vsel %vm630, %v2577, %v2581
      %v2583 = vshrl.u32 %v2270, 16
      %v2585 = vrot.slane %v2583, 4
      %v2586 = vor.u32 %v2585, %v2581
      %v2587 = vrot.slane %v2586, 4
      %v2589 = vshll.u32 %v2271, 16
      %v2591 = vrot.slane %v2589, 5
      %v2592 = vsel %vm630, %v2587, %v2591
      %v2594 = vshrl.u32 %v2272, 16
      %v2596 = vrot.slane %v2594, 4
      %v2597 = vshll.u32 %v2272, 16
      %v2599 = vrot.slane %v2597, 5
      %v2600 = vor.u32 %v2596, %v2599
      %v2601 = vrot.slane %v2600, 4
      %v2603 = vshll.u32 %v2273, 16
      %v2605 = vrot.slane %v2603, 5
      %v2606 = vsel %vm630, %v2601, %v2605
      %v2607 = vshrl.u32 %v2273, 16
      %v2609 = vrot.slane %v2607, 4
      %v2610 = vor.u32 %v2609, %v2605
      %v2611 = vrot.slane %v2610, 4
      %v2613 = vshll.u32 %v2274, 16
      %v2615 = vrot.slane %v2613, 5
      %v2616 = vsel %vm630, %v2611, %v2615
      %v2618 = vshrl.u32 %v2275, 16
      %v2620 = vrot.slane %v2618, 4
      %v2621 = vshll.u32 %v2275, 16
      %v2623 = vrot.slane %v2621, 5
      %v2624 = vor.u32 %v2620, %v2623
      %v2625 = vrot.slane %v2624, 4
      %v2627 = vshll.u32 %v2276, 16
      %v2629 = vrot.slane %v2627, 5
      %v2630 = vsel %vm630, %v2625, %v2629
      %v2631 = vshrl.u32 %v2276, 16
      %v2633 = vrot.slane %v2631, 4
      %v2634 = vor.u32 %v2633, %v2629
      %v2635 = vrot.slane %v2634, 4
      %v2637 = vshll.u32 %v2277, 16
      %v2639 = vrot.slane %v2637, 5
      %v2640 = vsel %vm630, %v2635, %v2639
      %v2642 = vshrl.u32 %v2278, 16
      %v2644 = vrot.slane %v2642, 4
      %v2645 = vshll.u32 %v2278, 16
      %v2647 = vrot.slane %v2645, 5
      %v2648 = vor.u32 %v2644, %v2647
      %v2649 = vrot.slane %v2648, 4
      %v2651 = vshll.u32 %v2279, 16
      %v2653 = vrot.slane %v2651, 5
      %v2654 = vsel %vm630, %v2649, %v2653
      %v2655 = vshrl.u32 %v2279, 16
      %v2657 = vrot.slane %v2655, 4
      %v2658 = vor.u32 %v2657, %v2653
      %v2659 = vrot.slane %v2658, 4
      %v2661 = vshll.u32 %v2280, 16
      %v2663 = vrot.slane %v2661, 5
      %v2664 = vsel %vm630, %v2659, %v2663
      %v2665 = vld [vmem:[#allocation2] sm:$0xff]
      %v2666 = vld [vmem:[#allocation2 + $0x8] sm:$0xff]
      %v2667 = vld [vmem:[#allocation2 + $0x10] sm:$0xff]
      %v2668 = vld [vmem:[#allocation2 + $0x18] sm:$0xff]
      %v2669 = vld [vmem:[#allocation2 + $0x20] sm:$0xff]
      %v2670 = vld [vmem:[#allocation2 + $0x28] sm:$0xff]
      %v2671 = vld [vmem:[#allocation2 + $0x30] sm:$0xff]
      %v2672 = vld [vmem:[#allocation2 + $0x38] sm:$0xff]
      %v2673 = vld [vmem:[#allocation2 + $0x40] sm:$0xff]
      %v2674 = vld [vmem:[#allocation2 + $0x48] sm:$0xff]
      %v2675 = vld [vmem:[#allocation2 + $0x50] sm:$0xff]
      %v2676 = vld [vmem:[#allocation2 + $0x58] sm:$0xff]
      %v2677 = vld [vmem:[#allocation2 + $0x60] sm:$0xff]
      %v2678 = vld [vmem:[#allocation2 + $0x68] sm:$0xff]
      %v2679 = vld [vmem:[#allocation2 + $0x70] sm:$0xff]
      %v2680 = vld [vmem:[#allocation2 + $0x78] sm:$0xff]
      %v2681 = vld [vmem:[#allocation2 + $0x80] sm:$0xff]
      %v2682 = vld [vmem:[#allocation2 + $0x88] sm:$0xff]
      %v2683 = vld [vmem:[#allocation2 + $0x90] sm:$0xff]
      %v2684 = vld [vmem:[#allocation2 + $0x98] sm:$0xff]
      %v2685 = vld [vmem:[#allocation2 + $0xa0] sm:$0xff]
      %v2686 = vld [vmem:[#allocation2 + $0xa8] sm:$0xff]
      %v2687 = vld [vmem:[#allocation2 + $0xb0] sm:$0xff]
      %v2688 = vld [vmem:[#allocation2 + $0xb8] sm:$0xff]
      %v2689 = vld [vmem:[#allocation2 + $0xc0] sm:$0xff]
      %v2690 = vld [vmem:[#allocation2 + $0xc8] sm:$0xff]
      %v2691 = vld [vmem:[#allocation2 + $0xd0] sm:$0xff]
      %v2692 = vld [vmem:[#allocation2 + $0xd8] sm:$0xff]
      %v2693 = vld [vmem:[#allocation2 + $0xe0] sm:$0xff]
      %v2694 = vld [vmem:[#allocation2 + $0xe8] sm:$0xff]
      %v2695 = vld [vmem:[#allocation2 + $0xf0] sm:$0xff]
      %v2696 = vld [vmem:[#allocation2 + $0xf8] sm:$0xff]
      %s2697 = scalar_lea.vmem %s1, 256
      %v2698 = vld [vmem:[%s2697] sm:$0xf]
      %v2699 = vld [vmem:[%s2697 + $0x4] sm:$0xf]
      %v2700 = vld [vmem:[%s2697 + $0x8] sm:$0xf]
      %v2701 = vld [vmem:[%s2697 + $0xc] sm:$0xf]
      %v2702 = vld [vmem:[%s2697 + $0x10] sm:$0xf]
      %v2703 = vld [vmem:[%s2697 + $0x14] sm:$0xf]
      %v2704 = vld [vmem:[%s2697 + $0x18] sm:$0xf]
      %v2705 = vld [vmem:[%s2697 + $0x1c] sm:$0xf]
      %v2706 = vld [vmem:[%s2697 + $0x20] sm:$0xf]
      %v2707 = vld [vmem:[%s2697 + $0x24] sm:$0xf]
      %v2708 = vld [vmem:[%s2697 + $0x28] sm:$0xf]
      %v2709 = vld [vmem:[%s2697 + $0x2c] sm:$0xf]
      %v2710 = vld [vmem:[%s2697 + $0x30] sm:$0xf]
      %v2711 = vld [vmem:[%s2697 + $0x34] sm:$0xf]
      %v2712 = vld [vmem:[%s2697 + $0x38] sm:$0xf]
      %v2713 = vld [vmem:[%s2697 + $0x3c] sm:$0xf]
      %v2714 = vunpack.c.l.b16 %v2294
      %v2715 = vunpack.c.l.b16 %v2304
      %v2716 = vunpack.c.l.b16 %v2318
      %v2717 = vunpack.c.l.b16 %v2328
      %v2718 = vunpack.c.l.b16 %v2342
      %v2719 = vunpack.c.l.b16 %v2352
      %v2720 = vunpack.c.l.b16 %v2366
      %v2721 = vunpack.c.l.b16 %v2376
      %v2722 = vunpack.c.l.b16 %v2390
      %v2723 = vunpack.c.l.b16 %v2400
      %v2724 = vunpack.c.l.b16 %v2414
      %v2725 = vunpack.c.l.b16 %v2424
      %v2726 = vunpack.c.l.b16 %v2438
      %v2727 = vunpack.c.l.b16 %v2448
      %v2728 = vunpack.c.l.b16 %v2462
      %v2729 = vunpack.c.l.b16 %v2472
      %v2730 = vunpack.c.l.b16 %v2486
      %v2731 = vunpack.c.l.b16 %v2496
      %v2732 = vunpack.c.l.b16 %v2510
      %v2733 = vunpack.c.l.b16 %v2520
      %v2734 = vunpack.c.l.b16 %v2534
      %v2735 = vunpack.c.l.b16 %v2544
      %v2736 = vunpack.c.l.b16 %v2558
      %v2737 = vunpack.c.l.b16 %v2568
      %v2738 = vunpack.c.l.b16 %v2582
      %v2739 = vunpack.c.l.b16 %v2592
      %v2740 = vunpack.c.l.b16 %v2606
      %v2741 = vunpack.c.l.b16 %v2616
      %v2742 = vunpack.c.l.b16 %v2630
      %v2743 = vunpack.c.l.b16 %v2640
      %v2744 = vunpack.c.l.b16 %v2654
      %v2745 = vunpack.c.l.b16 %v2664
      %v2746 = vpack.c.b16 %v2715, %v2714
      %v2747 = vpack.c.b16 %v2717, %v2716
      %v2748 = vpack.c.b16 %v2719, %v2718
      %v2749 = vpack.c.b16 %v2721, %v2720
      %v2750 = vpack.c.b16 %v2723, %v2722
      %v2751 = vpack.c.b16 %v2725, %v2724
      %v2752 = vpack.c.b16 %v2727, %v2726
      %v2753 = vpack.c.b16 %v2729, %v2728
      %v2754 = vpack.c.b16 %v2731, %v2730
      %v2755 = vpack.c.b16 %v2733, %v2732
      %v2756 = vpack.c.b16 %v2735, %v2734
      %v2757 = vpack.c.b16 %v2737, %v2736
      %v2758 = vpack.c.b16 %v2739, %v2738
      %v2759 = vpack.c.b16 %v2741, %v2740
      %v2760 = vpack.c.b16 %v2743, %v2742
      %v2761 = vpack.c.b16 %v2745, %v2744
      %v2794 = vunpack.c.l.b16 %v2698
      %v2795 = vunpack.c.l.b16 %v2699
      %v2796 = vunpack.c.l.b16 %v2700
      %v2797 = vunpack.c.l.b16 %v2701
      %v2798 = vunpack.c.l.b16 %v2702
      %v2799 = vunpack.c.l.b16 %v2703
      %v2800 = vunpack.c.l.b16 %v2704
      %v2801 = vunpack.c.l.b16 %v2705
      %v2802 = vunpack.c.l.b16 %v2706
      %v2803 = vunpack.c.l.b16 %v2707
      %v2804 = vunpack.c.l.b16 %v2708
      %v2805 = vunpack.c.l.b16 %v2709
      %v2806 = vunpack.c.l.b16 %v2710
      %v2807 = vunpack.c.l.b16 %v2711
      %v2808 = vunpack.c.l.b16 %v2712
      %v2809 = vunpack.c.l.b16 %v2713
      %v2810 = vpack.c.b16 %v2795, %v2794
      %v2811 = vpack.c.b16 %v2797, %v2796
      %v2812 = vpack.c.b16 %v2799, %v2798
      %v2813 = vpack.c.b16 %v2801, %v2800
      %v2814 = vpack.c.b16 %v2803, %v2802
      %v2815 = vpack.c.b16 %v2805, %v2804
      %v2816 = vpack.c.b16 %v2807, %v2806
      %v2817 = vpack.c.b16 %v2809, %v2808
      %2826 = vmatpush.bf16.msra.mxu0 %v2817
      %2827 = vmatpush.bf16.msra.mxu0 %v2816
      %2828 = vmatpush.bf16.msra.mxu0 %v2815
      %2829 = vmatpush.bf16.msra.mxu0 %v2814
      %2830 = vmatpush.bf16.msra.mxu0 %v2813
      %2831 = vmatpush.bf16.msra.mxu0 %v2812
      %2832 = vmatpush.bf16.msra.mxu0 %v2811
      %2833 = vmatpush.bf16.msra.mxu0 %v2810
      %2834 = vmatmul.bf16.gmra.mxu0 %v2746
      %v2835 = vpop.f32.mrf.mxu0
      %v2836 = vadd.f32 0.0, %v2835
      %v2837 = vpop.f32.mrf.mxu0
      %v2838 = vadd.f32 0.0, %v2837
      %2839 = vmatmul.bf16.gmra.mxu0 %v2747
      %v2840 = vpop.f32.mrf.mxu0
      %v2841 = vadd.f32 0.0, %v2840
      %v2842 = vpop.f32.mrf.mxu0
      %v2843 = vadd.f32 0.0, %v2842
      %2844 = vmatmul.bf16.gmra.mxu0 %v2748
      %v2845 = vpop.f32.mrf.mxu0
      %v2846 = vadd.f32 0.0, %v2845
      %v2847 = vpop.f32.mrf.mxu0
      %v2848 = vadd.f32 0.0, %v2847
      %2849 = vmatmul.bf16.gmra.mxu0 %v2749
      %v2850 = vpop.f32.mrf.mxu0
      %v2851 = vadd.f32 0.0, %v2850
      %v2852 = vpop.f32.mrf.mxu0
      %v2853 = vadd.f32 0.0, %v2852
      %2854 = vmatmul.bf16.gmra.mxu0 %v2750
      %v2855 = vpop.f32.mrf.mxu0
      %v2856 = vadd.f32 0.0, %v2855
      %v2857 = vpop.f32.mrf.mxu0
      %v2858 = vadd.f32 0.0, %v2857
      %2859 = vmatmul.bf16.gmra.mxu0 %v2751
      %v2860 = vpop.f32.mrf.mxu0
      %v2861 = vadd.f32 0.0, %v2860
      %v2862 = vpop.f32.mrf.mxu0
      %v2863 = vadd.f32 0.0, %v2862
      %2864 = vmatmul.bf16.gmra.mxu0 %v2752
      %v2865 = vpop.f32.mrf.mxu0
      %v2866 = vadd.f32 0.0, %v2865
      %v2867 = vpop.f32.mrf.mxu0
      %v2868 = vadd.f32 0.0, %v2867
      %2869 = vmatmul.bf16.gmra.mxu0 %v2753
      %v2870 = vpop.f32.mrf.mxu0
      %v2871 = vadd.f32 0.0, %v2870
      %v2872 = vpop.f32.mrf.mxu0
      %v2873 = vadd.f32 0.0, %v2872
      %2874 = vmatmul.bf16.gmra.mxu0 %v2754
      %v2875 = vpop.f32.mrf.mxu0
      %v2876 = vadd.f32 0.0, %v2875
      %v2877 = vpop.f32.mrf.mxu0
      %v2878 = vadd.f32 0.0, %v2877
      %2879 = vmatmul.bf16.gmra.mxu0 %v2755
      %v2880 = vpop.f32.mrf.mxu0
      %v2881 = vadd.f32 0.0, %v2880
      %v2882 = vpop.f32.mrf.mxu0
      %v2883 = vadd.f32 0.0, %v2882
      %2884 = vmatmul.bf16.gmra.mxu0 %v2756
      %v2885 = vpop.f32.mrf.mxu0
      %v2886 = vadd.f32 0.0, %v2885
      %v2887 = vpop.f32.mrf.mxu0
      %v2888 = vadd.f32 0.0, %v2887
      %2889 = vmatmul.bf16.gmra.mxu0 %v2757
      %v2890 = vpop.f32.mrf.mxu0
      %v2891 = vadd.f32 0.0, %v2890
      %v2892 = vpop.f32.mrf.mxu0
      %v2893 = vadd.f32 0.0, %v2892
      %2894 = vmatmul.bf16.gmra.mxu0 %v2758
      %v2895 = vpop.f32.mrf.mxu0
      %v2896 = vadd.f32 0.0, %v2895
      %v2897 = vpop.f32.mrf.mxu0
      %v2898 = vadd.f32 0.0, %v2897
      %2899 = vmatmul.bf16.gmra.mxu0 %v2759
      %v2900 = vpop.f32.mrf.mxu0
      %v2901 = vadd.f32 0.0, %v2900
      %v2902 = vpop.f32.mrf.mxu0
      %v2903 = vadd.f32 0.0, %v2902
      %2904 = vmatmul.bf16.gmra.mxu0 %v2760
      %v2905 = vpop.f32.mrf.mxu0
      %v2906 = vadd.f32 0.0, %v2905
      %v2907 = vpop.f32.mrf.mxu0
      %v2908 = vadd.f32 0.0, %v2907
      %2909 = vmatmul.bf16.gmra.mxu0 %v2761
      %v2910 = vpop.f32.mrf.mxu0
      %v2911 = vadd.f32 0.0, %v2910
      %v2912 = vpop.f32.mrf.mxu0
      %v2913 = vadd.f32 0.0, %v2912
      %2914 = vdwg.mxu0
      %v2915 = vadd.f32 %v2665, %v2836
      %v2916 = vadd.f32 %v2666, %v2838
      %v2917 = vadd.f32 %v2667, %v2841
      %v2918 = vadd.f32 %v2668, %v2843
      %v2919 = vadd.f32 %v2669, %v2846
      %v2920 = vadd.f32 %v2670, %v2848
      %v2921 = vadd.f32 %v2671, %v2851
      %v2922 = vadd.f32 %v2672, %v2853
      %v2923 = vadd.f32 %v2673, %v2856
      %v2924 = vadd.f32 %v2674, %v2858
      %v2925 = vadd.f32 %v2675, %v2861
      %v2926 = vadd.f32 %v2676, %v2863
      %v2927 = vadd.f32 %v2677, %v2866
      %v2928 = vadd.f32 %v2678, %v2868
      %v2929 = vadd.f32 %v2679, %v2871
      %v2930 = vadd.f32 %v2680, %v2873
      %v2931 = vadd.f32 %v2681, %v2876
      %v2932 = vadd.f32 %v2682, %v2878
      %v2933 = vadd.f32 %v2683, %v2881
      %v2934 = vadd.f32 %v2684, %v2883
      %v2935 = vadd.f32 %v2685, %v2886
      %v2936 = vadd.f32 %v2686, %v2888
      %v2937 = vadd.f32 %v2687, %v2891
      %v2938 = vadd.f32 %v2688, %v2893
      %v2939 = vadd.f32 %v2689, %v2896
      %v2940 = vadd.f32 %v2690, %v2898
      %v2941 = vadd.f32 %v2691, %v2901
      %v2942 = vadd.f32 %v2692, %v2903
      %v2943 = vadd.f32 %v2693, %v2906
      %v2944 = vadd.f32 %v2694, %v2908
      %v2945 = vadd.f32 %v2695, %v2911
      %v2946 = vadd.f32 %v2696, %v2913
      %2947 = vst [vmem:[#allocation2] sm:$0xff] %v2915
      %2948 = vst [vmem:[#allocation2 + $0x8] sm:$0xff] %v2916
      %2949 = vst [vmem:[#allocation2 + $0x10] sm:$0xff] %v2917
      %2950 = vst [vmem:[#allocation2 + $0x18] sm:$0xff] %v2918
      %2951 = vst [vmem:[#allocation2 + $0x20] sm:$0xff] %v2919
      %2952 = vst [vmem:[#allocation2 + $0x28] sm:$0xff] %v2920
      %2953 = vst [vmem:[#allocation2 + $0x30] sm:$0xff] %v2921
      %2954 = vst [vmem:[#allocation2 + $0x38] sm:$0xff] %v2922
      %2955 = vst [vmem:[#allocation2 + $0x40] sm:$0xff] %v2923
      %2956 = vst [vmem:[#allocation2 + $0x48] sm:$0xff] %v2924
      %2957 = vst [vmem:[#allocation2 + $0x50] sm:$0xff] %v2925
      %2958 = vst [vmem:[#allocation2 + $0x58] sm:$0xff] %v2926
      %2959 = vst [vmem:[#allocation2 + $0x60] sm:$0xff] %v2927
      %2960 = vst [vmem:[#allocation2 + $0x68] sm:$0xff] %v2928
      %2961 = vst [vmem:[#allocation2 + $0x70] sm:$0xff] %v2929
      %2962 = vst [vmem:[#allocation2 + $0x78] sm:$0xff] %v2930
      %2963 = vst [vmem:[#allocation2 + $0x80] sm:$0xff] %v2931
      %2964 = vst [vmem:[#allocation2 + $0x88] sm:$0xff] %v2932
      %2965 = vst [vmem:[#allocation2 + $0x90] sm:$0xff] %v2933
      %2966 = vst [vmem:[#allocation2 + $0x98] sm:$0xff] %v2934
      %2967 = vst [vmem:[#allocation2 + $0xa0] sm:$0xff] %v2935
      %2968 = vst [vmem:[#allocation2 + $0xa8] sm:$0xff] %v2936
      %2969 = vst [vmem:[#allocation2 + $0xb0] sm:$0xff] %v2937
      %2970 = vst [vmem:[#allocation2 + $0xb8] sm:$0xff] %v2938
      %2971 = vst [vmem:[#allocation2 + $0xc0] sm:$0xff] %v2939
      %2972 = vst [vmem:[#allocation2 + $0xc8] sm:$0xff] %v2940
      %2973 = vst [vmem:[#allocation2 + $0xd0] sm:$0xff] %v2941
      %2974 = vst [vmem:[#allocation2 + $0xd8] sm:$0xff] %v2942
      %2975 = vst [vmem:[#allocation2 + $0xe0] sm:$0xff] %v2943
      %2976 = vst [vmem:[#allocation2 + $0xe8] sm:$0xff] %v2944
      %2977 = vst [vmem:[#allocation2 + $0xf0] sm:$0xff] %v2945
      %2978 = vst [vmem:[#allocation2 + $0xf8] sm:$0xff] %v2946
      %v2979 = vld [vmem:[%s1854] sm:$0xe]
      %v2980 = vld [vmem:[%s1854 + $0x4] sm:$0xf]
      %v2981 = vld [vmem:[%s1854 + $0x8] sm:$0x1]
      %v2982 = vld [vmem:[%s1854 + $0xc] sm:$0xe]
      %v2983 = vld [vmem:[%s1854 + $0x10] sm:$0xf]
      %v2984 = vld [vmem:[%s1854 + $0x14] sm:$0x1]
      %v2985 = vld [vmem:[%s1854 + $0x18] sm:$0xe]
      %v2986 = vld [vmem:[%s1854 + $0x1c] sm:$0xf]
      %v2987 = vld [vmem:[%s1854 + $0x20] sm:$0x1]
      %v2988 = vld [vmem:[%s1854 + $0x24] sm:$0xe]
      %v2989 = vld [vmem:[%s1854 + $0x28] sm:$0xf]
      %v2990 = vld [vmem:[%s1854 + $0x2c] sm:$0x1]
      %v2991 = vld [vmem:[%s1854 + $0x30] sm:$0xe]
      %v2992 = vld [vmem:[%s1854 + $0x34] sm:$0xf]
      %v2993 = vld [vmem:[%s1854 + $0x38] sm:$0x1]
      %v2994 = vld [vmem:[%s1854 + $0x3c] sm:$0xe]
      %v2995 = vld [vmem:[%s1854 + $0x40] sm:$0xf]
      %v2996 = vld [vmem:[%s1854 + $0x44] sm:$0x1]
      %v2997 = vld [vmem:[%s1854 + $0x48] sm:$0xe]
      %v2998 = vld [vmem:[%s1854 + $0x4c] sm:$0xf]
      %v2999 = vld [vmem:[%s1854 + $0x50] sm:$0x1]
      %v3000 = vld [vmem:[%s1854 + $0x54] sm:$0xe]
      %v3001 = vld [vmem:[%s1854 + $0x58] sm:$0xf]
      %v3002 = vld [vmem:[%s1854 + $0x5c] sm:$0x1]
      %v3003 = vld [vmem:[%s1854 + $0x60] sm:$0xe]
      %v3004 = vld [vmem:[%s1854 + $0x64] sm:$0xf]
      %v3005 = vld [vmem:[%s1854 + $0x68] sm:$0x1]
      %v3006 = vld [vmem:[%s1854 + $0x6c] sm:$0xe]
      %v3007 = vld [vmem:[%s1854 + $0x70] sm:$0xf]
      %v3008 = vld [vmem:[%s1854 + $0x74] sm:$0x1]
      %v3009 = vld [vmem:[%s1854 + $0x78] sm:$0xe]
      %v3010 = vld [vmem:[%s1854 + $0x7c] sm:$0xf]
      %v3011 = vld [vmem:[%s1854 + $0x80] sm:$0x1]
      %v3012 = vld [vmem:[%s1854 + $0x84] sm:$0xe]
      %v3013 = vld [vmem:[%s1854 + $0x88] sm:$0xf]
      %v3014 = vld [vmem:[%s1854 + $0x8c] sm:$0x1]
      %v3015 = vld [vmem:[%s1854 + $0x90] sm:$0xe]
      %v3016 = vld [vmem:[%s1854 + $0x94] sm:$0xf]
      %v3017 = vld [vmem:[%s1854 + $0x98] sm:$0x1]
      %v3018 = vld [vmem:[%s1854 + $0x9c] sm:$0xe]
      %v3019 = vld [vmem:[%s1854 + $0xa0] sm:$0xf]
      %v3020 = vld [vmem:[%s1854 + $0xa4] sm:$0x1]
      %v3021 = vld [vmem:[%s1854 + $0xa8] sm:$0xe]
      %v3022 = vld [vmem:[%s1854 + $0xac] sm:$0xf]
      %v3023 = vld [vmem:[%s1854 + $0xb0] sm:$0x1]
      %v3024 = vld [vmem:[%s1854 + $0xb4] sm:$0xe]
      %v3025 = vld [vmem:[%s1854 + $0xb8] sm:$0xf]
      %v3026 = vld [vmem:[%s1854 + $0xbc] sm:$0x1]
      %v3075 = vrot.slane %v2979, 5
      %v3076 = vrot.slane %v3075, 4
      %v3077 = vrot.slane %v2980, 5
      %v3078 = vsel %vm1427, %v3076, %v3077
      %v3079 = vrot.slane %v3077, 4
      %v3080 = vrot.slane %v2981, 5
      %v3081 = vsel %vm1427, %v3079, %v3080
      %v3082 = vrot.slane %v2982, 5
      %v3083 = vrot.slane %v3082, 4
      %v3084 = vrot.slane %v2983, 5
      %v3085 = vsel %vm1427, %v3083, %v3084
      %v3086 = vrot.slane %v3084, 4
      %v3087 = vrot.slane %v2984, 5
      %v3088 = vsel %vm1427, %v3086, %v3087
      %v3089 = vrot.slane %v2985, 5
      %v3090 = vrot.slane %v3089, 4
      %v3091 = vrot.slane %v2986, 5
      %v3092 = vsel %vm1427, %v3090, %v3091
      %v3093 = vrot.slane %v3091, 4
      %v3094 = vrot.slane %v2987, 5
      %v3095 = vsel %vm1427, %v3093, %v3094
      %v3096 = vrot.slane %v2988, 5
      %v3097 = vrot.slane %v3096, 4
      %v3098 = vrot.slane %v2989, 5
      %v3099 = vsel %vm1427, %v3097, %v3098
      %v3100 = vrot.slane %v3098, 4
      %v3101 = vrot.slane %v2990, 5
      %v3102 = vsel %vm1427, %v3100, %v3101
      %v3103 = vrot.slane %v2991, 5
      %v3104 = vrot.slane %v3103, 4
      %v3105 = vrot.slane %v2992, 5
      %v3106 = vsel %vm1427, %v3104, %v3105
      %v3107 = vrot.slane %v3105, 4
      %v3108 = vrot.slane %v2993, 5
      %v3109 = vsel %vm1427, %v3107, %v3108
      %v3110 = vrot.slane %v2994, 5
      %v3111 = vrot.slane %v3110, 4
      %v3112 = vrot.slane %v2995, 5
      %v3113 = vsel %vm1427, %v3111, %v3112
      %v3114 = vrot.slane %v3112, 4
      %v3115 = vrot.slane %v2996, 5
      %v3116 = vsel %vm1427, %v3114, %v3115
      %v3117 = vrot.slane %v2997, 5
      %v3118 = vrot.slane %v3117, 4
      %v3119 = vrot.slane %v2998, 5
      %v3120 = vsel %vm1427, %v3118, %v3119
      %v3121 = vrot.slane %v3119, 4
      %v3122 = vrot.slane %v2999, 5
      %v3123 = vsel %vm1427, %v3121, %v3122
      %v3124 = vrot.slane %v3000, 5
      %v3125 = vrot.slane %v3124, 4
      %v3126 = vrot.slane %v3001, 5
      %v3127 = vsel %vm1427, %v3125, %v3126
      %v3128 = vrot.slane %v3126, 4
      %v3129 = vrot.slane %v3002, 5
      %v3130 = vsel %vm1427, %v3128, %v3129
      %v3131 = vrot.slane %v3003, 5
      %v3132 = vrot.slane %v3131, 4
      %v3133 = vrot.slane %v3004, 5
      %v3134 = vsel %vm1427, %v3132, %v3133
      %v3135 = vrot.slane %v3133, 4
      %v3136 = vrot.slane %v3005, 5
      %v3137 = vsel %vm1427, %v3135, %v3136
      %v3138 = vrot.slane %v3006, 5
      %v3139 = vrot.slane %v3138, 4
      %v3140 = vrot.slane %v3007, 5
      %v3141 = vsel %vm1427, %v3139, %v3140
      %v3142 = vrot.slane %v3140, 4
      %v3143 = vrot.slane %v3008, 5
      %v3144 = vsel %vm1427, %v3142, %v3143
      %v3145 = vrot.slane %v3009, 5
      %v3146 = vrot.slane %v3145, 4
      %v3147 = vrot.slane %v3010, 5
      %v3148 = vsel %vm1427, %v3146, %v3147
      %v3149 = vrot.slane %v3147, 4
      %v3150 = vrot.slane %v3011, 5
      %v3151 = vsel %vm1427, %v3149, %v3150
      %v3152 = vrot.slane %v3012, 5
      %v3153 = vrot.slane %v3152, 4
      %v3154 = vrot.slane %v3013, 5
      %v3155 = vsel %vm1427, %v3153, %v3154
      %v3156 = vrot.slane %v3154, 4
      %v3157 = vrot.slane %v3014, 5
      %v3158 = vsel %vm1427, %v3156, %v3157
      %v3159 = vrot.slane %v3015, 5
      %v3160 = vrot.slane %v3159, 4
      %v3161 = vrot.slane %v3016, 5
      %v3162 = vsel %vm1427, %v3160, %v3161
      %v3163 = vrot.slane %v3161, 4
      %v3164 = vrot.slane %v3017, 5
      %v3165 = vsel %vm1427, %v3163, %v3164
      %v3166 = vrot.slane %v3018, 5
      %v3167 = vrot.slane %v3166, 4
      %v3168 = vrot.slane %v3019, 5
      %v3169 = vsel %vm1427, %v3167, %v3168
      %v3170 = vrot.slane %v3168, 4
      %v3171 = vrot.slane %v3020, 5
      %v3172 = vsel %vm1427, %v3170, %v3171
      %v3173 = vrot.slane %v3021, 5
      %v3174 = vrot.slane %v3173, 4
      %v3175 = vrot.slane %v3022, 5
      %v3176 = vsel %vm1427, %v3174, %v3175
      %v3177 = vrot.slane %v3175, 4
      %v3178 = vrot.slane %v3023, 5
      %v3179 = vsel %vm1427, %v3177, %v3178
      %v3180 = vrot.slane %v3024, 5
      %v3181 = vrot.slane %v3180, 4
      %v3182 = vrot.slane %v3025, 5
      %v3183 = vsel %vm1427, %v3181, %v3182
      %v3184 = vrot.slane %v3182, 4
      %v3185 = vrot.slane %v3026, 5
      %v3186 = vsel %vm1427, %v3184, %v3185
      %v3187 = vld [vmem:[#allocation2] sm:$0xff]
      %v3188 = vld [vmem:[#allocation2 + $0x8] sm:$0xff]
      %v3189 = vld [vmem:[#allocation2 + $0x10] sm:$0xff]
      %v3190 = vld [vmem:[#allocation2 + $0x18] sm:$0xff]
      %v3191 = vld [vmem:[#allocation2 + $0x20] sm:$0xff]
      %v3192 = vld [vmem:[#allocation2 + $0x28] sm:$0xff]
      %v3193 = vld [vmem:[#allocation2 + $0x30] sm:$0xff]
      %v3194 = vld [vmem:[#allocation2 + $0x38] sm:$0xff]
      %v3195 = vld [vmem:[#allocation2 + $0x40] sm:$0xff]
      %v3196 = vld [vmem:[#allocation2 + $0x48] sm:$0xff]
      %v3197 = vld [vmem:[#allocation2 + $0x50] sm:$0xff]
      %v3198 = vld [vmem:[#allocation2 + $0x58] sm:$0xff]
      %v3199 = vld [vmem:[#allocation2 + $0x60] sm:$0xff]
      %v3200 = vld [vmem:[#allocation2 + $0x68] sm:$0xff]
      %v3201 = vld [vmem:[#allocation2 + $0x70] sm:$0xff]
      %v3202 = vld [vmem:[#allocation2 + $0x78] sm:$0xff]
      %v3203 = vld [vmem:[#allocation2 + $0x80] sm:$0xff]
      %v3204 = vld [vmem:[#allocation2 + $0x88] sm:$0xff]
      %v3205 = vld [vmem:[#allocation2 + $0x90] sm:$0xff]
      %v3206 = vld [vmem:[#allocation2 + $0x98] sm:$0xff]
      %v3207 = vld [vmem:[#allocation2 + $0xa0] sm:$0xff]
      %v3208 = vld [vmem:[#allocation2 + $0xa8] sm:$0xff]
      %v3209 = vld [vmem:[#allocation2 + $0xb0] sm:$0xff]
      %v3210 = vld [vmem:[#allocation2 + $0xb8] sm:$0xff]
      %v3211 = vld [vmem:[#allocation2 + $0xc0] sm:$0xff]
      %v3212 = vld [vmem:[#allocation2 + $0xc8] sm:$0xff]
      %v3213 = vld [vmem:[#allocation2 + $0xd0] sm:$0xff]
      %v3214 = vld [vmem:[#allocation2 + $0xd8] sm:$0xff]
      %v3215 = vld [vmem:[#allocation2 + $0xe0] sm:$0xff]
      %v3216 = vld [vmem:[#allocation2 + $0xe8] sm:$0xff]
      %v3217 = vld [vmem:[#allocation2 + $0xf0] sm:$0xff]
      %v3218 = vld [vmem:[#allocation2 + $0xf8] sm:$0xff]
      %s3219 = scalar_lea.vmem %s1, 320
      %v3220 = vld [vmem:[%s3219] sm:$0xf]
      %v3221 = vld [vmem:[%s3219 + $0x4] sm:$0xf]
      %v3222 = vld [vmem:[%s3219 + $0x8] sm:$0xf]
      %v3223 = vld [vmem:[%s3219 + $0xc] sm:$0xf]
      %v3224 = vld [vmem:[%s3219 + $0x10] sm:$0xf]
      %v3225 = vld [vmem:[%s3219 + $0x14] sm:$0xf]
      %v3226 = vld [vmem:[%s3219 + $0x18] sm:$0xf]
      %v3227 = vld [vmem:[%s3219 + $0x1c] sm:$0xf]
      %v3228 = vld [vmem:[%s3219 + $0x20] sm:$0xf]
      %v3229 = vld [vmem:[%s3219 + $0x24] sm:$0xf]
      %v3230 = vld [vmem:[%s3219 + $0x28] sm:$0xf]
      %v3231 = vld [vmem:[%s3219 + $0x2c] sm:$0xf]
      %v3232 = vld [vmem:[%s3219 + $0x30] sm:$0xf]
      %v3233 = vld [vmem:[%s3219 + $0x34] sm:$0xf]
      %v3234 = vld [vmem:[%s3219 + $0x38] sm:$0xf]
      %v3235 = vld [vmem:[%s3219 + $0x3c] sm:$0xf]
      %v3236 = vunpack.c.l.b16 %v3078
      %v3237 = vunpack.c.l.b16 %v3081
      %v3238 = vunpack.c.l.b16 %v3085
      %v3239 = vunpack.c.l.b16 %v3088
      %v3240 = vunpack.c.l.b16 %v3092
      %v3241 = vunpack.c.l.b16 %v3095
      %v3242 = vunpack.c.l.b16 %v3099
      %v3243 = vunpack.c.l.b16 %v3102
      %v3244 = vunpack.c.l.b16 %v3106
      %v3245 = vunpack.c.l.b16 %v3109
      %v3246 = vunpack.c.l.b16 %v3113
      %v3247 = vunpack.c.l.b16 %v3116
      %v3248 = vunpack.c.l.b16 %v3120
      %v3249 = vunpack.c.l.b16 %v3123
      %v3250 = vunpack.c.l.b16 %v3127
      %v3251 = vunpack.c.l.b16 %v3130
      %v3252 = vunpack.c.l.b16 %v3134
      %v3253 = vunpack.c.l.b16 %v3137
      %v3254 = vunpack.c.l.b16 %v3141
      %v3255 = vunpack.c.l.b16 %v3144
      %v3256 = vunpack.c.l.b16 %v3148
      %v3257 = vunpack.c.l.b16 %v3151
      %v3258 = vunpack.c.l.b16 %v3155
      %v3259 = vunpack.c.l.b16 %v3158
      %v3260 = vunpack.c.l.b16 %v3162
      %v3261 = vunpack.c.l.b16 %v3165
      %v3262 = vunpack.c.l.b16 %v3169
      %v3263 = vunpack.c.l.b16 %v3172
      %v3264 = vunpack.c.l.b16 %v3176
      %v3265 = vunpack.c.l.b16 %v3179
      %v3266 = vunpack.c.l.b16 %v3183
      %v3267 = vunpack.c.l.b16 %v3186
      %v3268 = vpack.c.b16 %v3237, %v3236
      %v3269 = vpack.c.b16 %v3239, %v3238
      %v3270 = vpack.c.b16 %v3241, %v3240
      %v3271 = vpack.c.b16 %v3243, %v3242
      %v3272 = vpack.c.b16 %v3245, %v3244
      %v3273 = vpack.c.b16 %v3247, %v3246
      %v3274 = vpack.c.b16 %v3249, %v3248
      %v3275 = vpack.c.b16 %v3251, %v3250
      %v3276 = vpack.c.b16 %v3253, %v3252
      %v3277 = vpack.c.b16 %v3255, %v3254
      %v3278 = vpack.c.b16 %v3257, %v3256
      %v3279 = vpack.c.b16 %v3259, %v3258
      %v3280 = vpack.c.b16 %v3261, %v3260
      %v3281 = vpack.c.b16 %v3263, %v3262
      %v3282 = vpack.c.b16 %v3265, %v3264
      %v3283 = vpack.c.b16 %v3267, %v3266
      %v3316 = vunpack.c.l.b16 %v3220
      %v3317 = vunpack.c.l.b16 %v3221
      %v3318 = vunpack.c.l.b16 %v3222
      %v3319 = vunpack.c.l.b16 %v3223
      %v3320 = vunpack.c.l.b16 %v3224
      %v3321 = vunpack.c.l.b16 %v3225
      %v3322 = vunpack.c.l.b16 %v3226
      %v3323 = vunpack.c.l.b16 %v3227
      %v3324 = vunpack.c.l.b16 %v3228
      %v3325 = vunpack.c.l.b16 %v3229
      %v3326 = vunpack.c.l.b16 %v3230
      %v3327 = vunpack.c.l.b16 %v3231
      %v3328 = vunpack.c.l.b16 %v3232
      %v3329 = vunpack.c.l.b16 %v3233
      %v3330 = vunpack.c.l.b16 %v3234
      %v3331 = vunpack.c.l.b16 %v3235
      %v3332 = vpack.c.b16 %v3317, %v3316
      %v3333 = vpack.c.b16 %v3319, %v3318
      %v3334 = vpack.c.b16 %v3321, %v3320
      %v3335 = vpack.c.b16 %v3323, %v3322
      %v3336 = vpack.c.b16 %v3325, %v3324
      %v3337 = vpack.c.b16 %v3327, %v3326
      %v3338 = vpack.c.b16 %v3329, %v3328
      %v3339 = vpack.c.b16 %v3331, %v3330
      %3348 = vmatpush.bf16.msra.mxu0 %v3339
      %3349 = vmatpush.bf16.msra.mxu0 %v3338
      %3350 = vmatpush.bf16.msra.mxu0 %v3337
      %3351 = vmatpush.bf16.msra.mxu0 %v3336
      %3352 = vmatpush.bf16.msra.mxu0 %v3335
      %3353 = vmatpush.bf16.msra.mxu0 %v3334
      %3354 = vmatpush.bf16.msra.mxu0 %v3333
      %3355 = vmatpush.bf16.msra.mxu0 %v3332
      %3356 = vmatmul.bf16.gmra.mxu0 %v3268
      %v3357 = vpop.f32.mrf.mxu0
      %v3358 = vadd.f32 0.0, %v3357
      %v3359 = vpop.f32.mrf.mxu0
      %v3360 = vadd.f32 0.0, %v3359
      %3361 = vmatmul.bf16.gmra.mxu0 %v3269
      %v3362 = vpop.f32.mrf.mxu0
      %v3363 = vadd.f32 0.0, %v3362
      %v3364 = vpop.f32.mrf.mxu0
      %v3365 = vadd.f32 0.0, %v3364
      %3366 = vmatmul.bf16.gmra.mxu0 %v3270
      %v3367 = vpop.f32.mrf.mxu0
      %v3368 = vadd.f32 0.0, %v3367
      %v3369 = vpop.f32.mrf.mxu0
      %v3370 = vadd.f32 0.0, %v3369
      %3371 = vmatmul.bf16.gmra.mxu0 %v3271
      %v3372 = vpop.f32.mrf.mxu0
      %v3373 = vadd.f32 0.0, %v3372
      %v3374 = vpop.f32.mrf.mxu0
      %v3375 = vadd.f32 0.0, %v3374
      %3376 = vmatmul.bf16.gmra.mxu0 %v3272
      %v3377 = vpop.f32.mrf.mxu0
      %v3378 = vadd.f32 0.0, %v3377
      %v3379 = vpop.f32.mrf.mxu0
      %v3380 = vadd.f32 0.0, %v3379
      %3381 = vmatmul.bf16.gmra.mxu0 %v3273
      %v3382 = vpop.f32.mrf.mxu0
      %v3383 = vadd.f32 0.0, %v3382
      %v3384 = vpop.f32.mrf.mxu0
      %v3385 = vadd.f32 0.0, %v3384
      %3386 = vmatmul.bf16.gmra.mxu0 %v3274
      %v3387 = vpop.f32.mrf.mxu0
      %v3388 = vadd.f32 0.0, %v3387
      %v3389 = vpop.f32.mrf.mxu0
      %v3390 = vadd.f32 0.0, %v3389
      %3391 = vmatmul.bf16.gmra.mxu0 %v3275
      %v3392 = vpop.f32.mrf.mxu0
      %v3393 = vadd.f32 0.0, %v3392
      %v3394 = vpop.f32.mrf.mxu0
      %v3395 = vadd.f32 0.0, %v3394
      %3396 = vmatmul.bf16.gmra.mxu0 %v3276
      %v3397 = vpop.f32.mrf.mxu0
      %v3398 = vadd.f32 0.0, %v3397
      %v3399 = vpop.f32.mrf.mxu0
      %v3400 = vadd.f32 0.0, %v3399
      %3401 = vmatmul.bf16.gmra.mxu0 %v3277
      %v3402 = vpop.f32.mrf.mxu0
      %v3403 = vadd.f32 0.0, %v3402
      %v3404 = vpop.f32.mrf.mxu0
      %v3405 = vadd.f32 0.0, %v3404
      %3406 = vmatmul.bf16.gmra.mxu0 %v3278
      %v3407 = vpop.f32.mrf.mxu0
      %v3408 = vadd.f32 0.0, %v3407
      %v3409 = vpop.f32.mrf.mxu0
      %v3410 = vadd.f32 0.0, %v3409
      %3411 = vmatmul.bf16.gmra.mxu0 %v3279
      %v3412 = vpop.f32.mrf.mxu0
      %v3413 = vadd.f32 0.0, %v3412
      %v3414 = vpop.f32.mrf.mxu0
      %v3415 = vadd.f32 0.0, %v3414
      %3416 = vmatmul.bf16.gmra.mxu0 %v3280
      %v3417 = vpop.f32.mrf.mxu0
      %v3418 = vadd.f32 0.0, %v3417
      %v3419 = vpop.f32.mrf.mxu0
      %v3420 = vadd.f32 0.0, %v3419
      %3421 = vmatmul.bf16.gmra.mxu0 %v3281
      %v3422 = vpop.f32.mrf.mxu0
      %v3423 = vadd.f32 0.0, %v3422
      %v3424 = vpop.f32.mrf.mxu0
      %v3425 = vadd.f32 0.0, %v3424
      %3426 = vmatmul.bf16.gmra.mxu0 %v3282
      %v3427 = vpop.f32.mrf.mxu0
      %v3428 = vadd.f32 0.0, %v3427
      %v3429 = vpop.f32.mrf.mxu0
      %v3430 = vadd.f32 0.0, %v3429
      %3431 = vmatmul.bf16.gmra.mxu0 %v3283
      %v3432 = vpop.f32.mrf.mxu0
      %v3433 = vadd.f32 0.0, %v3432
      %v3434 = vpop.f32.mrf.mxu0
      %v3435 = vadd.f32 0.0, %v3434
      %3436 = vdwg.mxu0
      %v3437 = vadd.f32 %v3187, %v3358
      %v3438 = vadd.f32 %v3188, %v3360
      %v3439 = vadd.f32 %v3189, %v3363
      %v3440 = vadd.f32 %v3190, %v3365
      %v3441 = vadd.f32 %v3191, %v3368
      %v3442 = vadd.f32 %v3192, %v3370
      %v3443 = vadd.f32 %v3193, %v3373
      %v3444 = vadd.f32 %v3194, %v3375
      %v3445 = vadd.f32 %v3195, %v3378
      %v3446 = vadd.f32 %v3196, %v3380
      %v3447 = vadd.f32 %v3197, %v3383
      %v3448 = vadd.f32 %v3198, %v3385
      %v3449 = vadd.f32 %v3199, %v3388
      %v3450 = vadd.f32 %v3200, %v3390
      %v3451 = vadd.f32 %v3201, %v3393
      %v3452 = vadd.f32 %v3202, %v3395
      %v3453 = vadd.f32 %v3203, %v3398
      %v3454 = vadd.f32 %v3204, %v3400
      %v3455 = vadd.f32 %v3205, %v3403
      %v3456 = vadd.f32 %v3206, %v3405
      %v3457 = vadd.f32 %v3207, %v3408
      %v3458 = vadd.f32 %v3208, %v3410
      %v3459 = vadd.f32 %v3209, %v3413
      %v3460 = vadd.f32 %v3210, %v3415
      %v3461 = vadd.f32 %v3211, %v3418
      %v3462 = vadd.f32 %v3212, %v3420
      %v3463 = vadd.f32 %v3213, %v3423
      %v3464 = vadd.f32 %v3214, %v3425
      %v3465 = vadd.f32 %v3215, %v3428
      %v3466 = vadd.f32 %v3216, %v3430
      %v3467 = vadd.f32 %v3217, %v3433
      %v3468 = vadd.f32 %v3218, %v3435
      %3469 = vst [vmem:[#allocation2] sm:$0xff] %v3437
      %3470 = vst [vmem:[#allocation2 + $0x8] sm:$0xff] %v3438
      %3471 = vst [vmem:[#allocation2 + $0x10] sm:$0xff] %v3439
      %3472 = vst [vmem:[#allocation2 + $0x18] sm:$0xff] %v3440
      %3473 = vst [vmem:[#allocation2 + $0x20] sm:$0xff] %v3441
      %3474 = vst [vmem:[#allocation2 + $0x28] sm:$0xff] %v3442
      %3475 = vst [vmem:[#allocation2 + $0x30] sm:$0xff] %v3443
      %3476 = vst [vmem:[#allocation2 + $0x38] sm:$0xff] %v3444
      %3477 = vst [vmem:[#allocation2 + $0x40] sm:$0xff] %v3445
      %3478 = vst [vmem:[#allocation2 + $0x48] sm:$0xff] %v3446
      %3479 = vst [vmem:[#allocation2 + $0x50] sm:$0xff] %v3447
      %3480 = vst [vmem:[#allocation2 + $0x58] sm:$0xff] %v3448
      %3481 = vst [vmem:[#allocation2 + $0x60] sm:$0xff] %v3449
      %3482 = vst [vmem:[#allocation2 + $0x68] sm:$0xff] %v3450
      %3483 = vst [vmem:[#allocation2 + $0x70] sm:$0xff] %v3451
      %3484 = vst [vmem:[#allocation2 + $0x78] sm:$0xff] %v3452
      %3485 = vst [vmem:[#allocation2 + $0x80] sm:$0xff] %v3453
      %3486 = vst [vmem:[#allocation2 + $0x88] sm:$0xff] %v3454
      %3487 = vst [vmem:[#allocation2 + $0x90] sm:$0xff] %v3455
      %3488 = vst [vmem:[#allocation2 + $0x98] sm:$0xff] %v3456
      %3489 = vst [vmem:[#allocation2 + $0xa0] sm:$0xff] %v3457
      %3490 = vst [vmem:[#allocation2 + $0xa8] sm:$0xff] %v3458
      %3491 = vst [vmem:[#allocation2 + $0xb0] sm:$0xff] %v3459
      %3492 = vst [vmem:[#allocation2 + $0xb8] sm:$0xff] %v3460
      %3493 = vst [vmem:[#allocation2 + $0xc0] sm:$0xff] %v3461
      %3494 = vst [vmem:[#allocation2 + $0xc8] sm:$0xff] %v3462
      %3495 = vst [vmem:[#allocation2 + $0xd0] sm:$0xff] %v3463
      %3496 = vst [vmem:[#allocation2 + $0xd8] sm:$0xff] %v3464
      %3497 = vst [vmem:[#allocation2 + $0xe0] sm:$0xff] %v3465
      %3498 = vst [vmem:[#allocation2 + $0xe8] sm:$0xff] %v3466
      %3499 = vst [vmem:[#allocation2 + $0xf0] sm:$0xff] %v3467
      %3500 = vst [vmem:[#allocation2 + $0xf8] sm:$0xff] %v3468
      %s3501 = scalar_lea.vmem %s165, 24
      %v3502 = vld [vmem:[%s3501] sm:$0xf]
      %v3503 = vld [vmem:[%s3501 + $0x4] sm:$0xf]
      %v3504 = vld [vmem:[%s3501 + $0xc] sm:$0xf]
      %v3505 = vld [vmem:[%s3501 + $0x10] sm:$0xf]
      %v3506 = vld [vmem:[%s3501 + $0x18] sm:$0xf]
      %v3507 = vld [vmem:[%s3501 + $0x1c] sm:$0xf]
      %v3508 = vld [vmem:[%s3501 + $0x24] sm:$0xf]
      %v3509 = vld [vmem:[%s3501 + $0x28] sm:$0xf]
      %v3510 = vld [vmem:[%s3501 + $0x30] sm:$0xf]
      %v3511 = vld [vmem:[%s3501 + $0x34] sm:$0xf]
      %v3512 = vld [vmem:[%s3501 + $0x3c] sm:$0xf]
      %v3513 = vld [vmem:[%s3501 + $0x40] sm:$0xf]
      %v3514 = vld [vmem:[%s3501 + $0x48] sm:$0xf]
      %v3515 = vld [vmem:[%s3501 + $0x4c] sm:$0xf]
      %v3516 = vld [vmem:[%s3501 + $0x54] sm:$0xf]
      %v3517 = vld [vmem:[%s3501 + $0x58] sm:$0xf]
      %v3518 = vld [vmem:[%s3501 + $0x60] sm:$0xf]
      %v3519 = vld [vmem:[%s3501 + $0x64] sm:$0xf]
      %v3520 = vld [vmem:[%s3501 + $0x6c] sm:$0xf]
      %v3521 = vld [vmem:[%s3501 + $0x70] sm:$0xf]
      %v3522 = vld [vmem:[%s3501 + $0x78] sm:$0xf]
      %v3523 = vld [vmem:[%s3501 + $0x7c] sm:$0xf]
      %v3524 = vld [vmem:[%s3501 + $0x84] sm:$0xf]
      %v3525 = vld [vmem:[%s3501 + $0x88] sm:$0xf]
      %v3526 = vld [vmem:[%s3501 + $0x90] sm:$0xf]
      %v3527 = vld [vmem:[%s3501 + $0x94] sm:$0xf]
      %v3528 = vld [vmem:[%s3501 + $0x9c] sm:$0xf]
      %v3529 = vld [vmem:[%s3501 + $0xa0] sm:$0xf]
      %v3530 = vld [vmem:[%s3501 + $0xa8] sm:$0xf]
      %v3531 = vld [vmem:[%s3501 + $0xac] sm:$0xf]
      %v3532 = vld [vmem:[%s3501 + $0xb4] sm:$0xf]
      %v3533 = vld [vmem:[%s3501 + $0xb8] sm:$0xf]
      %v3534 = vld [vmem:[#allocation2] sm:$0xff]
      %v3535 = vld [vmem:[#allocation2 + $0x8] sm:$0xff]
      %v3536 = vld [vmem:[#allocation2 + $0x10] sm:$0xff]
      %v3537 = vld [vmem:[#allocation2 + $0x18] sm:$0xff]
      %v3538 = vld [vmem:[#allocation2 + $0x20] sm:$0xff]
      %v3539 = vld [vmem:[#allocation2 + $0x28] sm:$0xff]
      %v3540 = vld [vmem:[#allocation2 + $0x30] sm:$0xff]
      %v3541 = vld [vmem:[#allocation2 + $0x38] sm:$0xff]
      %v3542 = vld [vmem:[#allocation2 + $0x40] sm:$0xff]
      %v3543 = vld [vmem:[#allocation2 + $0x48] sm:$0xff]
      %v3544 = vld [vmem:[#allocation2 + $0x50] sm:$0xff]
      %v3545 = vld [vmem:[#allocation2 + $0x58] sm:$0xff]
      %v3546 = vld [vmem:[#allocation2 + $0x60] sm:$0xff]
      %v3547 = vld [vmem:[#allocation2 + $0x68] sm:$0xff]
      %v3548 = vld [vmem:[#allocation2 + $0x70] sm:$0xff]
      %v3549 = vld [vmem:[#allocation2 + $0x78] sm:$0xff]
      %v3550 = vld [vmem:[#allocation2 + $0x80] sm:$0xff]
      %v3551 = vld [vmem:[#allocation2 + $0x88] sm:$0xff]
      %v3552 = vld [vmem:[#allocation2 + $0x90] sm:$0xff]
      %v3553 = vld [vmem:[#allocation2 + $0x98] sm:$0xff]
      %v3554 = vld [vmem:[#allocation2 + $0xa0] sm:$0xff]
      %v3555 = vld [vmem:[#allocation2 + $0xa8] sm:$0xff]
      %v3556 = vld [vmem:[#allocation2 + $0xb0] sm:$0xff]
      %v3557 = vld [vmem:[#allocation2 + $0xb8] sm:$0xff]
      %v3558 = vld [vmem:[#allocation2 + $0xc0] sm:$0xff]
      %v3559 = vld [vmem:[#allocation2 + $0xc8] sm:$0xff]
      %v3560 = vld [vmem:[#allocation2 + $0xd0] sm:$0xff]
      %v3561 = vld [vmem:[#allocation2 + $0xd8] sm:$0xff]
      %v3562 = vld [vmem:[#allocation2 + $0xe0] sm:$0xff]
      %v3563 = vld [vmem:[#allocation2 + $0xe8] sm:$0xff]
      %v3564 = vld [vmem:[#allocation2 + $0xf0] sm:$0xff]
      %v3565 = vld [vmem:[#allocation2 + $0xf8] sm:$0xff]
      %s3566 = scalar_lea.vmem %s1, 384
      %v3567 = vld [vmem:[%s3566] sm:$0xf]
      %v3568 = vld [vmem:[%s3566 + $0x4] sm:$0xf]
      %v3569 = vld [vmem:[%s3566 + $0x8] sm:$0xf]
      %v3570 = vld [vmem:[%s3566 + $0xc] sm:$0xf]
      %v3571 = vld [vmem:[%s3566 + $0x10] sm:$0xf]
      %v3572 = vld [vmem:[%s3566 + $0x14] sm:$0xf]
      %v3573 = vld [vmem:[%s3566 + $0x18] sm:$0xf]
      %v3574 = vld [vmem:[%s3566 + $0x1c] sm:$0xf]
      %v3575 = vld [vmem:[%s3566 + $0x20] sm:$0xf]
      %v3576 = vld [vmem:[%s3566 + $0x24] sm:$0xf]
      %v3577 = vld [vmem:[%s3566 + $0x28] sm:$0xf]
      %v3578 = vld [vmem:[%s3566 + $0x2c] sm:$0xf]
      %v3579 = vld [vmem:[%s3566 + $0x30] sm:$0xf]
      %v3580 = vld [vmem:[%s3566 + $0x34] sm:$0xf]
      %v3581 = vld [vmem:[%s3566 + $0x38] sm:$0xf]
      %v3582 = vld [vmem:[%s3566 + $0x3c] sm:$0xf]
      %v3615 = vunpack.c.l.b16 %v3502
      %v3616 = vunpack.c.l.b16 %v3503
      %v3617 = vunpack.c.l.b16 %v3504
      %v3618 = vunpack.c.l.b16 %v3505
      %v3619 = vunpack.c.l.b16 %v3506
      %v3620 = vunpack.c.l.b16 %v3507
      %v3621 = vunpack.c.l.b16 %v3508
      %v3622 = vunpack.c.l.b16 %v3509
      %v3623 = vunpack.c.l.b16 %v3510
      %v3624 = vunpack.c.l.b16 %v3511
      %v3625 = vunpack.c.l.b16 %v3512
      %v3626 = vunpack.c.l.b16 %v3513
      %v3627 = vunpack.c.l.b16 %v3514
      %v3628 = vunpack.c.l.b16 %v3515
      %v3629 = vunpack.c.l.b16 %v3516
      %v3630 = vunpack.c.l.b16 %v3517
      %v3631 = vunpack.c.l.b16 %v3518
      %v3632 = vunpack.c.l.b16 %v3519
      %v3633 = vunpack.c.l.b16 %v3520
      %v3634 = vunpack.c.l.b16 %v3521
      %v3635 = vunpack.c.l.b16 %v3522
      %v3636 = vunpack.c.l.b16 %v3523
      %v3637 = vunpack.c.l.b16 %v3524
      %v3638 = vunpack.c.l.b16 %v3525
      %v3639 = vunpack.c.l.b16 %v3526
      %v3640 = vunpack.c.l.b16 %v3527
      %v3641 = vunpack.c.l.b16 %v3528
      %v3642 = vunpack.c.l.b16 %v3529
      %v3643 = vunpack.c.l.b16 %v3530
      %v3644 = vunpack.c.l.b16 %v3531
      %v3645 = vunpack.c.l.b16 %v3532
      %v3646 = vunpack.c.l.b16 %v3533
      %v3647 = vpack.c.b16 %v3616, %v3615
      %v3648 = vpack.c.b16 %v3618, %v3617
      %v3649 = vpack.c.b16 %v3620, %v3619
      %v3650 = vpack.c.b16 %v3622, %v3621
      %v3651 = vpack.c.b16 %v3624, %v3623
      %v3652 = vpack.c.b16 %v3626, %v3625
      %v3653 = vpack.c.b16 %v3628, %v3627
      %v3654 = vpack.c.b16 %v3630, %v3629
      %v3655 = vpack.c.b16 %v3632, %v3631
      %v3656 = vpack.c.b16 %v3634, %v3633
      %v3657 = vpack.c.b16 %v3636, %v3635
      %v3658 = vpack.c.b16 %v3638, %v3637
      %v3659 = vpack.c.b16 %v3640, %v3639
      %v3660 = vpack.c.b16 %v3642, %v3641
      %v3661 = vpack.c.b16 %v3644, %v3643
      %v3662 = vpack.c.b16 %v3646, %v3645
      %v3695 = vunpack.c.l.b16 %v3567
      %v3696 = vunpack.c.l.b16 %v3568
      %v3697 = vunpack.c.l.b16 %v3569
      %v3698 = vunpack.c.l.b16 %v3570
      %v3699 = vunpack.c.l.b16 %v3571
      %v3700 = vunpack.c.l.b16 %v3572
      %v3701 = vunpack.c.l.b16 %v3573
      %v3702 = vunpack.c.l.b16 %v3574
      %v3703 = vunpack.c.l.b16 %v3575
      %v3704 = vunpack.c.l.b16 %v3576
      %v3705 = vunpack.c.l.b16 %v3577
      %v3706 = vunpack.c.l.b16 %v3578
      %v3707 = vunpack.c.l.b16 %v3579
      %v3708 = vunpack.c.l.b16 %v3580
      %v3709 = vunpack.c.l.b16 %v3581
      %v3710 = vunpack.c.l.b16 %v3582
      %v3711 = vpack.c.b16 %v3696, %v3695
      %v3712 = vpack.c.b16 %v3698, %v3697
      %v3713 = vpack.c.b16 %v3700, %v3699
      %v3714 = vpack.c.b16 %v3702, %v3701
      %v3715 = vpack.c.b16 %v3704, %v3703
      %v3716 = vpack.c.b16 %v3706, %v3705
      %v3717 = vpack.c.b16 %v3708, %v3707
      %v3718 = vpack.c.b16 %v3710, %v3709
      %3727 = vmatpush.bf16.msra.mxu0 %v3718
      %3728 = vmatpush.bf16.msra.mxu0 %v3717
      %3729 = vmatpush.bf16.msra.mxu0 %v3716
      %3730 = vmatpush.bf16.msra.mxu0 %v3715
      %3731 = vmatpush.bf16.msra.mxu0 %v3714
      %3732 = vmatpush.bf16.msra.mxu0 %v3713
      %3733 = vmatpush.bf16.msra.mxu0 %v3712
      %3734 = vmatpush.bf16.msra.mxu0 %v3711
      %3735 = vmatmul.bf16.gmra.mxu0 %v3647
      %v3736 = vpop.f32.mrf.mxu0
      %v3737 = vadd.f32 0.0, %v3736
      %v3738 = vpop.f32.mrf.mxu0
      %v3739 = vadd.f32 0.0, %v3738
      %3740 = vmatmul.bf16.gmra.mxu0 %v3648
      %v3741 = vpop.f32.mrf.mxu0
      %v3742 = vadd.f32 0.0, %v3741
      %v3743 = vpop.f32.mrf.mxu0
      %v3744 = vadd.f32 0.0, %v3743
      %3745 = vmatmul.bf16.gmra.mxu0 %v3649
      %v3746 = vpop.f32.mrf.mxu0
      %v3747 = vadd.f32 0.0, %v3746
      %v3748 = vpop.f32.mrf.mxu0
      %v3749 = vadd.f32 0.0, %v3748
      %3750 = vmatmul.bf16.gmra.mxu0 %v3650
      %v3751 = vpop.f32.mrf.mxu0
      %v3752 = vadd.f32 0.0, %v3751
      %v3753 = vpop.f32.mrf.mxu0
      %v3754 = vadd.f32 0.0, %v3753
      %3755 = vmatmul.bf16.gmra.mxu0 %v3651
      %v3756 = vpop.f32.mrf.mxu0
      %v3757 = vadd.f32 0.0, %v3756
      %v3758 = vpop.f32.mrf.mxu0
      %v3759 = vadd.f32 0.0, %v3758
      %3760 = vmatmul.bf16.gmra.mxu0 %v3652
      %v3761 = vpop.f32.mrf.mxu0
      %v3762 = vadd.f32 0.0, %v3761
      %v3763 = vpop.f32.mrf.mxu0
      %v3764 = vadd.f32 0.0, %v3763
      %3765 = vmatmul.bf16.gmra.mxu0 %v3653
      %v3766 = vpop.f32.mrf.mxu0
      %v3767 = vadd.f32 0.0, %v3766
      %v3768 = vpop.f32.mrf.mxu0
      %v3769 = vadd.f32 0.0, %v3768
      %3770 = vmatmul.bf16.gmra.mxu0 %v3654
      %v3771 = vpop.f32.mrf.mxu0
      %v3772 = vadd.f32 0.0, %v3771
      %v3773 = vpop.f32.mrf.mxu0
      %v3774 = vadd.f32 0.0, %v3773
      %3775 = vmatmul.bf16.gmra.mxu0 %v3655
      %v3776 = vpop.f32.mrf.mxu0
      %v3777 = vadd.f32 0.0, %v3776
      %v3778 = vpop.f32.mrf.mxu0
      %v3779 = vadd.f32 0.0, %v3778
      %3780 = vmatmul.bf16.gmra.mxu0 %v3656
      %v3781 = vpop.f32.mrf.mxu0
      %v3782 = vadd.f32 0.0, %v3781
      %v3783 = vpop.f32.mrf.mxu0
      %v3784 = vadd.f32 0.0, %v3783
      %3785 = vmatmul.bf16.gmra.mxu0 %v3657
      %v3786 = vpop.f32.mrf.mxu0
      %v3787 = vadd.f32 0.0, %v3786
      %v3788 = vpop.f32.mrf.mxu0
      %v3789 = vadd.f32 0.0, %v3788
      %3790 = vmatmul.bf16.gmra.mxu0 %v3658
      %v3791 = vpop.f32.mrf.mxu0
      %v3792 = vadd.f32 0.0, %v3791
      %v3793 = vpop.f32.mrf.mxu0
      %v3794 = vadd.f32 0.0, %v3793
      %3795 = vmatmul.bf16.gmra.mxu0 %v3659
      %v3796 = vpop.f32.mrf.mxu0
      %v3797 = vadd.f32 0.0, %v3796
      %v3798 = vpop.f32.mrf.mxu0
      %v3799 = vadd.f32 0.0, %v3798
      %3800 = vmatmul.bf16.gmra.mxu0 %v3660
      %v3801 = vpop.f32.mrf.mxu0
      %v3802 = vadd.f32 0.0, %v3801
      %v3803 = vpop.f32.mrf.mxu0
      %v3804 = vadd.f32 0.0, %v3803
      %3805 = vmatmul.bf16.gmra.mxu0 %v3661
      %v3806 = vpop.f32.mrf.mxu0
      %v3807 = vadd.f32 0.0, %v3806
      %v3808 = vpop.f32.mrf.mxu0
      %v3809 = vadd.f32 0.0, %v3808
      %3810 = vmatmul.bf16.gmra.mxu0 %v3662
      %v3811 = vpop.f32.mrf.mxu0
      %v3812 = vadd.f32 0.0, %v3811
      %v3813 = vpop.f32.mrf.mxu0
      %v3814 = vadd.f32 0.0, %v3813
      %3815 = vdwg.mxu0
      %v3816 = vadd.f32 %v3534, %v3737
      %v3817 = vadd.f32 %v3535, %v3739
      %v3818 = vadd.f32 %v3536, %v3742
      %v3819 = vadd.f32 %v3537, %v3744
      %v3820 = vadd.f32 %v3538, %v3747
      %v3821 = vadd.f32 %v3539, %v3749
      %v3822 = vadd.f32 %v3540, %v3752
      %v3823 = vadd.f32 %v3541, %v3754
      %v3824 = vadd.f32 %v3542, %v3757
      %v3825 = vadd.f32 %v3543, %v3759
      %v3826 = vadd.f32 %v3544, %v3762
      %v3827 = vadd.f32 %v3545, %v3764
      %v3828 = vadd.f32 %v3546, %v3767
      %v3829 = vadd.f32 %v3547, %v3769
      %v3830 = vadd.f32 %v3548, %v3772
      %v3831 = vadd.f32 %v3549, %v3774
      %v3832 = vadd.f32 %v3550, %v3777
      %v3833 = vadd.f32 %v3551, %v3779
      %v3834 = vadd.f32 %v3552, %v3782
      %v3835 = vadd.f32 %v3553, %v3784
      %v3836 = vadd.f32 %v3554, %v3787
      %v3837 = vadd.f32 %v3555, %v3789
      %v3838 = vadd.f32 %v3556, %v3792
      %v3839 = vadd.f32 %v3557, %v3794
      %v3840 = vadd.f32 %v3558, %v3797
      %v3841 = vadd.f32 %v3559, %v3799
      %v3842 = vadd.f32 %v3560, %v3802
      %v3843 = vadd.f32 %v3561, %v3804
      %v3844 = vadd.f32 %v3562, %v3807
      %v3845 = vadd.f32 %v3563, %v3809
      %v3846 = vadd.f32 %v3564, %v3812
      %v3847 = vadd.f32 %v3565, %v3814
      %3848 = vst [vmem:[#allocation2] sm:$0xff] %v3816
      %3849 = vst [vmem:[#allocation2 + $0x8] sm:$0xff] %v3817
      %3850 = vst [vmem:[#allocation2 + $0x10] sm:$0xff] %v3818
      %3851 = vst [vmem:[#allocation2 + $0x18] sm:$0xff] %v3819
      %3852 = vst [vmem:[#allocation2 + $0x20] sm:$0xff] %v3820
      %3853 = vst [vmem:[#allocation2 + $0x28] sm:$0xff] %v3821
      %3854 = vst [vmem:[#allocation2 + $0x30] sm:$0xff] %v3822
      %3855 = vst [vmem:[#allocation2 + $0x38] sm:$0xff] %v3823
      %3856 = vst [vmem:[#allocation2 + $0x40] sm:$0xff] %v3824
      %3857 = vst [vmem:[#allocation2 + $0x48] sm:$0xff] %v3825
      %3858 = vst [vmem:[#allocation2 + $0x50] sm:$0xff] %v3826
      %3859 = vst [vmem:[#allocation2 + $0x58] sm:$0xff] %v3827
      %3860 = vst [vmem:[#allocation2 + $0x60] sm:$0xff] %v3828
      %3861 = vst [vmem:[#allocation2 + $0x68] sm:$0xff] %v3829
      %3862 = vst [vmem:[#allocation2 + $0x70] sm:$0xff] %v3830
      %3863 = vst [vmem:[#allocation2 + $0x78] sm:$0xff] %v3831
      %3864 = vst [vmem:[#allocation2 + $0x80] sm:$0xff] %v3832
      %3865 = vst [vmem:[#allocation2 + $0x88] sm:$0xff] %v3833
      %3866 = vst [vmem:[#allocation2 + $0x90] sm:$0xff] %v3834
      %3867 = vst [vmem:[#allocation2 + $0x98] sm:$0xff] %v3835
      %3868 = vst [vmem:[#allocation2 + $0xa0] sm:$0xff] %v3836
      %3869 = vst [vmem:[#allocation2 + $0xa8] sm:$0xff] %v3837
      %3870 = vst [vmem:[#allocation2 + $0xb0] sm:$0xff] %v3838
      %3871 = vst [vmem:[#allocation2 + $0xb8] sm:$0xff] %v3839
      %3872 = vst [vmem:[#allocation2 + $0xc0] sm:$0xff] %v3840
      %3873 = vst [vmem:[#allocation2 + $0xc8] sm:$0xff] %v3841
      %3874 = vst [vmem:[#allocation2 + $0xd0] sm:$0xff] %v3842
      %3875 = vst [vmem:[#allocation2 + $0xd8] sm:$0xff] %v3843
      %3876 = vst [vmem:[#allocation2 + $0xe0] sm:$0xff] %v3844
      %3877 = vst [vmem:[#allocation2 + $0xe8] sm:$0xff] %v3845
      %3878 = vst [vmem:[#allocation2 + $0xf0] sm:$0xff] %v3846
      %3879 = vst [vmem:[#allocation2 + $0xf8] sm:$0xff] %v3847
      %v3880 = vld [vmem:[%s3501] sm:$0xf]
      %v3881 = vld [vmem:[%s3501 + $0x4] sm:$0xf]
      %v3882 = vld [vmem:[%s3501 + $0x8] sm:$0x1]
      %v3883 = vld [vmem:[%s3501 + $0xc] sm:$0xf]
      %v3884 = vld [vmem:[%s3501 + $0x10] sm:$0xf]
      %v3885 = vld [vmem:[%s3501 + $0x14] sm:$0x1]
      %v3886 = vld [vmem:[%s3501 + $0x18] sm:$0xf]
      %v3887 = vld [vmem:[%s3501 + $0x1c] sm:$0xf]
      %v3888 = vld [vmem:[%s3501 + $0x20] sm:$0x1]
      %v3889 = vld [vmem:[%s3501 + $0x24] sm:$0xf]
      %v3890 = vld [vmem:[%s3501 + $0x28] sm:$0xf]
      %v3891 = vld [vmem:[%s3501 + $0x2c] sm:$0x1]
      %v3892 = vld [vmem:[%s3501 + $0x30] sm:$0xf]
      %v3893 = vld [vmem:[%s3501 + $0x34] sm:$0xf]
      %v3894 = vld [vmem:[%s3501 + $0x38] sm:$0x1]
      %v3895 = vld [vmem:[%s3501 + $0x3c] sm:$0xf]
      %v3896 = vld [vmem:[%s3501 + $0x40] sm:$0xf]
      %v3897 = vld [vmem:[%s3501 + $0x44] sm:$0x1]
      %v3898 = vld [vmem:[%s3501 + $0x48] sm:$0xf]
      %v3899 = vld [vmem:[%s3501 + $0x4c] sm:$0xf]
      %v3900 = vld [vmem:[%s3501 + $0x50] sm:$0x1]
      %v3901 = vld [vmem:[%s3501 + $0x54] sm:$0xf]
      %v3902 = vld [vmem:[%s3501 + $0x58] sm:$0xf]
      %v3903 = vld [vmem:[%s3501 + $0x5c] sm:$0x1]
      %v3904 = vld [vmem:[%s3501 + $0x60] sm:$0xf]
      %v3905 = vld [vmem:[%s3501 + $0x64] sm:$0xf]
      %v3906 = vld [vmem:[%s3501 + $0x68] sm:$0x1]
      %v3907 = vld [vmem:[%s3501 + $0x6c] sm:$0xf]
      %v3908 = vld [vmem:[%s3501 + $0x70] sm:$0xf]
      %v3909 = vld [vmem:[%s3501 + $0x74] sm:$0x1]
      %v3910 = vld [vmem:[%s3501 + $0x78] sm:$0xf]
      %v3911 = vld [vmem:[%s3501 + $0x7c] sm:$0xf]
      %v3912 = vld [vmem:[%s3501 + $0x80] sm:$0x1]
      %v3913 = vld [vmem:[%s3501 + $0x84] sm:$0xf]
      %v3914 = vld [vmem:[%s3501 + $0x88] sm:$0xf]
      %v3915 = vld [vmem:[%s3501 + $0x8c] sm:$0x1]
      %v3916 = vld [vmem:[%s3501 + $0x90] sm:$0xf]
      %v3917 = vld [vmem:[%s3501 + $0x94] sm:$0xf]
      %v3918 = vld [vmem:[%s3501 + $0x98] sm:$0x1]
      %v3919 = vld [vmem:[%s3501 + $0x9c] sm:$0xf]
      %v3920 = vld [vmem:[%s3501 + $0xa0] sm:$0xf]
      %v3921 = vld [vmem:[%s3501 + $0xa4] sm:$0x1]
      %v3922 = vld [vmem:[%s3501 + $0xa8] sm:$0xf]
      %v3923 = vld [vmem:[%s3501 + $0xac] sm:$0xf]
      %v3924 = vld [vmem:[%s3501 + $0xb0] sm:$0x1]
      %v3925 = vld [vmem:[%s3501 + $0xb4] sm:$0xf]
      %v3926 = vld [vmem:[%s3501 + $0xb8] sm:$0xf]
      %v3927 = vld [vmem:[%s3501 + $0xbc] sm:$0x1]
      %v3929 = vshrl.u32 %v3880, 16
      %v3931 = vrot.slane %v3929, 4
      %v3932 = vshll.u32 %v3880, 16
      %v3934 = vrot.slane %v3932, 5
      %v3935 = vor.u32 %v3931, %v3934
      %v3936 = vrot.slane %v3935, 4
      %v3938 = vshll.u32 %v3881, 16
      %v3940 = vrot.slane %v3938, 5
      %v3941 = vsel %vm630, %v3936, %v3940
      %v3942 = vshrl.u32 %v3881, 16
      %v3944 = vrot.slane %v3942, 4
      %v3945 = vor.u32 %v3944, %v3940
      %v3946 = vrot.slane %v3945, 4
      %v3948 = vshll.u32 %v3882, 16
      %v3950 = vrot.slane %v3948, 5
      %v3951 = vsel %vm630, %v3946, %v3950
      %v3953 = vshrl.u32 %v3883, 16
      %v3955 = vrot.slane %v3953, 4
      %v3956 = vshll.u32 %v3883, 16
      %v3958 = vrot.slane %v3956, 5
      %v3959 = vor.u32 %v3955, %v3958
      %v3960 = vrot.slane %v3959, 4
      %v3962 = vshll.u32 %v3884, 16
      %v3964 = vrot.slane %v3962, 5
      %v3965 = vsel %vm630, %v3960, %v3964
      %v3966 = vshrl.u32 %v3884, 16
      %v3968 = vrot.slane %v3966, 4
      %v3969 = vor.u32 %v3968, %v3964
      %v3970 = vrot.slane %v3969, 4
      %v3972 = vshll.u32 %v3885, 16
      %v3974 = vrot.slane %v3972, 5
      %v3975 = vsel %vm630, %v3970, %v3974
      %v3977 = vshrl.u32 %v3886, 16
      %v3979 = vrot.slane %v3977, 4
      %v3980 = vshll.u32 %v3886, 16
      %v3982 = vrot.slane %v3980, 5
      %v3983 = vor.u32 %v3979, %v3982
      %v3984 = vrot.slane %v3983, 4
      %v3986 = vshll.u32 %v3887, 16
      %v3988 = vrot.slane %v3986, 5
      %v3989 = vsel %vm630, %v3984, %v3988
      %v3990 = vshrl.u32 %v3887, 16
      %v3992 = vrot.slane %v3990, 4
      %v3993 = vor.u32 %v3992, %v3988
      %v3994 = vrot.slane %v3993, 4
      %v3996 = vshll.u32 %v3888, 16
      %v3998 = vrot.slane %v3996, 5
      %v3999 = vsel %vm630, %v3994, %v3998
      %v4001 = vshrl.u32 %v3889, 16
      %v4003 = vrot.slane %v4001, 4
      %v4004 = vshll.u32 %v3889, 16
      %v4006 = vrot.slane %v4004, 5
      %v4007 = vor.u32 %v4003, %v4006
      %v4008 = vrot.slane %v4007, 4
      %v4010 = vshll.u32 %v3890, 16
      %v4012 = vrot.slane %v4010, 5
      %v4013 = vsel %vm630, %v4008, %v4012
      %v4014 = vshrl.u32 %v3890, 16
      %v4016 = vrot.slane %v4014, 4
      %v4017 = vor.u32 %v4016, %v4012
      %v4018 = vrot.slane %v4017, 4
      %v4020 = vshll.u32 %v3891, 16
      %v4022 = vrot.slane %v4020, 5
      %v4023 = vsel %vm630, %v4018, %v4022
      %v4025 = vshrl.u32 %v3892, 16
      %v4027 = vrot.slane %v4025, 4
      %v4028 = vshll.u32 %v3892, 16
      %v4030 = vrot.slane %v4028, 5
      %v4031 = vor.u32 %v4027, %v4030
      %v4032 = vrot.slane %v4031, 4
      %v4034 = vshll.u32 %v3893, 16
      %v4036 = vrot.slane %v4034, 5
      %v4037 = vsel %vm630, %v4032, %v4036
      %v4038 = vshrl.u32 %v3893, 16
      %v4040 = vrot.slane %v4038, 4
      %v4041 = vor.u32 %v4040, %v4036
      %v4042 = vrot.slane %v4041, 4
      %v4044 = vshll.u32 %v3894, 16
      %v4046 = vrot.slane %v4044, 5
      %v4047 = vsel %vm630, %v4042, %v4046
      %v4049 = vshrl.u32 %v3895, 16
      %v4051 = vrot.slane %v4049, 4
      %v4052 = vshll.u32 %v3895, 16
      %v4054 = vrot.slane %v4052, 5
      %v4055 = vor.u32 %v4051, %v4054
      %v4056 = vrot.slane %v4055, 4
      %v4058 = vshll.u32 %v3896, 16
      %v4060 = vrot.slane %v4058, 5
      %v4061 = vsel %vm630, %v4056, %v4060
      %v4062 = vshrl.u32 %v3896, 16
      %v4064 = vrot.slane %v4062, 4
      %v4065 = vor.u32 %v4064, %v4060
      %v4066 = vrot.slane %v4065, 4
      %v4068 = vshll.u32 %v3897, 16
      %v4070 = vrot.slane %v4068, 5
      %v4071 = vsel %vm630, %v4066, %v4070
      %v4073 = vshrl.u32 %v3898, 16
      %v4075 = vrot.slane %v4073, 4
      %v4076 = vshll.u32 %v3898, 16
      %v4078 = vrot.slane %v4076, 5
      %v4079 = vor.u32 %v4075, %v4078
      %v4080 = vrot.slane %v4079, 4
      %v4082 = vshll.u32 %v3899, 16
      %v4084 = vrot.slane %v4082, 5
      %v4085 = vsel %vm630, %v4080, %v4084
      %v4086 = vshrl.u32 %v3899, 16
      %v4088 = vrot.slane %v4086, 4
      %v4089 = vor.u32 %v4088, %v4084
      %v4090 = vrot.slane %v4089, 4
      %v4092 = vshll.u32 %v3900, 16
      %v4094 = vrot.slane %v4092, 5
      %v4095 = vsel %vm630, %v4090, %v4094
      %v4097 = vshrl.u32 %v3901, 16
      %v4099 = vrot.slane %v4097, 4
      %v4100 = vshll.u32 %v3901, 16
      %v4102 = vrot.slane %v4100, 5
      %v4103 = vor.u32 %v4099, %v4102
      %v4104 = vrot.slane %v4103, 4
      %v4106 = vshll.u32 %v3902, 16
      %v4108 = vrot.slane %v4106, 5
      %v4109 = vsel %vm630, %v4104, %v4108
      %v4110 = vshrl.u32 %v3902, 16
      %v4112 = vrot.slane %v4110, 4
      %v4113 = vor.u32 %v4112, %v4108
      %v4114 = vrot.slane %v4113, 4
      %v4116 = vshll.u32 %v3903, 16
      %v4118 = vrot.slane %v4116, 5
      %v4119 = vsel %vm630, %v4114, %v4118
      %v4121 = vshrl.u32 %v3904, 16
      %v4123 = vrot.slane %v4121, 4
      %v4124 = vshll.u32 %v3904, 16
      %v4126 = vrot.slane %v4124, 5
      %v4127 = vor.u32 %v4123, %v4126
      %v4128 = vrot.slane %v4127, 4
      %v4130 = vshll.u32 %v3905, 16
      %v4132 = vrot.slane %v4130, 5
      %v4133 = vsel %vm630, %v4128, %v4132
      %v4134 = vshrl.u32 %v3905, 16
      %v4136 = vrot.slane %v4134, 4
      %v4137 = vor.u32 %v4136, %v4132
      %v4138 = vrot.slane %v4137, 4
      %v4140 = vshll.u32 %v3906, 16
      %v4142 = vrot.slane %v4140, 5
      %v4143 = vsel %vm630, %v4138, %v4142
      %v4145 = vshrl.u32 %v3907, 16
      %v4147 = vrot.slane %v4145, 4
      %v4148 = vshll.u32 %v3907, 16
      %v4150 = vrot.slane %v4148, 5
      %v4151 = vor.u32 %v4147, %v4150
      %v4152 = vrot.slane %v4151, 4
      %v4154 = vshll.u32 %v3908, 16
      %v4156 = vrot.slane %v4154, 5
      %v4157 = vsel %vm630, %v4152, %v4156
      %v4158 = vshrl.u32 %v3908, 16
      %v4160 = vrot.slane %v4158, 4
      %v4161 = vor.u32 %v4160, %v4156
      %v4162 = vrot.slane %v4161, 4
      %v4164 = vshll.u32 %v3909, 16
      %v4166 = vrot.slane %v4164, 5
      %v4167 = vsel %vm630, %v4162, %v4166
      %v4169 = vshrl.u32 %v3910, 16
      %v4171 = vrot.slane %v4169, 4
      %v4172 = vshll.u32 %v3910, 16
      %v4174 = vrot.slane %v4172, 5
      %v4175 = vor.u32 %v4171, %v4174
      %v4176 = vrot.slane %v4175, 4
      %v4178 = vshll.u32 %v3911, 16
      %v4180 = vrot.slane %v4178, 5
      %v4181 = vsel %vm630, %v4176, %v4180
      %v4182 = vshrl.u32 %v3911, 16
      %v4184 = vrot.slane %v4182, 4
      %v4185 = vor.u32 %v4184, %v4180
      %v4186 = vrot.slane %v4185, 4
      %v4188 = vshll.u32 %v3912, 16
      %v4190 = vrot.slane %v4188, 5
      %v4191 = vsel %vm630, %v4186, %v4190
      %v4193 = vshrl.u32 %v3913, 16
      %v4195 = vrot.slane %v4193, 4
      %v4196 = vshll.u32 %v3913, 16
      %v4198 = vrot.slane %v4196, 5
      %v4199 = vor.u32 %v4195, %v4198
      %v4200 = vrot.slane %v4199, 4
      %v4202 = vshll.u32 %v3914, 16
      %v4204 = vrot.slane %v4202, 5
      %v4205 = vsel %vm630, %v4200, %v4204
      %v4206 = vshrl.u32 %v3914, 16
      %v4208 = vrot.slane %v4206, 4
      %v4209 = vor.u32 %v4208, %v4204
      %v4210 = vrot.slane %v4209, 4
      %v4212 = vshll.u32 %v3915, 16
      %v4214 = vrot.slane %v4212, 5
      %v4215 = vsel %vm630, %v4210, %v4214
      %v4217 = vshrl.u32 %v3916, 16
      %v4219 = vrot.slane %v4217, 4
      %v4220 = vshll.u32 %v3916, 16
      %v4222 = vrot.slane %v4220, 5
      %v4223 = vor.u32 %v4219, %v4222
      %v4224 = vrot.slane %v4223, 4
      %v4226 = vshll.u32 %v3917, 16
      %v4228 = vrot.slane %v4226, 5
      %v4229 = vsel %vm630, %v4224, %v4228
      %v4230 = vshrl.u32 %v3917, 16
      %v4232 = vrot.slane %v4230, 4
      %v4233 = vor.u32 %v4232, %v4228
      %v4234 = vrot.slane %v4233, 4
      %v4236 = vshll.u32 %v3918, 16
      %v4238 = vrot.slane %v4236, 5
      %v4239 = vsel %vm630, %v4234, %v4238
      %v4241 = vshrl.u32 %v3919, 16
      %v4243 = vrot.slane %v4241, 4
      %v4244 = vshll.u32 %v3919, 16
      %v4246 = vrot.slane %v4244, 5
      %v4247 = vor.u32 %v4243, %v4246
      %v4248 = vrot.slane %v4247, 4
      %v4250 = vshll.u32 %v3920, 16
      %v4252 = vrot.slane %v4250, 5
      %v4253 = vsel %vm630, %v4248, %v4252
      %v4254 = vshrl.u32 %v3920, 16
      %v4256 = vrot.slane %v4254, 4
      %v4257 = vor.u32 %v4256, %v4252
      %v4258 = vrot.slane %v4257, 4
      %v4260 = vshll.u32 %v3921, 16
      %v4262 = vrot.slane %v4260, 5
      %v4263 = vsel %vm630, %v4258, %v4262
      %v4265 = vshrl.u32 %v3922, 16
      %v4267 = vrot.slane %v4265, 4
      %v4268 = vshll.u32 %v3922, 16
      %v4270 = vrot.slane %v4268, 5
      %v4271 = vor.u32 %v4267, %v4270
      %v4272 = vrot.slane %v4271, 4
      %v4274 = vshll.u32 %v3923, 16
      %v4276 = vrot.slane %v4274, 5
      %v4277 = vsel %vm630, %v4272, %v4276
      %v4278 = vshrl.u32 %v3923, 16
      %v4280 = vrot.slane %v4278, 4
      %v4281 = vor.u32 %v4280, %v4276
      %v4282 = vrot.slane %v4281, 4
      %v4284 = vshll.u32 %v3924, 16
      %v4286 = vrot.slane %v4284, 5
      %v4287 = vsel %vm630, %v4282, %v4286
      %v4289 = vshrl.u32 %v3925, 16
      %v4291 = vrot.slane %v4289, 4
      %v4292 = vshll.u32 %v3925, 16
      %v4294 = vrot.slane %v4292, 5
      %v4295 = vor.u32 %v4291, %v4294
      %v4296 = vrot.slane %v4295, 4
      %v4298 = vshll.u32 %v3926, 16
      %v4300 = vrot.slane %v4298, 5
      %v4301 = vsel %vm630, %v4296, %v4300
      %v4302 = vshrl.u32 %v3926, 16
      %v4304 = vrot.slane %v4302, 4
      %v4305 = vor.u32 %v4304, %v4300
      %v4306 = vrot.slane %v4305, 4
      %v4308 = vshll.u32 %v3927, 16
      %v4310 = vrot.slane %v4308, 5
      %v4311 = vsel %vm630, %v4306, %v4310
      %v4312 = vld [vmem:[#allocation2] sm:$0xff]
      %v4313 = vld [vmem:[#allocation2 + $0x8] sm:$0xff]
      %v4314 = vld [vmem:[#allocation2 + $0x10] sm:$0xff]
      %v4315 = vld [vmem:[#allocation2 + $0x18] sm:$0xff]
      %v4316 = vld [vmem:[#allocation2 + $0x20] sm:$0xff]
      %v4317 = vld [vmem:[#allocation2 + $0x28] sm:$0xff]
      %v4318 = vld [vmem:[#allocation2 + $0x30] sm:$0xff]
      %v4319 = vld [vmem:[#allocation2 + $0x38] sm:$0xff]
      %v4320 = vld [vmem:[#allocation2 + $0x40] sm:$0xff]
      %v4321 = vld [vmem:[#allocation2 + $0x48] sm:$0xff]
      %v4322 = vld [vmem:[#allocation2 + $0x50] sm:$0xff]
      %v4323 = vld [vmem:[#allocation2 + $0x58] sm:$0xff]
      %v4324 = vld [vmem:[#allocation2 + $0x60] sm:$0xff]
      %v4325 = vld [vmem:[#allocation2 + $0x68] sm:$0xff]
      %v4326 = vld [vmem:[#allocation2 + $0x70] sm:$0xff]
      %v4327 = vld [vmem:[#allocation2 + $0x78] sm:$0xff]
      %v4328 = vld [vmem:[#allocation2 + $0x80] sm:$0xff]
      %v4329 = vld [vmem:[#allocation2 + $0x88] sm:$0xff]
      %v4330 = vld [vmem:[#allocation2 + $0x90] sm:$0xff]
      %v4331 = vld [vmem:[#allocation2 + $0x98] sm:$0xff]
      %v4332 = vld [vmem:[#allocation2 + $0xa0] sm:$0xff]
      %v4333 = vld [vmem:[#allocation2 + $0xa8] sm:$0xff]
      %v4334 = vld [vmem:[#allocation2 + $0xb0] sm:$0xff]
      %v4335 = vld [vmem:[#allocation2 + $0xb8] sm:$0xff]
      %v4336 = vld [vmem:[#allocation2 + $0xc0] sm:$0xff]
      %v4337 = vld [vmem:[#allocation2 + $0xc8] sm:$0xff]
      %v4338 = vld [vmem:[#allocation2 + $0xd0] sm:$0xff]
      %v4339 = vld [vmem:[#allocation2 + $0xd8] sm:$0xff]
      %v4340 = vld [vmem:[#allocation2 + $0xe0] sm:$0xff]
      %v4341 = vld [vmem:[#allocation2 + $0xe8] sm:$0xff]
      %v4342 = vld [vmem:[#allocation2 + $0xf0] sm:$0xff]
      %v4343 = vld [vmem:[#allocation2 + $0xf8] sm:$0xff]
      %s4344 = scalar_lea.vmem %s1, 448
      %v4345 = vld [vmem:[%s4344] sm:$0xf]
      %v4346 = vld [vmem:[%s4344 + $0x4] sm:$0xf]
      %v4347 = vld [vmem:[%s4344 + $0x8] sm:$0xf]
      %v4348 = vld [vmem:[%s4344 + $0xc] sm:$0xf]
      %v4349 = vld [vmem:[%s4344 + $0x10] sm:$0xf]
      %v4350 = vld [vmem:[%s4344 + $0x14] sm:$0xf]
      %v4351 = vld [vmem:[%s4344 + $0x18] sm:$0xf]
      %v4352 = vld [vmem:[%s4344 + $0x1c] sm:$0xf]
      %v4353 = vld [vmem:[%s4344 + $0x20] sm:$0xf]
      %v4354 = vld [vmem:[%s4344 + $0x24] sm:$0xf]
      %v4355 = vld [vmem:[%s4344 + $0x28] sm:$0xf]
      %v4356 = vld [vmem:[%s4344 + $0x2c] sm:$0xf]
      %v4357 = vld [vmem:[%s4344 + $0x30] sm:$0xf]
      %v4358 = vld [vmem:[%s4344 + $0x34] sm:$0xf]
      %v4359 = vld [vmem:[%s4344 + $0x38] sm:$0xf]
      %v4360 = vld [vmem:[%s4344 + $0x3c] sm:$0xf]
      %v4361 = vunpack.c.l.b16 %v3941
      %v4362 = vunpack.c.l.b16 %v3951
      %v4363 = vunpack.c.l.b16 %v3965
      %v4364 = vunpack.c.l.b16 %v3975
      %v4365 = vunpack.c.l.b16 %v3989
      %v4366 = vunpack.c.l.b16 %v3999
      %v4367 = vunpack.c.l.b16 %v4013
      %v4368 = vunpack.c.l.b16 %v4023
      %v4369 = vunpack.c.l.b16 %v4037
      %v4370 = vunpack.c.l.b16 %v4047
      %v4371 = vunpack.c.l.b16 %v4061
      %v4372 = vunpack.c.l.b16 %v4071
      %v4373 = vunpack.c.l.b16 %v4085
      %v4374 = vunpack.c.l.b16 %v4095
      %v4375 = vunpack.c.l.b16 %v4109
      %v4376 = vunpack.c.l.b16 %v4119
      %v4377 = vunpack.c.l.b16 %v4133
      %v4378 = vunpack.c.l.b16 %v4143
      %v4379 = vunpack.c.l.b16 %v4157
      %v4380 = vunpack.c.l.b16 %v4167
      %v4381 = vunpack.c.l.b16 %v4181
      %v4382 = vunpack.c.l.b16 %v4191
      %v4383 = vunpack.c.l.b16 %v4205
      %v4384 = vunpack.c.l.b16 %v4215
      %v4385 = vunpack.c.l.b16 %v4229
      %v4386 = vunpack.c.l.b16 %v4239
      %v4387 = vunpack.c.l.b16 %v4253
      %v4388 = vunpack.c.l.b16 %v4263
      %v4389 = vunpack.c.l.b16 %v4277
      %v4390 = vunpack.c.l.b16 %v4287
      %v4391 = vunpack.c.l.b16 %v4301
      %v4392 = vunpack.c.l.b16 %v4311
      %v4393 = vpack.c.b16 %v4362, %v4361
      %v4394 = vpack.c.b16 %v4364, %v4363
      %v4395 = vpack.c.b16 %v4366, %v4365
      %v4396 = vpack.c.b16 %v4368, %v4367
      %v4397 = vpack.c.b16 %v4370, %v4369
      %v4398 = vpack.c.b16 %v4372, %v4371
      %v4399 = vpack.c.b16 %v4374, %v4373
      %v4400 = vpack.c.b16 %v4376, %v4375
      %v4401 = vpack.c.b16 %v4378, %v4377
      %v4402 = vpack.c.b16 %v4380, %v4379
      %v4403 = vpack.c.b16 %v4382, %v4381
      %v4404 = vpack.c.b16 %v4384, %v4383
      %v4405 = vpack.c.b16 %v4386, %v4385
      %v4406 = vpack.c.b16 %v4388, %v4387
      %v4407 = vpack.c.b16 %v4390, %v4389
      %v4408 = vpack.c.b16 %v4392, %v4391
      %v4441 = vunpack.c.l.b16 %v4345
      %v4442 = vunpack.c.l.b16 %v4346
      %v4443 = vunpack.c.l.b16 %v4347
      %v4444 = vunpack.c.l.b16 %v4348
      %v4445 = vunpack.c.l.b16 %v4349
      %v4446 = vunpack.c.l.b16 %v4350
      %v4447 = vunpack.c.l.b16 %v4351
      %v4448 = vunpack.c.l.b16 %v4352
      %v4449 = vunpack.c.l.b16 %v4353
      %v4450 = vunpack.c.l.b16 %v4354
      %v4451 = vunpack.c.l.b16 %v4355
      %v4452 = vunpack.c.l.b16 %v4356
      %v4453 = vunpack.c.l.b16 %v4357
      %v4454 = vunpack.c.l.b16 %v4358
      %v4455 = vunpack.c.l.b16 %v4359
      %v4456 = vunpack.c.l.b16 %v4360
      %v4457 = vpack.c.b16 %v4442, %v4441
      %v4458 = vpack.c.b16 %v4444, %v4443
      %v4459 = vpack.c.b16 %v4446, %v4445
      %v4460 = vpack.c.b16 %v4448, %v4447
      %v4461 = vpack.c.b16 %v4450, %v4449
      %v4462 = vpack.c.b16 %v4452, %v4451
      %v4463 = vpack.c.b16 %v4454, %v4453
      %v4464 = vpack.c.b16 %v4456, %v4455
      %4473 = vmatpush.bf16.msra.mxu0 %v4464
      %4474 = vmatpush.bf16.msra.mxu0 %v4463
      %4475 = vmatpush.bf16.msra.mxu0 %v4462
      %4476 = vmatpush.bf16.msra.mxu0 %v4461
      %4477 = vmatpush.bf16.msra.mxu0 %v4460
      %4478 = vmatpush.bf16.msra.mxu0 %v4459
      %4479 = vmatpush.bf16.msra.mxu0 %v4458
      %4480 = vmatpush.bf16.msra.mxu0 %v4457
      %4481 = vmatmul.bf16.gmra.mxu0 %v4393
      %v4482 = vpop.f32.mrf.mxu0
      %v4483 = vadd.f32 0.0, %v4482
      %v4484 = vpop.f32.mrf.mxu0
      %v4485 = vadd.f32 0.0, %v4484
      %4486 = vmatmul.bf16.gmra.mxu0 %v4394
      %v4487 = vpop.f32.mrf.mxu0
      %v4488 = vadd.f32 0.0, %v4487
      %v4489 = vpop.f32.mrf.mxu0
      %v4490 = vadd.f32 0.0, %v4489
      %4491 = vmatmul.bf16.gmra.mxu0 %v4395
      %v4492 = vpop.f32.mrf.mxu0
      %v4493 = vadd.f32 0.0, %v4492
      %v4494 = vpop.f32.mrf.mxu0
      %v4495 = vadd.f32 0.0, %v4494
      %4496 = vmatmul.bf16.gmra.mxu0 %v4396
      %v4497 = vpop.f32.mrf.mxu0
      %v4498 = vadd.f32 0.0, %v4497
      %v4499 = vpop.f32.mrf.mxu0
      %v4500 = vadd.f32 0.0, %v4499
      %4501 = vmatmul.bf16.gmra.mxu0 %v4397
      %v4502 = vpop.f32.mrf.mxu0
      %v4503 = vadd.f32 0.0, %v4502
      %v4504 = vpop.f32.mrf.mxu0
      %v4505 = vadd.f32 0.0, %v4504
      %4506 = vmatmul.bf16.gmra.mxu0 %v4398
      %v4507 = vpop.f32.mrf.mxu0
      %v4508 = vadd.f32 0.0, %v4507
      %v4509 = vpop.f32.mrf.mxu0
      %v4510 = vadd.f32 0.0, %v4509
      %4511 = vmatmul.bf16.gmra.mxu0 %v4399
      %v4512 = vpop.f32.mrf.mxu0
      %v4513 = vadd.f32 0.0, %v4512
      %v4514 = vpop.f32.mrf.mxu0
      %v4515 = vadd.f32 0.0, %v4514
      %4516 = vmatmul.bf16.gmra.mxu0 %v4400
      %v4517 = vpop.f32.mrf.mxu0
      %v4518 = vadd.f32 0.0, %v4517
      %v4519 = vpop.f32.mrf.mxu0
      %v4520 = vadd.f32 0.0, %v4519
      %4521 = vmatmul.bf16.gmra.mxu0 %v4401
      %v4522 = vpop.f32.mrf.mxu0
      %v4523 = vadd.f32 0.0, %v4522
      %v4524 = vpop.f32.mrf.mxu0
      %v4525 = vadd.f32 0.0, %v4524
      %4526 = vmatmul.bf16.gmra.mxu0 %v4402
      %v4527 = vpop.f32.mrf.mxu0
      %v4528 = vadd.f32 0.0, %v4527
      %v4529 = vpop.f32.mrf.mxu0
      %v4530 = vadd.f32 0.0, %v4529
      %4531 = vmatmul.bf16.gmra.mxu0 %v4403
      %v4532 = vpop.f32.mrf.mxu0
      %v4533 = vadd.f32 0.0, %v4532
      %v4534 = vpop.f32.mrf.mxu0
      %v4535 = vadd.f32 0.0, %v4534
      %4536 = vmatmul.bf16.gmra.mxu0 %v4404
      %v4537 = vpop.f32.mrf.mxu0
      %v4538 = vadd.f32 0.0, %v4537
      %v4539 = vpop.f32.mrf.mxu0
      %v4540 = vadd.f32 0.0, %v4539
      %4541 = vmatmul.bf16.gmra.mxu0 %v4405
      %v4542 = vpop.f32.mrf.mxu0
      %v4543 = vadd.f32 0.0, %v4542
      %v4544 = vpop.f32.mrf.mxu0
      %v4545 = vadd.f32 0.0, %v4544
      %4546 = vmatmul.bf16.gmra.mxu0 %v4406
      %v4547 = vpop.f32.mrf.mxu0
      %v4548 = vadd.f32 0.0, %v4547
      %v4549 = vpop.f32.mrf.mxu0
      %v4550 = vadd.f32 0.0, %v4549
      %4551 = vmatmul.bf16.gmra.mxu0 %v4407
      %v4552 = vpop.f32.mrf.mxu0
      %v4553 = vadd.f32 0.0, %v4552
      %v4554 = vpop.f32.mrf.mxu0
      %v4555 = vadd.f32 0.0, %v4554
      %4556 = vmatmul.bf16.gmra.mxu0 %v4408
      %v4557 = vpop.f32.mrf.mxu0
      %v4558 = vadd.f32 0.0, %v4557
      %v4559 = vpop.f32.mrf.mxu0
      %v4560 = vadd.f32 0.0, %v4559
      %4561 = vdwg.mxu0
      %v4562 = vadd.f32 %v4312, %v4483
      %v4563 = vadd.f32 %v4313, %v4485
      %v4564 = vadd.f32 %v4314, %v4488
      %v4565 = vadd.f32 %v4315, %v4490
      %v4566 = vadd.f32 %v4316, %v4493
      %v4567 = vadd.f32 %v4317, %v4495
      %v4568 = vadd.f32 %v4318, %v4498
      %v4569 = vadd.f32 %v4319, %v4500
      %v4570 = vadd.f32 %v4320, %v4503
      %v4571 = vadd.f32 %v4321, %v4505
      %v4572 = vadd.f32 %v4322, %v4508
      %v4573 = vadd.f32 %v4323, %v4510
      %v4574 = vadd.f32 %v4324, %v4513
      %v4575 = vadd.f32 %v4325, %v4515
      %v4576 = vadd.f32 %v4326, %v4518
      %v4577 = vadd.f32 %v4327, %v4520
      %v4578 = vadd.f32 %v4328, %v4523
      %v4579 = vadd.f32 %v4329, %v4525
      %v4580 = vadd.f32 %v4330, %v4528
      %v4581 = vadd.f32 %v4331, %v4530
      %v4582 = vadd.f32 %v4332, %v4533
      %v4583 = vadd.f32 %v4333, %v4535
      %v4584 = vadd.f32 %v4334, %v4538
      %v4585 = vadd.f32 %v4335, %v4540
      %v4586 = vadd.f32 %v4336, %v4543
      %v4587 = vadd.f32 %v4337, %v4545
      %v4588 = vadd.f32 %v4338, %v4548
      %v4589 = vadd.f32 %v4339, %v4550
      %v4590 = vadd.f32 %v4340, %v4553
      %v4591 = vadd.f32 %v4341, %v4555
      %v4592 = vadd.f32 %v4342, %v4558
      %v4593 = vadd.f32 %v4343, %v4560
      %4594 = vst [vmem:[#allocation2] sm:$0xff] %v4562
      %4595 = vst [vmem:[#allocation2 + $0x8] sm:$0xff] %v4563
      %4596 = vst [vmem:[#allocation2 + $0x10] sm:$0xff] %v4564
      %4597 = vst [vmem:[#allocation2 + $0x18] sm:$0xff] %v4565
      %4598 = vst [vmem:[#allocation2 + $0x20] sm:$0xff] %v4566
      %4599 = vst [vmem:[#allocation2 + $0x28] sm:$0xff] %v4567
      %4600 = vst [vmem:[#allocation2 + $0x30] sm:$0xff] %v4568
      %4601 = vst [vmem:[#allocation2 + $0x38] sm:$0xff] %v4569
      %4602 = vst [vmem:[#allocation2 + $0x40] sm:$0xff] %v4570
      %4603 = vst [vmem:[#allocation2 + $0x48] sm:$0xff] %v4571
      %4604 = vst [vmem:[#allocation2 + $0x50] sm:$0xff] %v4572
      %4605 = vst [vmem:[#allocation2 + $0x58] sm:$0xff] %v4573
      %4606 = vst [vmem:[#allocation2 + $0x60] sm:$0xff] %v4574
      %4607 = vst [vmem:[#allocation2 + $0x68] sm:$0xff] %v4575
      %4608 = vst [vmem:[#allocation2 + $0x70] sm:$0xff] %v4576
      %4609 = vst [vmem:[#allocation2 + $0x78] sm:$0xff] %v4577
      %4610 = vst [vmem:[#allocation2 + $0x80] sm:$0xff] %v4578
      %4611 = vst [vmem:[#allocation2 + $0x88] sm:$0xff] %v4579
      %4612 = vst [vmem:[#allocation2 + $0x90] sm:$0xff] %v4580
      %4613 = vst [vmem:[#allocation2 + $0x98] sm:$0xff] %v4581
      %4614 = vst [vmem:[#allocation2 + $0xa0] sm:$0xff] %v4582
      %4615 = vst [vmem:[#allocation2 + $0xa8] sm:$0xff] %v4583
      %4616 = vst [vmem:[#allocation2 + $0xb0] sm:$0xff] %v4584
      %4617 = vst [vmem:[#allocation2 + $0xb8] sm:$0xff] %v4585
      %4618 = vst [vmem:[#allocation2 + $0xc0] sm:$0xff] %v4586
      %4619 = vst [vmem:[#allocation2 + $0xc8] sm:$0xff] %v4587
      %4620 = vst [vmem:[#allocation2 + $0xd0] sm:$0xff] %v4588
      %4621 = vst [vmem:[#allocation2 + $0xd8] sm:$0xff] %v4589
      %4622 = vst [vmem:[#allocation2 + $0xe0] sm:$0xff] %v4590
      %4623 = vst [vmem:[#allocation2 + $0xe8] sm:$0xff] %v4591
      %4624 = vst [vmem:[#allocation2 + $0xf0] sm:$0xff] %v4592
      %4625 = vst [vmem:[#allocation2 + $0xf8] sm:$0xff] %v4593
      %v4626 = vld [vmem:[%s3501] sm:$0xe]
      %v4627 = vld [vmem:[%s3501 + $0x4] sm:$0xf]
      %v4628 = vld [vmem:[%s3501 + $0x8] sm:$0x1]
      %v4629 = vld [vmem:[%s3501 + $0xc] sm:$0xe]
      %v4630 = vld [vmem:[%s3501 + $0x10] sm:$0xf]
      %v4631 = vld [vmem:[%s3501 + $0x14] sm:$0x1]
      %v4632 = vld [vmem:[%s3501 + $0x18] sm:$0xe]
      %v4633 = vld [vmem:[%s3501 + $0x1c] sm:$0xf]
      %v4634 = vld [vmem:[%s3501 + $0x20] sm:$0x1]
      %v4635 = vld [vmem:[%s3501 + $0x24] sm:$0xe]
      %v4636 = vld [vmem:[%s3501 + $0x28] sm:$0xf]
      %v4637 = vld [vmem:[%s3501 + $0x2c] sm:$0x1]
      %v4638 = vld [vmem:[%s3501 + $0x30] sm:$0xe]
      %v4639 = vld [vmem:[%s3501 + $0x34] sm:$0xf]
      %v4640 = vld [vmem:[%s3501 + $0x38] sm:$0x1]
      %v4641 = vld [vmem:[%s3501 + $0x3c] sm:$0xe]
      %v4642 = vld [vmem:[%s3501 + $0x40] sm:$0xf]
      %v4643 = vld [vmem:[%s3501 + $0x44] sm:$0x1]
      %v4644 = vld [vmem:[%s3501 + $0x48] sm:$0xe]
      %v4645 = vld [vmem:[%s3501 + $0x4c] sm:$0xf]
      %v4646 = vld [vmem:[%s3501 + $0x50] sm:$0x1]
      %v4647 = vld [vmem:[%s3501 + $0x54] sm:$0xe]
      %v4648 = vld [vmem:[%s3501 + $0x58] sm:$0xf]
      %v4649 = vld [vmem:[%s3501 + $0x5c] sm:$0x1]
      %v4650 = vld [vmem:[%s3501 + $0x60] sm:$0xe]
      %v4651 = vld [vmem:[%s3501 + $0x64] sm:$0xf]
      %v4652 = vld [vmem:[%s3501 + $0x68] sm:$0x1]
      %v4653 = vld [vmem:[%s3501 + $0x6c] sm:$0xe]
      %v4654 = vld [vmem:[%s3501 + $0x70] sm:$0xf]
      %v4655 = vld [vmem:[%s3501 + $0x74] sm:$0x1]
      %v4656 = vld [vmem:[%s3501 + $0x78] sm:$0xe]
      %v4657 = vld [vmem:[%s3501 + $0x7c] sm:$0xf]
      %v4658 = vld [vmem:[%s3501 + $0x80] sm:$0x1]
      %v4659 = vld [vmem:[%s3501 + $0x84] sm:$0xe]
      %v4660 = vld [vmem:[%s3501 + $0x88] sm:$0xf]
      %v4661 = vld [vmem:[%s3501 + $0x8c] sm:$0x1]
      %v4662 = vld [vmem:[%s3501 + $0x90] sm:$0xe]
      %v4663 = vld [vmem:[%s3501 + $0x94] sm:$0xf]
      %v4664 = vld [vmem:[%s3501 + $0x98] sm:$0x1]
      %v4665 = vld [vmem:[%s3501 + $0x9c] sm:$0xe]
      %v4666 = vld [vmem:[%s3501 + $0xa0] sm:$0xf]
      %v4667 = vld [vmem:[%s3501 + $0xa4] sm:$0x1]
      %v4668 = vld [vmem:[%s3501 + $0xa8] sm:$0xe]
      %v4669 = vld [vmem:[%s3501 + $0xac] sm:$0xf]
      %v4670 = vld [vmem:[%s3501 + $0xb0] sm:$0x1]
      %v4671 = vld [vmem:[%s3501 + $0xb4] sm:$0xe]
      %v4672 = vld [vmem:[%s3501 + $0xb8] sm:$0xf]
      %v4673 = vld [vmem:[%s3501 + $0xbc] sm:$0x1]
      %v4722 = vrot.slane %v4626, 5
      %v4723 = vrot.slane %v4722, 4
      %v4724 = vrot.slane %v4627, 5
      %v4725 = vsel %vm1427, %v4723, %v4724
      %v4726 = vrot.slane %v4724, 4
      %v4727 = vrot.slane %v4628, 5
      %v4728 = vsel %vm1427, %v4726, %v4727
      %v4729 = vrot.slane %v4629, 5
      %v4730 = vrot.slane %v4729, 4
      %v4731 = vrot.slane %v4630, 5
      %v4732 = vsel %vm1427, %v4730, %v4731
      %v4733 = vrot.slane %v4731, 4
      %v4734 = vrot.slane %v4631, 5
      %v4735 = vsel %vm1427, %v4733, %v4734
      %v4736 = vrot.slane %v4632, 5
      %v4737 = vrot.slane %v4736, 4
      %v4738 = vrot.slane %v4633, 5
      %v4739 = vsel %vm1427, %v4737, %v4738
      %v4740 = vrot.slane %v4738, 4
      %v4741 = vrot.slane %v4634, 5
      %v4742 = vsel %vm1427, %v4740, %v4741
      %v4743 = vrot.slane %v4635, 5
      %v4744 = vrot.slane %v4743, 4
      %v4745 = vrot.slane %v4636, 5
      %v4746 = vsel %vm1427, %v4744, %v4745
      %v4747 = vrot.slane %v4745, 4
      %v4748 = vrot.slane %v4637, 5
      %v4749 = vsel %vm1427, %v4747, %v4748
      %v4750 = vrot.slane %v4638, 5
      %v4751 = vrot.slane %v4750, 4
      %v4752 = vrot.slane %v4639, 5
      %v4753 = vsel %vm1427, %v4751, %v4752
      %v4754 = vrot.slane %v4752, 4
      %v4755 = vrot.slane %v4640, 5
      %v4756 = vsel %vm1427, %v4754, %v4755
      %v4757 = vrot.slane %v4641, 5
      %v4758 = vrot.slane %v4757, 4
      %v4759 = vrot.slane %v4642, 5
      %v4760 = vsel %vm1427, %v4758, %v4759
      %v4761 = vrot.slane %v4759, 4
      %v4762 = vrot.slane %v4643, 5
      %v4763 = vsel %vm1427, %v4761, %v4762
      %v4764 = vrot.slane %v4644, 5
      %v4765 = vrot.slane %v4764, 4
      %v4766 = vrot.slane %v4645, 5
      %v4767 = vsel %vm1427, %v4765, %v4766
      %v4768 = vrot.slane %v4766, 4
      %v4769 = vrot.slane %v4646, 5
      %v4770 = vsel %vm1427, %v4768, %v4769
      %v4771 = vrot.slane %v4647, 5
      %v4772 = vrot.slane %v4771, 4
      %v4773 = vrot.slane %v4648, 5
      %v4774 = vsel %vm1427, %v4772, %v4773
      %v4775 = vrot.slane %v4773, 4
      %v4776 = vrot.slane %v4649, 5
      %v4777 = vsel %vm1427, %v4775, %v4776
      %v4778 = vrot.slane %v4650, 5
      %v4779 = vrot.slane %v4778, 4
      %v4780 = vrot.slane %v4651, 5
      %v4781 = vsel %vm1427, %v4779, %v4780
      %v4782 = vrot.slane %v4780, 4
      %v4783 = vrot.slane %v4652, 5
      %v4784 = vsel %vm1427, %v4782, %v4783
      %v4785 = vrot.slane %v4653, 5
      %v4786 = vrot.slane %v4785, 4
      %v4787 = vrot.slane %v4654, 5
      %v4788 = vsel %vm1427, %v4786, %v4787
      %v4789 = vrot.slane %v4787, 4
      %v4790 = vrot.slane %v4655, 5
      %v4791 = vsel %vm1427, %v4789, %v4790
      %v4792 = vrot.slane %v4656, 5
      %v4793 = vrot.slane %v4792, 4
      %v4794 = vrot.slane %v4657, 5
      %v4795 = vsel %vm1427, %v4793, %v4794
      %v4796 = vrot.slane %v4794, 4
      %v4797 = vrot.slane %v4658, 5
      %v4798 = vsel %vm1427, %v4796, %v4797
      %v4799 = vrot.slane %v4659, 5
      %v4800 = vrot.slane %v4799, 4
      %v4801 = vrot.slane %v4660, 5
      %v4802 = vsel %vm1427, %v4800, %v4801
      %v4803 = vrot.slane %v4801, 4
      %v4804 = vrot.slane %v4661, 5
      %v4805 = vsel %vm1427, %v4803, %v4804
      %v4806 = vrot.slane %v4662, 5
      %v4807 = vrot.slane %v4806, 4
      %v4808 = vrot.slane %v4663, 5
      %v4809 = vsel %vm1427, %v4807, %v4808
      %v4810 = vrot.slane %v4808, 4
      %v4811 = vrot.slane %v4664, 5
      %v4812 = vsel %vm1427, %v4810, %v4811
      %v4813 = vrot.slane %v4665, 5
      %v4814 = vrot.slane %v4813, 4
      %v4815 = vrot.slane %v4666, 5
      %v4816 = vsel %vm1427, %v4814, %v4815
      %v4817 = vrot.slane %v4815, 4
      %v4818 = vrot.slane %v4667, 5
      %v4819 = vsel %vm1427, %v4817, %v4818
      %v4820 = vrot.slane %v4668, 5
      %v4821 = vrot.slane %v4820, 4
      %v4822 = vrot.slane %v4669, 5
      %v4823 = vsel %vm1427, %v4821, %v4822
      %v4824 = vrot.slane %v4822, 4
      %v4825 = vrot.slane %v4670, 5
      %v4826 = vsel %vm1427, %v4824, %v4825
      %v4827 = vrot.slane %v4671, 5
      %v4828 = vrot.slane %v4827, 4
      %v4829 = vrot.slane %v4672, 5
      %v4830 = vsel %vm1427, %v4828, %v4829
      %v4831 = vrot.slane %v4829, 4
      %v4832 = vrot.slane %v4673, 5
      %v4833 = vsel %vm1427, %v4831, %v4832
      %v4834 = vld [vmem:[#allocation2] sm:$0xff]
      %v4835 = vld [vmem:[#allocation2 + $0x8] sm:$0xff]
      %v4836 = vld [vmem:[#allocation2 + $0x10] sm:$0xff]
      %v4837 = vld [vmem:[#allocation2 + $0x18] sm:$0xff]
      %v4838 = vld [vmem:[#allocation2 + $0x20] sm:$0xff]
      %v4839 = vld [vmem:[#allocation2 + $0x28] sm:$0xff]
      %v4840 = vld [vmem:[#allocation2 + $0x30] sm:$0xff]
      %v4841 = vld [vmem:[#allocation2 + $0x38] sm:$0xff]
      %v4842 = vld [vmem:[#allocation2 + $0x40] sm:$0xff]
      %v4843 = vld [vmem:[#allocation2 + $0x48] sm:$0xff]
      %v4844 = vld [vmem:[#allocation2 + $0x50] sm:$0xff]
      %v4845 = vld [vmem:[#allocation2 + $0x58] sm:$0xff]
      %v4846 = vld [vmem:[#allocation2 + $0x60] sm:$0xff]
      %v4847 = vld [vmem:[#allocation2 + $0x68] sm:$0xff]
      %v4848 = vld [vmem:[#allocation2 + $0x70] sm:$0xff]
      %v4849 = vld [vmem:[#allocation2 + $0x78] sm:$0xff]
      %v4850 = vld [vmem:[#allocation2 + $0x80] sm:$0xff]
      %v4851 = vld [vmem:[#allocation2 + $0x88] sm:$0xff]
      %v4852 = vld [vmem:[#allocation2 + $0x90] sm:$0xff]
      %v4853 = vld [vmem:[#allocation2 + $0x98] sm:$0xff]
      %v4854 = vld [vmem:[#allocation2 + $0xa0] sm:$0xff]
      %v4855 = vld [vmem:[#allocation2 + $0xa8] sm:$0xff]
      %v4856 = vld [vmem:[#allocation2 + $0xb0] sm:$0xff]
      %v4857 = vld [vmem:[#allocation2 + $0xb8] sm:$0xff]
      %v4858 = vld [vmem:[#allocation2 + $0xc0] sm:$0xff]
      %v4859 = vld [vmem:[#allocation2 + $0xc8] sm:$0xff]
      %v4860 = vld [vmem:[#allocation2 + $0xd0] sm:$0xff]
      %v4861 = vld [vmem:[#allocation2 + $0xd8] sm:$0xff]
      %v4862 = vld [vmem:[#allocation2 + $0xe0] sm:$0xff]
      %v4863 = vld [vmem:[#allocation2 + $0xe8] sm:$0xff]
      %v4864 = vld [vmem:[#allocation2 + $0xf0] sm:$0xff]
      %v4865 = vld [vmem:[#allocation2 + $0xf8] sm:$0xff]
      %s4866 = scalar_lea.vmem %s1, 512
      %v4867 = vld [vmem:[%s4866] sm:$0xf]
      %v4868 = vld [vmem:[%s4866 + $0x4] sm:$0xf]
      %v4869 = vld [vmem:[%s4866 + $0x8] sm:$0xf]
      %v4870 = vld [vmem:[%s4866 + $0xc] sm:$0xf]
      %v4871 = vld [vmem:[%s4866 + $0x10] sm:$0xf]
      %v4872 = vld [vmem:[%s4866 + $0x14] sm:$0xf]
      %v4873 = vld [vmem:[%s4866 + $0x18] sm:$0xf]
      %v4874 = vld [vmem:[%s4866 + $0x1c] sm:$0xf]
      %v4875 = vld [vmem:[%s4866 + $0x20] sm:$0xf]
      %v4876 = vld [vmem:[%s4866 + $0x24] sm:$0xf]
      %v4877 = vld [vmem:[%s4866 + $0x28] sm:$0xf]
      %v4878 = vld [vmem:[%s4866 + $0x2c] sm:$0xf]
      %v4879 = vld [vmem:[%s4866 + $0x30] sm:$0xf]
      %v4880 = vld [vmem:[%s4866 + $0x34] sm:$0xf]
      %v4881 = vld [vmem:[%s4866 + $0x38] sm:$0xf]
      %v4882 = vld [vmem:[%s4866 + $0x3c] sm:$0xf]
      %v4883 = vunpack.c.l.b16 %v4725
      %v4884 = vunpack.c.l.b16 %v4728
      %v4885 = vunpack.c.l.b16 %v4732
      %v4886 = vunpack.c.l.b16 %v4735
      %v4887 = vunpack.c.l.b16 %v4739
      %v4888 = vunpack.c.l.b16 %v4742
      %v4889 = vunpack.c.l.b16 %v4746
      %v4890 = vunpack.c.l.b16 %v4749
      %v4891 = vunpack.c.l.b16 %v4753
      %v4892 = vunpack.c.l.b16 %v4756
      %v4893 = vunpack.c.l.b16 %v4760
      %v4894 = vunpack.c.l.b16 %v4763
      %v4895 = vunpack.c.l.b16 %v4767
      %v4896 = vunpack.c.l.b16 %v4770
      %v4897 = vunpack.c.l.b16 %v4774
      %v4898 = vunpack.c.l.b16 %v4777
      %v4899 = vunpack.c.l.b16 %v4781
      %v4900 = vunpack.c.l.b16 %v4784
      %v4901 = vunpack.c.l.b16 %v4788
      %v4902 = vunpack.c.l.b16 %v4791
      %v4903 = vunpack.c.l.b16 %v4795
      %v4904 = vunpack.c.l.b16 %v4798
      %v4905 = vunpack.c.l.b16 %v4802
      %v4906 = vunpack.c.l.b16 %v4805
      %v4907 = vunpack.c.l.b16 %v4809
      %v4908 = vunpack.c.l.b16 %v4812
      %v4909 = vunpack.c.l.b16 %v4816
      %v4910 = vunpack.c.l.b16 %v4819
      %v4911 = vunpack.c.l.b16 %v4823
      %v4912 = vunpack.c.l.b16 %v4826
      %v4913 = vunpack.c.l.b16 %v4830
      %v4914 = vunpack.c.l.b16 %v4833
      %v4915 = vpack.c.b16 %v4884, %v4883
      %v4916 = vpack.c.b16 %v4886, %v4885
      %v4917 = vpack.c.b16 %v4888, %v4887
      %v4918 = vpack.c.b16 %v4890, %v4889
      %v4919 = vpack.c.b16 %v4892, %v4891
      %v4920 = vpack.c.b16 %v4894, %v4893
      %v4921 = vpack.c.b16 %v4896, %v4895
      %v4922 = vpack.c.b16 %v4898, %v4897
      %v4923 = vpack.c.b16 %v4900, %v4899
      %v4924 = vpack.c.b16 %v4902, %v4901
      %v4925 = vpack.c.b16 %v4904, %v4903
      %v4926 = vpack.c.b16 %v4906, %v4905
      %v4927 = vpack.c.b16 %v4908, %v4907
      %v4928 = vpack.c.b16 %v4910, %v4909
      %v4929 = vpack.c.b16 %v4912, %v4911
      %v4930 = vpack.c.b16 %v4914, %v4913
      %v4963 = vunpack.c.l.b16 %v4867
      %v4964 = vunpack.c.l.b16 %v4868
      %v4965 = vunpack.c.l.b16 %v4869
      %v4966 = vunpack.c.l.b16 %v4870
      %v4967 = vunpack.c.l.b16 %v4871
      %v4968 = vunpack.c.l.b16 %v4872
      %v4969 = vunpack.c.l.b16 %v4873
      %v4970 = vunpack.c.l.b16 %v4874
      %v4971 = vunpack.c.l.b16 %v4875
      %v4972 = vunpack.c.l.b16 %v4876
      %v4973 = vunpack.c.l.b16 %v4877
      %v4974 = vunpack.c.l.b16 %v4878
      %v4975 = vunpack.c.l.b16 %v4879
      %v4976 = vunpack.c.l.b16 %v4880
      %v4977 = vunpack.c.l.b16 %v4881
      %v4978 = vunpack.c.l.b16 %v4882
      %v4979 = vpack.c.b16 %v4964, %v4963
      %v4980 = vpack.c.b16 %v4966, %v4965
      %v4981 = vpack.c.b16 %v4968, %v4967
      %v4982 = vpack.c.b16 %v4970, %v4969
      %v4983 = vpack.c.b16 %v4972, %v4971
      %v4984 = vpack.c.b16 %v4974, %v4973
      %v4985 = vpack.c.b16 %v4976, %v4975
      %v4986 = vpack.c.b16 %v4978, %v4977
      %4995 = vmatpush.bf16.msra.mxu0 %v4986
      %4996 = vmatpush.bf16.msra.mxu0 %v4985
      %4997 = vmatpush.bf16.msra.mxu0 %v4984
      %4998 = vmatpush.bf16.msra.mxu0 %v4983
      %4999 = vmatpush.bf16.msra.mxu0 %v4982
      %5000 = vmatpush.bf16.msra.mxu0 %v4981
      %5001 = vmatpush.bf16.msra.mxu0 %v4980
      %5002 = vmatpush.bf16.msra.mxu0 %v4979
      %5003 = vmatmul.bf16.gmra.mxu0 %v4915
      %v5004 = vpop.f32.mrf.mxu0
      %v5005 = vadd.f32 0.0, %v5004
      %v5006 = vpop.f32.mrf.mxu0
      %v5007 = vadd.f32 0.0, %v5006
      %5008 = vmatmul.bf16.gmra.mxu0 %v4916
      %v5009 = vpop.f32.mrf.mxu0
      %v5010 = vadd.f32 0.0, %v5009
      %v5011 = vpop.f32.mrf.mxu0
      %v5012 = vadd.f32 0.0, %v5011
      %5013 = vmatmul.bf16.gmra.mxu0 %v4917
      %v5014 = vpop.f32.mrf.mxu0
      %v5015 = vadd.f32 0.0, %v5014
      %v5016 = vpop.f32.mrf.mxu0
      %v5017 = vadd.f32 0.0, %v5016
      %5018 = vmatmul.bf16.gmra.mxu0 %v4918
      %v5019 = vpop.f32.mrf.mxu0
      %v5020 = vadd.f32 0.0, %v5019
      %v5021 = vpop.f32.mrf.mxu0
      %v5022 = vadd.f32 0.0, %v5021
      %5023 = vmatmul.bf16.gmra.mxu0 %v4919
      %v5024 = vpop.f32.mrf.mxu0
      %v5025 = vadd.f32 0.0, %v5024
      %v5026 = vpop.f32.mrf.mxu0
      %v5027 = vadd.f32 0.0, %v5026
      %5028 = vmatmul.bf16.gmra.mxu0 %v4920
      %v5029 = vpop.f32.mrf.mxu0
      %v5030 = vadd.f32 0.0, %v5029
      %v5031 = vpop.f32.mrf.mxu0
      %v5032 = vadd.f32 0.0, %v5031
      %5033 = vmatmul.bf16.gmra.mxu0 %v4921
      %v5034 = vpop.f32.mrf.mxu0
      %v5035 = vadd.f32 0.0, %v5034
      %v5036 = vpop.f32.mrf.mxu0
      %v5037 = vadd.f32 0.0, %v5036
      %5038 = vmatmul.bf16.gmra.mxu0 %v4922
      %v5039 = vpop.f32.mrf.mxu0
      %v5040 = vadd.f32 0.0, %v5039
      %v5041 = vpop.f32.mrf.mxu0
      %v5042 = vadd.f32 0.0, %v5041
      %5043 = vmatmul.bf16.gmra.mxu0 %v4923
      %v5044 = vpop.f32.mrf.mxu0
      %v5045 = vadd.f32 0.0, %v5044
      %v5046 = vpop.f32.mrf.mxu0
      %v5047 = vadd.f32 0.0, %v5046
      %5048 = vmatmul.bf16.gmra.mxu0 %v4924
      %v5049 = vpop.f32.mrf.mxu0
      %v5050 = vadd.f32 0.0, %v5049
      %v5051 = vpop.f32.mrf.mxu0
      %v5052 = vadd.f32 0.0, %v5051
      %5053 = vmatmul.bf16.gmra.mxu0 %v4925
      %v5054 = vpop.f32.mrf.mxu0
      %v5055 = vadd.f32 0.0, %v5054
      %v5056 = vpop.f32.mrf.mxu0
      %v5057 = vadd.f32 0.0, %v5056
      %5058 = vmatmul.bf16.gmra.mxu0 %v4926
      %v5059 = vpop.f32.mrf.mxu0
      %v5060 = vadd.f32 0.0, %v5059
      %v5061 = vpop.f32.mrf.mxu0
      %v5062 = vadd.f32 0.0, %v5061
      %5063 = vmatmul.bf16.gmra.mxu0 %v4927
      %v5064 = vpop.f32.mrf.mxu0
      %v5065 = vadd.f32 0.0, %v5064
      %v5066 = vpop.f32.mrf.mxu0
      %v5067 = vadd.f32 0.0, %v5066
      %5068 = vmatmul.bf16.gmra.mxu0 %v4928
      %v5069 = vpop.f32.mrf.mxu0
      %v5070 = vadd.f32 0.0, %v5069
      %v5071 = vpop.f32.mrf.mxu0
      %v5072 = vadd.f32 0.0, %v5071
      %5073 = vmatmul.bf16.gmra.mxu0 %v4929
      %v5074 = vpop.f32.mrf.mxu0
      %v5075 = vadd.f32 0.0, %v5074
      %v5076 = vpop.f32.mrf.mxu0
      %v5077 = vadd.f32 0.0, %v5076
      %5078 = vmatmul.bf16.gmra.mxu0 %v4930
      %v5079 = vpop.f32.mrf.mxu0
      %v5080 = vadd.f32 0.0, %v5079
      %v5081 = vpop.f32.mrf.mxu0
      %v5082 = vadd.f32 0.0, %v5081
      %5083 = vdwg.mxu0
      %v5084 = vadd.f32 %v4834, %v5005
      %v5085 = vadd.f32 %v4835, %v5007
      %v5086 = vadd.f32 %v4836, %v5010
      %v5087 = vadd.f32 %v4837, %v5012
      %v5088 = vadd.f32 %v4838, %v5015
      %v5089 = vadd.f32 %v4839, %v5017
      %v5090 = vadd.f32 %v4840, %v5020
      %v5091 = vadd.f32 %v4841, %v5022
      %v5092 = vadd.f32 %v4842, %v5025
      %v5093 = vadd.f32 %v4843, %v5027
      %v5094 = vadd.f32 %v4844, %v5030
      %v5095 = vadd.f32 %v4845, %v5032
      %v5096 = vadd.f32 %v4846, %v5035
      %v5097 = vadd.f32 %v4847, %v5037
      %v5098 = vadd.f32 %v4848, %v5040
      %v5099 = vadd.f32 %v4849, %v5042
      %v5100 = vadd.f32 %v4850, %v5045
      %v5101 = vadd.f32 %v4851, %v5047
      %v5102 = vadd.f32 %v4852, %v5050
      %v5103 = vadd.f32 %v4853, %v5052
      %v5104 = vadd.f32 %v4854, %v5055
      %v5105 = vadd.f32 %v4855, %v5057
      %v5106 = vadd.f32 %v4856, %v5060
      %v5107 = vadd.f32 %v4857, %v5062
      %v5108 = vadd.f32 %v4858, %v5065
      %v5109 = vadd.f32 %v4859, %v5067
      %v5110 = vadd.f32 %v4860, %v5070
      %v5111 = vadd.f32 %v4861, %v5072
      %v5112 = vadd.f32 %v4862, %v5075
      %v5113 = vadd.f32 %v4863, %v5077
      %v5114 = vadd.f32 %v4864, %v5080
      %v5115 = vadd.f32 %v4865, %v5082
      %5116 = vst [vmem:[#allocation2] sm:$0xff] %v5084
      %5117 = vst [vmem:[#allocation2 + $0x8] sm:$0xff] %v5085
      %5118 = vst [vmem:[#allocation2 + $0x10] sm:$0xff] %v5086
      %5119 = vst [vmem:[#allocation2 + $0x18] sm:$0xff] %v5087
      %5120 = vst [vmem:[#allocation2 + $0x20] sm:$0xff] %v5088
      %5121 = vst [vmem:[#allocation2 + $0x28] sm:$0xff] %v5089
      %5122 = vst [vmem:[#allocation2 + $0x30] sm:$0xff] %v5090
      %5123 = vst [vmem:[#allocation2 + $0x38] sm:$0xff] %v5091
      %5124 = vst [vmem:[#allocation2 + $0x40] sm:$0xff] %v5092
      %5125 = vst [vmem:[#allocation2 + $0x48] sm:$0xff] %v5093
      %5126 = vst [vmem:[#allocation2 + $0x50] sm:$0xff] %v5094
      %5127 = vst [vmem:[#allocation2 + $0x58] sm:$0xff] %v5095
      %5128 = vst [vmem:[#allocation2 + $0x60] sm:$0xff] %v5096
      %5129 = vst [vmem:[#allocation2 + $0x68] sm:$0xff] %v5097
      %5130 = vst [vmem:[#allocation2 + $0x70] sm:$0xff] %v5098
      %5131 = vst [vmem:[#allocation2 + $0x78] sm:$0xff] %v5099
      %5132 = vst [vmem:[#allocation2 + $0x80] sm:$0xff] %v5100
      %5133 = vst [vmem:[#allocation2 + $0x88] sm:$0xff] %v5101
      %5134 = vst [vmem:[#allocation2 + $0x90] sm:$0xff] %v5102
      %5135 = vst [vmem:[#allocation2 + $0x98] sm:$0xff] %v5103
      %5136 = vst [vmem:[#allocation2 + $0xa0] sm:$0xff] %v5104
      %5137 = vst [vmem:[#allocation2 + $0xa8] sm:$0xff] %v5105
      %5138 = vst [vmem:[#allocation2 + $0xb0] sm:$0xff] %v5106
      %5139 = vst [vmem:[#allocation2 + $0xb8] sm:$0xff] %v5107
      %5140 = vst [vmem:[#allocation2 + $0xc0] sm:$0xff] %v5108
      %5141 = vst [vmem:[#allocation2 + $0xc8] sm:$0xff] %v5109
      %5142 = vst [vmem:[#allocation2 + $0xd0] sm:$0xff] %v5110
      %5143 = vst [vmem:[#allocation2 + $0xd8] sm:$0xff] %v5111
      %5144 = vst [vmem:[#allocation2 + $0xe0] sm:$0xff] %v5112
      %5145 = vst [vmem:[#allocation2 + $0xe8] sm:$0xff] %v5113
      %5146 = vst [vmem:[#allocation2 + $0xf0] sm:$0xff] %v5114
      %5147 = vst [vmem:[#allocation2 + $0xf8] sm:$0xff] %v5115
      %v5148 = vld [vmem:[#allocation2] sm:$0xff]
      %v5149 = vld [vmem:[#allocation2 + $0x8] sm:$0xff]
      %v5150 = vld [vmem:[#allocation2 + $0x10] sm:$0xff]
      %v5151 = vld [vmem:[#allocation2 + $0x18] sm:$0xff]
      %v5152 = vld [vmem:[#allocation2 + $0x20] sm:$0xff]
      %v5153 = vld [vmem:[#allocation2 + $0x28] sm:$0xff]
      %v5154 = vld [vmem:[#allocation2 + $0x30] sm:$0xff]
      %v5155 = vld [vmem:[#allocation2 + $0x38] sm:$0xff]
      %v5156 = vld [vmem:[#allocation2 + $0x40] sm:$0xff]
      %v5157 = vld [vmem:[#allocation2 + $0x48] sm:$0xff]
      %v5158 = vld [vmem:[#allocation2 + $0x50] sm:$0xff]
      %v5159 = vld [vmem:[#allocation2 + $0x58] sm:$0xff]
      %v5160 = vld [vmem:[#allocation2 + $0x60] sm:$0xff]
      %v5161 = vld [vmem:[#allocation2 + $0x68] sm:$0xff]
      %v5162 = vld [vmem:[#allocation2 + $0x70] sm:$0xff]
      %v5163 = vld [vmem:[#allocation2 + $0x78] sm:$0xff]
      %v5164 = vld [vmem:[#allocation2 + $0x80] sm:$0xff]
      %v5165 = vld [vmem:[#allocation2 + $0x88] sm:$0xff]
      %v5166 = vld [vmem:[#allocation2 + $0x90] sm:$0xff]
      %v5167 = vld [vmem:[#allocation2 + $0x98] sm:$0xff]
      %v5168 = vld [vmem:[#allocation2 + $0xa0] sm:$0xff]
      %v5169 = vld [vmem:[#allocation2 + $0xa8] sm:$0xff]
      %v5170 = vld [vmem:[#allocation2 + $0xb0] sm:$0xff]
      %v5171 = vld [vmem:[#allocation2 + $0xb8] sm:$0xff]
      %v5172 = vld [vmem:[#allocation2 + $0xc0] sm:$0xff]
      %v5173 = vld [vmem:[#allocation2 + $0xc8] sm:$0xff]
      %v5174 = vld [vmem:[#allocation2 + $0xd0] sm:$0xff]
      %v5175 = vld [vmem:[#allocation2 + $0xd8] sm:$0xff]
      %v5176 = vld [vmem:[#allocation2 + $0xe0] sm:$0xff]
      %v5177 = vld [vmem:[#allocation2 + $0xe8] sm:$0xff]
      %v5178 = vld [vmem:[#allocation2 + $0xf0] sm:$0xff]
      %v5179 = vld [vmem:[#allocation2 + $0xf8] sm:$0xff]
      %v5180 = vld [vmem:[%s2] sm:$0x1]
      %v5182 = vperm.slane %v5180, 0
      %v5184 = vadd.f32 %v5148, %v5182
      %v5185 = vadd.f32 %v5149, %v5182
      %v5186 = vadd.f32 %v5150, %v5182
      %v5187 = vadd.f32 %v5151, %v5182
      %v5188 = vadd.f32 %v5152, %v5182
      %v5189 = vadd.f32 %v5153, %v5182
      %v5190 = vadd.f32 %v5154, %v5182
      %v5191 = vadd.f32 %v5155, %v5182
      %v5192 = vadd.f32 %v5156, %v5182
      %v5193 = vadd.f32 %v5157, %v5182
      %v5194 = vadd.f32 %v5158, %v5182
      %v5195 = vadd.f32 %v5159, %v5182
      %v5196 = vadd.f32 %v5160, %v5182
      %v5197 = vadd.f32 %v5161, %v5182
      %v5198 = vadd.f32 %v5162, %v5182
      %v5199 = vadd.f32 %v5163, %v5182
      %v5200 = vadd.f32 %v5164, %v5182
      %v5201 = vadd.f32 %v5165, %v5182
      %v5202 = vadd.f32 %v5166, %v5182
      %v5203 = vadd.f32 %v5167, %v5182
      %v5204 = vadd.f32 %v5168, %v5182
      %v5205 = vadd.f32 %v5169, %v5182
      %v5206 = vadd.f32 %v5170, %v5182
      %v5207 = vadd.f32 %v5171, %v5182
      %v5208 = vadd.f32 %v5172, %v5182
      %v5209 = vadd.f32 %v5173, %v5182
      %v5210 = vadd.f32 %v5174, %v5182
      %v5211 = vadd.f32 %v5175, %v5182
      %v5212 = vadd.f32 %v5176, %v5182
      %v5213 = vadd.f32 %v5177, %v5182
      %v5214 = vadd.f32 %v5178, %v5182
      %v5215 = vadd.f32 %v5179, %v5182
      %v5216 = vmax.f32 %v5184, 0.0
      %v5217 = vmax.f32 %v5185, 0.0
      %v5218 = vmax.f32 %v5186, 0.0
      %v5219 = vmax.f32 %v5187, 0.0
      %v5220 = vmax.f32 %v5188, 0.0
      %v5221 = vmax.f32 %v5189, 0.0
      %v5222 = vmax.f32 %v5190, 0.0
      %v5223 = vmax.f32 %v5191, 0.0
      %v5224 = vmax.f32 %v5192, 0.0
      %v5225 = vmax.f32 %v5193, 0.0
      %v5226 = vmax.f32 %v5194, 0.0
      %v5227 = vmax.f32 %v5195, 0.0
      %v5228 = vmax.f32 %v5196, 0.0
      %v5229 = vmax.f32 %v5197, 0.0
      %v5230 = vmax.f32 %v5198, 0.0
      %v5231 = vmax.f32 %v5199, 0.0
      %v5232 = vmax.f32 %v5200, 0.0
      %v5233 = vmax.f32 %v5201, 0.0
      %v5234 = vmax.f32 %v5202, 0.0
      %v5235 = vmax.f32 %v5203, 0.0
      %v5236 = vmax.f32 %v5204, 0.0
      %v5237 = vmax.f32 %v5205, 0.0
      %v5238 = vmax.f32 %v5206, 0.0
      %v5239 = vmax.f32 %v5207, 0.0
      %v5240 = vmax.f32 %v5208, 0.0
      %v5241 = vmax.f32 %v5209, 0.0
      %v5242 = vmax.f32 %v5210, 0.0
      %v5243 = vmax.f32 %v5211, 0.0
      %v5244 = vmax.f32 %v5212, 0.0
      %v5245 = vmax.f32 %v5213, 0.0
      %v5246 = vmax.f32 %v5214, 0.0
      %v5247 = vmax.f32 %v5215, 0.0
      %v5248 = vpack.c.bf16 %v5216, %v5216
      %v5249 = vpack.c.bf16 %v5217, %v5217
      %v5250 = vpack.c.bf16 %v5218, %v5218
      %v5251 = vpack.c.bf16 %v5219, %v5219
      %v5252 = vpack.c.bf16 %v5220, %v5220
      %v5253 = vpack.c.bf16 %v5221, %v5221
      %v5254 = vpack.c.bf16 %v5222, %v5222
      %v5255 = vpack.c.bf16 %v5223, %v5223
      %v5256 = vpack.c.bf16 %v5224, %v5224
      %v5257 = vpack.c.bf16 %v5225, %v5225
      %v5258 = vpack.c.bf16 %v5226, %v5226
      %v5259 = vpack.c.bf16 %v5227, %v5227
      %v5260 = vpack.c.bf16 %v5228, %v5228
      %v5261 = vpack.c.bf16 %v5229, %v5229
      %v5262 = vpack.c.bf16 %v5230, %v5230
      %v5263 = vpack.c.bf16 %v5231, %v5231
      %v5264 = vpack.c.bf16 %v5232, %v5232
      %v5265 = vpack.c.bf16 %v5233, %v5233
      %v5266 = vpack.c.bf16 %v5234, %v5234
      %v5267 = vpack.c.bf16 %v5235, %v5235
      %v5268 = vpack.c.bf16 %v5236, %v5236
      %v5269 = vpack.c.bf16 %v5237, %v5237
      %v5270 = vpack.c.bf16 %v5238, %v5238
      %v5271 = vpack.c.bf16 %v5239, %v5239
      %v5272 = vpack.c.bf16 %v5240, %v5240
      %v5273 = vpack.c.bf16 %v5241, %v5241
      %v5274 = vpack.c.bf16 %v5242, %v5242
      %v5275 = vpack.c.bf16 %v5243, %v5243
      %v5276 = vpack.c.bf16 %v5244, %v5244
      %v5277 = vpack.c.bf16 %v5245, %v5245
      %v5278 = vpack.c.bf16 %v5246, %v5246
      %v5279 = vpack.c.bf16 %v5247, %v5247
      %5280 = vst [vmem:[%s170] sm:$0xf] %v5248
      %5281 = vst [vmem:[%s170 + $0x4] sm:$0xf] %v5249
      %5282 = vst [vmem:[%s170 + $0x8] sm:$0xf] %v5250
      %5283 = vst [vmem:[%s170 + $0xc] sm:$0xf] %v5251
      %5284 = vst [vmem:[%s170 + $0x10] sm:$0xf] %v5252
      %5285 = vst [vmem:[%s170 + $0x14] sm:$0xf] %v5253
      %5286 = vst [vmem:[%s170 + $0x18] sm:$0xf] %v5254
      %5287 = vst [vmem:[%s170 + $0x1c] sm:$0xf] %v5255
      %5288 = vst [vmem:[%s170 + $0x20] sm:$0xf] %v5256
      %5289 = vst [vmem:[%s170 + $0x24] sm:$0xf] %v5257
      %5290 = vst [vmem:[%s170 + $0x28] sm:$0xf] %v5258
      %5291 = vst [vmem:[%s170 + $0x2c] sm:$0xf] %v5259
      %5292 = vst [vmem:[%s170 + $0x30] sm:$0xf] %v5260
      %5293 = vst [vmem:[%s170 + $0x34] sm:$0xf] %v5261
      %5294 = vst [vmem:[%s170 + $0x38] sm:$0xf] %v5262
      %5295 = vst [vmem:[%s170 + $0x3c] sm:$0xf] %v5263
      %5296 = vst [vmem:[%s170 + $0x40] sm:$0xf] %v5264
      %5297 = vst [vmem:[%s170 + $0x44] sm:$0xf] %v5265
      %5298 = vst [vmem:[%s170 + $0x48] sm:$0xf] %v5266
      %5299 = vst [vmem:[%s170 + $0x4c] sm:$0xf] %v5267
      %5300 = vst [vmem:[%s170 + $0x50] sm:$0xf] %v5268
      %5301 = vst [vmem:[%s170 + $0x54] sm:$0xf] %v5269
      %5302 = vst [vmem:[%s170 + $0x58] sm:$0xf] %v5270
      %5303 = vst [vmem:[%s170 + $0x5c] sm:$0xf] %v5271
      %5304 = vst [vmem:[%s170 + $0x60] sm:$0xf] %v5272
      %5305 = vst [vmem:[%s170 + $0x64] sm:$0xf] %v5273
      %5306 = vst [vmem:[%s170 + $0x68] sm:$0xf] %v5274
      %5307 = vst [vmem:[%s170 + $0x6c] sm:$0xf] %v5275
      %5308 = vst [vmem:[%s170 + $0x70] sm:$0xf] %v5276
      %5309 = vst [vmem:[%s170 + $0x74] sm:$0xf] %v5277
      %5310 = vst [vmem:[%s170 + $0x78] sm:$0xf] %v5278
      %5311 = vst [vmem:[%s170 + $0x7c] sm:$0xf] %v5279
      %p5312 = scmp.lt.s32.totalorder %s14, 1
      %s5313 = scalar_select %p5312, %s14, 1
      %s5314 = smul.addr %s5313, 32
      %s5315 = smul.addr %s5314, 4
      %s5316 = scalar_lea.vmem %s3, %s5315
      // Predicated region
      $region33: #{inception_b_forward.7} parent=31 // pred_check
        %p5317 = pneg %p100
      $region34: #{inception_b_forward.7} parent=31 // pred_check_branch
        %5319 = sbr.rel (%p5317) target = $region36
      $region35: #{inception_b_forward.7} parent=31 // pred_region
        _
      $region36: #{inception_b_forward.7} parent=31 // pred_fallthru
        _
    $region32: #{inception_b_forward.7} parent=5 // pred_fallthru
      _
    %p5320 = scmp.le.s32.totalorder 2, %s9
    // Predicated region
    $region37: #{inception_b_forward.7} parent=5 // pred_check
      %p5321 = pneg %p5320
    $region38: #{inception_b_forward.7} parent=5 // pred_check_branch
      %5323 = sbr.rel (%p5321) target = $region40
    $region39: #{inception_b_forward.7} parent=5 // pred_region
      %s5324 = ssub.s32 %s9, 2
      // Predicated region
      $region41: #{inception_b_forward.7} parent=39 // pred_check
        %p5325 = pneg %p106
      $region42: #{inception_b_forward.7} parent=39 // pred_check_branch
        %5327 = sbr.rel (%p5325) target = $region44
      $region43: #{inception_b_forward.7} parent=39 // pred_region
        %p5328 = scmp.lt.s32.totalorder %s15, 1
        %s5329 = scalar_select %p5328, %s15, 1
        %s5330 = smul.addr %s5329, 32
        %s5331 = smul.addr %s5330, 4
        %s5332 = scalar_lea.vmem %s3, %s5331
      $region44: #{inception_b_forward.7} parent=39 // pred_fallthru
        _
    $region40: #{inception_b_forward.7} parent=5 // pred_fallthru
      _
  $region6: #{inception_b_forward.7} parent=0 // loop_footer
    %s13 = sadd.s32 1, %s9
  $region7: #{inception_b_forward.7} parent=0 // loop_footer_branch
    %8 = sbr.rel target = $region3
  $region8: #{inception_b_forward.7} parent=0 // loop_exit
    _

// kernel: inception_b_forward.5
$region0: #{inception_b_forward.5}
  #allocation0 [shape = 'u32[]', space=smem, size = 0x4, offset = 0x4, fixed_abs, tag = 'smem constant byte address 0x4 - core index']
  #allocation1 [shape = 'u32[72,128]{1,0:T(1,128)}', space=vmem, size = 0x9000, scoped, tag = 'internal scratch']
  %s0 = inlined_call_operand.vmem [shape: bf16[128,128], index: 0, kind: input, shape index: {}]
  %s1 = inlined_call_operand.vmem [shape: bf16[128,384], index: 1, kind: input, shape index: {}]
  %s2 = inlined_call_operand.vmem [shape: f32[1,384], index: 2, kind: input, shape index: {}]
  %s3 = inlined_call_operand.vmem [shape: f32[128,384], index: 3, kind: output, shape index: {}]
  %s4 = sld [smem:[#allocation0]]
  $region45: #{inception_b_forward.5} parent=0
    _
  %s6 = ssub.s32 1, %s4
  %s7 = scalar_select 0, %s6, %s4
  loop: start=0, step=1, limit=4
  $region2: #{inception_b_forward.5} parent=0 // loop_pre_header
    _
  $region3: #{inception_b_forward.5} parent=0 // loop_header
    %s9 = sphi 0, %s13
    %p10 = scmp.ge.s32.totalorder %s9, 4
    %s19 = sphi 0, %s21
    %s22 = sphi 0, %s19
    %s23 = sphi 0, %s22
    %s39 = sphi 0, %s23
    %s43 = sphi 0, %s43
    %s45 = sphi 0, %s43
    %s46 = sphi 0, %s45
    %s60 = sphi 0, %s46
    %s64 = sphi 0, %s64
    %s66 = sphi 0, %s64
    %s67 = sphi 0, %s66
    %s81 = sphi 0, %s67
    %s87 = sphi 0, %s89
    %s90 = sphi 0, %s87
    %s91 = sphi 0, %s90
    %s107 = sphi 0, %s91
  $region4: #{inception_b_forward.5} parent=0 // loop_header_branch
    %12 = sbr.rel (%p10) target = $region8
  $region5: #{inception_b_forward.5} parent=0 // loop_body
    %s14 = ssub.s32 %s9, 1
    %s15 = ssub.s32 %s9, 2
    %s16 = sadd.s32 %s9, 1
    %s17 = ssub.s32 %s9, %s16
    %p18 = scmp.eq.s32.totalorder %s17, 0
    %s20 = sadd.s32 %s19, 1
    %s21 = scalar_select %p18, %s19, %s20
    %p24 = pneg %p18
    %p25 = scmp.eq.s32.totalorder %s9, 1
    %p26 = por %p24, %p25
    %p27 = scmp.ne.s32.totalorder %s19, %s22
    %p28 = scmp.eq.s32.totalorder %s9, 0
    %p29 = por %p27, %p28
    %p30 = scmp.ne.s32.totalorder %s19, %s22
    %p31 = scmp.eq.s32.totalorder %s14, 1
    %p32 = por %p30, %p31
    %p33 = scmp.ne.s32.totalorder %s22, %s23
    %p34 = scmp.eq.s32.totalorder %s14, 0
    %p35 = por %p33, %p34
    %p36 = scmp.ne.s32.totalorder %s22, %s23
    %p37 = scmp.eq.s32.totalorder %s15, 1
    %p38 = por %p36, %p37
    %p40 = scmp.ne.s32.totalorder %s23, %s39
    %p41 = scmp.eq.s32.totalorder %s15, 0
    %p42 = por %p40, %p41
    %s44 = sadd.s32 %s43, 1
    %p47 = scmp.eq.s32.totalorder %s9, 1
    %p48 = scmp.ne.s32.totalorder %s43, %s45
    %p49 = scmp.eq.s32.totalorder %s9, 0
    %p50 = por %p48, %p49
    %p51 = scmp.ne.s32.totalorder %s43, %s45
    %p52 = scmp.eq.s32.totalorder %s14, 1
    %p53 = por %p51, %p52
    %p54 = scmp.ne.s32.totalorder %s45, %s46
    %p55 = scmp.eq.s32.totalorder %s14, 0
    %p56 = por %p54, %p55
    %p57 = scmp.ne.s32.totalorder %s45, %s46
    %p58 = scmp.eq.s32.totalorder %s15, 1
    %p59 = por %p57, %p58
    %p61 = scmp.ne.s32.totalorder %s46, %s60
    %p62 = scmp.eq.s32.totalorder %s15, 0
    %p63 = por %p61, %p62
    %s65 = sadd.s32 %s64, 1
    %p68 = scmp.eq.s32.totalorder %s9, 1
    %p69 = scmp.ne.s32.totalorder %s64, %s66
    %p70 = scmp.eq.s32.totalorder %s9, 0
    %p71 = por %p69, %p70
    %p72 = scmp.ne.s32.totalorder %s64, %s66
    %p73 = scmp.eq.s32.totalorder %s14, 1
    %p74 = por %p72, %p73
    %p75 = scmp.ne.s32.totalorder %s66, %s67
    %p76 = scmp.eq.s32.totalorder %s14, 0
    %p77 = por %p75, %p76
    %p78 = scmp.ne.s32.totalorder %s66, %s67
    %p79 = scmp.eq.s32.totalorder %s15, 1
    %p80 = por %p78, %p79
    %p82 = scmp.ne.s32.totalorder %s67, %s81
    %p83 = scmp.eq.s32.totalorder %s15, 0
    %p84 = por %p82, %p83
    %s85 = ssub.s32 %s9, %s16
    %p86 = scmp.eq.s32.totalorder %s85, 0
    %s88 = sadd.s32 %s87, 1
    %s89 = scalar_select %p86, %s87, %s88
    %p92 = pneg %p86
    %p93 = scmp.eq.s32.totalorder %s9, 1
    %p94 = por %p92, %p93
    %p95 = scmp.ne.s32.totalorder %s87, %s90
    %p96 = scmp.eq.s32.totalorder %s9, 0
    %p97 = por %p95, %p96
    %p98 = scmp.ne.s32.totalorder %s87, %s90
    %p99 = scmp.eq.s32.totalorder %s14, 1
    %p100 = por %p98, %p99
    %p101 = scmp.ne.s32.totalorder %s90, %s91
    %p102 = scmp.eq.s32.totalorder %s14, 0
    %p103 = por %p101, %p102
    %p104 = scmp.ne.s32.totalorder %s90, %s91
    %p105 = scmp.eq.s32.totalorder %s15, 1
    %p106 = por %p104, %p105
    %p108 = scmp.ne.s32.totalorder %s91, %s107
    %p109 = scmp.eq.s32.totalorder %s15, 0
    %p110 = por %p108, %p109
    %p111 = scmp.le.s32.totalorder 1, %s9
    %p112 = scmp.lt.s32.totalorder %s9, 3
    %p113 = pnand %p111, %p112
    %p114 = pneg %p113
    // Predicated region
    $region9: #{inception_b_forward.5} parent=5 // pred_check
      _
    $region10: #{inception_b_forward.5} parent=5 // pred_check_branch
      %116 = sbr.rel (%p113) target = $region12
    $region11: #{inception_b_forward.5} parent=5 // pred_region
      %s117 = ssub.s32 %s9, 1
      // Predicated region
      $region13: #{inception_b_forward.5} parent=11 // pred_check
        %p118 = pneg %p56
      $region14: #{inception_b_forward.5} parent=11 // pred_check_branch
        %120 = sbr.rel (%p118) target = $region16
      $region15: #{inception_b_forward.5} parent=11 // pred_region
        _
      $region16: #{inception_b_forward.5} parent=11 // pred_fallthru
        _
      // Predicated region
      $region17: #{inception_b_forward.5} parent=11 // pred_check
        %p121 = pneg %p77
      $region18: #{inception_b_forward.5} parent=11 // pred_check_branch
        %123 = sbr.rel (%p121) target = $region20
      $region19: #{inception_b_forward.5} parent=11 // pred_region
        _
      $region20: #{inception_b_forward.5} parent=11 // pred_fallthru
        _
    $region12: #{inception_b_forward.5} parent=5 // pred_fallthru
      _
    %p124 = scmp.lt.s32.totalorder %s9, 2
    // Predicated region
    $region21: #{inception_b_forward.5} parent=5 // pred_check
      %p125 = pneg %p124
    $region22: #{inception_b_forward.5} parent=5 // pred_check_branch
      %127 = sbr.rel (%p125) target = $region24
    $region23: #{inception_b_forward.5} parent=5 // pred_region
      // Predicated region
      $region25: #{inception_b_forward.5} parent=23 // pred_check
        %p128 = pneg %p29
      $region26: #{inception_b_forward.5} parent=23 // pred_check_branch
        %130 = sbr.rel (%p128) target = $region28
      $region27: #{inception_b_forward.5} parent=23 // pred_region
        %s131 = smul.u32 8, %s9
        %p132 = scmp.lt.s32.totalorder %s131, 15
        %s133 = scalar_select %p132, %s131, 15
        %s134 = smul.addr %s133, 4
        %s135 = scalar_lea.vmem %s0, %s134
        %s136 = smul.u32 8, %s9
      $region28: #{inception_b_forward.5} parent=23 // pred_fallthru
        _
    $region24: #{inception_b_forward.5} parent=5 // pred_fallthru
      _
    %p137 = scmp.le.s32.totalorder 1, %s9
    %p138 = scmp.lt.s32.totalorder %s9, 3
    %p139 = pnand %p137, %p138
    %p140 = pneg %p139
    // Predicated region
    $region29: #{inception_b_forward.5} parent=5 // pred_check
      _
    $region30: #{inception_b_forward.5} parent=5 // pred_check_branch
      %142 = sbr.rel (%p139) target = $region32
    $region31: #{inception_b_forward.5} parent=5 // pred_region
      %s143 = ssub.s32 %s9, 1
      %s144 = smul.u32 8, %s14
      %p145 = scmp.lt.s32.totalorder %s144, 15
      %s146 = scalar_select %p145, %s144, 15
      %s147 = smul.addr %s146, 4
      %s148 = scalar_lea.vmem %s0, %s147
      %p149 = pneg %p35
      %p150 = pneg %p32
      %p151 = pneg %p56
      %p152 = pneg %p53
      %p153 = pneg %p77
      %p154 = pneg %p74
      %p155 = pneg %p103
      %p156 = pneg %p100
      %s157 = smul.u32 8, %s14
      %p158 = scmp.lt.s32.totalorder %s157, 15
      %s159 = scalar_select %p158, %s157, 15
      %s160 = smul.addr %s159, 3
      %s161 = smul.addr %s160, 8
      %s162 = scalar_lea.vmem %s3, %s161
      %s163 = smul.u32 8, %s14
      %p164 = scmp.lt.s32.totalorder %s163, 15
      %s165 = scalar_select %p164, %s163, 15
      %s166 = smul.addr %s165, 4
      %s167 = scalar_lea.vmem %s0, %s166
      %s168 = smul.u32 8, %s14
      %s169 = smul.u32 8, %s14
      %p170 = scmp.lt.s32.totalorder %s169, 15
      %s171 = scalar_select %p170, %s169, 15
      %s172 = smul.addr %s171, 3
      %s173 = smul.addr %s172, 8
      %s174 = scalar_lea.vmem %s3, %s173
      %s175 = smul.u32 8, %s14
      %v176 = vld [vmem:[%s167] sm:$0xf]
      %v177 = vld [vmem:[%s167 + $0x4] sm:$0xf]
      %v178 = vld [vmem:[%s167 + $0x8] sm:$0xf]
      %v179 = vld [vmem:[%s167 + $0xc] sm:$0xf]
      %v180 = vld [vmem:[%s167 + $0x10] sm:$0xf]
      %v181 = vld [vmem:[%s167 + $0x14] sm:$0xf]
      %v182 = vld [vmem:[%s167 + $0x18] sm:$0xf]
      %v183 = vld [vmem:[%s167 + $0x1c] sm:$0xf]
      %v184 = vld [vmem:[%s1] sm:$0xff]
      %v185 = vld [vmem:[%s1 + $0x8] sm:$0xf]
      %v186 = vld [vmem:[%s1 + $0xc] sm:$0xff]
      %v187 = vld [vmem:[%s1 + $0x14] sm:$0xf]
      %v188 = vld [vmem:[%s1 + $0x18] sm:$0xff]
      %v189 = vld [vmem:[%s1 + $0x20] sm:$0xf]
      %v190 = vld [vmem:[%s1 + $0x24] sm:$0xff]
      %v191 = vld [vmem:[%s1 + $0x2c] sm:$0xf]
      %v192 = vld [vmem:[%s1 + $0x30] sm:$0xff]
      %v193 = vld [vmem:[%s1 + $0x38] sm:$0xf]
      %v194 = vld [vmem:[%s1 + $0x3c] sm:$0xff]
      %v195 = vld [vmem:[%s1 + $0x44] sm:$0xf]
      %v196 = vld [vmem:[%s1 + $0x48] sm:$0xff]
      %v197 = vld [vmem:[%s1 + $0x50] sm:$0xf]
      %v198 = vld [vmem:[%s1 + $0x54] sm:$0xff]
      %v199 = vld [vmem:[%s1 + $0x5c] sm:$0xf]
      %v200 = vld [vmem:[%s1 + $0x60] sm:$0xff]
      %v201 = vld [vmem:[%s1 + $0x68] sm:$0xf]
      %v202 = vld [vmem:[%s1 + $0x6c] sm:$0xff]
      %v203 = vld [vmem:[%s1 + $0x74] sm:$0xf]
      %v204 = vld [vmem:[%s1 + $0x78] sm:$0xff]
      %v205 = vld [vmem:[%s1 + $0x80] sm:$0xf]
      %v206 = vld [vmem:[%s1 + $0x84] sm:$0xff]
      %v207 = vld [vmem:[%s1 + $0x8c] sm:$0xf]
      %v208 = vld [vmem:[%s1 + $0x90] sm:$0xff]
      %v209 = vld [vmem:[%s1 + $0x98] sm:$0xf]
      %v210 = vld [vmem:[%s1 + $0x9c] sm:$0xff]
      %v211 = vld [vmem:[%s1 + $0xa4] sm:$0xf]
      %v212 = vld [vmem:[%s1 + $0xa8] sm:$0xff]
      %v213 = vld [vmem:[%s1 + $0xb0] sm:$0xf]
      %v214 = vld [vmem:[%s1 + $0xb4] sm:$0xff]
      %v215 = vld [vmem:[%s1 + $0xbc] sm:$0xf]
      %v216 = vld [vmem:[%s2] sm:$0x7]
      %v218 = vperm.slane %v216, 0
      %v219 = vperm.slane %v216, 1
      %v220 = vperm.slane %v216, 2
      %v232 = vunpack.c.l.b16 %v176
      %v233 = vunpack.c.l.b16 %v177
      %v234 = vunpack.c.l.b16 %v178
      %v235 = vunpack.c.l.b16 %v179
      %v236 = vunpack.c.l.b16 %v180
      %v237 = vunpack.c.l.b16 %v181
      %v238 = vunpack.c.l.b16 %v182
      %v239 = vunpack.c.l.b16 %v183
      %v240 = vpack.c.b16 %v233, %v232
      %v241 = vpack.c.b16 %v235, %v234
      %v242 = vpack.c.b16 %v237, %v236
      %v243 = vpack.c.b16 %v239, %v238
      %v280 = vunpack.c.l.b16 %v184
      %v281 = vunpack.c.h.b16 %v184
      %v282 = vunpack.c.l.b16 %v185
      %v283 = vunpack.c.l.b16 %v186
      %v284 = vunpack.c.h.b16 %v186
      %v285 = vunpack.c.l.b16 %v187
      %v286 = vunpack.c.l.b16 %v188
      %v287 = vunpack.c.h.b16 %v188
      %v288 = vunpack.c.l.b16 %v189
      %v289 = vunpack.c.l.b16 %v190
      %v290 = vunpack.c.h.b16 %v190
      %v291 = vunpack.c.l.b16 %v191
      %v292 = vunpack.c.l.b16 %v192
      %v293 = vunpack.c.h.b16 %v192
      %v294 = vunpack.c.l.b16 %v193
      %v295 = vunpack.c.l.b16 %v194
      %v296 = vunpack.c.h.b16 %v194
      %v297 = vunpack.c.l.b16 %v195
      %v298 = vunpack.c.l.b16 %v196
      %v299 = vunpack.c.h.b16 %v196
      %v300 = vunpack.c.l.b16 %v197
      %v301 = vunpack.c.l.b16 %v198
      %v302 = vunpack.c.h.b16 %v198
      %v303 = vunpack.c.l.b16 %v199
      %v304 = vunpack.c.l.b16 %v200
      %v305 = vunpack.c.h.b16 %v200
      %v306 = vunpack.c.l.b16 %v201
      %v307 = vunpack.c.l.b16 %v202
      %v308 = vunpack.c.h.b16 %v202
      %v309 = vunpack.c.l.b16 %v203
      %v310 = vunpack.c.l.b16 %v204
      %v311 = vunpack.c.h.b16 %v204
      %v312 = vunpack.c.l.b16 %v205
      %v313 = vunpack.c.l.b16 %v206
      %v314 = vunpack.c.h.b16 %v206
      %v315 = vunpack.c.l.b16 %v207
      %v316 = vunpack.c.l.b16 %v208
      %v317 = vunpack.c.h.b16 %v208
      %v318 = vunpack.c.l.b16 %v209
      %v319 = vunpack.c.l.b16 %v210
      %v320 = vunpack.c.h.b16 %v210
      %v321 = vunpack.c.l.b16 %v211
      %v322 = vunpack.c.l.b16 %v212
      %v323 = vunpack.c.h.b16 %v212
      %v324 = vunpack.c.l.b16 %v213
      %v325 = vunpack.c.l.b16 %v214
      %v326 = vunpack.c.h.b16 %v214
      %v327 = vunpack.c.l.b16 %v215
      %v328 = vpack.c.b16 %v283, %v280
      %v329 = vpack.c.b16 %v284, %v281
      %v330 = vpack.c.b16 %v285, %v282
      %v331 = vpack.c.b16 %v289, %v286
      %v332 = vpack.c.b16 %v290, %v287
      %v333 = vpack.c.b16 %v291, %v288
      %v334 = vpack.c.b16 %v295, %v292
      %v335 = vpack.c.b16 %v296, %v293
      %v336 = vpack.c.b16 %v297, %v294
      %v337 = vpack.c.b16 %v301, %v298
      %v338 = vpack.c.b16 %v302, %v299
      %v339 = vpack.c.b16 %v303, %v300
      %v340 = vpack.c.b16 %v307, %v304
      %v341 = vpack.c.b16 %v308, %v305
      %v342 = vpack.c.b16 %v309, %v306
      %v343 = vpack.c.b16 %v313, %v310
      %v344 = vpack.c.b16 %v314, %v311
      %v345 = vpack.c.b16 %v315, %v312
      %v346 = vpack.c.b16 %v319, %v316
      %v347 = vpack.c.b16 %v320, %v317
      %v348 = vpack.c.b16 %v321, %v318
      %v349 = vpack.c.b16 %v325, %v322
      %v350 = vpack.c.b16 %v326, %v323
      %v351 = vpack.c.b16 %v327, %v324
      %376 = vmatpush.bf16.msra.mxu0 %v349
      %377 = vmatpush.bf16.msra.mxu0 %v346
      %378 = vmatpush.bf16.msra.mxu0 %v343
      %379 = vmatpush.bf16.msra.mxu0 %v340
      %380 = vmatpush.bf16.msra.mxu0 %v337
      %381 = vmatpush.bf16.msra.mxu0 %v334
      %382 = vmatpush.bf16.msra.mxu0 %v331
      %383 = vmatpush.bf16.msra.mxu0 %v328
      %384 = vmatmul.bf16.gmra.mxu0 %v240
      %v385 = vpop.f32.mrf.mxu0
      %v386 = vadd.f32 %v218, %v385
      %v387 = vpop.f32.mrf.mxu0
      %v388 = vadd.f32 %v218, %v387
      %389 = vmatmul.bf16.gmra.mxu0 %v241
      %v390 = vpop.f32.mrf.mxu0
      %v391 = vadd.f32 %v218, %v390
      %v392 = vpop.f32.mrf.mxu0
      %v393 = vadd.f32 %v218, %v392
      %394 = vmatmul.bf16.gmra.mxu0 %v242
      %v395 = vpop.f32.mrf.mxu0
      %v396 = vadd.f32 %v218, %v395
      %v397 = vpop.f32.mrf.mxu0
      %v398 = vadd.f32 %v218, %v397
      %399 = vmatmul.bf16.gmra.mxu0 %v243
      %v400 = vpop.f32.mrf.mxu0
      %v401 = vadd.f32 %v218, %v400
      %v402 = vpop.f32.mrf.mxu0
      %v403 = vadd.f32 %v218, %v402
      %404 = vdwg.mxu0
      %405 = vmatpush.bf16.msra.mxu0 %v350
      %406 = vmatpush.bf16.msra.mxu0 %v347
      %407 = vmatpush.bf16.msra.mxu0 %v344
      %408 = vmatpush.bf16.msra.mxu0 %v341
      %409 = vmatpush.bf16.msra.mxu0 %v338
      %410 = vmatpush.bf16.msra.mxu0 %v335
      %411 = vmatpush.bf16.msra.mxu0 %v332
      %412 = vmatpush.bf16.msra.mxu0 %v329
      %413 = vmatmul.bf16.gmra.mxu0 %v240
      %v414 = vpop.f32.mrf.mxu0
      %v415 = vadd.f32 %v219, %v414
      %v416 = vpop.f32.mrf.mxu0
      %v417 = vadd.f32 %v219, %v416
      %418 = vmatmul.bf16.gmra.mxu0 %v241
      %v419 = vpop.f32.mrf.mxu0
      %v420 = vadd.f32 %v219, %v419
      %v421 = vpop.f32.mrf.mxu0
      %v422 = vadd.f32 %v219, %v421
      %423 = vmatmul.bf16.gmra.mxu0 %v242
      %v424 = vpop.f32.mrf.mxu0
      %v425 = vadd.f32 %v219, %v424
      %v426 = vpop.f32.mrf.mxu0
      %v427 = vadd.f32 %v219, %v426
      %428 = vmatmul.bf16.gmra.mxu0 %v243
      %v429 = vpop.f32.mrf.mxu0
      %v430 = vadd.f32 %v219, %v429
      %v431 = vpop.f32.mrf.mxu0
      %v432 = vadd.f32 %v219, %v431
      %433 = vdwg.mxu0
      %434 = vmatpush.bf16.msra.mxu0 %v351
      %435 = vmatpush.bf16.msra.mxu0 %v348
      %436 = vmatpush.bf16.msra.mxu0 %v345
      %437 = vmatpush.bf16.msra.mxu0 %v342
      %438 = vmatpush.bf16.msra.mxu0 %v339
      %439 = vmatpush.bf16.msra.mxu0 %v336
      %440 = vmatpush.bf16.msra.mxu0 %v333
      %441 = vmatpush.bf16.msra.mxu0 %v330
      %442 = vmatmul.bf16.gmra.mxu0 %v240
      %v443 = vpop.f32.mrf.mxu0
      %v444 = vadd.f32 %v220, %v443
      %v445 = vpop.f32.mrf.mxu0
      %v446 = vadd.f32 %v220, %v445
      %447 = vmatmul.bf16.gmra.mxu0 %v241
      %v448 = vpop.f32.mrf.mxu0
      %v449 = vadd.f32 %v220, %v448
      %v450 = vpop.f32.mrf.mxu0
      %v451 = vadd.f32 %v220, %v450
      %452 = vmatmul.bf16.gmra.mxu0 %v242
      %v453 = vpop.f32.mrf.mxu0
      %v454 = vadd.f32 %v220, %v453
      %v455 = vpop.f32.mrf.mxu0
      %v456 = vadd.f32 %v220, %v455
      %457 = vmatmul.bf16.gmra.mxu0 %v243
      %v458 = vpop.f32.mrf.mxu0
      %v459 = vadd.f32 %v220, %v458
      %v460 = vpop.f32.mrf.mxu0
      %v461 = vadd.f32 %v220, %v460
      %462 = vdwg.mxu0
      %v463 = vmax.f32 %v386, 0.0
      %v464 = vmax.f32 %v415, 0.0
      %v465 = vmax.f32 %v444, 0.0
      %v466 = vmax.f32 %v388, 0.0
      %v467 = vmax.f32 %v417, 0.0
      %v468 = vmax.f32 %v446, 0.0
      %v469 = vmax.f32 %v391, 0.0
      %v470 = vmax.f32 %v420, 0.0
      %v471 = vmax.f32 %v449, 0.0
      %v472 = vmax.f32 %v393, 0.0
      %v473 = vmax.f32 %v422, 0.0
      %v474 = vmax.f32 %v451, 0.0
      %v475 = vmax.f32 %v396, 0.0
      %v476 = vmax.f32 %v425, 0.0
      %v477 = vmax.f32 %v454, 0.0
      %v478 = vmax.f32 %v398, 0.0
      %v479 = vmax.f32 %v427, 0.0
      %v480 = vmax.f32 %v456, 0.0
      %v481 = vmax.f32 %v401, 0.0
      %v482 = vmax.f32 %v430, 0.0
      %v483 = vmax.f32 %v459, 0.0
      %v484 = vmax.f32 %v403, 0.0
      %v485 = vmax.f32 %v432, 0.0
      %v486 = vmax.f32 %v461, 0.0
      %487 = vst [vmem:[%s174] sm:$0xff] %v463
      %488 = vst [vmem:[%s174 + $0x8] sm:$0xff] %v464
      %489 = vst [vmem:[%s174 + $0x10] sm:$0xff] %v465
      %490 = vst [vmem:[%s174 + $0x18] sm:$0xff] %v466
      %491 = vst [vmem:[%s174 + $0x20] sm:$0xff] %v467
      %492 = vst [vmem:[%s174 + $0x28] sm:$0xff] %v468
      %493 = vst [vmem:[%s174 + $0x30] sm:$0xff] %v469
      %494 = vst [vmem:[%s174 + $0x38] sm:$0xff] %v470
      %495 = vst [vmem:[%s174 + $0x40] sm:$0xff] %v471
      %496 = vst [vmem:[%s174 + $0x48] sm:$0xff] %v472
      %497 = vst [vmem:[%s174 + $0x50] sm:$0xff] %v473
      %498 = vst [vmem:[%s174 + $0x58] sm:$0xff] %v474
      %499 = vst [vmem:[%s174 + $0x60] sm:$0xff] %v475
      %500 = vst [vmem:[%s174 + $0x68] sm:$0xff] %v476
      %501 = vst [vmem:[%s174 + $0x70] sm:$0xff] %v477
      %502 = vst [vmem:[%s174 + $0x78] sm:$0xff] %v478
      %503 = vst [vmem:[%s174 + $0x80] sm:$0xff] %v479
      %504 = vst [vmem:[%s174 + $0x88] sm:$0xff] %v480
      %505 = vst [vmem:[%s174 + $0x90] sm:$0xff] %v481
      %506 = vst [vmem:[%s174 + $0x98] sm:$0xff] %v482
      %507 = vst [vmem:[%s174 + $0xa0] sm:$0xff] %v483
      %508 = vst [vmem:[%s174 + $0xa8] sm:$0xff] %v484
      %509 = vst [vmem:[%s174 + $0xb0] sm:$0xff] %v485
      %510 = vst [vmem:[%s174 + $0xb8] sm:$0xff] %v486
      %s511 = smul.u32 8, %s14
      %p512 = scmp.lt.s32.totalorder %s511, 15
      %s513 = scalar_select %p512, %s511, 15
      %s514 = smul.addr %s513, 3
      %s515 = smul.addr %s514, 8
      %s516 = scalar_lea.vmem %s3, %s515
      // Predicated region
      $region33: #{inception_b_forward.5} parent=31 // pred_check
        %p517 = pneg %p100
      $region34: #{inception_b_forward.5} parent=31 // pred_check_branch
        %519 = sbr.rel (%p517) target = $region36
      $region35: #{inception_b_forward.5} parent=31 // pred_region
        %s520 = smul.u32 8, %s14
      $region36: #{inception_b_forward.5} parent=31 // pred_fallthru
        _
    $region32: #{inception_b_forward.5} parent=5 // pred_fallthru
      _
    %p521 = scmp.le.s32.totalorder 2, %s9
    // Predicated region
    $region37: #{inception_b_forward.5} parent=5 // pred_check
      %p522 = pneg %p521
    $region38: #{inception_b_forward.5} parent=5 // pred_check_branch
      %524 = sbr.rel (%p522) target = $region40
    $region39: #{inception_b_forward.5} parent=5 // pred_region
      %s525 = ssub.s32 %s9, 2
      // Predicated region
      $region41: #{inception_b_forward.5} parent=39 // pred_check
        %p526 = pneg %p106
      $region42: #{inception_b_forward.5} parent=39 // pred_check_branch
        %528 = sbr.rel (%p526) target = $region44
      $region43: #{inception_b_forward.5} parent=39 // pred_region
        %s529 = smul.u32 8, %s15
        %p530 = scmp.lt.s32.totalorder %s529, 15
        %s531 = scalar_select %p530, %s529, 15
        %s532 = smul.addr %s531, 3
        %s533 = smul.addr %s532, 8
        %s534 = scalar_lea.vmem %s3, %s533
      $region44: #{inception_b_forward.5} parent=39 // pred_fallthru
        _
    $region40: #{inception_b_forward.5} parent=5 // pred_fallthru
      _
  $region6: #{inception_b_forward.5} parent=0 // loop_footer
    %s13 = sadd.s32 1, %s9
  $region7: #{inception_b_forward.5} parent=0 // loop_footer_branch
    %8 = sbr.rel target = $region3
  $region8: #{inception_b_forward.5} parent=0 // loop_exit
    _

// kernel: inception_b_forward.9
$region0: #{inception_b_forward.9}
  #allocation0 [shape = 'u32[]', space=smem, size = 0x4, offset = 0x4, fixed_abs, tag = 'smem constant byte address 0x4 - core index']
  #allocation1 [shape = 'u32[72,128]{1,0:T(1,128)}', space=vmem, size = 0x9000, scoped, tag = 'internal scratch']
  %s0 = inlined_call_operand.vmem [shape: f32[16,16,4], index: 0, kind: input, shape index: {}]
  %s1 = inlined_call_operand.vmem [shape: f32[16,16,4], index: 1, kind: input, shape index: {}]
  %s2 = inlined_call_operand.vmem [shape: f32[16,16,4], index: 2, kind: input, shape index: {}]
  %s3 = inlined_call_operand.vmem [shape: f32[16,7,4], index: 3, kind: output, shape index: {}]
  %s4 = sld [smem:[#allocation0]]
  $region45: #{inception_b_forward.9} parent=0
    _
  %s6 = ssub.s32 1, %s4
  %s7 = scalar_select 0, %s6, %s4
  loop: start=0, step=1, limit=4
  $region2: #{inception_b_forward.9} parent=0 // loop_pre_header
    _
  $region3: #{inception_b_forward.9} parent=0 // loop_header
    %s9 = sphi 0, %s13
    %p10 = scmp.ge.s32.totalorder %s9, 4
    %s19 = sphi 0, %s21
    %s22 = sphi 0, %s19
    %s23 = sphi 0, %s22
    %s39 = sphi 0, %s23
    %s45 = sphi 0, %s47
    %s48 = sphi 0, %s45
    %s49 = sphi 0, %s48
    %s65 = sphi 0, %s49
    %s71 = sphi 0, %s73
    %s74 = sphi 0, %s71
    %s75 = sphi 0, %s74
    %s91 = sphi 0, %s75
    %s97 = sphi 0, %s99
    %s100 = sphi 0, %s97
    %s101 = sphi 0, %s100
    %s117 = sphi 0, %s101
  $region4: #{inception_b_forward.9} parent=0 // loop_header_branch
    %12 = sbr.rel (%p10) target = $region8
  $region5: #{inception_b_forward.9} parent=0 // loop_body
    %s14 = ssub.s32 %s9, 1
    %s15 = ssub.s32 %s9, 2
    %s16 = sadd.s32 %s9, 1
    %s17 = ssub.s32 %s9, %s16
    %p18 = scmp.eq.s32.totalorder %s17, 0
    %s20 = sadd.s32 %s19, 1
    %s21 = scalar_select %p18, %s19, %s20
    %p24 = pneg %p18
    %p25 = scmp.eq.s32.totalorder %s9, 1
    %p26 = por %p24, %p25
    %p27 = scmp.ne.s32.totalorder %s19, %s22
    %p28 = scmp.eq.s32.totalorder %s9, 0
    %p29 = por %p27, %p28
    %p30 = scmp.ne.s32.totalorder %s19, %s22
    %p31 = scmp.eq.s32.totalorder %s14, 1
    %p32 = por %p30, %p31
    %p33 = scmp.ne.s32.totalorder %s22, %s23
    %p34 = scmp.eq.s32.totalorder %s14, 0
    %p35 = por %p33, %p34
    %p36 = scmp.ne.s32.totalorder %s22, %s23
    %p37 = scmp.eq.s32.totalorder %s15, 1
    %p38 = por %p36, %p37
    %p40 = scmp.ne.s32.totalorder %s23, %s39
    %p41 = scmp.eq.s32.totalorder %s15, 0
    %p42 = por %p40, %p41
    %s43 = ssub.s32 %s9, %s16
    %p44 = scmp.eq.s32.totalorder %s43, 0
    %s46 = sadd.s32 %s45, 1
    %s47 = scalar_select %p44, %s45, %s46
    %p50 = pneg %p44
    %p51 = scmp.eq.s32.totalorder %s9, 1
    %p52 = por %p50, %p51
    %p53 = scmp.ne.s32.totalorder %s45, %s48
    %p54 = scmp.eq.s32.totalorder %s9, 0
    %p55 = por %p53, %p54
    %p56 = scmp.ne.s32.totalorder %s45, %s48
    %p57 = scmp.eq.s32.totalorder %s14, 1
    %p58 = por %p56, %p57
    %p59 = scmp.ne.s32.totalorder %s48, %s49
    %p60 = scmp.eq.s32.totalorder %s14, 0
    %p61 = por %p59, %p60
    %p62 = scmp.ne.s32.totalorder %s48, %s49
    %p63 = scmp.eq.s32.totalorder %s15, 1
    %p64 = por %p62, %p63
    %p66 = scmp.ne.s32.totalorder %s49, %s65
    %p67 = scmp.eq.s32.totalorder %s15, 0
    %p68 = por %p66, %p67
    %s69 = ssub.s32 %s9, %s16
    %p70 = scmp.eq.s32.totalorder %s69, 0
    %s72 = sadd.s32 %s71, 1
    %s73 = scalar_select %p70, %s71, %s72
    %p76 = pneg %p70
    %p77 = scmp.eq.s32.totalorder %s9, 1
    %p78 = por %p76, %p77
    %p79 = scmp.ne.s32.totalorder %s71, %s74
    %p80 = scmp.eq.s32.totalorder %s9, 0
    %p81 = por %p79, %p80
    %p82 = scmp.ne.s32.totalorder %s71, %s74
    %p83 = scmp.eq.s32.totalorder %s14, 1
    %p84 = por %p82, %p83
    %p85 = scmp.ne.s32.totalorder %s74, %s75
    %p86 = scmp.eq.s32.totalorder %s14, 0
    %p87 = por %p85, %p86
    %p88 = scmp.ne.s32.totalorder %s74, %s75
    %p89 = scmp.eq.s32.totalorder %s15, 1
    %p90 = por %p88, %p89
    %p92 = scmp.ne.s32.totalorder %s75, %s91
    %p93 = scmp.eq.s32.totalorder %s15, 0
    %p94 = por %p92, %p93
    %s95 = ssub.s32 %s9, %s16
    %p96 = scmp.eq.s32.totalorder %s95, 0
    %s98 = sadd.s32 %s97, 1
    %s99 = scalar_select %p96, %s97, %s98
    %p102 = pneg %p96
    %p103 = scmp.eq.s32.totalorder %s9, 1
    %p104 = por %p102, %p103
    %p105 = scmp.ne.s32.totalorder %s97, %s100
    %p106 = scmp.eq.s32.totalorder %s9, 0
    %p107 = por %p105, %p106
    %p108 = scmp.ne.s32.totalorder %s97, %s100
    %p109 = scmp.eq.s32.totalorder %s14, 1
    %p110 = por %p108, %p109
    %p111 = scmp.ne.s32.totalorder %s100, %s101
    %p112 = scmp.eq.s32.totalorder %s14, 0
    %p113 = por %p111, %p112
    %p114 = scmp.ne.s32.totalorder %s100, %s101
    %p115 = scmp.eq.s32.totalorder %s15, 1
    %p116 = por %p114, %p115
    %p118 = scmp.ne.s32.totalorder %s101, %s117
    %p119 = scmp.eq.s32.totalorder %s15, 0
    %p120 = por %p118, %p119
    %p121 = scmp.le.s32.totalorder 1, %s9
    %p122 = scmp.lt.s32.totalorder %s9, 3
    %p123 = pnand %p121, %p122
    %p124 = pneg %p123
    // Predicated region
    $region9: #{inception_b_forward.9} parent=5 // pred_check
      _
    $region10: #{inception_b_forward.9} parent=5 // pred_check_branch
      %126 = sbr.rel (%p123) target = $region12
    $region11: #{inception_b_forward.9} parent=5 // pred_region
      %s127 = ssub.s32 %s9, 1
    $region12: #{inception_b_forward.9} parent=5 // pred_fallthru
      _
    %p128 = scmp.lt.s32.totalorder %s9, 2
    // Predicated region
    $region13: #{inception_b_forward.9} parent=5 // pred_check
      %p129 = pneg %p128
    $region14: #{inception_b_forward.9} parent=5 // pred_check_branch
      %131 = sbr.rel (%p129) target = $region16
    $region15: #{inception_b_forward.9} parent=5 // pred_region
      // Predicated region
      $region17: #{inception_b_forward.9} parent=15 // pred_check
        %p132 = pneg %p29
      $region18: #{inception_b_forward.9} parent=15 // pred_check_branch
        %134 = sbr.rel (%p132) target = $region20
      $region19: #{inception_b_forward.9} parent=15 // pred_region
        %s135 = smul.u32 8, %s9
        %p136 = scmp.lt.s32.totalorder %s135, 15
        %s137 = scalar_select %p136, %s135, 15
        %s138 = smul.addr %s137, 2
        %s139 = smul.addr %s138, 8
        %s140 = scalar_lea.vmem %s0, %s139
        %s141 = smul.u32 8, %s9
      $region20: #{inception_b_forward.9} parent=15 // pred_fallthru
        _
      // Predicated region
      $region21: #{inception_b_forward.9} parent=15 // pred_check
        %p142 = pneg %p55
      $region22: #{inception_b_forward.9} parent=15 // pred_check_branch
        %144 = sbr.rel (%p142) target = $region24
      $region23: #{inception_b_forward.9} parent=15 // pred_region
        %s145 = smul.u32 8, %s9
        %p146 = scmp.lt.s32.totalorder %s145, 15
        %s147 = scalar_select %p146, %s145, 15
        %s148 = smul.addr %s147, 2
        %s149 = smul.addr %s148, 8
        %s150 = scalar_lea.vmem %s1, %s149
        %s151 = smul.u32 8, %s9
      $region24: #{inception_b_forward.9} parent=15 // pred_fallthru
        _
      // Predicated region
      $region25: #{inception_b_forward.9} parent=15 // pred_check
        %p152 = pneg %p81
      $region26: #{inception_b_forward.9} parent=15 // pred_check_branch
        %154 = sbr.rel (%p152) target = $region28
      $region27: #{inception_b_forward.9} parent=15 // pred_region
        %s155 = smul.u32 8, %s9
        %p156 = scmp.lt.s32.totalorder %s155, 15
        %s157 = scalar_select %p156, %s155, 15
        %s158 = smul.addr %s157, 2
        %s159 = smul.addr %s158, 8
        %s160 = scalar_lea.vmem %s2, %s159
        %s161 = smul.u32 8, %s9
      $region28: #{inception_b_forward.9} parent=15 // pred_fallthru
        _
    $region16: #{inception_b_forward.9} parent=5 // pred_fallthru
      _
    %p162 = scmp.le.s32.totalorder 1, %s9
    %p163 = scmp.lt.s32.totalorder %s9, 3
    %p164 = pnand %p162, %p163
    %p165 = pneg %p164
    // Predicated region
    $region29: #{inception_b_forward.9} parent=5 // pred_check
      _
    $region30: #{inception_b_forward.9} parent=5 // pred_check_branch
      %167 = sbr.rel (%p164) target = $region32
    $region31: #{inception_b_forward.9} parent=5 // pred_region
      %s168 = ssub.s32 %s9, 1
      %s169 = smul.u32 8, %s14
      %p170 = scmp.lt.s32.totalorder %s169, 15
      %s171 = scalar_select %p170, %s169, 15
      %s172 = smul.addr %s171, 2
      %s173 = smul.addr %s172, 8
      %s174 = scalar_lea.vmem %s0, %s173
      %p175 = pneg %p35
      %p176 = pneg %p32
      %s177 = smul.u32 8, %s14
      %p178 = scmp.lt.s32.totalorder %s177, 15
      %s179 = scalar_select %p178, %s177, 15
      %s180 = smul.addr %s179, 2
      %s181 = smul.addr %s180, 8
      %s182 = scalar_lea.vmem %s1, %s181
      %p183 = pneg %p61
      %p184 = pneg %p58
      %s185 = smul.u32 8, %s14
      %p186 = scmp.lt.s32.totalorder %s185, 15
      %s187 = scalar_select %p186, %s185, 15
      %s188 = smul.addr %s187, 2
      %s189 = smul.addr %s188, 8
      %s190 = scalar_lea.vmem %s2, %s189
      %p191 = pneg %p87
      %p192 = pneg %p84
      %p193 = pneg %p113
      %p194 = pneg %p110
      %s195 = smul.u32 8, %s14
      %p196 = scmp.lt.s32.totalorder %s195, 15
      %s197 = scalar_select %p196, %s195, 15
      %s198 = smul.addr %s197, 8
      %s199 = scalar_lea.vmem %s3, %s198
      %s200 = smul.u32 8, %s14
      %p201 = scmp.lt.s32.totalorder %s200, 15
      %s202 = scalar_select %p201, %s200, 15
      %s203 = smul.addr %s202, 2
      %s204 = smul.addr %s203, 8
      %s205 = scalar_lea.vmem %s0, %s204
      %s206 = smul.u32 8, %s14
      %s207 = smul.u32 8, %s14
      %p208 = scmp.lt.s32.totalorder %s207, 15
      %s209 = scalar_select %p208, %s207, 15
      %s210 = smul.addr %s209, 2
      %s211 = smul.addr %s210, 8
      %s212 = scalar_lea.vmem %s1, %s211
      %s213 = smul.u32 8, %s14
      %s214 = smul.u32 8, %s14
      %p215 = scmp.lt.s32.totalorder %s214, 15
      %s216 = scalar_select %p215, %s214, 15
      %s217 = smul.addr %s216, 2
      %s218 = smul.addr %s217, 8
      %s219 = scalar_lea.vmem %s2, %s218
      %s220 = smul.u32 8, %s14
      %s221 = smul.u32 8, %s14
      %p222 = scmp.lt.s32.totalorder %s221, 15
      %s223 = scalar_select %p222, %s221, 15
      %s224 = smul.addr %s223, 8
      %s225 = scalar_lea.vmem %s3, %s224
      %s226 = smul.u32 8, %s14
      %v227 = vld [vmem:[%s205] ss:$2 sm:$0x7f]
      %s228 = scalar_lea.vmem %s205, 16
      %v229 = vld [vmem:[%s228] ss:$2 sm:$0x7f]
      %s230 = scalar_lea.vmem %s205, 32
      %v231 = vld [vmem:[%s230] ss:$2 sm:$0x7f]
      %s232 = scalar_lea.vmem %s205, 48
      %v233 = vld [vmem:[%s232] ss:$2 sm:$0x7f]
      %s234 = scalar_lea.vmem %s205, 64
      %v235 = vld [vmem:[%s234] ss:$2 sm:$0x7f]
      %s236 = scalar_lea.vmem %s205, 80
      %v237 = vld [vmem:[%s236] ss:$2 sm:$0x7f]
      %s238 = scalar_lea.vmem %s205, 96
      %v239 = vld [vmem:[%s238] ss:$2 sm:$0x7f]
      %s240 = scalar_lea.vmem %s205, 112
      %v241 = vld [vmem:[%s240] ss:$2 sm:$0x7f]
      %s242 = scalar_lea.vmem %s205, 1
      %v243 = vld [vmem:[%s242] ss:$2 sm:$0x7f]
      %s244 = scalar_lea.vmem %s205, 17
      %v245 = vld [vmem:[%s244] ss:$2 sm:$0x7f]
      %s246 = scalar_lea.vmem %s205, 33
      %v247 = vld [vmem:[%s246] ss:$2 sm:$0x7f]
      %s248 = scalar_lea.vmem %s205, 49
      %v249 = vld [vmem:[%s248] ss:$2 sm:$0x7f]
      %s250 = scalar_lea.vmem %s205, 65
      %v251 = vld [vmem:[%s250] ss:$2 sm:$0x7f]
      %s252 = scalar_lea.vmem %s205, 81
      %v253 = vld [vmem:[%s252] ss:$2 sm:$0x7f]
      %s254 = scalar_lea.vmem %s205, 97
      %v255 = vld [vmem:[%s254] ss:$2 sm:$0x7f]
      %s256 = scalar_lea.vmem %s205, 113
      %v257 = vld [vmem:[%s256] ss:$2 sm:$0x7f]
      %v258 = vmax.f32 %v227, %v243
      %v259 = vmax.f32 %v229, %v245
      %v260 = vmax.f32 %v231, %v247
      %v261 = vmax.f32 %v233, %v249
      %v262 = vmax.f32 %v235, %v251
      %v263 = vmax.f32 %v237, %v253
      %v264 = vmax.f32 %v239, %v255
      %v265 = vmax.f32 %v241, %v257
      %s266 = scalar_lea.vmem %s205, 2
      %v267 = vld [vmem:[%s266] ss:$2 sm:$0x7f]
      %s268 = scalar_lea.vmem %s205, 18
      %v269 = vld [vmem:[%s268] ss:$2 sm:$0x7f]
      %s270 = scalar_lea.vmem %s205, 34
      %v271 = vld [vmem:[%s270] ss:$2 sm:$0x7f]
      %s272 = scalar_lea.vmem %s205, 50
      %v273 = vld [vmem:[%s272] ss:$2 sm:$0x7f]
      %s274 = scalar_lea.vmem %s205, 66
      %v275 = vld [vmem:[%s274] ss:$2 sm:$0x7f]
      %s276 = scalar_lea.vmem %s205, 82
      %v277 = vld [vmem:[%s276] ss:$2 sm:$0x7f]
      %s278 = scalar_lea.vmem %s205, 98
      %v279 = vld [vmem:[%s278] ss:$2 sm:$0x7f]
      %s280 = scalar_lea.vmem %s205, 114
      %v281 = vld [vmem:[%s280] ss:$2 sm:$0x7f]
      %v282 = vmax.f32 %v258, %v267
      %v283 = vmax.f32 %v259, %v269
      %v284 = vmax.f32 %v260, %v271
      %v285 = vmax.f32 %v261, %v273
      %v286 = vmax.f32 %v262, %v275
      %v287 = vmax.f32 %v263, %v277
      %v288 = vmax.f32 %v264, %v279
      %v289 = vmax.f32 %v265, %v281
      %v290 = vld [vmem:[%s212] ss:$2 sm:$0x7f]
      %s291 = scalar_lea.vmem %s212, 16
      %v292 = vld [vmem:[%s291] ss:$2 sm:$0x7f]
      %s293 = scalar_lea.vmem %s212, 32
      %v294 = vld [vmem:[%s293] ss:$2 sm:$0x7f]
      %s295 = scalar_lea.vmem %s212, 48
      %v296 = vld [vmem:[%s295] ss:$2 sm:$0x7f]
      %s297 = scalar_lea.vmem %s212, 64
      %v298 = vld [vmem:[%s297] ss:$2 sm:$0x7f]
      %s299 = scalar_lea.vmem %s212, 80
      %v300 = vld [vmem:[%s299] ss:$2 sm:$0x7f]
      %s301 = scalar_lea.vmem %s212, 96
      %v302 = vld [vmem:[%s301] ss:$2 sm:$0x7f]
      %s303 = scalar_lea.vmem %s212, 112
      %v304 = vld [vmem:[%s303] ss:$2 sm:$0x7f]
      %s305 = scalar_lea.vmem %s212, 1
      %v306 = vld [vmem:[%s305] ss:$2 sm:$0x7f]
      %s307 = scalar_lea.vmem %s212, 17
      %v308 = vld [vmem:[%s307] ss:$2 sm:$0x7f]
      %s309 = scalar_lea.vmem %s212, 33
      %v310 = vld [vmem:[%s309] ss:$2 sm:$0x7f]
      %s311 = scalar_lea.vmem %s212, 49
      %v312 = vld [vmem:[%s311] ss:$2 sm:$0x7f]
      %s313 = scalar_lea.vmem %s212, 65
      %v314 = vld [vmem:[%s313] ss:$2 sm:$0x7f]
      %s315 = scalar_lea.vmem %s212, 81
      %v316 = vld [vmem:[%s315] ss:$2 sm:$0x7f]
      %s317 = scalar_lea.vmem %s212, 97
      %v318 = vld [vmem:[%s317] ss:$2 sm:$0x7f]
      %s319 = scalar_lea.vmem %s212, 113
      %v320 = vld [vmem:[%s319] ss:$2 sm:$0x7f]
      %v321 = vmax.f32 %v290, %v306
      %v322 = vmax.f32 %v292, %v308
      %v323 = vmax.f32 %v294, %v310
      %v324 = vmax.f32 %v296, %v312
      %v325 = vmax.f32 %v298, %v314
      %v326 = vmax.f32 %v300, %v316
      %v327 = vmax.f32 %v302, %v318
      %v328 = vmax.f32 %v304, %v320
      %s329 = scalar_lea.vmem %s212, 2
      %v330 = vld [vmem:[%s329] ss:$2 sm:$0x7f]
      %s331 = scalar_lea.vmem %s212, 18
      %v332 = vld [vmem:[%s331] ss:$2 sm:$0x7f]
      %s333 = scalar_lea.vmem %s212, 34
      %v334 = vld [vmem:[%s333] ss:$2 sm:$0x7f]
      %s335 = scalar_lea.vmem %s212, 50
      %v336 = vld [vmem:[%s335] ss:$2 sm:$0x7f]
      %s337 = scalar_lea.vmem %s212, 66
      %v338 = vld [vmem:[%s337] ss:$2 sm:$0x7f]
      %s339 = scalar_lea.vmem %s212, 82
      %v340 = vld [vmem:[%s339] ss:$2 sm:$0x7f]
      %s341 = scalar_lea.vmem %s212, 98
      %v342 = vld [vmem:[%s341] ss:$2 sm:$0x7f]
      %s343 = scalar_lea.vmem %s212, 114
      %v344 = vld [vmem:[%s343] ss:$2 sm:$0x7f]
      %v345 = vmax.f32 %v321, %v330
      %v346 = vmax.f32 %v322, %v332
      %v347 = vmax.f32 %v323, %v334
      %v348 = vmax.f32 %v324, %v336
      %v349 = vmax.f32 %v325, %v338
      %v350 = vmax.f32 %v326, %v340
      %v351 = vmax.f32 %v327, %v342
      %v352 = vmax.f32 %v328, %v344
      %v353 = vmax.f32 %v282, %v345
      %v354 = vmax.f32 %v283, %v346
      %v355 = vmax.f32 %v284, %v347
      %v356 = vmax.f32 %v285, %v348
      %v357 = vmax.f32 %v286, %v349
      %v358 = vmax.f32 %v287, %v350
      %v359 = vmax.f32 %v288, %v351
      %v360 = vmax.f32 %v289, %v352
      %v361 = vld [vmem:[%s219] ss:$2 sm:$0x7f]
      %s362 = scalar_lea.vmem %s219, 16
      %v363 = vld [vmem:[%s362] ss:$2 sm:$0x7f]
      %s364 = scalar_lea.vmem %s219, 32
      %v365 = vld [vmem:[%s364] ss:$2 sm:$0x7f]
      %s366 = scalar_lea.vmem %s219, 48
      %v367 = vld [vmem:[%s366] ss:$2 sm:$0x7f]
      %s368 = scalar_lea.vmem %s219, 64
      %v369 = vld [vmem:[%s368] ss:$2 sm:$0x7f]
      %s370 = scalar_lea.vmem %s219, 80
      %v371 = vld [vmem:[%s370] ss:$2 sm:$0x7f]
      %s372 = scalar_lea.vmem %s219, 96
      %v373 = vld [vmem:[%s372] ss:$2 sm:$0x7f]
      %s374 = scalar_lea.vmem %s219, 112
      %v375 = vld [vmem:[%s374] ss:$2 sm:$0x7f]
      %s376 = scalar_lea.vmem %s219, 1
      %v377 = vld [vmem:[%s376] ss:$2 sm:$0x7f]
      %s378 = scalar_lea.vmem %s219, 17
      %v379 = vld [vmem:[%s378] ss:$2 sm:$0x7f]
      %s380 = scalar_lea.vmem %s219, 33
      %v381 = vld [vmem:[%s380] ss:$2 sm:$0x7f]
      %s382 = scalar_lea.vmem %s219, 49
      %v383 = vld [vmem:[%s382] ss:$2 sm:$0x7f]
      %s384 = scalar_lea.vmem %s219, 65
      %v385 = vld [vmem:[%s384] ss:$2 sm:$0x7f]
      %s386 = scalar_lea.vmem %s219, 81
      %v387 = vld [vmem:[%s386] ss:$2 sm:$0x7f]
      %s388 = scalar_lea.vmem %s219, 97
      %v389 = vld [vmem:[%s388] ss:$2 sm:$0x7f]
      %s390 = scalar_lea.vmem %s219, 113
      %v391 = vld [vmem:[%s390] ss:$2 sm:$0x7f]
      %v392 = vmax.f32 %v361, %v377
      %v393 = vmax.f32 %v363, %v379
      %v394 = vmax.f32 %v365, %v381
      %v395 = vmax.f32 %v367, %v383
      %v396 = vmax.f32 %v369, %v385
      %v397 = vmax.f32 %v371, %v387
      %v398 = vmax.f32 %v373, %v389
      %v399 = vmax.f32 %v375, %v391
      %s400 = scalar_lea.vmem %s219, 2
      %v401 = vld [vmem:[%s400] ss:$2 sm:$0x7f]
      %s402 = scalar_lea.vmem %s219, 18
      %v403 = vld [vmem:[%s402] ss:$2 sm:$0x7f]
      %s404 = scalar_lea.vmem %s219, 34
      %v405 = vld [vmem:[%s404] ss:$2 sm:$0x7f]
      %s406 = scalar_lea.vmem %s219, 50
      %v407 = vld [vmem:[%s406] ss:$2 sm:$0x7f]
      %s408 = scalar_lea.vmem %s219, 66
      %v409 = vld [vmem:[%s408] ss:$2 sm:$0x7f]
      %s410 = scalar_lea.vmem %s219, 82
      %v411 = vld [vmem:[%s410] ss:$2 sm:$0x7f]
      %s412 = scalar_lea.vmem %s219, 98
      %v413 = vld [vmem:[%s412] ss:$2 sm:$0x7f]
      %s414 = scalar_lea.vmem %s219, 114
      %v415 = vld [vmem:[%s414] ss:$2 sm:$0x7f]
      %v416 = vmax.f32 %v392, %v401
      %v417 = vmax.f32 %v393, %v403
      %v418 = vmax.f32 %v394, %v405
      %v419 = vmax.f32 %v395, %v407
      %v420 = vmax.f32 %v396, %v409
      %v421 = vmax.f32 %v397, %v411
      %v422 = vmax.f32 %v398, %v413
      %v423 = vmax.f32 %v399, %v415
      %v424 = vmax.f32 %v353, %v416
      %v425 = vmax.f32 %v354, %v417
      %v426 = vmax.f32 %v355, %v418
      %v427 = vmax.f32 %v356, %v419
      %v428 = vmax.f32 %v357, %v420
      %v429 = vmax.f32 %v358, %v421
      %v430 = vmax.f32 %v359, %v422
      %v431 = vmax.f32 %v360, %v423
      %vm432 = vcmask 30720
      %433 = vst.msk [vmem:[%s225] sm:$0x7f] %vm432, %v424
      %434 = vst.msk [vmem:[%s225 + $0x8] sm:$0x7f] %vm432, %v425
      %435 = vst.msk [vmem:[%s225 + $0x10] sm:$0x7f] %vm432, %v426
      %436 = vst.msk [vmem:[%s225 + $0x18] sm:$0x7f] %vm432, %v427
      %437 = vst.msk [vmem:[%s225 + $0x20] sm:$0x7f] %vm432, %v428
      %438 = vst.msk [vmem:[%s225 + $0x28] sm:$0x7f] %vm432, %v429
      %439 = vst.msk [vmem:[%s225 + $0x30] sm:$0x7f] %vm432, %v430
      %440 = vst.msk [vmem:[%s225 + $0x38] sm:$0x7f] %vm432, %v431
      %s441 = smul.u32 8, %s14
      %p442 = scmp.lt.s32.totalorder %s441, 15
      %s443 = scalar_select %p442, %s441, 15
      %s444 = smul.addr %s443, 8
      %s445 = scalar_lea.vmem %s3, %s444
      // Predicated region
      $region33: #{inception_b_forward.9} parent=31 // pred_check
        %p446 = pneg %p110
      $region34: #{inception_b_forward.9} parent=31 // pred_check_branch
        %448 = sbr.rel (%p446) target = $region36
      $region35: #{inception_b_forward.9} parent=31 // pred_region
        %s449 = smul.u32 8, %s14
      $region36: #{inception_b_forward.9} parent=31 // pred_fallthru
        _
    $region32: #{inception_b_forward.9} parent=5 // pred_fallthru
      _
    %p450 = scmp.le.s32.totalorder 2, %s9
    // Predicated region
    $region37: #{inception_b_forward.9} parent=5 // pred_check
      %p451 = pneg %p450
    $region38: #{inception_b_forward.9} parent=5 // pred_check_branch
      %453 = sbr.rel (%p451) target = $region40
    $region39: #{inception_b_forward.9} parent=5 // pred_region
      %s454 = ssub.s32 %s9, 2
      // Predicated region
      $region41: #{inception_b_forward.9} parent=39 // pred_check
        %p455 = pneg %p116
      $region42: #{inception_b_forward.9} parent=39 // pred_check_branch
        %457 = sbr.rel (%p455) target = $region44
      $region43: #{inception_b_forward.9} parent=39 // pred_region
        %s458 = smul.u32 8, %s15
        %p459 = scmp.lt.s32.totalorder %s458, 15
        %s460 = scalar_select %p459, %s458, 15
        %s461 = smul.addr %s460, 8
        %s462 = scalar_lea.vmem %s3, %s461
      $region44: #{inception_b_forward.9} parent=39 // pred_fallthru
        _
    $region40: #{inception_b_forward.9} parent=5 // pred_fallthru
      _
  $region6: #{inception_b_forward.9} parent=0 // loop_footer
    %s13 = sadd.s32 1, %s9
  $region7: #{inception_b_forward.9} parent=0 // loop_footer_branch
    %8 = sbr.rel target = $region3
  $region8: #{inception_b_forward.9} parent=0 // loop_exit
    _

</llo_original>
